<compile_context>
chip_gen: v7x
topology: tpu7x:2x2x1
jax: 0.10.0
libtpu: 0.0.40
codegen_flags: <defaults>
</compile_context>

<pallas_src>
import functools
import math

import numpy as np

import jax
import jax.numpy as jnp
from jax.experimental import pallas as pl
from jax.experimental.pallas import tpu as pltpu

LANES = 128


def _sigmoid(x):
    return 1.0 / (1.0 + jnp.exp(-x))


def _mxu(a, b):
    # bf16 MXU operands, f32 accumulation (v6e/v7x native; fine on v5e too).
    return jnp.dot(a.astype(jnp.bfloat16), b.astype(jnp.bfloat16),
                   preferred_element_type=jnp.float32)


def _mm32(a, b):
    return jnp.dot(a, b, preferred_element_type=jnp.float32)


def cnn_attn_lstm_kernel(B, T, F, C, H, HD,
                         xcat_ref, smats_ref, negmask_ref,
                         w1_ref, w2_ref, bcnn_ref,
                         wq_ref, wk_ref, wv_ref, bq_ref, bk_ref, bv_ref,
                         wo_ref, wih_ref, bl_ref, whh_ref,
                         wcomb_ref, bcomb_ref,
                         out_ref,
                         xi_ref, xf_ref, xg_ref, xo_ref):
    d = C // H
    scale = 1.0 / math.sqrt(d)
    BT = B * T

    # ---- Conv1d(F->C, k=3, pad=1) + ReLU : fused-tap matmul on (B*T, 3F) ----
    h1 = jnp.maximum(_mxu(xcat_ref[...], w1_ref[...]) + bcnn_ref[0], 0.0)      # (BT, C)
    h1b = h1.astype(jnp.bfloat16)

    # ---- Conv1d(C->C, k=3, pad=1) + ReLU ----
    # Shifted taps via 0/1 shift matrices (batch-boundary aware): pure MXU
    # work, no lane concat / roll on the critical path.
    hprev = _mxu(smats_ref[0], h1b)                                            # (BT, C)
    hnext = _mxu(smats_ref[1], h1b)                                            # (BT, C)
    h2 = jnp.maximum(_mxu(hprev, w2_ref[0]) + _mxu(h1b, w2_ref[1])
                     + _mxu(hnext, w2_ref[2]) + bcnn_ref[1], 0.0)              # (BT, C)
    h2b = h2.astype(jnp.bfloat16)

    # ---- Multi-head self attention (batch folded into rows) ----
    # Per-head weight slabs -> no non-aligned lane slices; output projection
    # applied per head and accumulated -> no head concat.
    negmask = negmask_ref[...]                                                 # (BT, BT)
    ao = jnp.zeros((BT, C), jnp.float32)
    for h in range(H):
        qh = _mxu(h2b, wq_ref[h]) + bq_ref[h]                                  # (BT, d)
        kh = _mxu(h2b, wk_ref[h]) + bk_ref[h]                                  # (BT, d)
        vh = _mxu(h2b, wv_ref[h]) + bv_ref[h]                                  # (BT, d)
        s = jax.lax.dot_general(qh, kh, (((1,), (1,)), ((), ())),
                                preferred_element_type=jnp.float32)
        s = s * scale + negmask                                                # block-diag batch mask
        s = s - jnp.max(s, axis=-1, keepdims=True)
        e = jnp.exp(s)
        p = e * pl.reciprocal(jnp.sum(e, axis=-1, keepdims=True), approx=True)
        oh = _mm32(p, vh)                                                      # (BT, d)
        ao = ao + _mxu(oh, wo_ref[h])                                          # += head_h @ wo[h*d:(h+1)*d, :]
    ao = ao + bcnn_ref[2]                                                      # (BT, C)

    # ---- LSTM input precompute ----
    # Permute rows (b,t)->(t,b) with a 0/1 permutation matmul, then per-gate
    # input projections, staged in VMEM scratch (no lane slicing later).
    ao_tb = _mxu(smats_ref[2], ao).astype(jnp.bfloat16)                        # (BT, C), t-major
    xi_ref[...] = _mxu(ao_tb, wih_ref[0]) + bl_ref[0]
    xf_ref[...] = _mxu(ao_tb, wih_ref[1]) + bl_ref[1]
    xg_ref[...] = _mxu(ao_tb, wih_ref[2]) + bl_ref[2]
    xo_ref[...] = _mxu(ao_tb, wih_ref[3]) + bl_ref[3]

    whh_i, whh_f, whh_g, whh_o = whh_ref[0], whh_ref[1], whh_ref[2], whh_ref[3]

    # ---- Single-layer LSTM recurrence over T (all batches per step) ----
    def step(t, carry):
        hh, cc = carry
        r = pl.ds(t * B, B)
        ig = _sigmoid(xi_ref[r, :] + _mm32(hh, whh_i))
        fg = _sigmoid(xf_ref[r, :] + _mm32(hh, whh_f))
        gg = jnp.tanh(xg_ref[r, :] + _mm32(hh, whh_g))
        og = _sigmoid(xo_ref[r, :] + _mm32(hh, whh_o))
        cc = fg * cc + ig * gg
        hh = og * jnp.tanh(cc)
        return hh, cc

    hh, _ = jax.lax.fori_loop(
        0, T, step,
        (jnp.zeros((B, HD), jnp.float32), jnp.zeros((B, HD), jnp.float32)),
        unroll=True)

    # ---- Lane-dense packed output: lanes [0:HD) = emb, lane HD = pred ----
    # (emb recovered through an identity block, pred through the head weights,
    #  all in one f32 matmul and one dense 128-lane store).
    out_ref[...] = _mm32(hh, wcomb_ref[...]) + bcomb_ref[...]


def cnn_attention_lstm_forward(x, params, *, attn_heads):
    B, T, F = x.shape
    C = params["b1"].shape[-1]
    HD = params["w_hh_t"].shape[0]
    H = attn_heads
    d = C // H
    BT = B * T
    f32, bf16 = jnp.float32, jnp.bfloat16

    # ---------- wrapper-side packing (pure layout, outside the hot path) ----------
    xprev = jnp.pad(x[:, :-1, :], ((0, 0), (1, 0), (0, 0)))
    xnext = jnp.pad(x[:, 1:, :], ((0, 0), (0, 1), (0, 0)))
    xcat = jnp.concatenate([xprev, x, xnext], axis=-1).reshape(BT, 3 * F).astype(bf16)

    # 0/1 structural matrices: time shifts (zero at batch boundaries) and the
    # (b,t)->(t,b) LSTM row permutation; consumed on the MXU inside the kernel.
    idx = np.arange(BT)
    sprev = np.zeros((BT, BT), np.float32)
    rows = idx[idx % T != 0]
    sprev[rows, rows - 1] = 1.0
    snext = np.zeros((BT, BT), np.float32)
    rows = idx[idx % T != T - 1]
    snext[rows, rows + 1] = 1.0
    pbt = np.zeros((BT, BT), np.float32)
    for t in range(T):
        for b in range(B):
            pbt[t * B + b, b * T + t] = 1.0
    smats = jnp.asarray(np.stack([sprev, snext, pbt]), dtype=bf16)             # (3, BT, BT)

    same_batch = (idx[:, None] // T) == (idx[None, :] // T)
    negmask = jnp.asarray(np.where(same_batch, 0.0, -1e30), dtype=f32)         # (BT, BT)

    w1r = params["w1"].reshape(3 * F, C).astype(bf16)                          # (3F, C)
    w2s = params["w2"].astype(bf16)                                            # (3, C, C)
    bcnn = jnp.stack([params["b1"], params["b2"], params["bo"]]).astype(f32)   # (3, 1, C)

    def per_head_in(w):    # (C, C) -> (H, C, d) :  [h] = w[:, h*d:(h+1)*d]
        return w.reshape(C, H, d).transpose(1, 0, 2).astype(bf16)

    def per_head_bias(b):  # (1, C) -> (H, 1, d)
        return b.reshape(1, H, d).transpose(1, 0, 2).astype(f32)

    wq_h, wk_h, wv_h = (per_head_in(params[k]) for k in ("wq", "wk", "wv"))
    bq_h, bk_h, bv_h = (per_head_bias(params[k]) for k in ("bq", "bk", "bv"))
    wo_h = params["wo"].reshape(H, d, C).astype(bf16)                          # [h] = wo[h*d:(h+1)*d, :]

    # Per-gate LSTM weight slabs (gate order i, f, g, o).
    wih4 = params["w_ih_t"].reshape(C, 4, HD).transpose(1, 0, 2).astype(bf16)  # (4, C, HD)
    whh4 = params["w_hh_t"].reshape(HD, 4, HD).transpose(1, 0, 2).astype(f32)  # (4, HD, HD)
    bl4 = params["b_lstm"].reshape(1, 4, HD).transpose(1, 0, 2).astype(f32)    # (4, 1, HD)

    # Packed head: lanes [0:HD) identity (emb), lane HD = head weights (pred).
    wcomb = jnp.zeros((HD, LANES), f32)
    wcomb = wcomb.at[:, :HD].set(jnp.eye(HD, dtype=f32))
    wcomb = wcomb.at[:, HD:HD + 1].set(params["w_head"].astype(f32))
    bcomb = jnp.zeros((1, LANES), f32).at[:, HD:HD + 1].set(params["b_head"].astype(f32))

    args = (xcat, smats, negmask, w1r, w2s, bcnn,
            wq_h, wk_h, wv_h, bq_h, bk_h, bv_h, wo_h,
            wih4, bl4, whh4, wcomb, bcomb)

    vmem_spec = pl.BlockSpec(memory_space=pltpu.MemorySpace.VMEM)

    # Rough cost hint for the XLA scheduler.
    flops = int(2 * BT * 3 * F * C + 2 * 2 * BT * BT * C + 3 * 2 * BT * C * C
                + H * (3 * 2 * BT * C * d + 2 * 2 * BT * BT * d + 2 * BT * d * C)
                + 2 * BT * BT * C + 4 * 2 * BT * C * HD
                + T * 4 * 2 * B * HD * HD + 2 * B * HD * LANES)
    transcendentals = int(H * BT * BT + T * B * HD * 5)
    bytes_accessed = int(4 * (sum(int(np.prod(a.shape)) for a in args) + B * LANES))
    cost = pl.CostEstimate(flops=flops, transcendentals=transcendentals,
                           bytes_accessed=bytes_accessed)

    kernel = functools.partial(cnn_attn_lstm_kernel, B, T, F, C, H, HD)

    # Single grid step: the whole (B, T) problem is folded onto sublanes, so
    # there is no per-batch grid overhead and every matmul sees B*T rows.
    packed = pl.pallas_call(
        kernel,
        out_shape=jax.ShapeDtypeStruct((B, LANES), jnp.float32),
        in_specs=[vmem_spec] * len(args),
        out_specs=vmem_spec,
        scratch_shapes=[pltpu.VMEM((BT, HD), jnp.float32) for _ in range(4)],
        compiler_params=pltpu.CompilerParams(vmem_limit_bytes=32 * 1024 * 1024),
        cost_estimate=cost,
    )(*args)

    emb = packed[:, :HD]
    pred = packed[:, HD:HD + 1]
    return pred, emb


def init_params(key, num_features, cnn_channels, lstm_hidden):
    F, C, HD = num_features, cnn_channels, lstm_hidden
    keys = jax.random.split(key, 16)

    def r(k, shape, scale=0.1):
        return (scale * jax.random.normal(k, shape)).astype(jnp.float32)

    return dict(
        w1=r(keys[0], (3, F, C)), b1=r(keys[1], (1, C)),
        w2=r(keys[2], (3, C, C)), b2=r(keys[3], (1, C)),
        wq=r(keys[4], (C, C)), wk=r(keys[5], (C, C)), wv=r(keys[6], (C, C)),
        bq=r(keys[7], (1, C)), bk=r(keys[8], (1, C)), bv=r(keys[9], (1, C)),
        wo=r(keys[10], (C, C)), bo=r(keys[11], (1, C)),
        w_ih_t=r(keys[12], (C, 4 * HD)), w_hh_t=r(keys[13], (HD, 4 * HD)),
        b_lstm=r(keys[14], (1, 4 * HD)),
        w_head=r(keys[15], (HD, 1)), b_head=jnp.zeros((1, 1), jnp.float32),
    )


def reference_forward(x, params, attn_heads):
    """Pure-JAX f32 reference mirroring the PyTorch forward semantics."""
    B, T, F = x.shape
    C = params["b1"].shape[-1]
    HD = params["w_hh_t"].shape[0]
    d = C // attn_heads

    def conv1d(xin, w, b):  # xin: (B, T, Cin), w: (3, Cin, Cout)
        xp = jnp.pad(xin, ((0, 0), (1, 1), (0, 0)))
        y = sum(jnp.einsum("btf,fc->btc", xp[:, k:k + T, :], w[k]) for k in range(3))
        return y + b

    h1 = jax.nn.relu(conv1d(x, params["w1"], params["b1"]))
    h2 = jax.nn.relu(conv1d(h1, params["w2"], params["b2"]))

    q = h2 @ params["wq"] + params["bq"]
    k = h2 @ params["wk"] + params["bk"]
    v = h2 @ params["wv"] + params["bv"]
    qh = q.reshape(B, T, attn_heads, d).transpose(0, 2, 1, 3)
    kh = k.reshape(B, T, attn_heads, d).transpose(0, 2, 1, 3)
    vh = v.reshape(B, T, attn_heads, d).transpose(0, 2, 1, 3)
    s = jnp.einsum("bhtd,bhsd->bhts", qh, kh) / math.sqrt(d)
    p = jax.nn.softmax(s, axis=-1)
    o = jnp.einsum("bhts,bhsd->bhtd", p, vh).transpose(0, 2, 1, 3).reshape(B, T, C)
    ao = o @ params["wo"] + params["bo"]

    xg = ao @ params["w_ih_t"] + params["b_lstm"]
    h = jnp.zeros((B, HD), jnp.float32)
    c = jnp.zeros((B, HD), jnp.float32)
    for t in range(T):
        g = xg[:, t, :] + h @ params["w_hh_t"]
        i = jax.nn.sigmoid(g[:, :HD])
        f = jax.nn.sigmoid(g[:, HD:2 * HD])
        gg = jnp.tanh(g[:, 2 * HD:3 * HD])
        og = jax.nn.sigmoid(g[:, 3 * HD:])
        c = f * c + i * gg
        h = og * jnp.tanh(c)
    pred = h @ params["w_head"] + params["b_head"]
    return pred, h


if __name__ == "__main__":
    B, T, F = 2, 8, 4            # batch, seq_len, num_features
    C, HEADS, HD = 32, 4, 32     # cnn_channels, attn_heads, lstm_hidden

    key = jax.random.PRNGKey(0)
    kx, kp = jax.random.split(key)
    x = jax.random.normal(kx, (B, T, F), dtype=jnp.float32)
    params = init_params(kp, F, C, HD)

    pred, emb = cnn_attention_lstm_forward(x, params, attn_heads=HEADS)
    jax.block_until_ready((pred, emb))

    pred_r, emb_r = reference_forward(x, params, HEADS)
    assert pred.shape == (B, 1) and emb.shape == (B, HD)
    # bf16 MXU operands (per perf guidance) + approx softmax reciprocal give
    # ~1e-3-level deviations vs. the pure-f32 reference; 1e-2 bounds that.
    assert jnp.allclose(pred, pred_r, atol=1e-2, rtol=1e-2), \
        f"pred mismatch, max diff {jnp.max(jnp.abs(pred - pred_r))}"
    assert jnp.allclose(emb, emb_r, atol=1e-2, rtol=1e-2), \
        f"emb mismatch, max diff {jnp.max(jnp.abs(emb - emb_r))}"

    print("KERNEL_OK")
</pallas_src>

<mosaic_0001>
module attributes {stable_mosaic.version = 11 : i64} {
  func.func @cnn_attn_lstm_kernel(%arg0: memref<16x12xbf16, #tpu.memory_space<vmem>>, %arg1: memref<3x16x16xbf16, #tpu.memory_space<vmem>>, %arg2: memref<16x16xf32, #tpu.memory_space<vmem>>, %arg3: memref<12x32xbf16, #tpu.memory_space<vmem>>, %arg4: memref<3x32x32xbf16, #tpu.memory_space<vmem>>, %arg5: memref<3x1x32xf32, #tpu.memory_space<vmem>>, %arg6: memref<4x32x8xbf16, #tpu.memory_space<vmem>>, %arg7: memref<4x32x8xbf16, #tpu.memory_space<vmem>>, %arg8: memref<4x32x8xbf16, #tpu.memory_space<vmem>>, %arg9: memref<4x1x8xf32, #tpu.memory_space<vmem>>, %arg10: memref<4x1x8xf32, #tpu.memory_space<vmem>>, %arg11: memref<4x1x8xf32, #tpu.memory_space<vmem>>, %arg12: memref<4x8x32xbf16, #tpu.memory_space<vmem>>, %arg13: memref<4x32x32xbf16, #tpu.memory_space<vmem>>, %arg14: memref<4x1x32xf32, #tpu.memory_space<vmem>>, %arg15: memref<4x32x32xf32, #tpu.memory_space<vmem>>, %arg16: memref<32x128xf32, #tpu.memory_space<vmem>>, %arg17: memref<1x128xf32, #tpu.memory_space<vmem>>, %arg18: memref<2x128xf32, #tpu.memory_space<vmem>>, %arg19: memref<16x32xf32, #tpu.memory_space<vmem>>, %arg20: memref<16x32xf32, #tpu.memory_space<vmem>>, %arg21: memref<16x32xf32, #tpu.memory_space<vmem>>, %arg22: memref<16x32xf32, #tpu.memory_space<vmem>>) attributes {dimension_semantics = [], scalar_prefetch = 0 : i64, scratch_operands = 4 : i64, tpu.core_type = #tpu.core_type<tc>} {
    %c0 = arith.constant 0 : index
    %c0_0 = arith.constant 0 : index
    %0 = vector.load %arg0[%c0, %c0_0] : memref<16x12xbf16, #tpu.memory_space<vmem>>, vector<16x12xbf16>
    %c0_1 = arith.constant 0 : index
    %c0_2 = arith.constant 0 : index
    %1 = vector.load %arg3[%c0_1, %c0_2] : memref<12x32xbf16, #tpu.memory_space<vmem>>, vector<12x32xbf16>
    %cst = arith.constant dense<0.000000e+00> : vector<16x32xf32>
    %2 = tpu.matmul %0, %1, %cst {dimension_numbers = #tpu.dot_dimension_numbers<[1], [0], [0], [1], [0, 0, 1, 1], [], []>} : vector<16x12xbf16>, vector<12x32xbf16>, vector<16x32xf32> -> vector<16x32xf32>
    %c0_3 = arith.constant 0 : index
    %c0_4 = arith.constant 0 : index
    %c0_5 = arith.constant 0 : index
    %3 = vector.load %arg5[%c0_3, %c0_4, %c0_5] : memref<3x1x32xf32, #tpu.memory_space<vmem>>, vector<1x1x32xf32>
    %4 = vector.shape_cast %3 : vector<1x1x32xf32> to vector<1x32xf32>
    %5 = vector.broadcast %4 : vector<1x32xf32> to vector<16x32xf32>
    %6 = arith.addf %2, %5 : vector<16x32xf32>
    %cst_6 = arith.constant 0.000000e+00 : f32
    %7 = vector.broadcast %cst_6 : f32 to vector<16x32xf32>
    %8 = arith.maximumf %6, %7 : vector<16x32xf32>
    %9 = arith.truncf %8 : vector<16x32xf32> to vector<16x32xbf16>
    %c0_7 = arith.constant 0 : index
    %c0_8 = arith.constant 0 : index
    %c0_9 = arith.constant 0 : index
    %10 = vector.load %arg1[%c0_7, %c0_8, %c0_9] : memref<3x16x16xbf16, #tpu.memory_space<vmem>>, vector<1x16x16xbf16>
    %11 = vector.shape_cast %10 : vector<1x16x16xbf16> to vector<16x16xbf16>
    %cst_10 = arith.constant dense<0.000000e+00> : vector<16x32xf32>
    %12 = tpu.matmul %11, %9, %cst_10 {dimension_numbers = #tpu.dot_dimension_numbers<[1], [0], [0], [1], [0, 0, 1, 1], [], []>} : vector<16x16xbf16>, vector<16x32xbf16>, vector<16x32xf32> -> vector<16x32xf32>
    %c1 = arith.constant 1 : index
    %c0_11 = arith.constant 0 : index
    %c0_12 = arith.constant 0 : index
    %13 = vector.load %arg1[%c1, %c0_11, %c0_12] : memref<3x16x16xbf16, #tpu.memory_space<vmem>>, vector<1x16x16xbf16>
    %14 = vector.shape_cast %13 : vector<1x16x16xbf16> to vector<16x16xbf16>
    %cst_13 = arith.constant dense<0.000000e+00> : vector<16x32xf32>
    %15 = tpu.matmul %14, %9, %cst_13 {dimension_numbers = #tpu.dot_dimension_numbers<[1], [0], [0], [1], [0, 0, 1, 1], [], []>} : vector<16x16xbf16>, vector<16x32xbf16>, vector<16x32xf32> -> vector<16x32xf32>
    %c0_14 = arith.constant 0 : index
    %c0_15 = arith.constant 0 : index
    %c0_16 = arith.constant 0 : index
    %16 = vector.load %arg4[%c0_14, %c0_15, %c0_16] : memref<3x32x32xbf16, #tpu.memory_space<vmem>>, vector<1x32x32xbf16>
    %17 = vector.shape_cast %16 : vector<1x32x32xbf16> to vector<32x32xbf16>
    %18 = arith.truncf %12 : vector<16x32xf32> to vector<16x32xbf16>
    %cst_17 = arith.constant dense<0.000000e+00> : vector<16x32xf32>
    %19 = tpu.matmul %18, %17, %cst_17 {dimension_numbers = #tpu.dot_dimension_numbers<[1], [0], [0], [1], [0, 0, 1, 1], [], []>} : vector<16x32xbf16>, vector<32x32xbf16>, vector<16x32xf32> -> vector<16x32xf32>
    %c1_18 = arith.constant 1 : index
    %c0_19 = arith.constant 0 : index
    %c0_20 = arith.constant 0 : index
    %20 = vector.load %arg4[%c1_18, %c0_19, %c0_20] : memref<3x32x32xbf16, #tpu.memory_space<vmem>>, vector<1x32x32xbf16>
    %21 = vector.shape_cast %20 : vector<1x32x32xbf16> to vector<32x32xbf16>
    %cst_21 = arith.constant dense<0.000000e+00> : vector<16x32xf32>
    %22 = tpu.matmul %9, %21, %cst_21 {dimension_numbers = #tpu.dot_dimension_numbers<[1], [0], [0], [1], [0, 0, 1, 1], [], []>} : vector<16x32xbf16>, vector<32x32xbf16>, vector<16x32xf32> -> vector<16x32xf32>
    %23 = arith.addf %19, %22 : vector<16x32xf32>
    %c2 = arith.constant 2 : index
    %c0_22 = arith.constant 0 : index
    %c0_23 = arith.constant 0 : index
    %24 = vector.load %arg4[%c2, %c0_22, %c0_23] : memref<3x32x32xbf16, #tpu.memory_space<vmem>>, vector<1x32x32xbf16>
    %25 = vector.shape_cast %24 : vector<1x32x32xbf16> to vector<32x32xbf16>
    %26 = arith.truncf %15 : vector<16x32xf32> to vector<16x32xbf16>
    %cst_24 = arith.constant dense<0.000000e+00> : vector<16x32xf32>
    %27 = tpu.matmul %26, %25, %cst_24 {dimension_numbers = #tpu.dot_dimension_numbers<[1], [0], [0], [1], [0, 0, 1, 1], [], []>} : vector<16x32xbf16>, vector<32x32xbf16>, vector<16x32xf32> -> vector<16x32xf32>
    %28 = arith.addf %23, %27 : vector<16x32xf32>
    %c1_25 = arith.constant 1 : index
    %c0_26 = arith.constant 0 : index
    %c0_27 = arith.constant 0 : index
    %29 = vector.load %arg5[%c1_25, %c0_26, %c0_27] : memref<3x1x32xf32, #tpu.memory_space<vmem>>, vector<1x1x32xf32>
    %30 = vector.shape_cast %29 : vector<1x1x32xf32> to vector<1x32xf32>
    %31 = vector.broadcast %30 : vector<1x32xf32> to vector<16x32xf32>
    %32 = arith.addf %28, %31 : vector<16x32xf32>
    %cst_28 = arith.constant 0.000000e+00 : f32
    %33 = vector.broadcast %cst_28 : f32 to vector<16x32xf32>
    %34 = arith.maximumf %32, %33 : vector<16x32xf32>
    %35 = arith.truncf %34 : vector<16x32xf32> to vector<16x32xbf16>
    %c0_29 = arith.constant 0 : index
    %c0_30 = arith.constant 0 : index
    %36 = vector.load %arg2[%c0_29, %c0_30] : memref<16x16xf32, #tpu.memory_space<vmem>>, vector<16x16xf32>
    %cst_31 = arith.constant 0.000000e+00 : f32
    %37 = vector.broadcast %cst_31 : f32 to vector<16x32xf32>
    %c0_32 = arith.constant 0 : index
    %c0_33 = arith.constant 0 : index
    %c0_34 = arith.constant 0 : index
    %38 = vector.load %arg6[%c0_32, %c0_33, %c0_34] : memref<4x32x8xbf16, #tpu.memory_space<vmem>>, vector<1x32x8xbf16>
    %39 = vector.shape_cast %38 : vector<1x32x8xbf16> to vector<32x8xbf16>
    %cst_35 = arith.constant dense<0.000000e+00> : vector<16x8xf32>
    %40 = tpu.matmul %35, %39, %cst_35 {dimension_numbers = #tpu.dot_dimension_numbers<[1], [0], [0], [1], [0, 0, 1, 1], [], []>} : vector<16x32xbf16>, vector<32x8xbf16>, vector<16x8xf32> -> vector<16x8xf32>
    %c0_36 = arith.constant 0 : index
    %c0_37 = arith.constant 0 : index
    %c0_38 = arith.constant 0 : index
    %41 = vector.load %arg9[%c0_36, %c0_37, %c0_38] : memref<4x1x8xf32, #tpu.memory_space<vmem>>, vector<1x1x8xf32>
    %42 = vector.shape_cast %41 : vector<1x1x8xf32> to vector<1x8xf32>
    %43 = vector.broadcast %42 : vector<1x8xf32> to vector<16x8xf32>
    %44 = arith.addf %40, %43 : vector<16x8xf32>
    %c0_39 = arith.constant 0 : index
    %c0_40 = arith.constant 0 : index
    %c0_41 = arith.constant 0 : index
    %45 = vector.load %arg7[%c0_39, %c0_40, %c0_41] : memref<4x32x8xbf16, #tpu.memory_space<vmem>>, vector<1x32x8xbf16>
    %46 = vector.shape_cast %45 : vector<1x32x8xbf16> to vector<32x8xbf16>
    %cst_42 = arith.constant dense<0.000000e+00> : vector<16x8xf32>
    %47 = tpu.matmul %35, %46, %cst_42 {dimension_numbers = #tpu.dot_dimension_numbers<[1], [0], [0], [1], [0, 0, 1, 1], [], []>} : vector<16x32xbf16>, vector<32x8xbf16>, vector<16x8xf32> -> vector<16x8xf32>
    %c0_43 = arith.constant 0 : index
    %c0_44 = arith.constant 0 : index
    %c0_45 = arith.constant 0 : index
    %48 = vector.load %arg10[%c0_43, %c0_44, %c0_45] : memref<4x1x8xf32, #tpu.memory_space<vmem>>, vector<1x1x8xf32>
    %49 = vector.shape_cast %48 : vector<1x1x8xf32> to vector<1x8xf32>
    %50 = vector.broadcast %49 : vector<1x8xf32> to vector<16x8xf32>
    %51 = arith.addf %47, %50 : vector<16x8xf32>
    %c0_46 = arith.constant 0 : index
    %c0_47 = arith.constant 0 : index
    %c0_48 = arith.constant 0 : index
    %52 = vector.load %arg8[%c0_46, %c0_47, %c0_48] : memref<4x32x8xbf16, #tpu.memory_space<vmem>>, vector<1x32x8xbf16>
    %53 = vector.shape_cast %52 : vector<1x32x8xbf16> to vector<32x8xbf16>
    %cst_49 = arith.constant dense<0.000000e+00> : vector<16x8xf32>
    %54 = tpu.matmul %35, %53, %cst_49 {dimension_numbers = #tpu.dot_dimension_numbers<[1], [0], [0], [1], [0, 0, 1, 1], [], []>} : vector<16x32xbf16>, vector<32x8xbf16>, vector<16x8xf32> -> vector<16x8xf32>
    %c0_50 = arith.constant 0 : index
    %c0_51 = arith.constant 0 : index
    %c0_52 = arith.constant 0 : index
    %55 = vector.load %arg11[%c0_50, %c0_51, %c0_52] : memref<4x1x8xf32, #tpu.memory_space<vmem>>, vector<1x1x8xf32>
    %56 = vector.shape_cast %55 : vector<1x1x8xf32> to vector<1x8xf32>
    %57 = vector.broadcast %56 : vector<1x8xf32> to vector<16x8xf32>
    %58 = arith.addf %54, %57 : vector<16x8xf32>
    %cst_53 = arith.constant dense<0.000000e+00> : vector<16x16xf32>
    %59 = tpu.matmul %44, %51, %cst_53 {dimension_numbers = #tpu.dot_dimension_numbers<[1], [1], [0], [0], [0, 0, 1, 0], [], []>} : vector<16x8xf32>, vector<16x8xf32>, vector<16x16xf32> -> vector<16x16xf32>
    %cst_54 = arith.constant 0.353553385 : f32
    %60 = vector.broadcast %cst_54 : f32 to vector<16x16xf32>
    %61 = arith.mulf %59, %60 : vector<16x16xf32>
    %62 = arith.addf %61, %36 : vector<16x16xf32>
    %cst_55 = arith.constant dense<0xFF800000> : vector<16xf32>
    %63 = vector.multi_reduction <maximumf>, %62, %cst_55 [1] : vector<16x16xf32> to vector<16xf32>
    %64 = vector.shape_cast %63 : vector<16xf32> to vector<16x1xf32>
    %65 = vector.broadcast %64 : vector<16x1xf32> to vector<16x16xf32>
    %66 = arith.subf %62, %65 : vector<16x16xf32>
    %67 = math.exp %66 : vector<16x16xf32>
    %cst_56 = arith.constant dense<0.000000e+00> : vector<16xf32>
    %68 = vector.multi_reduction <add>, %67, %cst_56 [1] : vector<16x16xf32> to vector<16xf32>
    %69 = vector.shape_cast %68 : vector<16xf32> to vector<16x1xf32>
    %70 = tpu.reciprocal %69 {approx = true} : vector<16x1xf32> -> vector<16x1xf32>
    %71 = vector.broadcast %70 : vector<16x1xf32> to vector<16x16xf32>
    %72 = arith.mulf %67, %71 : vector<16x16xf32>
    %cst_57 = arith.constant dense<0.000000e+00> : vector<16x8xf32>
    %73 = tpu.matmul %72, %58, %cst_57 {dimension_numbers = #tpu.dot_dimension_numbers<[1], [0], [0], [1], [0, 0, 1, 1], [], []>} : vector<16x16xf32>, vector<16x8xf32>, vector<16x8xf32> -> vector<16x8xf32>
    %c0_58 = arith.constant 0 : index
    %c0_59 = arith.constant 0 : index
    %c0_60 = arith.constant 0 : index
    %74 = vector.load %arg12[%c0_58, %c0_59, %c0_60] : memref<4x8x32xbf16, #tpu.memory_space<vmem>>, vector<1x8x32xbf16>
    %75 = vector.shape_cast %74 : vector<1x8x32xbf16> to vector<8x32xbf16>
    %76 = arith.truncf %73 : vector<16x8xf32> to vector<16x8xbf16>
    %cst_61 = arith.constant dense<0.000000e+00> : vector<16x32xf32>
    %77 = tpu.matmul %76, %75, %cst_61 {dimension_numbers = #tpu.dot_dimension_numbers<[1], [0], [0], [1], [0, 0, 1, 1], [], []>} : vector<16x8xbf16>, vector<8x32xbf16>, vector<16x32xf32> -> vector<16x32xf32>
    %78 = arith.addf %37, %77 : vector<16x32xf32>
    %c1_62 = arith.constant 1 : index
    %c0_63 = arith.constant 0 : index
    %c0_64 = arith.constant 0 : index
    %79 = vector.load %arg6[%c1_62, %c0_63, %c0_64] : memref<4x32x8xbf16, #tpu.memory_space<vmem>>, vector<1x32x8xbf16>
    %80 = vector.shape_cast %79 : vector<1x32x8xbf16> to vector<32x8xbf16>
    %cst_65 = arith.constant dense<0.000000e+00> : vector<16x8xf32>
    %81 = tpu.matmul %35, %80, %cst_65 {dimension_numbers = #tpu.dot_dimension_numbers<[1], [0], [0], [1], [0, 0, 1, 1], [], []>} : vector<16x32xbf16>, vector<32x8xbf16>, vector<16x8xf32> -> vector<16x8xf32>
    %c1_66 = arith.constant 1 : index
    %c0_67 = arith.constant 0 : index
    %c0_68 = arith.constant 0 : index
    %82 = vector.load %arg9[%c1_66, %c0_67, %c0_68] : memref<4x1x8xf32, #tpu.memory_space<vmem>>, vector<1x1x8xf32>
    %83 = vector.shape_cast %82 : vector<1x1x8xf32> to vector<1x8xf32>
    %84 = vector.broadcast %83 : vector<1x8xf32> to vector<16x8xf32>
    %85 = arith.addf %81, %84 : vector<16x8xf32>
    %c1_69 = arith.constant 1 : index
    %c0_70 = arith.constant 0 : index
    %c0_71 = arith.constant 0 : index
    %86 = vector.load %arg7[%c1_69, %c0_70, %c0_71] : memref<4x32x8xbf16, #tpu.memory_space<vmem>>, vector<1x32x8xbf16>
    %87 = vector.shape_cast %86 : vector<1x32x8xbf16> to vector<32x8xbf16>
    %cst_72 = arith.constant dense<0.000000e+00> : vector<16x8xf32>
    %88 = tpu.matmul %35, %87, %cst_72 {dimension_numbers = #tpu.dot_dimension_numbers<[1], [0], [0], [1], [0, 0, 1, 1], [], []>} : vector<16x32xbf16>, vector<32x8xbf16>, vector<16x8xf32> -> vector<16x8xf32>
    %c1_73 = arith.constant 1 : index
    %c0_74 = arith.constant 0 : index
    %c0_75 = arith.constant 0 : index
    %89 = vector.load %arg10[%c1_73, %c0_74, %c0_75] : memref<4x1x8xf32, #tpu.memory_space<vmem>>, vector<1x1x8xf32>
    %90 = vector.shape_cast %89 : vector<1x1x8xf32> to vector<1x8xf32>
    %91 = vector.broadcast %90 : vector<1x8xf32> to vector<16x8xf32>
    %92 = arith.addf %88, %91 : vector<16x8xf32>
    %c1_76 = arith.constant 1 : index
    %c0_77 = arith.constant 0 : index
    %c0_78 = arith.constant 0 : index
    %93 = vector.load %arg8[%c1_76, %c0_77, %c0_78] : memref<4x32x8xbf16, #tpu.memory_space<vmem>>, vector<1x32x8xbf16>
    %94 = vector.shape_cast %93 : vector<1x32x8xbf16> to vector<32x8xbf16>
    %cst_79 = arith.constant dense<0.000000e+00> : vector<16x8xf32>
    %95 = tpu.matmul %35, %94, %cst_79 {dimension_numbers = #tpu.dot_dimension_numbers<[1], [0], [0], [1], [0, 0, 1, 1], [], []>} : vector<16x32xbf16>, vector<32x8xbf16>, vector<16x8xf32> -> vector<16x8xf32>
    %c1_80 = arith.constant 1 : index
    %c0_81 = arith.constant 0 : index
    %c0_82 = arith.constant 0 : index
    %96 = vector.load %arg11[%c1_80, %c0_81, %c0_82] : memref<4x1x8xf32, #tpu.memory_space<vmem>>, vector<1x1x8xf32>
    %97 = vector.shape_cast %96 : vector<1x1x8xf32> to vector<1x8xf32>
    %98 = vector.broadcast %97 : vector<1x8xf32> to vector<16x8xf32>
    %99 = arith.addf %95, %98 : vector<16x8xf32>
    %cst_83 = arith.constant dense<0.000000e+00> : vector<16x16xf32>
    %100 = tpu.matmul %85, %92, %cst_83 {dimension_numbers = #tpu.dot_dimension_numbers<[1], [1], [0], [0], [0, 0, 1, 0], [], []>} : vector<16x8xf32>, vector<16x8xf32>, vector<16x16xf32> -> vector<16x16xf32>
    %cst_84 = arith.constant 0.353553385 : f32
    %101 = vector.broadcast %cst_84 : f32 to vector<16x16xf32>
    %102 = arith.mulf %100, %101 : vector<16x16xf32>
    %103 = arith.addf %102, %36 : vector<16x16xf32>
    %cst_85 = arith.constant dense<0xFF800000> : vector<16xf32>
    %104 = vector.multi_reduction <maximumf>, %103, %cst_85 [1] : vector<16x16xf32> to vector<16xf32>
    %105 = vector.shape_cast %104 : vector<16xf32> to vector<16x1xf32>
    %106 = vector.broadcast %105 : vector<16x1xf32> to vector<16x16xf32>
    %107 = arith.subf %103, %106 : vector<16x16xf32>
    %108 = math.exp %107 : vector<16x16xf32>
    %cst_86 = arith.constant dense<0.000000e+00> : vector<16xf32>
    %109 = vector.multi_reduction <add>, %108, %cst_86 [1] : vector<16x16xf32> to vector<16xf32>
    %110 = vector.shape_cast %109 : vector<16xf32> to vector<16x1xf32>
    %111 = tpu.reciprocal %110 {approx = true} : vector<16x1xf32> -> vector<16x1xf32>
    %112 = vector.broadcast %111 : vector<16x1xf32> to vector<16x16xf32>
    %113 = arith.mulf %108, %112 : vector<16x16xf32>
    %cst_87 = arith.constant dense<0.000000e+00> : vector<16x8xf32>
    %114 = tpu.matmul %113, %99, %cst_87 {dimension_numbers = #tpu.dot_dimension_numbers<[1], [0], [0], [1], [0, 0, 1, 1], [], []>} : vector<16x16xf32>, vector<16x8xf32>, vector<16x8xf32> -> vector<16x8xf32>
    %c1_88 = arith.constant 1 : index
    %c0_89 = arith.constant 0 : index
    %c0_90 = arith.constant 0 : index
    %115 = vector.load %arg12[%c1_88, %c0_89, %c0_90] : memref<4x8x32xbf16, #tpu.memory_space<vmem>>, vector<1x8x32xbf16>
    %116 = vector.shape_cast %115 : vector<1x8x32xbf16> to vector<8x32xbf16>
    %117 = arith.truncf %114 : vector<16x8xf32> to vector<16x8xbf16>
    %cst_91 = arith.constant dense<0.000000e+00> : vector<16x32xf32>
    %118 = tpu.matmul %117, %116, %cst_91 {dimension_numbers = #tpu.dot_dimension_numbers<[1], [0], [0], [1], [0, 0, 1, 1], [], []>} : vector<16x8xbf16>, vector<8x32xbf16>, vector<16x32xf32> -> vector<16x32xf32>
    %119 = arith.addf %78, %118 : vector<16x32xf32>
    %c2_92 = arith.constant 2 : index
    %c0_93 = arith.constant 0 : index
    %c0_94 = arith.constant 0 : index
    %120 = vector.load %arg6[%c2_92, %c0_93, %c0_94] : memref<4x32x8xbf16, #tpu.memory_space<vmem>>, vector<1x32x8xbf16>
    %121 = vector.shape_cast %120 : vector<1x32x8xbf16> to vector<32x8xbf16>
    %cst_95 = arith.constant dense<0.000000e+00> : vector<16x8xf32>
    %122 = tpu.matmul %35, %121, %cst_95 {dimension_numbers = #tpu.dot_dimension_numbers<[1], [0], [0], [1], [0, 0, 1, 1], [], []>} : vector<16x32xbf16>, vector<32x8xbf16>, vector<16x8xf32> -> vector<16x8xf32>
    %c2_96 = arith.constant 2 : index
    %c0_97 = arith.constant 0 : index
    %c0_98 = arith.constant 0 : index
    %123 = vector.load %arg9[%c2_96, %c0_97, %c0_98] : memref<4x1x8xf32, #tpu.memory_space<vmem>>, vector<1x1x8xf32>
    %124 = vector.shape_cast %123 : vector<1x1x8xf32> to vector<1x8xf32>
    %125 = vector.broadcast %124 : vector<1x8xf32> to vector<16x8xf32>
    %126 = arith.addf %122, %125 : vector<16x8xf32>
    %c2_99 = arith.constant 2 : index
    %c0_100 = arith.constant 0 : index
    %c0_101 = arith.constant 0 : index
    %127 = vector.load %arg7[%c2_99, %c0_100, %c0_101] : memref<4x32x8xbf16, #tpu.memory_space<vmem>>, vector<1x32x8xbf16>
    %128 = vector.shape_cast %127 : vector<1x32x8xbf16> to vector<32x8xbf16>
    %cst_102 = arith.constant dense<0.000000e+00> : vector<16x8xf32>
    %129 = tpu.matmul %35, %128, %cst_102 {dimension_numbers = #tpu.dot_dimension_numbers<[1], [0], [0], [1], [0, 0, 1, 1], [], []>} : vector<16x32xbf16>, vector<32x8xbf16>, vector<16x8xf32> -> vector<16x8xf32>
    %c2_103 = arith.constant 2 : index
    %c0_104 = arith.constant 0 : index
    %c0_105 = arith.constant 0 : index
    %130 = vector.load %arg10[%c2_103, %c0_104, %c0_105] : memref<4x1x8xf32, #tpu.memory_space<vmem>>, vector<1x1x8xf32>
    %131 = vector.shape_cast %130 : vector<1x1x8xf32> to vector<1x8xf32>
    %132 = vector.broadcast %131 : vector<1x8xf32> to vector<16x8xf32>
    %133 = arith.addf %129, %132 : vector<16x8xf32>
    %c2_106 = arith.constant 2 : index
    %c0_107 = arith.constant 0 : index
    %c0_108 = arith.constant 0 : index
    %134 = vector.load %arg8[%c2_106, %c0_107, %c0_108] : memref<4x32x8xbf16, #tpu.memory_space<vmem>>, vector<1x32x8xbf16>
    %135 = vector.shape_cast %134 : vector<1x32x8xbf16> to vector<32x8xbf16>
    %cst_109 = arith.constant dense<0.000000e+00> : vector<16x8xf32>
    %136 = tpu.matmul %35, %135, %cst_109 {dimension_numbers = #tpu.dot_dimension_numbers<[1], [0], [0], [1], [0, 0, 1, 1], [], []>} : vector<16x32xbf16>, vector<32x8xbf16>, vector<16x8xf32> -> vector<16x8xf32>
    %c2_110 = arith.constant 2 : index
    %c0_111 = arith.constant 0 : index
    %c0_112 = arith.constant 0 : index
    %137 = vector.load %arg11[%c2_110, %c0_111, %c0_112] : memref<4x1x8xf32, #tpu.memory_space<vmem>>, vector<1x1x8xf32>
    %138 = vector.shape_cast %137 : vector<1x1x8xf32> to vector<1x8xf32>
    %139 = vector.broadcast %138 : vector<1x8xf32> to vector<16x8xf32>
    %140 = arith.addf %136, %139 : vector<16x8xf32>
    %cst_113 = arith.constant dense<0.000000e+00> : vector<16x16xf32>
    %141 = tpu.matmul %126, %133, %cst_113 {dimension_numbers = #tpu.dot_dimension_numbers<[1], [1], [0], [0], [0, 0, 1, 0], [], []>} : vector<16x8xf32>, vector<16x8xf32>, vector<16x16xf32> -> vector<16x16xf32>
    %cst_114 = arith.constant 0.353553385 : f32
    %142 = vector.broadcast %cst_114 : f32 to vector<16x16xf32>
    %143 = arith.mulf %141, %142 : vector<16x16xf32>
    %144 = arith.addf %143, %36 : vector<16x16xf32>
    %cst_115 = arith.constant dense<0xFF800000> : vector<16xf32>
    %145 = vector.multi_reduction <maximumf>, %144, %cst_115 [1] : vector<16x16xf32> to vector<16xf32>
    %146 = vector.shape_cast %145 : vector<16xf32> to vector<16x1xf32>
    %147 = vector.broadcast %146 : vector<16x1xf32> to vector<16x16xf32>
    %148 = arith.subf %144, %147 : vector<16x16xf32>
    %149 = math.exp %148 : vector<16x16xf32>
    %cst_116 = arith.constant dense<0.000000e+00> : vector<16xf32>
    %150 = vector.multi_reduction <add>, %149, %cst_116 [1] : vector<16x16xf32> to vector<16xf32>
    %151 = vector.shape_cast %150 : vector<16xf32> to vector<16x1xf32>
    %152 = tpu.reciprocal %151 {approx = true} : vector<16x1xf32> -> vector<16x1xf32>
    %153 = vector.broadcast %152 : vector<16x1xf32> to vector<16x16xf32>
    %154 = arith.mulf %149, %153 : vector<16x16xf32>
    %cst_117 = arith.constant dense<0.000000e+00> : vector<16x8xf32>
    %155 = tpu.matmul %154, %140, %cst_117 {dimension_numbers = #tpu.dot_dimension_numbers<[1], [0], [0], [1], [0, 0, 1, 1], [], []>} : vector<16x16xf32>, vector<16x8xf32>, vector<16x8xf32> -> vector<16x8xf32>
    %c2_118 = arith.constant 2 : index
    %c0_119 = arith.constant 0 : index
    %c0_120 = arith.constant 0 : index
    %156 = vector.load %arg12[%c2_118, %c0_119, %c0_120] : memref<4x8x32xbf16, #tpu.memory_space<vmem>>, vector<1x8x32xbf16>
    %157 = vector.shape_cast %156 : vector<1x8x32xbf16> to vector<8x32xbf16>
    %158 = arith.truncf %155 : vector<16x8xf32> to vector<16x8xbf16>
    %cst_121 = arith.constant dense<0.000000e+00> : vector<16x32xf32>
    %159 = tpu.matmul %158, %157, %cst_121 {dimension_numbers = #tpu.dot_dimension_numbers<[1], [0], [0], [1], [0, 0, 1, 1], [], []>} : vector<16x8xbf16>, vector<8x32xbf16>, vector<16x32xf32> -> vector<16x32xf32>
    %160 = arith.addf %119, %159 : vector<16x32xf32>
    %c3 = arith.constant 3 : index
    %c0_122 = arith.constant 0 : index
    %c0_123 = arith.constant 0 : index
    %161 = vector.load %arg6[%c3, %c0_122, %c0_123] : memref<4x32x8xbf16, #tpu.memory_space<vmem>>, vector<1x32x8xbf16>
    %162 = vector.shape_cast %161 : vector<1x32x8xbf16> to vector<32x8xbf16>
    %cst_124 = arith.constant dense<0.000000e+00> : vector<16x8xf32>
    %163 = tpu.matmul %35, %162, %cst_124 {dimension_numbers = #tpu.dot_dimension_numbers<[1], [0], [0], [1], [0, 0, 1, 1], [], []>} : vector<16x32xbf16>, vector<32x8xbf16>, vector<16x8xf32> -> vector<16x8xf32>
    %c3_125 = arith.constant 3 : index
    %c0_126 = arith.constant 0 : index
    %c0_127 = arith.constant 0 : index
    %164 = vector.load %arg9[%c3_125, %c0_126, %c0_127] : memref<4x1x8xf32, #tpu.memory_space<vmem>>, vector<1x1x8xf32>
    %165 = vector.shape_cast %164 : vector<1x1x8xf32> to vector<1x8xf32>
    %166 = vector.broadcast %165 : vector<1x8xf32> to vector<16x8xf32>
    %167 = arith.addf %163, %166 : vector<16x8xf32>
    %c3_128 = arith.constant 3 : index
    %c0_129 = arith.constant 0 : index
    %c0_130 = arith.constant 0 : index
    %168 = vector.load %arg7[%c3_128, %c0_129, %c0_130] : memref<4x32x8xbf16, #tpu.memory_space<vmem>>, vector<1x32x8xbf16>
    %169 = vector.shape_cast %168 : vector<1x32x8xbf16> to vector<32x8xbf16>
    %cst_131 = arith.constant dense<0.000000e+00> : vector<16x8xf32>
    %170 = tpu.matmul %35, %169, %cst_131 {dimension_numbers = #tpu.dot_dimension_numbers<[1], [0], [0], [1], [0, 0, 1, 1], [], []>} : vector<16x32xbf16>, vector<32x8xbf16>, vector<16x8xf32> -> vector<16x8xf32>
    %c3_132 = arith.constant 3 : index
    %c0_133 = arith.constant 0 : index
    %c0_134 = arith.constant 0 : index
    %171 = vector.load %arg10[%c3_132, %c0_133, %c0_134] : memref<4x1x8xf32, #tpu.memory_space<vmem>>, vector<1x1x8xf32>
    %172 = vector.shape_cast %171 : vector<1x1x8xf32> to vector<1x8xf32>
    %173 = vector.broadcast %172 : vector<1x8xf32> to vector<16x8xf32>
    %174 = arith.addf %170, %173 : vector<16x8xf32>
    %c3_135 = arith.constant 3 : index
    %c0_136 = arith.constant 0 : index
    %c0_137 = arith.constant 0 : index
    %175 = vector.load %arg8[%c3_135, %c0_136, %c0_137] : memref<4x32x8xbf16, #tpu.memory_space<vmem>>, vector<1x32x8xbf16>
    %176 = vector.shape_cast %175 : vector<1x32x8xbf16> to vector<32x8xbf16>
    %cst_138 = arith.constant dense<0.000000e+00> : vector<16x8xf32>
    %177 = tpu.matmul %35, %176, %cst_138 {dimension_numbers = #tpu.dot_dimension_numbers<[1], [0], [0], [1], [0, 0, 1, 1], [], []>} : vector<16x32xbf16>, vector<32x8xbf16>, vector<16x8xf32> -> vector<16x8xf32>
    %c3_139 = arith.constant 3 : index
    %c0_140 = arith.constant 0 : index
    %c0_141 = arith.constant 0 : index
    %178 = vector.load %arg11[%c3_139, %c0_140, %c0_141] : memref<4x1x8xf32, #tpu.memory_space<vmem>>, vector<1x1x8xf32>
    %179 = vector.shape_cast %178 : vector<1x1x8xf32> to vector<1x8xf32>
    %180 = vector.broadcast %179 : vector<1x8xf32> to vector<16x8xf32>
    %181 = arith.addf %177, %180 : vector<16x8xf32>
    %cst_142 = arith.constant dense<0.000000e+00> : vector<16x16xf32>
    %182 = tpu.matmul %167, %174, %cst_142 {dimension_numbers = #tpu.dot_dimension_numbers<[1], [1], [0], [0], [0, 0, 1, 0], [], []>} : vector<16x8xf32>, vector<16x8xf32>, vector<16x16xf32> -> vector<16x16xf32>
    %cst_143 = arith.constant 0.353553385 : f32
    %183 = vector.broadcast %cst_143 : f32 to vector<16x16xf32>
    %184 = arith.mulf %182, %183 : vector<16x16xf32>
    %185 = arith.addf %184, %36 : vector<16x16xf32>
    %cst_144 = arith.constant dense<0xFF800000> : vector<16xf32>
    %186 = vector.multi_reduction <maximumf>, %185, %cst_144 [1] : vector<16x16xf32> to vector<16xf32>
    %187 = vector.shape_cast %186 : vector<16xf32> to vector<16x1xf32>
    %188 = vector.broadcast %187 : vector<16x1xf32> to vector<16x16xf32>
    %189 = arith.subf %185, %188 : vector<16x16xf32>
    %190 = math.exp %189 : vector<16x16xf32>
    %cst_145 = arith.constant dense<0.000000e+00> : vector<16xf32>
    %191 = vector.multi_reduction <add>, %190, %cst_145 [1] : vector<16x16xf32> to vector<16xf32>
    %192 = vector.shape_cast %191 : vector<16xf32> to vector<16x1xf32>
    %193 = tpu.reciprocal %192 {approx = true} : vector<16x1xf32> -> vector<16x1xf32>
    %194 = vector.broadcast %193 : vector<16x1xf32> to vector<16x16xf32>
    %195 = arith.mulf %190, %194 : vector<16x16xf32>
    %cst_146 = arith.constant dense<0.000000e+00> : vector<16x8xf32>
    %196 = tpu.matmul %195, %181, %cst_146 {dimension_numbers = #tpu.dot_dimension_numbers<[1], [0], [0], [1], [0, 0, 1, 1], [], []>} : vector<16x16xf32>, vector<16x8xf32>, vector<16x8xf32> -> vector<16x8xf32>
    %c3_147 = arith.constant 3 : index
    %c0_148 = arith.constant 0 : index
    %c0_149 = arith.constant 0 : index
    %197 = vector.load %arg12[%c3_147, %c0_148, %c0_149] : memref<4x8x32xbf16, #tpu.memory_space<vmem>>, vector<1x8x32xbf16>
    %198 = vector.shape_cast %197 : vector<1x8x32xbf16> to vector<8x32xbf16>
    %199 = arith.truncf %196 : vector<16x8xf32> to vector<16x8xbf16>
    %cst_150 = arith.constant dense<0.000000e+00> : vector<16x32xf32>
    %200 = tpu.matmul %199, %198, %cst_150 {dimension_numbers = #tpu.dot_dimension_numbers<[1], [0], [0], [1], [0, 0, 1, 1], [], []>} : vector<16x8xbf16>, vector<8x32xbf16>, vector<16x32xf32> -> vector<16x32xf32>
    %201 = arith.addf %160, %200 : vector<16x32xf32>
    %c2_151 = arith.constant 2 : index
    %c0_152 = arith.constant 0 : index
    %c0_153 = arith.constant 0 : index
    %202 = vector.load %arg5[%c2_151, %c0_152, %c0_153] : memref<3x1x32xf32, #tpu.memory_space<vmem>>, vector<1x1x32xf32>
    %203 = vector.shape_cast %202 : vector<1x1x32xf32> to vector<1x32xf32>
    %204 = vector.broadcast %203 : vector<1x32xf32> to vector<16x32xf32>
    %205 = arith.addf %201, %204 : vector<16x32xf32>
    %c2_154 = arith.constant 2 : index
    %c0_155 = arith.constant 0 : index
    %c0_156 = arith.constant 0 : index
    %206 = vector.load %arg1[%c2_154, %c0_155, %c0_156] : memref<3x16x16xbf16, #tpu.memory_space<vmem>>, vector<1x16x16xbf16>
    %207 = vector.shape_cast %206 : vector<1x16x16xbf16> to vector<16x16xbf16>
    %208 = arith.truncf %205 : vector<16x32xf32> to vector<16x32xbf16>
    %cst_157 = arith.constant dense<0.000000e+00> : vector<16x32xf32>
    %209 = tpu.matmul %207, %208, %cst_157 {dimension_numbers = #tpu.dot_dimension_numbers<[1], [0], [0], [1], [0, 0, 1, 1], [], []>} : vector<16x16xbf16>, vector<16x32xbf16>, vector<16x32xf32> -> vector<16x32xf32>
    %210 = arith.truncf %209 : vector<16x32xf32> to vector<16x32xbf16>
    %c0_158 = arith.constant 0 : index
    %c0_159 = arith.constant 0 : index
    %c0_160 = arith.constant 0 : index
    %211 = vector.load %arg13[%c0_158, %c0_159, %c0_160] : memref<4x32x32xbf16, #tpu.memory_space<vmem>>, vector<1x32x32xbf16>
    %212 = vector.shape_cast %211 : vector<1x32x32xbf16> to vector<32x32xbf16>
    %cst_161 = arith.constant dense<0.000000e+00> : vector<16x32xf32>
    %213 = tpu.matmul %210, %212, %cst_161 {dimension_numbers = #tpu.dot_dimension_numbers<[1], [0], [0], [1], [0, 0, 1, 1], [], []>} : vector<16x32xbf16>, vector<32x32xbf16>, vector<16x32xf32> -> vector<16x32xf32>
    %c0_162 = arith.constant 0 : index
    %c0_163 = arith.constant 0 : index
    %c0_164 = arith.constant 0 : index
    %214 = vector.load %arg14[%c0_162, %c0_163, %c0_164] : memref<4x1x32xf32, #tpu.memory_space<vmem>>, vector<1x1x32xf32>
    %215 = vector.shape_cast %214 : vector<1x1x32xf32> to vector<1x32xf32>
    %216 = vector.broadcast %215 : vector<1x32xf32> to vector<16x32xf32>
    %217 = arith.addf %213, %216 : vector<16x32xf32>
    %c0_165 = arith.constant 0 : index
    %c0_166 = arith.constant 0 : index
    %218 = vector.load %arg19[%c0_165, %c0_166] : memref<16x32xf32, #tpu.memory_space<vmem>>, vector<16x32xf32>
    tpu.vector_store %arg19[%c0_165, %c0_166], %217 {strides = array<i32>} : memref<16x32xf32, #tpu.memory_space<vmem>>, vector<16x32xf32>,
    %c1_167 = arith.constant 1 : index
    %c0_168 = arith.constant 0 : index
    %c0_169 = arith.constant 0 : index
    %219 = vector.load %arg13[%c1_167, %c0_168, %c0_169] : memref<4x32x32xbf16, #tpu.memory_space<vmem>>, vector<1x32x32xbf16>
    %220 = vector.shape_cast %219 : vector<1x32x32xbf16> to vector<32x32xbf16>
    %cst_170 = arith.constant dense<0.000000e+00> : vector<16x32xf32>
    %221 = tpu.matmul %210, %220, %cst_170 {dimension_numbers = #tpu.dot_dimension_numbers<[1], [0], [0], [1], [0, 0, 1, 1], [], []>} : vector<16x32xbf16>, vector<32x32xbf16>, vector<16x32xf32> -> vector<16x32xf32>
    %c1_171 = arith.constant 1 : index
    %c0_172 = arith.constant 0 : index
    %c0_173 = arith.constant 0 : index
    %222 = vector.load %arg14[%c1_171, %c0_172, %c0_173] : memref<4x1x32xf32, #tpu.memory_space<vmem>>, vector<1x1x32xf32>
    %223 = vector.shape_cast %222 : vector<1x1x32xf32> to vector<1x32xf32>
    %224 = vector.broadcast %223 : vector<1x32xf32> to vector<16x32xf32>
    %225 = arith.addf %221, %224 : vector<16x32xf32>
    %c0_174 = arith.constant 0 : index
    %c0_175 = arith.constant 0 : index
    %226 = vector.load %arg20[%c0_174, %c0_175] : memref<16x32xf32, #tpu.memory_space<vmem>>, vector<16x32xf32>
    tpu.vector_store %arg20[%c0_174, %c0_175], %225 {strides = array<i32>} : memref<16x32xf32, #tpu.memory_space<vmem>>, vector<16x32xf32>,
    %c2_176 = arith.constant 2 : index
    %c0_177 = arith.constant 0 : index
    %c0_178 = arith.constant 0 : index
    %227 = vector.load %arg13[%c2_176, %c0_177, %c0_178] : memref<4x32x32xbf16, #tpu.memory_space<vmem>>, vector<1x32x32xbf16>
    %228 = vector.shape_cast %227 : vector<1x32x32xbf16> to vector<32x32xbf16>
    %cst_179 = arith.constant dense<0.000000e+00> : vector<16x32xf32>
    %229 = tpu.matmul %210, %228, %cst_179 {dimension_numbers = #tpu.dot_dimension_numbers<[1], [0], [0], [1], [0, 0, 1, 1], [], []>} : vector<16x32xbf16>, vector<32x32xbf16>, vector<16x32xf32> -> vector<16x32xf32>
    %c2_180 = arith.constant 2 : index
    %c0_181 = arith.constant 0 : index
    %c0_182 = arith.constant 0 : index
    %230 = vector.load %arg14[%c2_180, %c0_181, %c0_182] : memref<4x1x32xf32, #tpu.memory_space<vmem>>, vector<1x1x32xf32>
    %231 = vector.shape_cast %230 : vector<1x1x32xf32> to vector<1x32xf32>
    %232 = vector.broadcast %231 : vector<1x32xf32> to vector<16x32xf32>
    %233 = arith.addf %229, %232 : vector<16x32xf32>
    %c0_183 = arith.constant 0 : index
    %c0_184 = arith.constant 0 : index
    %234 = vector.load %arg21[%c0_183, %c0_184] : memref<16x32xf32, #tpu.memory_space<vmem>>, vector<16x32xf32>
    tpu.vector_store %arg21[%c0_183, %c0_184], %233 {strides = array<i32>} : memref<16x32xf32, #tpu.memory_space<vmem>>, vector<16x32xf32>,
    %c3_185 = arith.constant 3 : index
    %c0_186 = arith.constant 0 : index
    %c0_187 = arith.constant 0 : index
    %235 = vector.load %arg13[%c3_185, %c0_186, %c0_187] : memref<4x32x32xbf16, #tpu.memory_space<vmem>>, vector<1x32x32xbf16>
    %236 = vector.shape_cast %235 : vector<1x32x32xbf16> to vector<32x32xbf16>
    %cst_188 = arith.constant dense<0.000000e+00> : vector<16x32xf32>
    %237 = tpu.matmul %210, %236, %cst_188 {dimension_numbers = #tpu.dot_dimension_numbers<[1], [0], [0], [1], [0, 0, 1, 1], [], []>} : vector<16x32xbf16>, vector<32x32xbf16>, vector<16x32xf32> -> vector<16x32xf32>
    %c3_189 = arith.constant 3 : index
    %c0_190 = arith.constant 0 : index
    %c0_191 = arith.constant 0 : index
    %238 = vector.load %arg14[%c3_189, %c0_190, %c0_191] : memref<4x1x32xf32, #tpu.memory_space<vmem>>, vector<1x1x32xf32>
    %239 = vector.shape_cast %238 : vector<1x1x32xf32> to vector<1x32xf32>
    %240 = vector.broadcast %239 : vector<1x32xf32> to vector<16x32xf32>
    %241 = arith.addf %237, %240 : vector<16x32xf32>
    %c0_192 = arith.constant 0 : index
    %c0_193 = arith.constant 0 : index
    %242 = vector.load %arg22[%c0_192, %c0_193] : memref<16x32xf32, #tpu.memory_space<vmem>>, vector<16x32xf32>
    tpu.vector_store %arg22[%c0_192, %c0_193], %241 {strides = array<i32>} : memref<16x32xf32, #tpu.memory_space<vmem>>, vector<16x32xf32>,
    %c0_194 = arith.constant 0 : index
    %c0_195 = arith.constant 0 : index
    %c0_196 = arith.constant 0 : index
    %243 = vector.load %arg15[%c0_194, %c0_195, %c0_196] : memref<4x32x32xf32, #tpu.memory_space<vmem>>, vector<1x32x32xf32>
    %244 = vector.shape_cast %243 : vector<1x32x32xf32> to vector<32x32xf32>
    %c1_197 = arith.constant 1 : index
    %c0_198 = arith.constant 0 : index
    %c0_199 = arith.constant 0 : index
    %245 = vector.load %arg15[%c1_197, %c0_198, %c0_199] : memref<4x32x32xf32, #tpu.memory_space<vmem>>, vector<1x32x32xf32>
    %246 = vector.shape_cast %245 : vector<1x32x32xf32> to vector<32x32xf32>
    %c2_200 = arith.constant 2 : index
    %c0_201 = arith.constant 0 : index
    %c0_202 = arith.constant 0 : index
    %247 = vector.load %arg15[%c2_200, %c0_201, %c0_202] : memref<4x32x32xf32, #tpu.memory_space<vmem>>, vector<1x32x32xf32>
    %248 = vector.shape_cast %247 : vector<1x32x32xf32> to vector<32x32xf32>
    %c3_203 = arith.constant 3 : index
    %c0_204 = arith.constant 0 : index
    %c0_205 = arith.constant 0 : index
    %249 = vector.load %arg15[%c3_203, %c0_204, %c0_205] : memref<4x32x32xf32, #tpu.memory_space<vmem>>, vector<1x32x32xf32>
    %250 = vector.shape_cast %249 : vector<1x32x32xf32> to vector<32x32xf32>
    %cst_206 = arith.constant 0.000000e+00 : f32
    %251 = vector.broadcast %cst_206 : f32 to vector<2x32xf32>
    %cst_207 = arith.constant 0.000000e+00 : f32
    %252 = vector.broadcast %cst_207 : f32 to vector<2x32xf32>
    %c0_i32 = arith.constant 0 : i32
    %c2_i32 = arith.constant 2 : i32
    %253 = arith.muli %c0_i32, %c2_i32 : i32
    %254 = arith.index_cast %253 : i32 to index
    %c0_208 = arith.constant 0 : index
    %255 = vector.load %arg19[%254, %c0_208] : memref<16x32xf32, #tpu.memory_space<vmem>>, vector<2x32xf32>
    %cst_209 = arith.constant dense<0.000000e+00> : vector<2x32xf32>
    %256 = tpu.matmul %251, %244, %cst_209 {dimension_numbers = #tpu.dot_dimension_numbers<[1], [0], [0], [1], [0, 0, 1, 1], [], []>} : vector<2x32xf32>, vector<32x32xf32>, vector<2x32xf32> -> vector<2x32xf32>
    %257 = arith.addf %255, %256 : vector<2x32xf32>
    %cst_210 = arith.constant 0.000000e+00 : f32
    %258 = vector.broadcast %cst_210 : f32 to vector<2x32xf32>
    %259 = arith.subf %258, %257 : vector<2x32xf32>
    %260 = math.exp %259 : vector<2x32xf32>
    %cst_211 = arith.constant 1.000000e+00 : f32
    %261 = vector.broadcast %cst_211 : f32 to vector<2x32xf32>
    %262 = arith.addf %261, %260 : vector<2x32xf32>
    %cst_212 = arith.constant 1.000000e+00 : f32
    %263 = vector.broadcast %cst_212 : f32 to vector<2x32xf32>
    %264 = arith.divf %263, %262 : vector<2x32xf32>
    %265 = arith.index_cast %253 : i32 to index
    %c0_213 = arith.constant 0 : index
    %266 = vector.load %arg20[%265, %c0_213] : memref<16x32xf32, #tpu.memory_space<vmem>>, vector<2x32xf32>
    %cst_214 = arith.constant dense<0.000000e+00> : vector<2x32xf32>
    %267 = tpu.matmul %251, %246, %cst_214 {dimension_numbers = #tpu.dot_dimension_numbers<[1], [0], [0], [1], [0, 0, 1, 1], [], []>} : vector<2x32xf32>, vector<32x32xf32>, vector<2x32xf32> -> vector<2x32xf32>
    %268 = arith.addf %266, %267 : vector<2x32xf32>
    %cst_215 = arith.constant 0.000000e+00 : f32
    %269 = vector.broadcast %cst_215 : f32 to vector<2x32xf32>
    %270 = arith.subf %269, %268 : vector<2x32xf32>
    %271 = math.exp %270 : vector<2x32xf32>
    %cst_216 = arith.constant 1.000000e+00 : f32
    %272 = vector.broadcast %cst_216 : f32 to vector<2x32xf32>
    %273 = arith.addf %272, %271 : vector<2x32xf32>
    %cst_217 = arith.constant 1.000000e+00 : f32
    %274 = vector.broadcast %cst_217 : f32 to vector<2x32xf32>
    %275 = arith.divf %274, %273 : vector<2x32xf32>
    %276 = arith.index_cast %253 : i32 to index
    %c0_218 = arith.constant 0 : index
    %277 = vector.load %arg21[%276, %c0_218] : memref<16x32xf32, #tpu.memory_space<vmem>>, vector<2x32xf32>
    %cst_219 = arith.constant dense<0.000000e+00> : vector<2x32xf32>
    %278 = tpu.matmul %251, %248, %cst_219 {dimension_numbers = #tpu.dot_dimension_numbers<[1], [0], [0], [1], [0, 0, 1, 1], [], []>} : vector<2x32xf32>, vector<32x32xf32>, vector<2x32xf32> -> vector<2x32xf32>
    %279 = arith.addf %277, %278 : vector<2x32xf32>
    %280 = math.tanh %279 : vector<2x32xf32>
    %281 = arith.index_cast %253 : i32 to index
    %c0_220 = arith.constant 0 : index
    %282 = vector.load %arg22[%281, %c0_220] : memref<16x32xf32, #tpu.memory_space<vmem>>, vector<2x32xf32>
    %cst_221 = arith.constant dense<0.000000e+00> : vector<2x32xf32>
    %283 = tpu.matmul %251, %250, %cst_221 {dimension_numbers = #tpu.dot_dimension_numbers<[1], [0], [0], [1], [0, 0, 1, 1], [], []>} : vector<2x32xf32>, vector<32x32xf32>, vector<2x32xf32> -> vector<2x32xf32>
    %284 = arith.addf %282, %283 : vector<2x32xf32>
    %cst_222 = arith.constant 0.000000e+00 : f32
    %285 = vector.broadcast %cst_222 : f32 to vector<2x32xf32>
    %286 = arith.subf %285, %284 : vector<2x32xf32>
    %287 = math.exp %286 : vector<2x32xf32>
    %cst_223 = arith.constant 1.000000e+00 : f32
    %288 = vector.broadcast %cst_223 : f32 to vector<2x32xf32>
    %289 = arith.addf %288, %287 : vector<2x32xf32>
    %cst_224 = arith.constant 1.000000e+00 : f32
    %290 = vector.broadcast %cst_224 : f32 to vector<2x32xf32>
    %291 = arith.divf %290, %289 : vector<2x32xf32>
    %292 = arith.mulf %275, %252 : vector<2x32xf32>
    %293 = arith.mulf %264, %280 : vector<2x32xf32>
    %294 = arith.addf %292, %293 : vector<2x32xf32>
    %295 = math.tanh %294 : vector<2x32xf32>
    %296 = arith.mulf %291, %295 : vector<2x32xf32>
    %c1_i32 = arith.constant 1 : i32
    %c2_i32_225 = arith.constant 2 : i32
    %297 = arith.muli %c1_i32, %c2_i32_225 : i32
    %298 = arith.index_cast %297 : i32 to index
    %c0_226 = arith.constant 0 : index
    %299 = vector.load %arg19[%298, %c0_226] : memref<16x32xf32, #tpu.memory_space<vmem>>, vector<2x32xf32>
    %cst_227 = arith.constant dense<0.000000e+00> : vector<2x32xf32>
    %300 = tpu.matmul %296, %244, %cst_227 {dimension_numbers = #tpu.dot_dimension_numbers<[1], [0], [0], [1], [0, 0, 1, 1], [], []>} : vector<2x32xf32>, vector<32x32xf32>, vector<2x32xf32> -> vector<2x32xf32>
    %301 = arith.addf %299, %300 : vector<2x32xf32>
    %cst_228 = arith.constant 0.000000e+00 : f32
    %302 = vector.broadcast %cst_228 : f32 to vector<2x32xf32>
    %303 = arith.subf %302, %301 : vector<2x32xf32>
    %304 = math.exp %303 : vector<2x32xf32>
    %cst_229 = arith.constant 1.000000e+00 : f32
    %305 = vector.broadcast %cst_229 : f32 to vector<2x32xf32>
    %306 = arith.addf %305, %304 : vector<2x32xf32>
    %cst_230 = arith.constant 1.000000e+00 : f32
    %307 = vector.broadcast %cst_230 : f32 to vector<2x32xf32>
    %308 = arith.divf %307, %306 : vector<2x32xf32>
    %309 = arith.index_cast %297 : i32 to index
    %c0_231 = arith.constant 0 : index
    %310 = vector.load %arg20[%309, %c0_231] : memref<16x32xf32, #tpu.memory_space<vmem>>, vector<2x32xf32>
    %cst_232 = arith.constant dense<0.000000e+00> : vector<2x32xf32>
    %311 = tpu.matmul %296, %246, %cst_232 {dimension_numbers = #tpu.dot_dimension_numbers<[1], [0], [0], [1], [0, 0, 1, 1], [], []>} : vector<2x32xf32>, vector<32x32xf32>, vector<2x32xf32> -> vector<2x32xf32>
    %312 = arith.addf %310, %311 : vector<2x32xf32>
    %cst_233 = arith.constant 0.000000e+00 : f32
    %313 = vector.broadcast %cst_233 : f32 to vector<2x32xf32>
    %314 = arith.subf %313, %312 : vector<2x32xf32>
    %315 = math.exp %314 : vector<2x32xf32>
    %cst_234 = arith.constant 1.000000e+00 : f32
    %316 = vector.broadcast %cst_234 : f32 to vector<2x32xf32>
    %317 = arith.addf %316, %315 : vector<2x32xf32>
    %cst_235 = arith.constant 1.000000e+00 : f32
    %318 = vector.broadcast %cst_235 : f32 to vector<2x32xf32>
    %319 = arith.divf %318, %317 : vector<2x32xf32>
    %320 = arith.index_cast %297 : i32 to index
    %c0_236 = arith.constant 0 : index
    %321 = vector.load %arg21[%320, %c0_236] : memref<16x32xf32, #tpu.memory_space<vmem>>, vector<2x32xf32>
    %cst_237 = arith.constant dense<0.000000e+00> : vector<2x32xf32>
    %322 = tpu.matmul %296, %248, %cst_237 {dimension_numbers = #tpu.dot_dimension_numbers<[1], [0], [0], [1], [0, 0, 1, 1], [], []>} : vector<2x32xf32>, vector<32x32xf32>, vector<2x32xf32> -> vector<2x32xf32>
    %323 = arith.addf %321, %322 : vector<2x32xf32>
    %324 = math.tanh %323 : vector<2x32xf32>
    %325 = arith.index_cast %297 : i32 to index
    %c0_238 = arith.constant 0 : index
    %326 = vector.load %arg22[%325, %c0_238] : memref<16x32xf32, #tpu.memory_space<vmem>>, vector<2x32xf32>
    %cst_239 = arith.constant dense<0.000000e+00> : vector<2x32xf32>
    %327 = tpu.matmul %296, %250, %cst_239 {dimension_numbers = #tpu.dot_dimension_numbers<[1], [0], [0], [1], [0, 0, 1, 1], [], []>} : vector<2x32xf32>, vector<32x32xf32>, vector<2x32xf32> -> vector<2x32xf32>
    %328 = arith.addf %326, %327 : vector<2x32xf32>
    %cst_240 = arith.constant 0.000000e+00 : f32
    %329 = vector.broadcast %cst_240 : f32 to vector<2x32xf32>
    %330 = arith.subf %329, %328 : vector<2x32xf32>
    %331 = math.exp %330 : vector<2x32xf32>
    %cst_241 = arith.constant 1.000000e+00 : f32
    %332 = vector.broadcast %cst_241 : f32 to vector<2x32xf32>
    %333 = arith.addf %332, %331 : vector<2x32xf32>
    %cst_242 = arith.constant 1.000000e+00 : f32
    %334 = vector.broadcast %cst_242 : f32 to vector<2x32xf32>
    %335 = arith.divf %334, %333 : vector<2x32xf32>
    %336 = arith.mulf %319, %294 : vector<2x32xf32>
    %337 = arith.mulf %308, %324 : vector<2x32xf32>
    %338 = arith.addf %336, %337 : vector<2x32xf32>
    %339 = math.tanh %338 : vector<2x32xf32>
    %340 = arith.mulf %335, %339 : vector<2x32xf32>
    %c2_i32_243 = arith.constant 2 : i32
    %c2_i32_244 = arith.constant 2 : i32
    %341 = arith.muli %c2_i32_243, %c2_i32_244 : i32
    %342 = arith.index_cast %341 : i32 to index
    %c0_245 = arith.constant 0 : index
    %343 = vector.load %arg19[%342, %c0_245] : memref<16x32xf32, #tpu.memory_space<vmem>>, vector<2x32xf32>
    %cst_246 = arith.constant dense<0.000000e+00> : vector<2x32xf32>
    %344 = tpu.matmul %340, %244, %cst_246 {dimension_numbers = #tpu.dot_dimension_numbers<[1], [0], [0], [1], [0, 0, 1, 1], [], []>} : vector<2x32xf32>, vector<32x32xf32>, vector<2x32xf32> -> vector<2x32xf32>
    %345 = arith.addf %343, %344 : vector<2x32xf32>
    %cst_247 = arith.constant 0.000000e+00 : f32
    %346 = vector.broadcast %cst_247 : f32 to vector<2x32xf32>
    %347 = arith.subf %346, %345 : vector<2x32xf32>
    %348 = math.exp %347 : vector<2x32xf32>
    %cst_248 = arith.constant 1.000000e+00 : f32
    %349 = vector.broadcast %cst_248 : f32 to vector<2x32xf32>
    %350 = arith.addf %349, %348 : vector<2x32xf32>
    %cst_249 = arith.constant 1.000000e+00 : f32
    %351 = vector.broadcast %cst_249 : f32 to vector<2x32xf32>
    %352 = arith.divf %351, %350 : vector<2x32xf32>
    %353 = arith.index_cast %341 : i32 to index
    %c0_250 = arith.constant 0 : index
    %354 = vector.load %arg20[%353, %c0_250] : memref<16x32xf32, #tpu.memory_space<vmem>>, vector<2x32xf32>
    %cst_251 = arith.constant dense<0.000000e+00> : vector<2x32xf32>
    %355 = tpu.matmul %340, %246, %cst_251 {dimension_numbers = #tpu.dot_dimension_numbers<[1], [0], [0], [1], [0, 0, 1, 1], [], []>} : vector<2x32xf32>, vector<32x32xf32>, vector<2x32xf32> -> vector<2x32xf32>
    %356 = arith.addf %354, %355 : vector<2x32xf32>
    %cst_252 = arith.constant 0.000000e+00 : f32
    %357 = vector.broadcast %cst_252 : f32 to vector<2x32xf32>
    %358 = arith.subf %357, %356 : vector<2x32xf32>
    %359 = math.exp %358 : vector<2x32xf32>
    %cst_253 = arith.constant 1.000000e+00 : f32
    %360 = vector.broadcast %cst_253 : f32 to vector<2x32xf32>
    %361 = arith.addf %360, %359 : vector<2x32xf32>
    %cst_254 = arith.constant 1.000000e+00 : f32
    %362 = vector.broadcast %cst_254 : f32 to vector<2x32xf32>
    %363 = arith.divf %362, %361 : vector<2x32xf32>
    %364 = arith.index_cast %341 : i32 to index
    %c0_255 = arith.constant 0 : index
    %365 = vector.load %arg21[%364, %c0_255] : memref<16x32xf32, #tpu.memory_space<vmem>>, vector<2x32xf32>
    %cst_256 = arith.constant dense<0.000000e+00> : vector<2x32xf32>
    %366 = tpu.matmul %340, %248, %cst_256 {dimension_numbers = #tpu.dot_dimension_numbers<[1], [0], [0], [1], [0, 0, 1, 1], [], []>} : vector<2x32xf32>, vector<32x32xf32>, vector<2x32xf32> -> vector<2x32xf32>
    %367 = arith.addf %365, %366 : vector<2x32xf32>
    %368 = math.tanh %367 : vector<2x32xf32>
    %369 = arith.index_cast %341 : i32 to index
    %c0_257 = arith.constant 0 : index
    %370 = vector.load %arg22[%369, %c0_257] : memref<16x32xf32, #tpu.memory_space<vmem>>, vector<2x32xf32>
    %cst_258 = arith.constant dense<0.000000e+00> : vector<2x32xf32>
    %371 = tpu.matmul %340, %250, %cst_258 {dimension_numbers = #tpu.dot_dimension_numbers<[1], [0], [0], [1], [0, 0, 1, 1], [], []>} : vector<2x32xf32>, vector<32x32xf32>, vector<2x32xf32> -> vector<2x32xf32>
    %372 = arith.addf %370, %371 : vector<2x32xf32>
    %cst_259 = arith.constant 0.000000e+00 : f32
    %373 = vector.broadcast %cst_259 : f32 to vector<2x32xf32>
    %374 = arith.subf %373, %372 : vector<2x32xf32>
    %375 = math.exp %374 : vector<2x32xf32>
    %cst_260 = arith.constant 1.000000e+00 : f32
    %376 = vector.broadcast %cst_260 : f32 to vector<2x32xf32>
    %377 = arith.addf %376, %375 : vector<2x32xf32>
    %cst_261 = arith.constant 1.000000e+00 : f32
    %378 = vector.broadcast %cst_261 : f32 to vector<2x32xf32>
    %379 = arith.divf %378, %377 : vector<2x32xf32>
    %380 = arith.mulf %363, %338 : vector<2x32xf32>
    %381 = arith.mulf %352, %368 : vector<2x32xf32>
    %382 = arith.addf %380, %381 : vector<2x32xf32>
    %383 = math.tanh %382 : vector<2x32xf32>
    %384 = arith.mulf %379, %383 : vector<2x32xf32>
    %c3_i32 = arith.constant 3 : i32
    %c2_i32_262 = arith.constant 2 : i32
    %385 = arith.muli %c3_i32, %c2_i32_262 : i32
    %386 = arith.index_cast %385 : i32 to index
    %c0_263 = arith.constant 0 : index
    %387 = vector.load %arg19[%386, %c0_263] : memref<16x32xf32, #tpu.memory_space<vmem>>, vector<2x32xf32>
    %cst_264 = arith.constant dense<0.000000e+00> : vector<2x32xf32>
    %388 = tpu.matmul %384, %244, %cst_264 {dimension_numbers = #tpu.dot_dimension_numbers<[1], [0], [0], [1], [0, 0, 1, 1], [], []>} : vector<2x32xf32>, vector<32x32xf32>, vector<2x32xf32> -> vector<2x32xf32>
    %389 = arith.addf %387, %388 : vector<2x32xf32>
    %cst_265 = arith.constant 0.000000e+00 : f32
    %390 = vector.broadcast %cst_265 : f32 to vector<2x32xf32>
    %391 = arith.subf %390, %389 : vector<2x32xf32>
    %392 = math.exp %391 : vector<2x32xf32>
    %cst_266 = arith.constant 1.000000e+00 : f32
    %393 = vector.broadcast %cst_266 : f32 to vector<2x32xf32>
    %394 = arith.addf %393, %392 : vector<2x32xf32>
    %cst_267 = arith.constant 1.000000e+00 : f32
    %395 = vector.broadcast %cst_267 : f32 to vector<2x32xf32>
    %396 = arith.divf %395, %394 : vector<2x32xf32>
    %397 = arith.index_cast %385 : i32 to index
    %c0_268 = arith.constant 0 : index
    %398 = vector.load %arg20[%397, %c0_268] : memref<16x32xf32, #tpu.memory_space<vmem>>, vector<2x32xf32>
    %cst_269 = arith.constant dense<0.000000e+00> : vector<2x32xf32>
    %399 = tpu.matmul %384, %246, %cst_269 {dimension_numbers = #tpu.dot_dimension_numbers<[1], [0], [0], [1], [0, 0, 1, 1], [], []>} : vector<2x32xf32>, vector<32x32xf32>, vector<2x32xf32> -> vector<2x32xf32>
    %400 = arith.addf %398, %399 : vector<2x32xf32>
    %cst_270 = arith.constant 0.000000e+00 : f32
    %401 = vector.broadcast %cst_270 : f32 to vector<2x32xf32>
    %402 = arith.subf %401, %400 : vector<2x32xf32>
    %403 = math.exp %402 : vector<2x32xf32>
    %cst_271 = arith.constant 1.000000e+00 : f32
    %404 = vector.broadcast %cst_271 : f32 to vector<2x32xf32>
    %405 = arith.addf %404, %403 : vector<2x32xf32>
    %cst_272 = arith.constant 1.000000e+00 : f32
    %406 = vector.broadcast %cst_272 : f32 to vector<2x32xf32>
    %407 = arith.divf %406, %405 : vector<2x32xf32>
    %408 = arith.index_cast %385 : i32 to index
    %c0_273 = arith.constant 0 : index
    %409 = vector.load %arg21[%408, %c0_273] : memref<16x32xf32, #tpu.memory_space<vmem>>, vector<2x32xf32>
    %cst_274 = arith.constant dense<0.000000e+00> : vector<2x32xf32>
    %410 = tpu.matmul %384, %248, %cst_274 {dimension_numbers = #tpu.dot_dimension_numbers<[1], [0], [0], [1], [0, 0, 1, 1], [], []>} : vector<2x32xf32>, vector<32x32xf32>, vector<2x32xf32> -> vector<2x32xf32>
    %411 = arith.addf %409, %410 : vector<2x32xf32>
    %412 = math.tanh %411 : vector<2x32xf32>
    %413 = arith.index_cast %385 : i32 to index
    %c0_275 = arith.constant 0 : index
    %414 = vector.load %arg22[%413, %c0_275] : memref<16x32xf32, #tpu.memory_space<vmem>>, vector<2x32xf32>
    %cst_276 = arith.constant dense<0.000000e+00> : vector<2x32xf32>
    %415 = tpu.matmul %384, %250, %cst_276 {dimension_numbers = #tpu.dot_dimension_numbers<[1], [0], [0], [1], [0, 0, 1, 1], [], []>} : vector<2x32xf32>, vector<32x32xf32>, vector<2x32xf32> -> vector<2x32xf32>
    %416 = arith.addf %414, %415 : vector<2x32xf32>
    %cst_277 = arith.constant 0.000000e+00 : f32
    %417 = vector.broadcast %cst_277 : f32 to vector<2x32xf32>
    %418 = arith.subf %417, %416 : vector<2x32xf32>
    %419 = math.exp %418 : vector<2x32xf32>
    %cst_278 = arith.constant 1.000000e+00 : f32
    %420 = vector.broadcast %cst_278 : f32 to vector<2x32xf32>
    %421 = arith.addf %420, %419 : vector<2x32xf32>
    %cst_279 = arith.constant 1.000000e+00 : f32
    %422 = vector.broadcast %cst_279 : f32 to vector<2x32xf32>
    %423 = arith.divf %422, %421 : vector<2x32xf32>
    %424 = arith.mulf %407, %382 : vector<2x32xf32>
    %425 = arith.mulf %396, %412 : vector<2x32xf32>
    %426 = arith.addf %424, %425 : vector<2x32xf32>
    %427 = math.tanh %426 : vector<2x32xf32>
    %428 = arith.mulf %423, %427 : vector<2x32xf32>
    %c4_i32 = arith.constant 4 : i32
    %c2_i32_280 = arith.constant 2 : i32
    %429 = arith.muli %c4_i32, %c2_i32_280 : i32
    %430 = arith.index_cast %429 : i32 to index
    %c0_281 = arith.constant 0 : index
    %431 = vector.load %arg19[%430, %c0_281] : memref<16x32xf32, #tpu.memory_space<vmem>>, vector<2x32xf32>
    %cst_282 = arith.constant dense<0.000000e+00> : vector<2x32xf32>
    %432 = tpu.matmul %428, %244, %cst_282 {dimension_numbers = #tpu.dot_dimension_numbers<[1], [0], [0], [1], [0, 0, 1, 1], [], []>} : vector<2x32xf32>, vector<32x32xf32>, vector<2x32xf32> -> vector<2x32xf32>
    %433 = arith.addf %431, %432 : vector<2x32xf32>
    %cst_283 = arith.constant 0.000000e+00 : f32
    %434 = vector.broadcast %cst_283 : f32 to vector<2x32xf32>
    %435 = arith.subf %434, %433 : vector<2x32xf32>
    %436 = math.exp %435 : vector<2x32xf32>
    %cst_284 = arith.constant 1.000000e+00 : f32
    %437 = vector.broadcast %cst_284 : f32 to vector<2x32xf32>
    %438 = arith.addf %437, %436 : vector<2x32xf32>
    %cst_285 = arith.constant 1.000000e+00 : f32
    %439 = vector.broadcast %cst_285 : f32 to vector<2x32xf32>
    %440 = arith.divf %439, %438 : vector<2x32xf32>
    %441 = arith.index_cast %429 : i32 to index
    %c0_286 = arith.constant 0 : index
    %442 = vector.load %arg20[%441, %c0_286] : memref<16x32xf32, #tpu.memory_space<vmem>>, vector<2x32xf32>
    %cst_287 = arith.constant dense<0.000000e+00> : vector<2x32xf32>
    %443 = tpu.matmul %428, %246, %cst_287 {dimension_numbers = #tpu.dot_dimension_numbers<[1], [0], [0], [1], [0, 0, 1, 1], [], []>} : vector<2x32xf32>, vector<32x32xf32>, vector<2x32xf32> -> vector<2x32xf32>
    %444 = arith.addf %442, %443 : vector<2x32xf32>
    %cst_288 = arith.constant 0.000000e+00 : f32
    %445 = vector.broadcast %cst_288 : f32 to vector<2x32xf32>
    %446 = arith.subf %445, %444 : vector<2x32xf32>
    %447 = math.exp %446 : vector<2x32xf32>
    %cst_289 = arith.constant 1.000000e+00 : f32
    %448 = vector.broadcast %cst_289 : f32 to vector<2x32xf32>
    %449 = arith.addf %448, %447 : vector<2x32xf32>
    %cst_290 = arith.constant 1.000000e+00 : f32
    %450 = vector.broadcast %cst_290 : f32 to vector<2x32xf32>
    %451 = arith.divf %450, %449 : vector<2x32xf32>
    %452 = arith.index_cast %429 : i32 to index
    %c0_291 = arith.constant 0 : index
    %453 = vector.load %arg21[%452, %c0_291] : memref<16x32xf32, #tpu.memory_space<vmem>>, vector<2x32xf32>
    %cst_292 = arith.constant dense<0.000000e+00> : vector<2x32xf32>
    %454 = tpu.matmul %428, %248, %cst_292 {dimension_numbers = #tpu.dot_dimension_numbers<[1], [0], [0], [1], [0, 0, 1, 1], [], []>} : vector<2x32xf32>, vector<32x32xf32>, vector<2x32xf32> -> vector<2x32xf32>
    %455 = arith.addf %453, %454 : vector<2x32xf32>
    %456 = math.tanh %455 : vector<2x32xf32>
    %457 = arith.index_cast %429 : i32 to index
    %c0_293 = arith.constant 0 : index
    %458 = vector.load %arg22[%457, %c0_293] : memref<16x32xf32, #tpu.memory_space<vmem>>, vector<2x32xf32>
    %cst_294 = arith.constant dense<0.000000e+00> : vector<2x32xf32>
    %459 = tpu.matmul %428, %250, %cst_294 {dimension_numbers = #tpu.dot_dimension_numbers<[1], [0], [0], [1], [0, 0, 1, 1], [], []>} : vector<2x32xf32>, vector<32x32xf32>, vector<2x32xf32> -> vector<2x32xf32>
    %460 = arith.addf %458, %459 : vector<2x32xf32>
    %cst_295 = arith.constant 0.000000e+00 : f32
    %461 = vector.broadcast %cst_295 : f32 to vector<2x32xf32>
    %462 = arith.subf %461, %460 : vector<2x32xf32>
    %463 = math.exp %462 : vector<2x32xf32>
    %cst_296 = arith.constant 1.000000e+00 : f32
    %464 = vector.broadcast %cst_296 : f32 to vector<2x32xf32>
    %465 = arith.addf %464, %463 : vector<2x32xf32>
    %cst_297 = arith.constant 1.000000e+00 : f32
    %466 = vector.broadcast %cst_297 : f32 to vector<2x32xf32>
    %467 = arith.divf %466, %465 : vector<2x32xf32>
    %468 = arith.mulf %451, %426 : vector<2x32xf32>
    %469 = arith.mulf %440, %456 : vector<2x32xf32>
    %470 = arith.addf %468, %469 : vector<2x32xf32>
    %471 = math.tanh %470 : vector<2x32xf32>
    %472 = arith.mulf %467, %471 : vector<2x32xf32>
    %c5_i32 = arith.constant 5 : i32
    %c2_i32_298 = arith.constant 2 : i32
    %473 = arith.muli %c5_i32, %c2_i32_298 : i32
    %474 = arith.index_cast %473 : i32 to index
    %c0_299 = arith.constant 0 : index
    %475 = vector.load %arg19[%474, %c0_299] : memref<16x32xf32, #tpu.memory_space<vmem>>, vector<2x32xf32>
    %cst_300 = arith.constant dense<0.000000e+00> : vector<2x32xf32>
    %476 = tpu.matmul %472, %244, %cst_300 {dimension_numbers = #tpu.dot_dimension_numbers<[1], [0], [0], [1], [0, 0, 1, 1], [], []>} : vector<2x32xf32>, vector<32x32xf32>, vector<2x32xf32> -> vector<2x32xf32>
    %477 = arith.addf %475, %476 : vector<2x32xf32>
    %cst_301 = arith.constant 0.000000e+00 : f32
    %478 = vector.broadcast %cst_301 : f32 to vector<2x32xf32>
    %479 = arith.subf %478, %477 : vector<2x32xf32>
    %480 = math.exp %479 : vector<2x32xf32>
    %cst_302 = arith.constant 1.000000e+00 : f32
    %481 = vector.broadcast %cst_302 : f32 to vector<2x32xf32>
    %482 = arith.addf %481, %480 : vector<2x32xf32>
    %cst_303 = arith.constant 1.000000e+00 : f32
    %483 = vector.broadcast %cst_303 : f32 to vector<2x32xf32>
    %484 = arith.divf %483, %482 : vector<2x32xf32>
    %485 = arith.index_cast %473 : i32 to index
    %c0_304 = arith.constant 0 : index
    %486 = vector.load %arg20[%485, %c0_304] : memref<16x32xf32, #tpu.memory_space<vmem>>, vector<2x32xf32>
    %cst_305 = arith.constant dense<0.000000e+00> : vector<2x32xf32>
    %487 = tpu.matmul %472, %246, %cst_305 {dimension_numbers = #tpu.dot_dimension_numbers<[1], [0], [0], [1], [0, 0, 1, 1], [], []>} : vector<2x32xf32>, vector<32x32xf32>, vector<2x32xf32> -> vector<2x32xf32>
    %488 = arith.addf %486, %487 : vector<2x32xf32>
    %cst_306 = arith.constant 0.000000e+00 : f32
    %489 = vector.broadcast %cst_306 : f32 to vector<2x32xf32>
    %490 = arith.subf %489, %488 : vector<2x32xf32>
    %491 = math.exp %490 : vector<2x32xf32>
    %cst_307 = arith.constant 1.000000e+00 : f32
    %492 = vector.broadcast %cst_307 : f32 to vector<2x32xf32>
    %493 = arith.addf %492, %491 : vector<2x32xf32>
    %cst_308 = arith.constant 1.000000e+00 : f32
    %494 = vector.broadcast %cst_308 : f32 to vector<2x32xf32>
    %495 = arith.divf %494, %493 : vector<2x32xf32>
    %496 = arith.index_cast %473 : i32 to index
    %c0_309 = arith.constant 0 : index
    %497 = vector.load %arg21[%496, %c0_309] : memref<16x32xf32, #tpu.memory_space<vmem>>, vector<2x32xf32>
    %cst_310 = arith.constant dense<0.000000e+00> : vector<2x32xf32>
    %498 = tpu.matmul %472, %248, %cst_310 {dimension_numbers = #tpu.dot_dimension_numbers<[1], [0], [0], [1], [0, 0, 1, 1], [], []>} : vector<2x32xf32>, vector<32x32xf32>, vector<2x32xf32> -> vector<2x32xf32>
    %499 = arith.addf %497, %498 : vector<2x32xf32>
    %500 = math.tanh %499 : vector<2x32xf32>
    %501 = arith.index_cast %473 : i32 to index
    %c0_311 = arith.constant 0 : index
    %502 = vector.load %arg22[%501, %c0_311] : memref<16x32xf32, #tpu.memory_space<vmem>>, vector<2x32xf32>
    %cst_312 = arith.constant dense<0.000000e+00> : vector<2x32xf32>
    %503 = tpu.matmul %472, %250, %cst_312 {dimension_numbers = #tpu.dot_dimension_numbers<[1], [0], [0], [1], [0, 0, 1, 1], [], []>} : vector<2x32xf32>, vector<32x32xf32>, vector<2x32xf32> -> vector<2x32xf32>
    %504 = arith.addf %502, %503 : vector<2x32xf32>
    %cst_313 = arith.constant 0.000000e+00 : f32
    %505 = vector.broadcast %cst_313 : f32 to vector<2x32xf32>
    %506 = arith.subf %505, %504 : vector<2x32xf32>
    %507 = math.exp %506 : vector<2x32xf32>
    %cst_314 = arith.constant 1.000000e+00 : f32
    %508 = vector.broadcast %cst_314 : f32 to vector<2x32xf32>
    %509 = arith.addf %508, %507 : vector<2x32xf32>
    %cst_315 = arith.constant 1.000000e+00 : f32
    %510 = vector.broadcast %cst_315 : f32 to vector<2x32xf32>
    %511 = arith.divf %510, %509 : vector<2x32xf32>
    %512 = arith.mulf %495, %470 : vector<2x32xf32>
    %513 = arith.mulf %484, %500 : vector<2x32xf32>
    %514 = arith.addf %512, %513 : vector<2x32xf32>
    %515 = math.tanh %514 : vector<2x32xf32>
    %516 = arith.mulf %511, %515 : vector<2x32xf32>
    %c6_i32 = arith.constant 6 : i32
    %c2_i32_316 = arith.constant 2 : i32
    %517 = arith.muli %c6_i32, %c2_i32_316 : i32
    %518 = arith.index_cast %517 : i32 to index
    %c0_317 = arith.constant 0 : index
    %519 = vector.load %arg19[%518, %c0_317] : memref<16x32xf32, #tpu.memory_space<vmem>>, vector<2x32xf32>
    %cst_318 = arith.constant dense<0.000000e+00> : vector<2x32xf32>
    %520 = tpu.matmul %516, %244, %cst_318 {dimension_numbers = #tpu.dot_dimension_numbers<[1], [0], [0], [1], [0, 0, 1, 1], [], []>} : vector<2x32xf32>, vector<32x32xf32>, vector<2x32xf32> -> vector<2x32xf32>
    %521 = arith.addf %519, %520 : vector<2x32xf32>
    %cst_319 = arith.constant 0.000000e+00 : f32
    %522 = vector.broadcast %cst_319 : f32 to vector<2x32xf32>
    %523 = arith.subf %522, %521 : vector<2x32xf32>
    %524 = math.exp %523 : vector<2x32xf32>
    %cst_320 = arith.constant 1.000000e+00 : f32
    %525 = vector.broadcast %cst_320 : f32 to vector<2x32xf32>
    %526 = arith.addf %525, %524 : vector<2x32xf32>
    %cst_321 = arith.constant 1.000000e+00 : f32
    %527 = vector.broadcast %cst_321 : f32 to vector<2x32xf32>
    %528 = arith.divf %527, %526 : vector<2x32xf32>
    %529 = arith.index_cast %517 : i32 to index
    %c0_322 = arith.constant 0 : index
    %530 = vector.load %arg20[%529, %c0_322] : memref<16x32xf32, #tpu.memory_space<vmem>>, vector<2x32xf32>
    %cst_323 = arith.constant dense<0.000000e+00> : vector<2x32xf32>
    %531 = tpu.matmul %516, %246, %cst_323 {dimension_numbers = #tpu.dot_dimension_numbers<[1], [0], [0], [1], [0, 0, 1, 1], [], []>} : vector<2x32xf32>, vector<32x32xf32>, vector<2x32xf32> -> vector<2x32xf32>
    %532 = arith.addf %530, %531 : vector<2x32xf32>
    %cst_324 = arith.constant 0.000000e+00 : f32
    %533 = vector.broadcast %cst_324 : f32 to vector<2x32xf32>
    %534 = arith.subf %533, %532 : vector<2x32xf32>
    %535 = math.exp %534 : vector<2x32xf32>
    %cst_325 = arith.constant 1.000000e+00 : f32
    %536 = vector.broadcast %cst_325 : f32 to vector<2x32xf32>
    %537 = arith.addf %536, %535 : vector<2x32xf32>
    %cst_326 = arith.constant 1.000000e+00 : f32
    %538 = vector.broadcast %cst_326 : f32 to vector<2x32xf32>
    %539 = arith.divf %538, %537 : vector<2x32xf32>
    %540 = arith.index_cast %517 : i32 to index
    %c0_327 = arith.constant 0 : index
    %541 = vector.load %arg21[%540, %c0_327] : memref<16x32xf32, #tpu.memory_space<vmem>>, vector<2x32xf32>
    %cst_328 = arith.constant dense<0.000000e+00> : vector<2x32xf32>
    %542 = tpu.matmul %516, %248, %cst_328 {dimension_numbers = #tpu.dot_dimension_numbers<[1], [0], [0], [1], [0, 0, 1, 1], [], []>} : vector<2x32xf32>, vector<32x32xf32>, vector<2x32xf32> -> vector<2x32xf32>
    %543 = arith.addf %541, %542 : vector<2x32xf32>
    %544 = math.tanh %543 : vector<2x32xf32>
    %545 = arith.index_cast %517 : i32 to index
    %c0_329 = arith.constant 0 : index
    %546 = vector.load %arg22[%545, %c0_329] : memref<16x32xf32, #tpu.memory_space<vmem>>, vector<2x32xf32>
    %cst_330 = arith.constant dense<0.000000e+00> : vector<2x32xf32>
    %547 = tpu.matmul %516, %250, %cst_330 {dimension_numbers = #tpu.dot_dimension_numbers<[1], [0], [0], [1], [0, 0, 1, 1], [], []>} : vector<2x32xf32>, vector<32x32xf32>, vector<2x32xf32> -> vector<2x32xf32>
    %548 = arith.addf %546, %547 : vector<2x32xf32>
    %cst_331 = arith.constant 0.000000e+00 : f32
    %549 = vector.broadcast %cst_331 : f32 to vector<2x32xf32>
    %550 = arith.subf %549, %548 : vector<2x32xf32>
    %551 = math.exp %550 : vector<2x32xf32>
    %cst_332 = arith.constant 1.000000e+00 : f32
    %552 = vector.broadcast %cst_332 : f32 to vector<2x32xf32>
    %553 = arith.addf %552, %551 : vector<2x32xf32>
    %cst_333 = arith.constant 1.000000e+00 : f32
    %554 = vector.broadcast %cst_333 : f32 to vector<2x32xf32>
    %555 = arith.divf %554, %553 : vector<2x32xf32>
    %556 = arith.mulf %539, %514 : vector<2x32xf32>
    %557 = arith.mulf %528, %544 : vector<2x32xf32>
    %558 = arith.addf %556, %557 : vector<2x32xf32>
    %559 = math.tanh %558 : vector<2x32xf32>
    %560 = arith.mulf %555, %559 : vector<2x32xf32>
    %c7_i32 = arith.constant 7 : i32
    %c2_i32_334 = arith.constant 2 : i32
    %561 = arith.muli %c7_i32, %c2_i32_334 : i32
    %562 = arith.index_cast %561 : i32 to index
    %c0_335 = arith.constant 0 : index
    %563 = vector.load %arg19[%562, %c0_335] : memref<16x32xf32, #tpu.memory_space<vmem>>, vector<2x32xf32>
    %cst_336 = arith.constant dense<0.000000e+00> : vector<2x32xf32>
    %564 = tpu.matmul %560, %244, %cst_336 {dimension_numbers = #tpu.dot_dimension_numbers<[1], [0], [0], [1], [0, 0, 1, 1], [], []>} : vector<2x32xf32>, vector<32x32xf32>, vector<2x32xf32> -> vector<2x32xf32>
    %565 = arith.addf %563, %564 : vector<2x32xf32>
    %cst_337 = arith.constant 0.000000e+00 : f32
    %566 = vector.broadcast %cst_337 : f32 to vector<2x32xf32>
    %567 = arith.subf %566, %565 : vector<2x32xf32>
    %568 = math.exp %567 : vector<2x32xf32>
    %cst_338 = arith.constant 1.000000e+00 : f32
    %569 = vector.broadcast %cst_338 : f32 to vector<2x32xf32>
    %570 = arith.addf %569, %568 : vector<2x32xf32>
    %cst_339 = arith.constant 1.000000e+00 : f32
    %571 = vector.broadcast %cst_339 : f32 to vector<2x32xf32>
    %572 = arith.divf %571, %570 : vector<2x32xf32>
    %573 = arith.index_cast %561 : i32 to index
    %c0_340 = arith.constant 0 : index
    %574 = vector.load %arg20[%573, %c0_340] : memref<16x32xf32, #tpu.memory_space<vmem>>, vector<2x32xf32>
    %cst_341 = arith.constant dense<0.000000e+00> : vector<2x32xf32>
    %575 = tpu.matmul %560, %246, %cst_341 {dimension_numbers = #tpu.dot_dimension_numbers<[1], [0], [0], [1], [0, 0, 1, 1], [], []>} : vector<2x32xf32>, vector<32x32xf32>, vector<2x32xf32> -> vector<2x32xf32>
    %576 = arith.addf %574, %575 : vector<2x32xf32>
    %cst_342 = arith.constant 0.000000e+00 : f32
    %577 = vector.broadcast %cst_342 : f32 to vector<2x32xf32>
    %578 = arith.subf %577, %576 : vector<2x32xf32>
    %579 = math.exp %578 : vector<2x32xf32>
    %cst_343 = arith.constant 1.000000e+00 : f32
    %580 = vector.broadcast %cst_343 : f32 to vector<2x32xf32>
    %581 = arith.addf %580, %579 : vector<2x32xf32>
    %cst_344 = arith.constant 1.000000e+00 : f32
    %582 = vector.broadcast %cst_344 : f32 to vector<2x32xf32>
    %583 = arith.divf %582, %581 : vector<2x32xf32>
    %584 = arith.index_cast %561 : i32 to index
    %c0_345 = arith.constant 0 : index
    %585 = vector.load %arg21[%584, %c0_345] : memref<16x32xf32, #tpu.memory_space<vmem>>, vector<2x32xf32>
    %cst_346 = arith.constant dense<0.000000e+00> : vector<2x32xf32>
    %586 = tpu.matmul %560, %248, %cst_346 {dimension_numbers = #tpu.dot_dimension_numbers<[1], [0], [0], [1], [0, 0, 1, 1], [], []>} : vector<2x32xf32>, vector<32x32xf32>, vector<2x32xf32> -> vector<2x32xf32>
    %587 = arith.addf %585, %586 : vector<2x32xf32>
    %588 = math.tanh %587 : vector<2x32xf32>
    %589 = arith.index_cast %561 : i32 to index
    %c0_347 = arith.constant 0 : index
    %590 = vector.load %arg22[%589, %c0_347] : memref<16x32xf32, #tpu.memory_space<vmem>>, vector<2x32xf32>
    %cst_348 = arith.constant dense<0.000000e+00> : vector<2x32xf32>
    %591 = tpu.matmul %560, %250, %cst_348 {dimension_numbers = #tpu.dot_dimension_numbers<[1], [0], [0], [1], [0, 0, 1, 1], [], []>} : vector<2x32xf32>, vector<32x32xf32>, vector<2x32xf32> -> vector<2x32xf32>
    %592 = arith.addf %590, %591 : vector<2x32xf32>
    %cst_349 = arith.constant 0.000000e+00 : f32
    %593 = vector.broadcast %cst_349 : f32 to vector<2x32xf32>
    %594 = arith.subf %593, %592 : vector<2x32xf32>
    %595 = math.exp %594 : vector<2x32xf32>
    %cst_350 = arith.constant 1.000000e+00 : f32
    %596 = vector.broadcast %cst_350 : f32 to vector<2x32xf32>
    %597 = arith.addf %596, %595 : vector<2x32xf32>
    %cst_351 = arith.constant 1.000000e+00 : f32
    %598 = vector.broadcast %cst_351 : f32 to vector<2x32xf32>
    %599 = arith.divf %598, %597 : vector<2x32xf32>
    %600 = arith.mulf %583, %558 : vector<2x32xf32>
    %601 = arith.mulf %572, %588 : vector<2x32xf32>
    %602 = arith.addf %600, %601 : vector<2x32xf32>
    %603 = math.tanh %602 : vector<2x32xf32>
    %604 = arith.mulf %599, %603 : vector<2x32xf32>
    %c8_i32 = arith.constant 8 : i32
    %c0_352 = arith.constant 0 : index
    %c0_353 = arith.constant 0 : index
    %605 = vector.load %arg16[%c0_352, %c0_353] : memref<32x128xf32, #tpu.memory_space<vmem>>, vector<32x128xf32>
    %cst_354 = arith.constant dense<0.000000e+00> : vector<2x128xf32>
    %606 = tpu.matmul %604, %605, %cst_354 {dimension_numbers = #tpu.dot_dimension_numbers<[1], [0], [0], [1], [0, 0, 1, 1], [], []>} : vector<2x32xf32>, vector<32x128xf32>, vector<2x128xf32> -> vector<2x128xf32>
    %c0_355 = arith.constant 0 : index
    %c0_356 = arith.constant 0 : index
    %607 = vector.load %arg17[%c0_355, %c0_356] : memref<1x128xf32, #tpu.memory_space<vmem>>, vector<1x128xf32>
    %608 = vector.broadcast %607 : vector<1x128xf32> to vector<2x128xf32>
    %609 = arith.addf %606, %608 : vector<2x128xf32>
    %c0_357 = arith.constant 0 : index
    %c0_358 = arith.constant 0 : index
    %610 = vector.load %arg18[%c0_357, %c0_358] : memref<2x128xf32, #tpu.memory_space<vmem>>, vector<2x128xf32>
    tpu.vector_store %arg18[%c0_357, %c0_358], %609 {strides = array<i32>} : memref<2x128xf32, #tpu.memory_space<vmem>>, vector<2x128xf32>,
    return
  }
}

</mosaic_0001>

<llo_original>
// kernel: tpu_custom_call.1
$region0: #{tpu_custom_call.1}
  #allocation0 [shape = 'u32[]', space=smem, size = 0x4, offset = 0x4, fixed_abs, tag = 'smem constant byte address 0x4 - core index']
  #allocation1 [shape = 'u32[144,128]{1,0:T(1,128)}', space=vmem, size = 0x12000, scoped, tag = 'internal scratch']
  #allocation2 [shape = 'f32[16,32]{1,0:T(8,128)}', space=vmem, size = 0x2000, scoped, tag = 'scratch operand']
  #allocation3 [shape = 'f32[16,32]{1,0:T(8,128)}', space=vmem, size = 0x2000, scoped, tag = 'scratch operand']
  #allocation4 [shape = 'f32[16,32]{1,0:T(8,128)}', space=vmem, size = 0x2000, scoped, tag = 'scratch operand']
  #allocation5 [shape = 'f32[16,32]{1,0:T(8,128)}', space=vmem, size = 0x2000, scoped, tag = 'scratch operand']
  %s0 = inlined_call_operand.hbm [shape: bf16[16,12], index: 0, kind: input, shape index: {}]
  %s1 = inlined_call_operand.hbm [shape: bf16[3,16,16], index: 1, kind: input, shape index: {}]
  %s2 = inlined_call_operand.hbm [shape: f32[16,16], index: 2, kind: input, shape index: {}]
  %s3 = inlined_call_operand.hbm [shape: bf16[12,32], index: 3, kind: input, shape index: {}]
  %s4 = inlined_call_operand.vmem [shape: bf16[3,32,32], index: 4, kind: input, shape index: {}]
  %s5 = inlined_call_operand.hbm [shape: f32[3,1,32], index: 5, kind: input, shape index: {}]
  %s6 = inlined_call_operand.vmem [shape: bf16[4,32,8], index: 6, kind: input, shape index: {}]
  %s7 = inlined_call_operand.vmem [shape: bf16[4,32,8], index: 7, kind: input, shape index: {}]
  %s8 = inlined_call_operand.vmem [shape: bf16[4,32,8], index: 8, kind: input, shape index: {}]
  %s9 = inlined_call_operand.hbm [shape: f32[4,1,8], index: 9, kind: input, shape index: {}]
  %s10 = inlined_call_operand.vmem [shape: f32[4,1,8], index: 10, kind: input, shape index: {}]
  %s11 = inlined_call_operand.vmem [shape: f32[4,1,8], index: 11, kind: input, shape index: {}]
  %s12 = inlined_call_operand.hbm [shape: bf16[4,8,32], index: 12, kind: input, shape index: {}]
  %s13 = inlined_call_operand.vmem [shape: bf16[4,32,32], index: 13, kind: input, shape index: {}]
  %s14 = inlined_call_operand.vmem [shape: f32[4,1,32], index: 14, kind: input, shape index: {}]
  %s15 = inlined_call_operand.vmem [shape: f32[4,32,32], index: 15, kind: input, shape index: {}]
  %s16 = inlined_call_operand.vmem [shape: f32[32,128], index: 16, kind: input, shape index: {}]
  %s17 = inlined_call_operand.vmem [shape: f32[1,128], index: 17, kind: input, shape index: {}]
  %s18 = inlined_call_operand.hbm [shape: f32[2,128], index: 18, kind: output, shape index: {}]
  %s19 = sld [smem:[#allocation0]]
  $region110: #{tpu_custom_call.1} parent=0
    _
  %s21 = ssub.s32 1, %s19
  %s22 = scalar_select 0, %s21, %s19
  $region1: #{tpu_custom_call.1} parent=0
    #allocation6 [shape = 'u8[4096]{0}', space=vmem, size = 0x1000, scoped, tag = 'input window, operand 0, single buffered']
    #allocation7 [shape = 's32[1]{0}', space=sflag, size = 0x4, scoped, tag = 'scoped memory for tpu_custom_call.1']
    #allocation8 [shape = 's32[1]{0}', space=sflag, size = 0x4, scoped, tag = 'scoped memory for tpu_custom_call.1']
    #allocation9 [shape = 'u8[12288]{0}', space=vmem, size = 0x3000, scoped, tag = 'input window, operand 1, single buffered']
    #allocation10 [shape = 's32[1]{0}', space=sflag, size = 0x4, scoped, tag = 'scoped memory for tpu_custom_call.1']
    #allocation11 [shape = 'u8[8192]{0}', space=vmem, size = 0x2000, scoped, tag = 'input window, operand 2, single buffered']
    #allocation12 [shape = 'u8[4096]{0}', space=vmem, size = 0x1000, scoped, tag = 'input window, operand 3, single buffered']
    #allocation13 [shape = 's32[1]{0}', space=sflag, size = 0x4, scoped, tag = 'scoped memory for tpu_custom_call.1']
    #allocation14 [shape = 'u8[1536]{0}', space=vmem, size = 0x800, scoped, tag = 'input window, operand 5, single buffered']
    #allocation15 [shape = 'u8[2048]{0}', space=vmem, size = 0x800, scoped, tag = 'input window, operand 9, single buffered']
    #allocation16 [shape = 's32[1]{0}', space=sflag, size = 0x4, scoped, tag = 'scoped memory for tpu_custom_call.1']
    #allocation17 [shape = 'u8[8192]{0}', space=vmem, size = 0x2000, scoped, tag = 'input window, operand 12, single buffered']
    #allocation18 [shape = 'u8[1024]{0}', space=vmem, size = 0x400, scoped, tag = 'output window, operand 0, single buffered']
    %23 = vsyncpa [#allocation7], 0
    %24 = vsyncpa [#allocation10], 0
    %25 = vsyncpa [#allocation13], 0
    %26 = vsyncpa [#allocation16], 0
    %27 = vsyncpa [#allocation8], 0
    // Predicated region
    $region2: #{tpu_custom_call.1} parent=1 // pred_check
      _
    $region3: #{tpu_custom_call.1} parent=1 // pred_check_branch
      %29 = sbr.rel (0) target = $region5
    $region4: #{tpu_custom_call.1} parent=1 // pred_region
      %s31 = ssub.s32 128, 128
      %32 = vsyncadd [#allocation7], %s31
      %s33 = sshll.u32 [#allocation6], 4
      %s34 = int_to_ptr.vmem [resolvable:$true] %s33
      %39 = dma.hbm_to_vmem [thread:$0]  %s0, 128, %s34, [#allocation7], 64, 64, 4
    $region5: #{tpu_custom_call.1} parent=1 // pred_fallthru
      _
    // Predicated region
    $region6: #{tpu_custom_call.1} parent=1 // pred_check
      _
    $region7: #{tpu_custom_call.1} parent=1 // pred_check_branch
      %41 = sbr.rel (0) target = $region9
    $region8: #{tpu_custom_call.1} parent=1 // pred_region
      %s43 = ssub.s32 384, 384
      %44 = vsyncadd [#allocation10], %s43
      %s45 = sshll.u32 [#allocation9], 4
      %s46 = int_to_ptr.vmem [resolvable:$true] %s45
      %51 = dma.hbm_to_vmem [thread:$0]  %s1, 384, %s46, [#allocation10], 64, 64, 4
    $region9: #{tpu_custom_call.1} parent=1 // pred_fallthru
      _
    // Predicated region
    $region10: #{tpu_custom_call.1} parent=1 // pred_check
      _
    $region11: #{tpu_custom_call.1} parent=1 // pred_check_branch
      %53 = sbr.rel (0) target = $region13
    $region12: #{tpu_custom_call.1} parent=1 // pred_region
      %s55 = ssub.s32 256, 256
      %56 = vsyncadd [#allocation10], %s55
      %s57 = sshll.u32 [#allocation11], 4
      %s58 = int_to_ptr.vmem [resolvable:$true] %s57
      %63 = dma.hbm_to_vmem [thread:$0]  %s2, 256, %s58, [#allocation10], 128, 128, 8
    $region13: #{tpu_custom_call.1} parent=1 // pred_fallthru
      _
    // Predicated region
    $region14: #{tpu_custom_call.1} parent=1 // pred_check
      _
    $region15: #{tpu_custom_call.1} parent=1 // pred_check_branch
      %65 = sbr.rel (0) target = $region17
    $region16: #{tpu_custom_call.1} parent=1 // pred_region
      %s67 = ssub.s32 128, 128
      %68 = vsyncadd [#allocation13], %s67
      %s69 = sshll.u32 [#allocation12], 4
      %s70 = int_to_ptr.vmem [resolvable:$true] %s69
      %75 = dma.hbm_to_vmem [thread:$0]  %s3, 128, %s70, [#allocation13], 64, 64, 4
    $region17: #{tpu_custom_call.1} parent=1 // pred_fallthru
      _
    // Predicated region
    $region18: #{tpu_custom_call.1} parent=1 // pred_check
      _
    $region19: #{tpu_custom_call.1} parent=1 // pred_check_branch
      %77 = sbr.rel (0) target = $region21
    $region20: #{tpu_custom_call.1} parent=1 // pred_region
      _
    $region21: #{tpu_custom_call.1} parent=1 // pred_fallthru
      _
    // Predicated region
    $region22: #{tpu_custom_call.1} parent=1 // pred_check
      _
    $region23: #{tpu_custom_call.1} parent=1 // pred_check_branch
      %79 = sbr.rel (0) target = $region25
    $region24: #{tpu_custom_call.1} parent=1 // pred_region
      %s81 = ssub.s32 48, 48
      %82 = vsyncadd [#allocation13], %s81
      %s83 = sshll.u32 [#allocation14], 4
      %s84 = int_to_ptr.vmem [resolvable:$true] %s83
      %89 = dma.hbm_to_vmem [thread:$0]  %s5, 48, %s84, [#allocation13], 16, 16, 1
    $region25: #{tpu_custom_call.1} parent=1 // pred_fallthru
      _
    // Predicated region
    $region26: #{tpu_custom_call.1} parent=1 // pred_check
      _
    $region27: #{tpu_custom_call.1} parent=1 // pred_check_branch
      %91 = sbr.rel (0) target = $region29
    $region28: #{tpu_custom_call.1} parent=1 // pred_region
      _
    $region29: #{tpu_custom_call.1} parent=1 // pred_fallthru
      _
    // Predicated region
    $region30: #{tpu_custom_call.1} parent=1 // pred_check
      _
    $region31: #{tpu_custom_call.1} parent=1 // pred_check_branch
      %93 = sbr.rel (0) target = $region33
    $region32: #{tpu_custom_call.1} parent=1 // pred_region
      _
    $region33: #{tpu_custom_call.1} parent=1 // pred_fallthru
      _
    // Predicated region
    $region34: #{tpu_custom_call.1} parent=1 // pred_check
      _
    $region35: #{tpu_custom_call.1} parent=1 // pred_check_branch
      %95 = sbr.rel (0) target = $region37
    $region36: #{tpu_custom_call.1} parent=1 // pred_region
      _
    $region37: #{tpu_custom_call.1} parent=1 // pred_fallthru
      _
    // Predicated region
    $region38: #{tpu_custom_call.1} parent=1 // pred_check
      _
    $region39: #{tpu_custom_call.1} parent=1 // pred_check_branch
      %97 = sbr.rel (0) target = $region41
    $region40: #{tpu_custom_call.1} parent=1 // pred_region
      %s99 = ssub.s32 64, 64
      %100 = vsyncadd [#allocation16], %s99
      %s101 = sshll.u32 [#allocation15], 4
      %s102 = int_to_ptr.vmem [resolvable:$true] %s101
      %107 = dma.hbm_to_vmem [thread:$0]  %s9, 64, %s102, [#allocation16], 16, 16, 1
    $region41: #{tpu_custom_call.1} parent=1 // pred_fallthru
      _
    // Predicated region
    $region42: #{tpu_custom_call.1} parent=1 // pred_check
      _
    $region43: #{tpu_custom_call.1} parent=1 // pred_check_branch
      %109 = sbr.rel (0) target = $region45
    $region44: #{tpu_custom_call.1} parent=1 // pred_region
      _
    $region45: #{tpu_custom_call.1} parent=1 // pred_fallthru
      _
    // Predicated region
    $region46: #{tpu_custom_call.1} parent=1 // pred_check
      _
    $region47: #{tpu_custom_call.1} parent=1 // pred_check_branch
      %111 = sbr.rel (0) target = $region49
    $region48: #{tpu_custom_call.1} parent=1 // pred_region
      _
    $region49: #{tpu_custom_call.1} parent=1 // pred_fallthru
      _
    // Predicated region
    $region50: #{tpu_custom_call.1} parent=1 // pred_check
      _
    $region51: #{tpu_custom_call.1} parent=1 // pred_check_branch
      %113 = sbr.rel (0) target = $region53
    $region52: #{tpu_custom_call.1} parent=1 // pred_region
      %s115 = ssub.s32 256, 256
      %116 = vsyncadd [#allocation16], %s115
      %s117 = sshll.u32 [#allocation17], 4
      %s118 = int_to_ptr.vmem [resolvable:$true] %s117
      %123 = dma.hbm_to_vmem [thread:$0]  %s12, 256, %s118, [#allocation16], 64, 64, 4
    $region53: #{tpu_custom_call.1} parent=1 // pred_fallthru
      _
    // Predicated region
    $region54: #{tpu_custom_call.1} parent=1 // pred_check
      _
    $region55: #{tpu_custom_call.1} parent=1 // pred_check_branch
      %125 = sbr.rel (0) target = $region57
    $region56: #{tpu_custom_call.1} parent=1 // pred_region
      _
    $region57: #{tpu_custom_call.1} parent=1 // pred_fallthru
      _
    // Predicated region
    $region58: #{tpu_custom_call.1} parent=1 // pred_check
      _
    $region59: #{tpu_custom_call.1} parent=1 // pred_check_branch
      %127 = sbr.rel (0) target = $region61
    $region60: #{tpu_custom_call.1} parent=1 // pred_region
      _
    $region61: #{tpu_custom_call.1} parent=1 // pred_fallthru
      _
    // Predicated region
    $region62: #{tpu_custom_call.1} parent=1 // pred_check
      _
    $region63: #{tpu_custom_call.1} parent=1 // pred_check_branch
      %129 = sbr.rel (0) target = $region65
    $region64: #{tpu_custom_call.1} parent=1 // pred_region
      _
    $region65: #{tpu_custom_call.1} parent=1 // pred_fallthru
      _
    // Predicated region
    $region66: #{tpu_custom_call.1} parent=1 // pred_check
      _
    $region67: #{tpu_custom_call.1} parent=1 // pred_check_branch
      %131 = sbr.rel (0) target = $region69
    $region68: #{tpu_custom_call.1} parent=1 // pred_region
      _
    $region69: #{tpu_custom_call.1} parent=1 // pred_fallthru
      _
    // Predicated region
    $region70: #{tpu_custom_call.1} parent=1 // pred_check
      _
    $region71: #{tpu_custom_call.1} parent=1 // pred_check_branch
      %133 = sbr.rel (0) target = $region73
    $region72: #{tpu_custom_call.1} parent=1 // pred_region
      _
    $region73: #{tpu_custom_call.1} parent=1 // pred_fallthru
      _
    // Predicated region
    $region74: #{tpu_custom_call.1} parent=1 // pred_check
      _
    $region75: #{tpu_custom_call.1} parent=1 // pred_check_branch
      %135 = sbr.rel (0) target = $region77
    $region76: #{tpu_custom_call.1} parent=1 // pred_region
      %136 = dma.done [#allocation7], 128
    $region77: #{tpu_custom_call.1} parent=1 // pred_fallthru
      _
    // Predicated region
    $region78: #{tpu_custom_call.1} parent=1 // pred_check
      _
    $region79: #{tpu_custom_call.1} parent=1 // pred_check_branch
      %138 = sbr.rel (0) target = $region81
    $region80: #{tpu_custom_call.1} parent=1 // pred_region
      %139 = dma.done [#allocation10], 384
    $region81: #{tpu_custom_call.1} parent=1 // pred_fallthru
      _
    // Predicated region
    $region82: #{tpu_custom_call.1} parent=1 // pred_check
      _
    $region83: #{tpu_custom_call.1} parent=1 // pred_check_branch
      %141 = sbr.rel (0) target = $region85
    $region84: #{tpu_custom_call.1} parent=1 // pred_region
      %142 = dma.done [#allocation10], 256
    $region85: #{tpu_custom_call.1} parent=1 // pred_fallthru
      _
    // Predicated region
    $region86: #{tpu_custom_call.1} parent=1 // pred_check
      _
    $region87: #{tpu_custom_call.1} parent=1 // pred_check_branch
      %144 = sbr.rel (0) target = $region89
    $region88: #{tpu_custom_call.1} parent=1 // pred_region
      %145 = dma.done [#allocation13], 128
    $region89: #{tpu_custom_call.1} parent=1 // pred_fallthru
      _
    // Predicated region
    $region90: #{tpu_custom_call.1} parent=1 // pred_check
      _
    $region91: #{tpu_custom_call.1} parent=1 // pred_check_branch
      %147 = sbr.rel (0) target = $region93
    $region92: #{tpu_custom_call.1} parent=1 // pred_region
      %148 = dma.done [#allocation13], 48
    $region93: #{tpu_custom_call.1} parent=1 // pred_fallthru
      _
    // Predicated region
    $region94: #{tpu_custom_call.1} parent=1 // pred_check
      _
    $region95: #{tpu_custom_call.1} parent=1 // pred_check_branch
      %150 = sbr.rel (0) target = $region97
    $region96: #{tpu_custom_call.1} parent=1 // pred_region
      %151 = dma.done [#allocation16], 64
    $region97: #{tpu_custom_call.1} parent=1 // pred_fallthru
      _
    // Predicated region
    $region98: #{tpu_custom_call.1} parent=1 // pred_check
      _
    $region99: #{tpu_custom_call.1} parent=1 // pred_check_branch
      %153 = sbr.rel (0) target = $region101
    $region100: #{tpu_custom_call.1} parent=1 // pred_region
      %154 = dma.done [#allocation16], 256
    $region101: #{tpu_custom_call.1} parent=1 // pred_fallthru
      _
    %v156 = vld [vmem:[#allocation6] sm:$0xf]
    %v157 = vld [vmem:[#allocation6 + $0x4] sm:$0xf]
    %v158 = vld [vmem:[#allocation12] sm:$0xf]
    %v159 = vld [vmem:[#allocation12 + $0x4] sm:$0x3]
    %v160 = vld [vmem:[#allocation14] sm:$0x1]
    %v162 = vlaneseq
    %v163 = vshrl.u32 %v162, 7
    %v164 = vsub.s32 0, %v163
    %v165 = vrot.slane %v160, %v164
    %v169 = vunpack.c.l.b16 %v156
    %v170 = vunpack.c.l.b16 %v157
    %v171 = vpack.c.b16 %v170, %v169
    %v174 = vunpack.c.l.b16 %v158
    %v175 = vunpack.c.l.b16 %v159
    %v176 = vpack.c.b16 %v175, %v174
    %vm177 = vcmask 97280
    %v179 = vsel %vm177, %v171, 0
    %vm181 = vcmask 1045504
    %v183 = vsel %vm181, %v176, 0
    %185 = vmatprep.subr.bf16.mxu0 0
    %186 = vmatpush1.bf16.msra.mxu0 %v183
    %187 = vmatprep.subr.bf16.mxu0 0
    %188 = vmatpush1.bf16.msra.mxu0 0
    %189 = vmatprep.subr.bf16.mxu0 0
    %190 = vmatpush1.bf16.msra.mxu0 0
    %191 = vmatprep.subr.bf16.mxu0 0
    %192 = vmatpush1.bf16.msra.mxu0 0
    %193 = vmatprep.subr.bf16.mxu0 0
    %194 = vmatpush1.bf16.msra.mxu0 0
    %195 = vmatprep.subr.bf16.mxu0 0
    %196 = vmatpush1.bf16.msra.mxu0 0
    %197 = vmatprep.subr.bf16.mxu0 0
    %198 = vmatpush1.bf16.msra.mxu0 0
    %199 = vmatprep.subr.bf16.mxu0 0
    %200 = vmatpush1.bf16.msra.mxu0 0
    %201 = vmatprep.subr.bf16.mxu0 0
    %202 = vmatpush1.bf16.msra.mxu0 0
    %203 = vmatprep.subr.bf16.mxu0 0
    %204 = vmatpush1.bf16.msra.mxu0 0
    %205 = vmatprep.subr.bf16.mxu0 0
    %206 = vmatpush1.bf16.msra.mxu0 0
    %207 = vmatprep.subr.bf16.mxu0 0
    %208 = vmatpush1.bf16.msra.mxu0 0
    %209 = vmatprep.subr.bf16.mxu0 0
    %210 = vmatpush1.bf16.msra.mxu0 0
    %211 = vmatprep.subr.bf16.mxu0 0
    %212 = vmatpush1.bf16.msra.mxu0 0
    %213 = vmatprep.subr.bf16.mxu0 0
    %214 = vmatpush1.bf16.msra.mxu0 0
    %215 = vmatprep.subr.bf16.mxu0 0
    %216 = vmatpush1.bf16.msra.mxu0 0
    %217 = vmatprep.mubr.bf16.mxu0 0
    %218 = vmatmul.mubr.bf16.gmra.mrb[0].mxu0 %v179
    %v219 = vpop.f32.mrb[0].mxu0
    %v220 = vadd.f32 %v165, %v219
    %v221 = vpop.f32.mrb[0].mxu0
    %v222 = vpop.f32.mrb[0].mxu0
    %v223 = vadd.f32 %v165, %v222
    %v224 = vpop.f32.mrb[0].mxu0
    %225 = vdwg.mxu0
    %v226 = vmax.f32 %v220, 0.0
    %v227 = vmax.f32 %v223, 0.0
    %v228 = vpack.c.bf16 %v227, %v226
    %v229 = vld [vmem:[#allocation9] sm:$0xf]
    %v230 = vld [vmem:[#allocation9 + $0x4] sm:$0xf]
    %v233 = vunpack.c.l.b16 %v229
    %v234 = vunpack.c.l.b16 %v230
    %v235 = vpack.c.b16 %v234, %v233
    %vm236 = vcmask 130048
    %v238 = vsel %vm236, %v235, 0
    %240 = vmatprep.subr.bf16.mxu0 0
    %241 = vmatpush1.bf16.msra.mxu0 %v228
    %242 = vmatprep.subr.bf16.mxu0 0
    %243 = vmatpush1.bf16.msra.mxu0 0
    %244 = vmatprep.subr.bf16.mxu0 0
    %245 = vmatpush1.bf16.msra.mxu0 0
    %246 = vmatprep.subr.bf16.mxu0 0
    %247 = vmatpush1.bf16.msra.mxu0 0
    %248 = vmatprep.subr.bf16.mxu0 0
    %249 = vmatpush1.bf16.msra.mxu0 0
    %250 = vmatprep.subr.bf16.mxu0 0
    %251 = vmatpush1.bf16.msra.mxu0 0
    %252 = vmatprep.subr.bf16.mxu0 0
    %253 = vmatpush1.bf16.msra.mxu0 0
    %254 = vmatprep.subr.bf16.mxu0 0
    %255 = vmatpush1.bf16.msra.mxu0 0
    %256 = vmatprep.subr.bf16.mxu0 0
    %257 = vmatpush1.bf16.msra.mxu0 0
    %258 = vmatprep.subr.bf16.mxu0 0
    %259 = vmatpush1.bf16.msra.mxu0 0
    %260 = vmatprep.subr.bf16.mxu0 0
    %261 = vmatpush1.bf16.msra.mxu0 0
    %262 = vmatprep.subr.bf16.mxu0 0
    %263 = vmatpush1.bf16.msra.mxu0 0
    %264 = vmatprep.subr.bf16.mxu0 0
    %265 = vmatpush1.bf16.msra.mxu0 0
    %266 = vmatprep.subr.bf16.mxu0 0
    %267 = vmatpush1.bf16.msra.mxu0 0
    %268 = vmatprep.subr.bf16.mxu0 0
    %269 = vmatpush1.bf16.msra.mxu0 0
    %270 = vmatprep.subr.bf16.mxu0 0
    %271 = vmatpush1.bf16.msra.mxu0 0
    %272 = vmatprep.mubr.bf16.mxu0 0
    %273 = vmatmul.mubr.bf16.gmra.mrb[0].mxu0 %v238
    %v274 = vpop.f32.mrb[0].mxu0
    %v275 = vadd.f32 0.0, %v274
    %v276 = vpop.f32.mrb[0].mxu0
    %v277 = vpop.f32.mrb[0].mxu0
    %v278 = vadd.f32 0.0, %v277
    %v279 = vpop.f32.mrb[0].mxu0
    %280 = vdwg.mxu0
    %s281 = scalar_lea.vmem [#allocation9], 8
    %v282 = vld [vmem:[%s281] sm:$0xf]
    %v283 = vld [vmem:[%s281 + $0x4] sm:$0xf]
    %v286 = vunpack.c.l.b16 %v282
    %v287 = vunpack.c.l.b16 %v283
    %v288 = vpack.c.b16 %v287, %v286
    %v290 = vsel %vm236, %v288, 0
    %292 = vmatprep.subr.bf16.mxu0 0
    %293 = vmatpush1.bf16.msra.mxu0 %v228
    %294 = vmatprep.subr.bf16.mxu0 0
    %295 = vmatpush1.bf16.msra.mxu0 0
    %296 = vmatprep.subr.bf16.mxu0 0
    %297 = vmatpush1.bf16.msra.mxu0 0
    %298 = vmatprep.subr.bf16.mxu0 0
    %299 = vmatpush1.bf16.msra.mxu0 0
    %300 = vmatprep.subr.bf16.mxu0 0
    %301 = vmatpush1.bf16.msra.mxu0 0
    %302 = vmatprep.subr.bf16.mxu0 0
    %303 = vmatpush1.bf16.msra.mxu0 0
    %304 = vmatprep.subr.bf16.mxu0 0
    %305 = vmatpush1.bf16.msra.mxu0 0
    %306 = vmatprep.subr.bf16.mxu0 0
    %307 = vmatpush1.bf16.msra.mxu0 0
    %308 = vmatprep.subr.bf16.mxu0 0
    %309 = vmatpush1.bf16.msra.mxu0 0
    %310 = vmatprep.subr.bf16.mxu0 0
    %311 = vmatpush1.bf16.msra.mxu0 0
    %312 = vmatprep.subr.bf16.mxu0 0
    %313 = vmatpush1.bf16.msra.mxu0 0
    %314 = vmatprep.subr.bf16.mxu0 0
    %315 = vmatpush1.bf16.msra.mxu0 0
    %316 = vmatprep.subr.bf16.mxu0 0
    %317 = vmatpush1.bf16.msra.mxu0 0
    %318 = vmatprep.subr.bf16.mxu0 0
    %319 = vmatpush1.bf16.msra.mxu0 0
    %320 = vmatprep.subr.bf16.mxu0 0
    %321 = vmatpush1.bf16.msra.mxu0 0
    %322 = vmatprep.subr.bf16.mxu0 0
    %323 = vmatpush1.bf16.msra.mxu0 0
    %324 = vmatprep.mubr.bf16.mxu0 0
    %325 = vmatmul.mubr.bf16.gmra.mrb[0].mxu0 %v290
    %v326 = vpop.f32.mrb[0].mxu0
    %v327 = vadd.f32 0.0, %v326
    %v328 = vpop.f32.mrb[0].mxu0
    %v329 = vpop.f32.mrb[0].mxu0
    %v330 = vadd.f32 0.0, %v329
    %v331 = vpop.f32.mrb[0].mxu0
    %332 = vdwg.mxu0
    %v333 = vld [vmem:[%s4] sm:$0xf]
    %v334 = vld [vmem:[%s4 + $0x4] sm:$0xf]
    %v335 = vld [vmem:[%s4 + $0x8] sm:$0xf]
    %v336 = vld [vmem:[%s4 + $0xc] sm:$0xf]
    %v337 = vpack.c.bf16 %v278, %v275
    %s338 = scalar_lea.vmem %s4, 16
    %v339 = vld [vmem:[%s338] sm:$0xf]
    %v340 = vld [vmem:[%s338 + $0x4] sm:$0xf]
    %v341 = vld [vmem:[%s338 + $0x8] sm:$0xf]
    %v342 = vld [vmem:[%s338 + $0xc] sm:$0xf]
    %v347 = vunpack.c.l.b16 %v339
    %v348 = vunpack.c.l.b16 %v340
    %v349 = vunpack.c.l.b16 %v341
    %v350 = vunpack.c.l.b16 %v342
    %v351 = vpack.c.b16 %v348, %v347
    %v352 = vpack.c.b16 %v350, %v349
    %vm355 = vcmask 261120
    %v357 = vsel %vm355, %v228, 0
    %359 = vmatprep.subr.bf16.mxu0 0
    %360 = vmatpush1.bf16.msra.mxu0 %v351
    %361 = vmatprep.subr.bf16.mxu0 0
    %362 = vmatpush1.bf16.msra.mxu0 %v352
    %363 = vmatprep.subr.bf16.mxu0 0
    %364 = vmatpush1.bf16.msra.mxu0 0
    %365 = vmatprep.subr.bf16.mxu0 0
    %366 = vmatpush1.bf16.msra.mxu0 0
    %367 = vmatprep.subr.bf16.mxu0 0
    %368 = vmatpush1.bf16.msra.mxu0 0
    %369 = vmatprep.subr.bf16.mxu0 0
    %370 = vmatpush1.bf16.msra.mxu0 0
    %371 = vmatprep.subr.bf16.mxu0 0
    %372 = vmatpush1.bf16.msra.mxu0 0
    %373 = vmatprep.subr.bf16.mxu0 0
    %374 = vmatpush1.bf16.msra.mxu0 0
    %375 = vmatprep.subr.bf16.mxu0 0
    %376 = vmatpush1.bf16.msra.mxu0 0
    %377 = vmatprep.subr.bf16.mxu0 0
    %378 = vmatpush1.bf16.msra.mxu0 0
    %379 = vmatprep.subr.bf16.mxu0 0
    %380 = vmatpush1.bf16.msra.mxu0 0
    %381 = vmatprep.subr.bf16.mxu0 0
    %382 = vmatpush1.bf16.msra.mxu0 0
    %383 = vmatprep.subr.bf16.mxu0 0
    %384 = vmatpush1.bf16.msra.mxu0 0
    %385 = vmatprep.subr.bf16.mxu0 0
    %386 = vmatpush1.bf16.msra.mxu0 0
    %387 = vmatprep.subr.bf16.mxu0 0
    %388 = vmatpush1.bf16.msra.mxu0 0
    %389 = vmatprep.subr.bf16.mxu0 0
    %390 = vmatpush1.bf16.msra.mxu0 0
    %391 = vmatprep.mubr.bf16.mxu0 0
    %392 = vmatmul.mubr.bf16.gmra.mrb[0].mxu0 %v357
    %v393 = vpop.f32.mrb[0].mxu0
    %v394 = vadd.f32 0.0, %v393
    %v395 = vpop.f32.mrb[0].mxu0
    %v396 = vpop.f32.mrb[0].mxu0
    %v397 = vadd.f32 0.0, %v396
    %v398 = vpop.f32.mrb[0].mxu0
    %399 = vdwg.mxu0
    %v404 = vunpack.c.l.b16 %v333
    %v405 = vunpack.c.l.b16 %v334
    %v406 = vunpack.c.l.b16 %v335
    %v407 = vunpack.c.l.b16 %v336
    %v408 = vpack.c.b16 %v405, %v404
    %v409 = vpack.c.b16 %v407, %v406
    %v413 = vsel %vm355, %v337, 0
    %415 = vmatprep.subr.bf16.mxu0 0
    %416 = vmatpush1.bf16.msra.mxu0 %v408
    %417 = vmatprep.subr.bf16.mxu0 0
    %418 = vmatpush1.bf16.msra.mxu0 %v409
    %419 = vmatprep.subr.bf16.mxu0 0
    %420 = vmatpush1.bf16.msra.mxu0 0
    %421 = vmatprep.subr.bf16.mxu0 0
    %422 = vmatpush1.bf16.msra.mxu0 0
    %423 = vmatprep.subr.bf16.mxu0 0
    %424 = vmatpush1.bf16.msra.mxu0 0
    %425 = vmatprep.subr.bf16.mxu0 0
    %426 = vmatpush1.bf16.msra.mxu0 0
    %427 = vmatprep.subr.bf16.mxu0 0
    %428 = vmatpush1.bf16.msra.mxu0 0
    %429 = vmatprep.subr.bf16.mxu0 0
    %430 = vmatpush1.bf16.msra.mxu0 0
    %431 = vmatprep.subr.bf16.mxu0 0
    %432 = vmatpush1.bf16.msra.mxu0 0
    %433 = vmatprep.subr.bf16.mxu0 0
    %434 = vmatpush1.bf16.msra.mxu0 0
    %435 = vmatprep.subr.bf16.mxu0 0
    %436 = vmatpush1.bf16.msra.mxu0 0
    %437 = vmatprep.subr.bf16.mxu0 0
    %438 = vmatpush1.bf16.msra.mxu0 0
    %439 = vmatprep.subr.bf16.mxu0 0
    %440 = vmatpush1.bf16.msra.mxu0 0
    %441 = vmatprep.subr.bf16.mxu0 0
    %442 = vmatpush1.bf16.msra.mxu0 0
    %443 = vmatprep.subr.bf16.mxu0 0
    %444 = vmatpush1.bf16.msra.mxu0 0
    %445 = vmatprep.subr.bf16.mxu0 0
    %446 = vmatpush1.bf16.msra.mxu0 0
    %447 = vmatprep.mubr.bf16.mxu0 0
    %448 = vmatmul.mubr.bf16.gmra.mrb[0].mxu0 %v413
    %v449 = vpop.f32.mrb[0].mxu0
    %v450 = vadd.f32 %v394, %v449
    %v451 = vpop.f32.mrb[0].mxu0
    %v452 = vpop.f32.mrb[0].mxu0
    %v453 = vadd.f32 %v397, %v452
    %v454 = vpop.f32.mrb[0].mxu0
    %455 = vdwg.mxu0
    %s456 = scalar_lea.vmem %s4, 32
    %v457 = vld [vmem:[%s456] sm:$0xf]
    %v458 = vld [vmem:[%s456 + $0x4] sm:$0xf]
    %v459 = vld [vmem:[%s456 + $0x8] sm:$0xf]
    %v460 = vld [vmem:[%s456 + $0xc] sm:$0xf]
    %v461 = vpack.c.bf16 %v330, %v327
    %v466 = vunpack.c.l.b16 %v457
    %v467 = vunpack.c.l.b16 %v458
    %v468 = vunpack.c.l.b16 %v459
    %v469 = vunpack.c.l.b16 %v460
    %v470 = vpack.c.b16 %v467, %v466
    %v471 = vpack.c.b16 %v469, %v468
    %v475 = vsel %vm355, %v461, 0
    %477 = vmatprep.subr.bf16.mxu0 0
    %478 = vmatpush1.bf16.msra.mxu0 %v470
    %479 = vmatprep.subr.bf16.mxu0 0
    %480 = vmatpush1.bf16.msra.mxu0 %v471
    %481 = vmatprep.subr.bf16.mxu0 0
    %482 = vmatpush1.bf16.msra.mxu0 0
    %483 = vmatprep.subr.bf16.mxu0 0
    %484 = vmatpush1.bf16.msra.mxu0 0
    %485 = vmatprep.subr.bf16.mxu0 0
    %486 = vmatpush1.bf16.msra.mxu0 0
    %487 = vmatprep.subr.bf16.mxu0 0
    %488 = vmatpush1.bf16.msra.mxu0 0
    %489 = vmatprep.subr.bf16.mxu0 0
    %490 = vmatpush1.bf16.msra.mxu0 0
    %491 = vmatprep.subr.bf16.mxu0 0
    %492 = vmatpush1.bf16.msra.mxu0 0
    %493 = vmatprep.subr.bf16.mxu0 0
    %494 = vmatpush1.bf16.msra.mxu0 0
    %495 = vmatprep.subr.bf16.mxu0 0
    %496 = vmatpush1.bf16.msra.mxu0 0
    %497 = vmatprep.subr.bf16.mxu0 0
    %498 = vmatpush1.bf16.msra.mxu0 0
    %499 = vmatprep.subr.bf16.mxu0 0
    %500 = vmatpush1.bf16.msra.mxu0 0
    %501 = vmatprep.subr.bf16.mxu0 0
    %502 = vmatpush1.bf16.msra.mxu0 0
    %503 = vmatprep.subr.bf16.mxu0 0
    %504 = vmatpush1.bf16.msra.mxu0 0
    %505 = vmatprep.subr.bf16.mxu0 0
    %506 = vmatpush1.bf16.msra.mxu0 0
    %507 = vmatprep.subr.bf16.mxu0 0
    %508 = vmatpush1.bf16.msra.mxu0 0
    %509 = vmatprep.mubr.bf16.mxu0 0
    %510 = vmatmul.mubr.bf16.gmra.mrb[0].mxu0 %v475
    %v511 = vpop.f32.mrb[0].mxu0
    %v512 = vadd.f32 0.0, %v511
    %v513 = vpop.f32.mrb[0].mxu0
    %v514 = vpop.f32.mrb[0].mxu0
    %v515 = vadd.f32 0.0, %v514
    %v516 = vpop.f32.mrb[0].mxu0
    %517 = vdwg.mxu0
    %v518 = vadd.f32 %v450, %v512
    %v519 = vadd.f32 %v453, %v515
    %s520 = scalar_lea.vmem [#allocation14], 1
    %v521 = vld [vmem:[%s520] sm:$0x1]
    %v523 = vlaneseq
    %v524 = vshrl.u32 %v523, 7
    %v525 = vsub.s32 0, %v524
    %v526 = vrot.slane %v521, %v525
    %v528 = vadd.f32 %v518, %v526
    %v529 = vadd.f32 %v519, %v526
    %v530 = vmax.f32 %v528, 0.0
    %v531 = vmax.f32 %v529, 0.0
    %v532 = vpack.c.bf16 %v531, %v530
    %v533 = vld [vmem:[#allocation11] sm:$0xff]
    %v534 = vld [vmem:[#allocation11 + $0x8] sm:$0xff]
    %v535 = vld [vmem:[%s6] sm:$0xf]
    %v536 = vld [vmem:[%s6 + $0x4] sm:$0xf]
    %v537 = vld [vmem:[%s6 + $0x8] sm:$0xf]
    %v538 = vld [vmem:[%s6 + $0xc] sm:$0xf]
    %v539 = vld [vmem:[#allocation15] sm:$0x1]
    %v541 = vlaneseq
    %v542 = vshrl.u32 %v541, 7
    %v543 = vsub.s32 0, %v542
    %v544 = vrot.slane %v539, %v543
    %v550 = vunpack.c.l.b16 %v535
    %v551 = vunpack.c.l.b16 %v536
    %v552 = vunpack.c.l.b16 %v537
    %v553 = vunpack.c.l.b16 %v538
    %v554 = vpack.c.b16 %v551, %v550
    %v555 = vpack.c.b16 %v553, %v552
    %v559 = vsel %vm355, %v532, 0
    %561 = vmatprep.subr.bf16.mxu0 0
    %562 = vmatpush1.bf16.msra.mxu0 %v554
    %563 = vmatprep.subr.bf16.mxu0 0
    %564 = vmatpush1.bf16.msra.mxu0 %v555
    %565 = vmatprep.subr.bf16.mxu0 0
    %566 = vmatpush1.bf16.msra.mxu0 0
    %567 = vmatprep.subr.bf16.mxu0 0
    %568 = vmatpush1.bf16.msra.mxu0 0
    %569 = vmatprep.subr.bf16.mxu0 0
    %570 = vmatpush1.bf16.msra.mxu0 0
    %571 = vmatprep.subr.bf16.mxu0 0
    %572 = vmatpush1.bf16.msra.mxu0 0
    %573 = vmatprep.subr.bf16.mxu0 0
    %574 = vmatpush1.bf16.msra.mxu0 0
    %575 = vmatprep.subr.bf16.mxu0 0
    %576 = vmatpush1.bf16.msra.mxu0 0
    %577 = vmatprep.subr.bf16.mxu0 0
    %578 = vmatpush1.bf16.msra.mxu0 0
    %579 = vmatprep.subr.bf16.mxu0 0
    %580 = vmatpush1.bf16.msra.mxu0 0
    %581 = vmatprep.subr.bf16.mxu0 0
    %582 = vmatpush1.bf16.msra.mxu0 0
    %583 = vmatprep.subr.bf16.mxu0 0
    %584 = vmatpush1.bf16.msra.mxu0 0
    %585 = vmatprep.subr.bf16.mxu0 0
    %586 = vmatpush1.bf16.msra.mxu0 0
    %587 = vmatprep.subr.bf16.mxu0 0
    %588 = vmatpush1.bf16.msra.mxu0 0
    %589 = vmatprep.subr.bf16.mxu0 0
    %590 = vmatpush1.bf16.msra.mxu0 0
    %591 = vmatprep.subr.bf16.mxu0 0
    %592 = vmatpush1.bf16.msra.mxu0 0
    %593 = vmatprep.mubr.bf16.mxu0 0
    %594 = vmatmul.mubr.bf16.gmra.mrb[0].mxu0 %v559
    %v595 = vpop.f32.mrb[0].mxu0
    %v596 = vadd.f32 %v544, %v595
    %v597 = vpop.f32.mrb[0].mxu0
    %v598 = vpop.f32.mrb[0].mxu0
    %v599 = vadd.f32 %v544, %v598
    %v600 = vpop.f32.mrb[0].mxu0
    %601 = vdwg.mxu0
    %v602 = vld [vmem:[%s7] sm:$0xf]
    %v603 = vld [vmem:[%s7 + $0x4] sm:$0xf]
    %v604 = vld [vmem:[%s7 + $0x8] sm:$0xf]
    %v605 = vld [vmem:[%s7 + $0xc] sm:$0xf]
    %v606 = vld [vmem:[%s10] sm:$0x1]
    %v608 = vlaneseq
    %v609 = vshrl.u32 %v608, 7
    %v610 = vsub.s32 0, %v609
    %v611 = vrot.slane %v606, %v610
    %v617 = vunpack.c.l.b16 %v602
    %v618 = vunpack.c.l.b16 %v603
    %v619 = vunpack.c.l.b16 %v604
    %v620 = vunpack.c.l.b16 %v605
    %v621 = vpack.c.b16 %v618, %v617
    %v622 = vpack.c.b16 %v620, %v619
    %625 = vmatprep.subr.bf16.mxu0 0
    %626 = vmatpush1.bf16.msra.mxu0 %v621
    %627 = vmatprep.subr.bf16.mxu0 0
    %628 = vmatpush1.bf16.msra.mxu0 %v622
    %629 = vmatprep.subr.bf16.mxu0 0
    %630 = vmatpush1.bf16.msra.mxu0 0
    %631 = vmatprep.subr.bf16.mxu0 0
    %632 = vmatpush1.bf16.msra.mxu0 0
    %633 = vmatprep.subr.bf16.mxu0 0
    %634 = vmatpush1.bf16.msra.mxu0 0
    %635 = vmatprep.subr.bf16.mxu0 0
    %636 = vmatpush1.bf16.msra.mxu0 0
    %637 = vmatprep.subr.bf16.mxu0 0
    %638 = vmatpush1.bf16.msra.mxu0 0
    %639 = vmatprep.subr.bf16.mxu0 0
    %640 = vmatpush1.bf16.msra.mxu0 0
    %641 = vmatprep.subr.bf16.mxu0 0
    %642 = vmatpush1.bf16.msra.mxu0 0
    %643 = vmatprep.subr.bf16.mxu0 0
    %644 = vmatpush1.bf16.msra.mxu0 0
    %645 = vmatprep.subr.bf16.mxu0 0
    %646 = vmatpush1.bf16.msra.mxu0 0
    %647 = vmatprep.subr.bf16.mxu0 0
    %648 = vmatpush1.bf16.msra.mxu0 0
    %649 = vmatprep.subr.bf16.mxu0 0
    %650 = vmatpush1.bf16.msra.mxu0 0
    %651 = vmatprep.subr.bf16.mxu0 0
    %652 = vmatpush1.bf16.msra.mxu0 0
    %653 = vmatprep.subr.bf16.mxu0 0
    %654 = vmatpush1.bf16.msra.mxu0 0
    %655 = vmatprep.subr.bf16.mxu0 0
    %656 = vmatpush1.bf16.msra.mxu0 0
    %657 = vmatprep.mubr.bf16.mxu0 0
    %658 = vmatmul.mubr.bf16.gmra.mrb[0].mxu0 %v559
    %v659 = vpop.f32.mrb[0].mxu0
    %v660 = vadd.f32 %v611, %v659
    %v661 = vpop.f32.mrb[0].mxu0
    %v662 = vpop.f32.mrb[0].mxu0
    %v663 = vadd.f32 %v611, %v662
    %v664 = vpop.f32.mrb[0].mxu0
    %665 = vdwg.mxu0
    %v666 = vld [vmem:[%s8] sm:$0xf]
    %v667 = vld [vmem:[%s8 + $0x4] sm:$0xf]
    %v668 = vld [vmem:[%s8 + $0x8] sm:$0xf]
    %v669 = vld [vmem:[%s8 + $0xc] sm:$0xf]
    %v670 = vld [vmem:[%s11] sm:$0x1]
    %v672 = vlaneseq
    %v673 = vshrl.u32 %v672, 7
    %v674 = vsub.s32 0, %v673
    %v675 = vrot.slane %v670, %v674
    %v681 = vunpack.c.l.b16 %v666
    %v682 = vunpack.c.l.b16 %v667
    %v683 = vunpack.c.l.b16 %v668
    %v684 = vunpack.c.l.b16 %v669
    %v685 = vpack.c.b16 %v682, %v681
    %v686 = vpack.c.b16 %v684, %v683
    %689 = vmatprep.subr.bf16.mxu0 0
    %690 = vmatpush1.bf16.msra.mxu0 %v685
    %691 = vmatprep.subr.bf16.mxu0 0
    %692 = vmatpush1.bf16.msra.mxu0 %v686
    %693 = vmatprep.subr.bf16.mxu0 0
    %694 = vmatpush1.bf16.msra.mxu0 0
    %695 = vmatprep.subr.bf16.mxu0 0
    %696 = vmatpush1.bf16.msra.mxu0 0
    %697 = vmatprep.subr.bf16.mxu0 0
    %698 = vmatpush1.bf16.msra.mxu0 0
    %699 = vmatprep.subr.bf16.mxu0 0
    %700 = vmatpush1.bf16.msra.mxu0 0
    %701 = vmatprep.subr.bf16.mxu0 0
    %702 = vmatpush1.bf16.msra.mxu0 0
    %703 = vmatprep.subr.bf16.mxu0 0
    %704 = vmatpush1.bf16.msra.mxu0 0
    %705 = vmatprep.subr.bf16.mxu0 0
    %706 = vmatpush1.bf16.msra.mxu0 0
    %707 = vmatprep.subr.bf16.mxu0 0
    %708 = vmatpush1.bf16.msra.mxu0 0
    %709 = vmatprep.subr.bf16.mxu0 0
    %710 = vmatpush1.bf16.msra.mxu0 0
    %711 = vmatprep.subr.bf16.mxu0 0
    %712 = vmatpush1.bf16.msra.mxu0 0
    %713 = vmatprep.subr.bf16.mxu0 0
    %714 = vmatpush1.bf16.msra.mxu0 0
    %715 = vmatprep.subr.bf16.mxu0 0
    %716 = vmatpush1.bf16.msra.mxu0 0
    %717 = vmatprep.subr.bf16.mxu0 0
    %718 = vmatpush1.bf16.msra.mxu0 0
    %719 = vmatprep.subr.bf16.mxu0 0
    %720 = vmatpush1.bf16.msra.mxu0 0
    %721 = vmatprep.mubr.bf16.mxu0 0
    %722 = vmatmul.mubr.bf16.gmra.mrb[0].mxu0 %v559
    %v723 = vpop.f32.mrb[0].mxu0
    %v724 = vadd.f32 %v675, %v723
    %v725 = vpop.f32.mrb[0].mxu0
    %v726 = vpop.f32.mrb[0].mxu0
    %v727 = vadd.f32 %v675, %v726
    %v728 = vpop.f32.mrb[0].mxu0
    %729 = vdwg.mxu0
    %vm730 = vcmask 64512
    %v732 = vsel %vm730, %v596, 0
    %v735 = vsel %vm730, %v599, 0
    %v738 = vsel %vm730, %v660, 0
    %v741 = vsel %vm730, %v663, 0
    %743 = vmatprep.subr.mxu0 0.0
    %744 = vmatpush1.xpose.msra.mxu0 %v738
    %745 = vmatprep.subr.mxu0 0.0
    %746 = vmatpush1.xpose.msra.mxu0 %v741
    %747 = vmatprep.subr.mxu0 0.0
    %748 = vmatpush1.xpose.msra.mxu0 0.0
    %749 = vmatprep.subr.mxu0 0.0
    %750 = vmatpush1.xpose.msra.mxu0 0.0
    %751 = vmatprep.subr.mxu0 0.0
    %752 = vmatpush1.xpose.msra.mxu0 0.0
    %753 = vmatprep.subr.mxu0 0.0
    %754 = vmatpush1.xpose.msra.mxu0 0.0
    %755 = vmatprep.subr.mxu0 0.0
    %756 = vmatpush1.xpose.msra.mxu0 0.0
    %757 = vmatprep.subr.mxu0 0.0
    %758 = vmatpush1.xpose.msra.mxu0 0.0
    %759 = vmatprep.subr.mxu0 0.0
    %760 = vmatpush1.xpose.msra.mxu0 0.0
    %761 = vmatprep.subr.mxu0 0.0
    %762 = vmatpush1.xpose.msra.mxu0 0.0
    %763 = vmatprep.subr.mxu0 0.0
    %764 = vmatpush1.xpose.msra.mxu0 0.0
    %765 = vmatprep.subr.mxu0 0.0
    %766 = vmatpush1.xpose.msra.mxu0 0.0
    %767 = vmatprep.subr.mxu0 0.0
    %768 = vmatpush1.xpose.msra.mxu0 0.0
    %769 = vmatprep.subr.mxu0 0.0
    %770 = vmatpush1.xpose.msra.mxu0 0.0
    %771 = vmatprep.subr.mxu0 0.0
    %772 = vmatpush1.xpose.msra.mxu0 0.0
    %773 = vmatprep.subr.mxu0 0.0
    %774 = vmatpush1.xpose.msra.mxu0 0.0
    %775 = vmatprep.subr.mxu0 0.0
    %776 = vmatpush1.xpose.msra.mxu0 0.0
    %777 = vmatprep.subr.mxu0 0.0
    %778 = vmatpush1.xpose.msra.mxu0 0.0
    %779 = vmatprep.subr.mxu0 0.0
    %780 = vmatpush1.xpose.msra.mxu0 0.0
    %781 = vmatprep.subr.mxu0 0.0
    %782 = vmatpush1.xpose.msra.mxu0 0.0
    %783 = vmatprep.subr.mxu0 0.0
    %784 = vmatpush1.xpose.msra.mxu0 0.0
    %785 = vmatprep.subr.mxu0 0.0
    %786 = vmatpush1.xpose.msra.mxu0 0.0
    %787 = vmatprep.subr.mxu0 0.0
    %788 = vmatpush1.xpose.msra.mxu0 0.0
    %789 = vmatprep.subr.mxu0 0.0
    %790 = vmatpush1.xpose.msra.mxu0 0.0
    %791 = vmatprep.subr.mxu0 0.0
    %792 = vmatpush1.xpose.msra.mxu0 0.0
    %793 = vmatprep.subr.mxu0 0.0
    %794 = vmatpush1.xpose.msra.mxu0 0.0
    %795 = vmatprep.subr.mxu0 0.0
    %796 = vmatpush1.xpose.msra.mxu0 0.0
    %797 = vmatprep.subr.mxu0 0.0
    %798 = vmatpush1.xpose.msra.mxu0 0.0
    %799 = vmatprep.subr.mxu0 0.0
    %800 = vmatpush1.xpose.msra.mxu0 0.0
    %801 = vmatprep.subr.mxu0 0.0
    %802 = vmatpush1.xpose.msra.mxu0 0.0
    %803 = vmatprep.subr.mxu0 0.0
    %804 = vmatpush1.xpose.msra.mxu0 0.0
    %805 = vmatprep.subr.mxu0 0.0
    %806 = vmatpush1.xpose.msra.mxu0 0.0
    %807 = vmatprep.mubr.f32.mxu0 0.0
    %808 = vmatmul.mubr.f32.gmra.mrb[0].mxu0 %v732
    %v809 = vpop.f32.mrb[0].mxu0
    %v810 = vadd.f32 0.0, %v809
    %v811 = vpop.f32.mrb[0].mxu0
    %812 = vmatprep.mubr.f32.mxu0 0.0
    %813 = vmatmul.mubr.f32.gmra.mrb[0].mxu0 %v735
    %v814 = vpop.f32.mrb[0].mxu0
    %v815 = vadd.f32 0.0, %v814
    %v816 = vpop.f32.mrb[0].mxu0
    %817 = vdwg.mxu0
    %v818 = vmul.f32 %v810, 0.35355338
    %v819 = vmul.f32 %v815, 0.35355338
    %v820 = vadd.f32 %v818, %v533
    %v821 = vadd.f32 %v819, %v534
    %v822 = vsel %vm236, %v820, -inf
    %823 = vmax.xlane.f32.xlu0 %v822
    %v824 = vpop.xlane.xlu0 %823
    %v825 = vsel %vm236, %v821, -inf
    %826 = vmax.xlane.f32.xlu0 %v825
    %v827 = vpop.xlane.xlu0 %826
    %v828 = vsub.f32 %v820, %v824
    %v829 = vsub.f32 %v821, %v827
    %v830 = vmul.f32 %v828, 1.442695
    %v831 = vpow.pop %v830
    %v832 = vmul.f32 %v829, 1.442695
    %v833 = vpow.pop %v832
    %v834 = vsel %vm236, %v831, 0.0
    %835 = vadd.xlane.f32.xlu0 %v834
    %v836 = vpop.xlane.xlu0 %835
    %v837 = vsel %vm236, %v833, 0.0
    %838 = vadd.xlane.f32.xlu0 %v837
    %v839 = vpop.xlane.xlu0 %838
    %v840 = vrcp.pop %v836
    %v841 = vrcp.pop %v839
    %v842 = vmul.f32 %v831, %v840
    %v843 = vmul.f32 %v833, %v841
    %v845 = vsel %vm236, %v842, 0
    %v848 = vsel %vm236, %v843, 0
    %850 = vmatprep.subr.mxu0 0.0
    %851 = vmatpush1.msra.mxu0 %v724
    %852 = vmatprep.subr.mxu0 0.0
    %853 = vmatpush1.msra.mxu0 %v727
    %854 = vmatprep.subr.mxu0 0.0
    %855 = vmatpush1.msra.mxu0 0.0
    %856 = vmatprep.subr.mxu0 0.0
    %857 = vmatpush1.msra.mxu0 0.0
    %858 = vmatprep.subr.mxu0 0.0
    %859 = vmatpush1.msra.mxu0 0.0
    %860 = vmatprep.subr.mxu0 0.0
    %861 = vmatpush1.msra.mxu0 0.0
    %862 = vmatprep.subr.mxu0 0.0
    %863 = vmatpush1.msra.mxu0 0.0
    %864 = vmatprep.subr.mxu0 0.0
    %865 = vmatpush1.msra.mxu0 0.0
    %866 = vmatprep.subr.mxu0 0.0
    %867 = vmatpush1.msra.mxu0 0.0
    %868 = vmatprep.subr.mxu0 0.0
    %869 = vmatpush1.msra.mxu0 0.0
    %870 = vmatprep.subr.mxu0 0.0
    %871 = vmatpush1.msra.mxu0 0.0
    %872 = vmatprep.subr.mxu0 0.0
    %873 = vmatpush1.msra.mxu0 0.0
    %874 = vmatprep.subr.mxu0 0.0
    %875 = vmatpush1.msra.mxu0 0.0
    %876 = vmatprep.subr.mxu0 0.0
    %877 = vmatpush1.msra.mxu0 0.0
    %878 = vmatprep.subr.mxu0 0.0
    %879 = vmatpush1.msra.mxu0 0.0
    %880 = vmatprep.subr.mxu0 0.0
    %881 = vmatpush1.msra.mxu0 0.0
    %882 = vmatprep.subr.mxu0 0.0
    %883 = vmatpush1.msra.mxu0 0.0
    %884 = vmatprep.subr.mxu0 0.0
    %885 = vmatpush1.msra.mxu0 0.0
    %886 = vmatprep.subr.mxu0 0.0
    %887 = vmatpush1.msra.mxu0 0.0
    %888 = vmatprep.subr.mxu0 0.0
    %889 = vmatpush1.msra.mxu0 0.0
    %890 = vmatprep.subr.mxu0 0.0
    %891 = vmatpush1.msra.mxu0 0.0
    %892 = vmatprep.subr.mxu0 0.0
    %893 = vmatpush1.msra.mxu0 0.0
    %894 = vmatprep.subr.mxu0 0.0
    %895 = vmatpush1.msra.mxu0 0.0
    %896 = vmatprep.subr.mxu0 0.0
    %897 = vmatpush1.msra.mxu0 0.0
    %898 = vmatprep.subr.mxu0 0.0
    %899 = vmatpush1.msra.mxu0 0.0
    %900 = vmatprep.subr.mxu0 0.0
    %901 = vmatpush1.msra.mxu0 0.0
    %902 = vmatprep.subr.mxu0 0.0
    %903 = vmatpush1.msra.mxu0 0.0
    %904 = vmatprep.subr.mxu0 0.0
    %905 = vmatpush1.msra.mxu0 0.0
    %906 = vmatprep.subr.mxu0 0.0
    %907 = vmatpush1.msra.mxu0 0.0
    %908 = vmatprep.subr.mxu0 0.0
    %909 = vmatpush1.msra.mxu0 0.0
    %910 = vmatprep.subr.mxu0 0.0
    %911 = vmatpush1.msra.mxu0 0.0
    %912 = vmatprep.subr.mxu0 0.0
    %913 = vmatpush1.msra.mxu0 0.0
    %914 = vmatprep.mubr.f32.mxu0 0.0
    %915 = vmatmul.mubr.f32.gmra.mrb[0].mxu0 %v845
    %v916 = vpop.f32.mrb[0].mxu0
    %v917 = vadd.f32 0.0, %v916
    %v918 = vpop.f32.mrb[0].mxu0
    %919 = vmatprep.mubr.f32.mxu0 0.0
    %920 = vmatmul.mubr.f32.gmra.mrb[0].mxu0 %v848
    %v921 = vpop.f32.mrb[0].mxu0
    %v922 = vadd.f32 0.0, %v921
    %v923 = vpop.f32.mrb[0].mxu0
    %924 = vdwg.mxu0
    %v925 = vld [vmem:[#allocation17] sm:$0xf]
    %v926 = vpack.c.bf16 %v922, %v917
    %s927 = scalar_lea.vmem %s6, 16
    %v928 = vld [vmem:[%s927] sm:$0xf]
    %v929 = vld [vmem:[%s927 + $0x4] sm:$0xf]
    %v930 = vld [vmem:[%s927 + $0x8] sm:$0xf]
    %v931 = vld [vmem:[%s927 + $0xc] sm:$0xf]
    %s932 = scalar_lea.vmem [#allocation15], 1
    %v933 = vld [vmem:[%s932] sm:$0x1]
    %v935 = vlaneseq
    %v936 = vshrl.u32 %v935, 7
    %v937 = vsub.s32 0, %v936
    %v938 = vrot.slane %v933, %v937
    %v944 = vunpack.c.l.b16 %v928
    %v945 = vunpack.c.l.b16 %v929
    %v946 = vunpack.c.l.b16 %v930
    %v947 = vunpack.c.l.b16 %v931
    %v948 = vpack.c.b16 %v945, %v944
    %v949 = vpack.c.b16 %v947, %v946
    %952 = vmatprep.subr.bf16.mxu0 0
    %953 = vmatpush1.bf16.msra.mxu0 %v948
    %954 = vmatprep.subr.bf16.mxu0 0
    %955 = vmatpush1.bf16.msra.mxu0 %v949
    %956 = vmatprep.subr.bf16.mxu0 0
    %957 = vmatpush1.bf16.msra.mxu0 0
    %958 = vmatprep.subr.bf16.mxu0 0
    %959 = vmatpush1.bf16.msra.mxu0 0
    %960 = vmatprep.subr.bf16.mxu0 0
    %961 = vmatpush1.bf16.msra.mxu0 0
    %962 = vmatprep.subr.bf16.mxu0 0
    %963 = vmatpush1.bf16.msra.mxu0 0
    %964 = vmatprep.subr.bf16.mxu0 0
    %965 = vmatpush1.bf16.msra.mxu0 0
    %966 = vmatprep.subr.bf16.mxu0 0
    %967 = vmatpush1.bf16.msra.mxu0 0
    %968 = vmatprep.subr.bf16.mxu0 0
    %969 = vmatpush1.bf16.msra.mxu0 0
    %970 = vmatprep.subr.bf16.mxu0 0
    %971 = vmatpush1.bf16.msra.mxu0 0
    %972 = vmatprep.subr.bf16.mxu0 0
    %973 = vmatpush1.bf16.msra.mxu0 0
    %974 = vmatprep.subr.bf16.mxu0 0
    %975 = vmatpush1.bf16.msra.mxu0 0
    %976 = vmatprep.subr.bf16.mxu0 0
    %977 = vmatpush1.bf16.msra.mxu0 0
    %978 = vmatprep.subr.bf16.mxu0 0
    %979 = vmatpush1.bf16.msra.mxu0 0
    %980 = vmatprep.subr.bf16.mxu0 0
    %981 = vmatpush1.bf16.msra.mxu0 0
    %982 = vmatprep.subr.bf16.mxu0 0
    %983 = vmatpush1.bf16.msra.mxu0 0
    %984 = vmatprep.mubr.bf16.mxu0 0
    %985 = vmatmul.mubr.bf16.gmra.mrb[0].mxu0 %v559
    %v986 = vpop.f32.mrb[0].mxu0
    %v987 = vadd.f32 %v938, %v986
    %v988 = vpop.f32.mrb[0].mxu0
    %v989 = vpop.f32.mrb[0].mxu0
    %v990 = vadd.f32 %v938, %v989
    %v991 = vpop.f32.mrb[0].mxu0
    %992 = vdwg.mxu0
    %s993 = scalar_lea.vmem %s7, 16
    %v994 = vld [vmem:[%s993] sm:$0xf]
    %v995 = vld [vmem:[%s993 + $0x4] sm:$0xf]
    %v996 = vld [vmem:[%s993 + $0x8] sm:$0xf]
    %v997 = vld [vmem:[%s993 + $0xc] sm:$0xf]
    %s998 = scalar_lea.vmem %s10, 1
    %v999 = vld [vmem:[%s998] sm:$0x1]
    %v1001 = vlaneseq
    %v1002 = vshrl.u32 %v1001, 7
    %v1003 = vsub.s32 0, %v1002
    %v1004 = vrot.slane %v999, %v1003
    %v1010 = vunpack.c.l.b16 %v994
    %v1011 = vunpack.c.l.b16 %v995
    %v1012 = vunpack.c.l.b16 %v996
    %v1013 = vunpack.c.l.b16 %v997
    %v1014 = vpack.c.b16 %v1011, %v1010
    %v1015 = vpack.c.b16 %v1013, %v1012
    %1018 = vmatprep.subr.bf16.mxu0 0
    %1019 = vmatpush1.bf16.msra.mxu0 %v1014
    %1020 = vmatprep.subr.bf16.mxu0 0
    %1021 = vmatpush1.bf16.msra.mxu0 %v1015
    %1022 = vmatprep.subr.bf16.mxu0 0
    %1023 = vmatpush1.bf16.msra.mxu0 0
    %1024 = vmatprep.subr.bf16.mxu0 0
    %1025 = vmatpush1.bf16.msra.mxu0 0
    %1026 = vmatprep.subr.bf16.mxu0 0
    %1027 = vmatpush1.bf16.msra.mxu0 0
    %1028 = vmatprep.subr.bf16.mxu0 0
    %1029 = vmatpush1.bf16.msra.mxu0 0
    %1030 = vmatprep.subr.bf16.mxu0 0
    %1031 = vmatpush1.bf16.msra.mxu0 0
    %1032 = vmatprep.subr.bf16.mxu0 0
    %1033 = vmatpush1.bf16.msra.mxu0 0
    %1034 = vmatprep.subr.bf16.mxu0 0
    %1035 = vmatpush1.bf16.msra.mxu0 0
    %1036 = vmatprep.subr.bf16.mxu0 0
    %1037 = vmatpush1.bf16.msra.mxu0 0
    %1038 = vmatprep.subr.bf16.mxu0 0
    %1039 = vmatpush1.bf16.msra.mxu0 0
    %1040 = vmatprep.subr.bf16.mxu0 0
    %1041 = vmatpush1.bf16.msra.mxu0 0
    %1042 = vmatprep.subr.bf16.mxu0 0
    %1043 = vmatpush1.bf16.msra.mxu0 0
    %1044 = vmatprep.subr.bf16.mxu0 0
    %1045 = vmatpush1.bf16.msra.mxu0 0
    %1046 = vmatprep.subr.bf16.mxu0 0
    %1047 = vmatpush1.bf16.msra.mxu0 0
    %1048 = vmatprep.subr.bf16.mxu0 0
    %1049 = vmatpush1.bf16.msra.mxu0 0
    %1050 = vmatprep.mubr.bf16.mxu0 0
    %1051 = vmatmul.mubr.bf16.gmra.mrb[0].mxu0 %v559
    %v1052 = vpop.f32.mrb[0].mxu0
    %v1053 = vadd.f32 %v1004, %v1052
    %v1054 = vpop.f32.mrb[0].mxu0
    %v1055 = vpop.f32.mrb[0].mxu0
    %v1056 = vadd.f32 %v1004, %v1055
    %v1057 = vpop.f32.mrb[0].mxu0
    %1058 = vdwg.mxu0
    %s1059 = scalar_lea.vmem %s8, 16
    %v1060 = vld [vmem:[%s1059] sm:$0xf]
    %v1061 = vld [vmem:[%s1059 + $0x4] sm:$0xf]
    %v1062 = vld [vmem:[%s1059 + $0x8] sm:$0xf]
    %v1063 = vld [vmem:[%s1059 + $0xc] sm:$0xf]
    %s1064 = scalar_lea.vmem %s11, 1
    %v1065 = vld [vmem:[%s1064] sm:$0x1]
    %v1067 = vlaneseq
    %v1068 = vshrl.u32 %v1067, 7
    %v1069 = vsub.s32 0, %v1068
    %v1070 = vrot.slane %v1065, %v1069
    %v1076 = vunpack.c.l.b16 %v1060
    %v1077 = vunpack.c.l.b16 %v1061
    %v1078 = vunpack.c.l.b16 %v1062
    %v1079 = vunpack.c.l.b16 %v1063
    %v1080 = vpack.c.b16 %v1077, %v1076
    %v1081 = vpack.c.b16 %v1079, %v1078
    %1084 = vmatprep.subr.bf16.mxu0 0
    %1085 = vmatpush1.bf16.msra.mxu0 %v1080
    %1086 = vmatprep.subr.bf16.mxu0 0
    %1087 = vmatpush1.bf16.msra.mxu0 %v1081
    %1088 = vmatprep.subr.bf16.mxu0 0
    %1089 = vmatpush1.bf16.msra.mxu0 0
    %1090 = vmatprep.subr.bf16.mxu0 0
    %1091 = vmatpush1.bf16.msra.mxu0 0
    %1092 = vmatprep.subr.bf16.mxu0 0
    %1093 = vmatpush1.bf16.msra.mxu0 0
    %1094 = vmatprep.subr.bf16.mxu0 0
    %1095 = vmatpush1.bf16.msra.mxu0 0
    %1096 = vmatprep.subr.bf16.mxu0 0
    %1097 = vmatpush1.bf16.msra.mxu0 0
    %1098 = vmatprep.subr.bf16.mxu0 0
    %1099 = vmatpush1.bf16.msra.mxu0 0
    %1100 = vmatprep.subr.bf16.mxu0 0
    %1101 = vmatpush1.bf16.msra.mxu0 0
    %1102 = vmatprep.subr.bf16.mxu0 0
    %1103 = vmatpush1.bf16.msra.mxu0 0
    %1104 = vmatprep.subr.bf16.mxu0 0
    %1105 = vmatpush1.bf16.msra.mxu0 0
    %1106 = vmatprep.subr.bf16.mxu0 0
    %1107 = vmatpush1.bf16.msra.mxu0 0
    %1108 = vmatprep.subr.bf16.mxu0 0
    %1109 = vmatpush1.bf16.msra.mxu0 0
    %1110 = vmatprep.subr.bf16.mxu0 0
    %1111 = vmatpush1.bf16.msra.mxu0 0
    %1112 = vmatprep.subr.bf16.mxu0 0
    %1113 = vmatpush1.bf16.msra.mxu0 0
    %1114 = vmatprep.subr.bf16.mxu0 0
    %1115 = vmatpush1.bf16.msra.mxu0 0
    %1116 = vmatprep.mubr.bf16.mxu0 0
    %1117 = vmatmul.mubr.bf16.gmra.mrb[0].mxu0 %v559
    %v1118 = vpop.f32.mrb[0].mxu0
    %v1119 = vadd.f32 %v1070, %v1118
    %v1120 = vpop.f32.mrb[0].mxu0
    %v1121 = vpop.f32.mrb[0].mxu0
    %v1122 = vadd.f32 %v1070, %v1121
    %v1123 = vpop.f32.mrb[0].mxu0
    %1124 = vdwg.mxu0
    %v1126 = vsel %vm730, %v987, 0
    %v1129 = vsel %vm730, %v990, 0
    %v1132 = vsel %vm730, %v1053, 0
    %v1135 = vsel %vm730, %v1056, 0
    %1137 = vmatprep.subr.mxu0 0.0
    %1138 = vmatpush1.xpose.msra.mxu0 %v1132
    %1139 = vmatprep.subr.mxu0 0.0
    %1140 = vmatpush1.xpose.msra.mxu0 %v1135
    %1141 = vmatprep.subr.mxu0 0.0
    %1142 = vmatpush1.xpose.msra.mxu0 0.0
    %1143 = vmatprep.subr.mxu0 0.0
    %1144 = vmatpush1.xpose.msra.mxu0 0.0
    %1145 = vmatprep.subr.mxu0 0.0
    %1146 = vmatpush1.xpose.msra.mxu0 0.0
    %1147 = vmatprep.subr.mxu0 0.0
    %1148 = vmatpush1.xpose.msra.mxu0 0.0
    %1149 = vmatprep.subr.mxu0 0.0
    %1150 = vmatpush1.xpose.msra.mxu0 0.0
    %1151 = vmatprep.subr.mxu0 0.0
    %1152 = vmatpush1.xpose.msra.mxu0 0.0
    %1153 = vmatprep.subr.mxu0 0.0
    %1154 = vmatpush1.xpose.msra.mxu0 0.0
    %1155 = vmatprep.subr.mxu0 0.0
    %1156 = vmatpush1.xpose.msra.mxu0 0.0
    %1157 = vmatprep.subr.mxu0 0.0
    %1158 = vmatpush1.xpose.msra.mxu0 0.0
    %1159 = vmatprep.subr.mxu0 0.0
    %1160 = vmatpush1.xpose.msra.mxu0 0.0
    %1161 = vmatprep.subr.mxu0 0.0
    %1162 = vmatpush1.xpose.msra.mxu0 0.0
    %1163 = vmatprep.subr.mxu0 0.0
    %1164 = vmatpush1.xpose.msra.mxu0 0.0
    %1165 = vmatprep.subr.mxu0 0.0
    %1166 = vmatpush1.xpose.msra.mxu0 0.0
    %1167 = vmatprep.subr.mxu0 0.0
    %1168 = vmatpush1.xpose.msra.mxu0 0.0
    %1169 = vmatprep.subr.mxu0 0.0
    %1170 = vmatpush1.xpose.msra.mxu0 0.0
    %1171 = vmatprep.subr.mxu0 0.0
    %1172 = vmatpush1.xpose.msra.mxu0 0.0
    %1173 = vmatprep.subr.mxu0 0.0
    %1174 = vmatpush1.xpose.msra.mxu0 0.0
    %1175 = vmatprep.subr.mxu0 0.0
    %1176 = vmatpush1.xpose.msra.mxu0 0.0
    %1177 = vmatprep.subr.mxu0 0.0
    %1178 = vmatpush1.xpose.msra.mxu0 0.0
    %1179 = vmatprep.subr.mxu0 0.0
    %1180 = vmatpush1.xpose.msra.mxu0 0.0
    %1181 = vmatprep.subr.mxu0 0.0
    %1182 = vmatpush1.xpose.msra.mxu0 0.0
    %1183 = vmatprep.subr.mxu0 0.0
    %1184 = vmatpush1.xpose.msra.mxu0 0.0
    %1185 = vmatprep.subr.mxu0 0.0
    %1186 = vmatpush1.xpose.msra.mxu0 0.0
    %1187 = vmatprep.subr.mxu0 0.0
    %1188 = vmatpush1.xpose.msra.mxu0 0.0
    %1189 = vmatprep.subr.mxu0 0.0
    %1190 = vmatpush1.xpose.msra.mxu0 0.0
    %1191 = vmatprep.subr.mxu0 0.0
    %1192 = vmatpush1.xpose.msra.mxu0 0.0
    %1193 = vmatprep.subr.mxu0 0.0
    %1194 = vmatpush1.xpose.msra.mxu0 0.0
    %1195 = vmatprep.subr.mxu0 0.0
    %1196 = vmatpush1.xpose.msra.mxu0 0.0
    %1197 = vmatprep.subr.mxu0 0.0
    %1198 = vmatpush1.xpose.msra.mxu0 0.0
    %1199 = vmatprep.subr.mxu0 0.0
    %1200 = vmatpush1.xpose.msra.mxu0 0.0
    %1201 = vmatprep.mubr.f32.mxu0 0.0
    %1202 = vmatmul.mubr.f32.gmra.mrb[0].mxu0 %v1126
    %v1203 = vpop.f32.mrb[0].mxu0
    %v1204 = vadd.f32 0.0, %v1203
    %v1205 = vpop.f32.mrb[0].mxu0
    %1206 = vmatprep.mubr.f32.mxu0 0.0
    %1207 = vmatmul.mubr.f32.gmra.mrb[0].mxu0 %v1129
    %v1208 = vpop.f32.mrb[0].mxu0
    %v1209 = vadd.f32 0.0, %v1208
    %v1210 = vpop.f32.mrb[0].mxu0
    %1211 = vdwg.mxu0
    %v1212 = vmul.f32 %v1204, 0.35355338
    %v1213 = vmul.f32 %v1209, 0.35355338
    %v1214 = vadd.f32 %v1212, %v533
    %v1215 = vadd.f32 %v1213, %v534
    %v1216 = vsel %vm236, %v1214, -inf
    %1217 = vmax.xlane.f32.xlu0 %v1216
    %v1218 = vpop.xlane.xlu0 %1217
    %v1219 = vsel %vm236, %v1215, -inf
    %1220 = vmax.xlane.f32.xlu0 %v1219
    %v1221 = vpop.xlane.xlu0 %1220
    %v1222 = vsub.f32 %v1214, %v1218
    %v1223 = vsub.f32 %v1215, %v1221
    %v1224 = vmul.f32 %v1222, 1.442695
    %v1225 = vpow.pop %v1224
    %v1226 = vmul.f32 %v1223, 1.442695
    %v1227 = vpow.pop %v1226
    %v1228 = vsel %vm236, %v1225, 0.0
    %1229 = vadd.xlane.f32.xlu0 %v1228
    %v1230 = vpop.xlane.xlu0 %1229
    %v1231 = vsel %vm236, %v1227, 0.0
    %1232 = vadd.xlane.f32.xlu0 %v1231
    %v1233 = vpop.xlane.xlu0 %1232
    %v1234 = vrcp.pop %v1230
    %v1235 = vrcp.pop %v1233
    %v1236 = vmul.f32 %v1225, %v1234
    %v1237 = vmul.f32 %v1227, %v1235
    %v1239 = vsel %vm236, %v1236, 0
    %v1242 = vsel %vm236, %v1237, 0
    %1244 = vmatprep.subr.mxu0 0.0
    %1245 = vmatpush1.msra.mxu0 %v1119
    %1246 = vmatprep.subr.mxu0 0.0
    %1247 = vmatpush1.msra.mxu0 %v1122
    %1248 = vmatprep.subr.mxu0 0.0
    %1249 = vmatpush1.msra.mxu0 0.0
    %1250 = vmatprep.subr.mxu0 0.0
    %1251 = vmatpush1.msra.mxu0 0.0
    %1252 = vmatprep.subr.mxu0 0.0
    %1253 = vmatpush1.msra.mxu0 0.0
    %1254 = vmatprep.subr.mxu0 0.0
    %1255 = vmatpush1.msra.mxu0 0.0
    %1256 = vmatprep.subr.mxu0 0.0
    %1257 = vmatpush1.msra.mxu0 0.0
    %1258 = vmatprep.subr.mxu0 0.0
    %1259 = vmatpush1.msra.mxu0 0.0
    %1260 = vmatprep.subr.mxu0 0.0
    %1261 = vmatpush1.msra.mxu0 0.0
    %1262 = vmatprep.subr.mxu0 0.0
    %1263 = vmatpush1.msra.mxu0 0.0
    %1264 = vmatprep.subr.mxu0 0.0
    %1265 = vmatpush1.msra.mxu0 0.0
    %1266 = vmatprep.subr.mxu0 0.0
    %1267 = vmatpush1.msra.mxu0 0.0
    %1268 = vmatprep.subr.mxu0 0.0
    %1269 = vmatpush1.msra.mxu0 0.0
    %1270 = vmatprep.subr.mxu0 0.0
    %1271 = vmatpush1.msra.mxu0 0.0
    %1272 = vmatprep.subr.mxu0 0.0
    %1273 = vmatpush1.msra.mxu0 0.0
    %1274 = vmatprep.subr.mxu0 0.0
    %1275 = vmatpush1.msra.mxu0 0.0
    %1276 = vmatprep.subr.mxu0 0.0
    %1277 = vmatpush1.msra.mxu0 0.0
    %1278 = vmatprep.subr.mxu0 0.0
    %1279 = vmatpush1.msra.mxu0 0.0
    %1280 = vmatprep.subr.mxu0 0.0
    %1281 = vmatpush1.msra.mxu0 0.0
    %1282 = vmatprep.subr.mxu0 0.0
    %1283 = vmatpush1.msra.mxu0 0.0
    %1284 = vmatprep.subr.mxu0 0.0
    %1285 = vmatpush1.msra.mxu0 0.0
    %1286 = vmatprep.subr.mxu0 0.0
    %1287 = vmatpush1.msra.mxu0 0.0
    %1288 = vmatprep.subr.mxu0 0.0
    %1289 = vmatpush1.msra.mxu0 0.0
    %1290 = vmatprep.subr.mxu0 0.0
    %1291 = vmatpush1.msra.mxu0 0.0
    %1292 = vmatprep.subr.mxu0 0.0
    %1293 = vmatpush1.msra.mxu0 0.0
    %1294 = vmatprep.subr.mxu0 0.0
    %1295 = vmatpush1.msra.mxu0 0.0
    %1296 = vmatprep.subr.mxu0 0.0
    %1297 = vmatpush1.msra.mxu0 0.0
    %1298 = vmatprep.subr.mxu0 0.0
    %1299 = vmatpush1.msra.mxu0 0.0
    %1300 = vmatprep.subr.mxu0 0.0
    %1301 = vmatpush1.msra.mxu0 0.0
    %1302 = vmatprep.subr.mxu0 0.0
    %1303 = vmatpush1.msra.mxu0 0.0
    %1304 = vmatprep.subr.mxu0 0.0
    %1305 = vmatpush1.msra.mxu0 0.0
    %1306 = vmatprep.subr.mxu0 0.0
    %1307 = vmatpush1.msra.mxu0 0.0
    %1308 = vmatprep.mubr.f32.mxu0 0.0
    %1309 = vmatmul.mubr.f32.gmra.mrb[0].mxu0 %v1239
    %v1310 = vpop.f32.mrb[0].mxu0
    %v1311 = vadd.f32 0.0, %v1310
    %v1312 = vpop.f32.mrb[0].mxu0
    %1313 = vmatprep.mubr.f32.mxu0 0.0
    %1314 = vmatmul.mubr.f32.gmra.mrb[0].mxu0 %v1242
    %v1315 = vpop.f32.mrb[0].mxu0
    %v1316 = vadd.f32 0.0, %v1315
    %v1317 = vpop.f32.mrb[0].mxu0
    %1318 = vdwg.mxu0
    %s1319 = scalar_lea.vmem [#allocation17], 4
    %v1320 = vld [vmem:[%s1319] sm:$0xf]
    %v1321 = vpack.c.bf16 %v1316, %v1311
    %v1323 = vsel %vm730, %v1321, 0
    %vm1325 = vcmask 1043456
    %v1327 = vsel %vm1325, %v1320, 0
    %1329 = vmatprep.subr.bf16.mxu0 0
    %1330 = vmatpush1.bf16.msra.mxu0 %v1327
    %1331 = vmatprep.subr.bf16.mxu0 0
    %1332 = vmatpush1.bf16.msra.mxu0 0
    %1333 = vmatprep.subr.bf16.mxu0 0
    %1334 = vmatpush1.bf16.msra.mxu0 0
    %1335 = vmatprep.subr.bf16.mxu0 0
    %1336 = vmatpush1.bf16.msra.mxu0 0
    %1337 = vmatprep.subr.bf16.mxu0 0
    %1338 = vmatpush1.bf16.msra.mxu0 0
    %1339 = vmatprep.subr.bf16.mxu0 0
    %1340 = vmatpush1.bf16.msra.mxu0 0
    %1341 = vmatprep.subr.bf16.mxu0 0
    %1342 = vmatpush1.bf16.msra.mxu0 0
    %1343 = vmatprep.subr.bf16.mxu0 0
    %1344 = vmatpush1.bf16.msra.mxu0 0
    %1345 = vmatprep.subr.bf16.mxu0 0
    %1346 = vmatpush1.bf16.msra.mxu0 0
    %1347 = vmatprep.subr.bf16.mxu0 0
    %1348 = vmatpush1.bf16.msra.mxu0 0
    %1349 = vmatprep.subr.bf16.mxu0 0
    %1350 = vmatpush1.bf16.msra.mxu0 0
    %1351 = vmatprep.subr.bf16.mxu0 0
    %1352 = vmatpush1.bf16.msra.mxu0 0
    %1353 = vmatprep.subr.bf16.mxu0 0
    %1354 = vmatpush1.bf16.msra.mxu0 0
    %1355 = vmatprep.subr.bf16.mxu0 0
    %1356 = vmatpush1.bf16.msra.mxu0 0
    %1357 = vmatprep.subr.bf16.mxu0 0
    %1358 = vmatpush1.bf16.msra.mxu0 0
    %1359 = vmatprep.subr.bf16.mxu0 0
    %1360 = vmatpush1.bf16.msra.mxu0 0
    %1361 = vmatprep.mubr.bf16.mxu0 0
    %1362 = vmatmul.mubr.bf16.gmra.mrb[0].mxu0 %v1323
    %v1363 = vpop.f32.mrb[0].mxu0
    %v1364 = vadd.f32 0.0, %v1363
    %v1365 = vpop.f32.mrb[0].mxu0
    %v1366 = vpop.f32.mrb[0].mxu0
    %v1367 = vadd.f32 0.0, %v1366
    %v1368 = vpop.f32.mrb[0].mxu0
    %1369 = vdwg.mxu0
    %v1371 = vsel %vm730, %v926, 0
    %v1374 = vsel %vm1325, %v925, 0
    %1376 = vmatprep.subr.bf16.mxu0 0
    %1377 = vmatpush1.bf16.msra.mxu0 %v1374
    %1378 = vmatprep.subr.bf16.mxu0 0
    %1379 = vmatpush1.bf16.msra.mxu0 0
    %1380 = vmatprep.subr.bf16.mxu0 0
    %1381 = vmatpush1.bf16.msra.mxu0 0
    %1382 = vmatprep.subr.bf16.mxu0 0
    %1383 = vmatpush1.bf16.msra.mxu0 0
    %1384 = vmatprep.subr.bf16.mxu0 0
    %1385 = vmatpush1.bf16.msra.mxu0 0
    %1386 = vmatprep.subr.bf16.mxu0 0
    %1387 = vmatpush1.bf16.msra.mxu0 0
    %1388 = vmatprep.subr.bf16.mxu0 0
    %1389 = vmatpush1.bf16.msra.mxu0 0
    %1390 = vmatprep.subr.bf16.mxu0 0
    %1391 = vmatpush1.bf16.msra.mxu0 0
    %1392 = vmatprep.subr.bf16.mxu0 0
    %1393 = vmatpush1.bf16.msra.mxu0 0
    %1394 = vmatprep.subr.bf16.mxu0 0
    %1395 = vmatpush1.bf16.msra.mxu0 0
    %1396 = vmatprep.subr.bf16.mxu0 0
    %1397 = vmatpush1.bf16.msra.mxu0 0
    %1398 = vmatprep.subr.bf16.mxu0 0
    %1399 = vmatpush1.bf16.msra.mxu0 0
    %1400 = vmatprep.subr.bf16.mxu0 0
    %1401 = vmatpush1.bf16.msra.mxu0 0
    %1402 = vmatprep.subr.bf16.mxu0 0
    %1403 = vmatpush1.bf16.msra.mxu0 0
    %1404 = vmatprep.subr.bf16.mxu0 0
    %1405 = vmatpush1.bf16.msra.mxu0 0
    %1406 = vmatprep.subr.bf16.mxu0 0
    %1407 = vmatpush1.bf16.msra.mxu0 0
    %1408 = vmatprep.mubr.bf16.mxu0 0
    %1409 = vmatmul.mubr.bf16.gmra.mrb[0].mxu0 %v1371
    %v1410 = vpop.f32.mrb[0].mxu0
    %v1411 = vadd.f32 %v1364, %v1410
    %v1412 = vpop.f32.mrb[0].mxu0
    %v1413 = vpop.f32.mrb[0].mxu0
    %v1414 = vadd.f32 %v1367, %v1413
    %v1415 = vpop.f32.mrb[0].mxu0
    %1416 = vdwg.mxu0
    %s1417 = scalar_lea.vmem %s6, 32
    %v1418 = vld [vmem:[%s1417] sm:$0xf]
    %v1419 = vld [vmem:[%s1417 + $0x4] sm:$0xf]
    %v1420 = vld [vmem:[%s1417 + $0x8] sm:$0xf]
    %v1421 = vld [vmem:[%s1417 + $0xc] sm:$0xf]
    %s1422 = scalar_lea.vmem [#allocation15], 2
    %v1423 = vld [vmem:[%s1422] sm:$0x1]
    %v1425 = vlaneseq
    %v1426 = vshrl.u32 %v1425, 7
    %v1427 = vsub.s32 0, %v1426
    %v1428 = vrot.slane %v1423, %v1427
    %v1434 = vunpack.c.l.b16 %v1418
    %v1435 = vunpack.c.l.b16 %v1419
    %v1436 = vunpack.c.l.b16 %v1420
    %v1437 = vunpack.c.l.b16 %v1421
    %v1438 = vpack.c.b16 %v1435, %v1434
    %v1439 = vpack.c.b16 %v1437, %v1436
    %1442 = vmatprep.subr.bf16.mxu0 0
    %1443 = vmatpush1.bf16.msra.mxu0 %v1438
    %1444 = vmatprep.subr.bf16.mxu0 0
    %1445 = vmatpush1.bf16.msra.mxu0 %v1439
    %1446 = vmatprep.subr.bf16.mxu0 0
    %1447 = vmatpush1.bf16.msra.mxu0 0
    %1448 = vmatprep.subr.bf16.mxu0 0
    %1449 = vmatpush1.bf16.msra.mxu0 0
    %1450 = vmatprep.subr.bf16.mxu0 0
    %1451 = vmatpush1.bf16.msra.mxu0 0
    %1452 = vmatprep.subr.bf16.mxu0 0
    %1453 = vmatpush1.bf16.msra.mxu0 0
    %1454 = vmatprep.subr.bf16.mxu0 0
    %1455 = vmatpush1.bf16.msra.mxu0 0
    %1456 = vmatprep.subr.bf16.mxu0 0
    %1457 = vmatpush1.bf16.msra.mxu0 0
    %1458 = vmatprep.subr.bf16.mxu0 0
    %1459 = vmatpush1.bf16.msra.mxu0 0
    %1460 = vmatprep.subr.bf16.mxu0 0
    %1461 = vmatpush1.bf16.msra.mxu0 0
    %1462 = vmatprep.subr.bf16.mxu0 0
    %1463 = vmatpush1.bf16.msra.mxu0 0
    %1464 = vmatprep.subr.bf16.mxu0 0
    %1465 = vmatpush1.bf16.msra.mxu0 0
    %1466 = vmatprep.subr.bf16.mxu0 0
    %1467 = vmatpush1.bf16.msra.mxu0 0
    %1468 = vmatprep.subr.bf16.mxu0 0
    %1469 = vmatpush1.bf16.msra.mxu0 0
    %1470 = vmatprep.subr.bf16.mxu0 0
    %1471 = vmatpush1.bf16.msra.mxu0 0
    %1472 = vmatprep.subr.bf16.mxu0 0
    %1473 = vmatpush1.bf16.msra.mxu0 0
    %1474 = vmatprep.mubr.bf16.mxu0 0
    %1475 = vmatmul.mubr.bf16.gmra.mrb[0].mxu0 %v559
    %v1476 = vpop.f32.mrb[0].mxu0
    %v1477 = vadd.f32 %v1428, %v1476
    %v1478 = vpop.f32.mrb[0].mxu0
    %v1479 = vpop.f32.mrb[0].mxu0
    %v1480 = vadd.f32 %v1428, %v1479
    %v1481 = vpop.f32.mrb[0].mxu0
    %1482 = vdwg.mxu0
    %s1483 = scalar_lea.vmem %s7, 32
    %v1484 = vld [vmem:[%s1483] sm:$0xf]
    %v1485 = vld [vmem:[%s1483 + $0x4] sm:$0xf]
    %v1486 = vld [vmem:[%s1483 + $0x8] sm:$0xf]
    %v1487 = vld [vmem:[%s1483 + $0xc] sm:$0xf]
    %s1488 = scalar_lea.vmem %s10, 2
    %v1489 = vld [vmem:[%s1488] sm:$0x1]
    %v1491 = vlaneseq
    %v1492 = vshrl.u32 %v1491, 7
    %v1493 = vsub.s32 0, %v1492
    %v1494 = vrot.slane %v1489, %v1493
    %v1500 = vunpack.c.l.b16 %v1484
    %v1501 = vunpack.c.l.b16 %v1485
    %v1502 = vunpack.c.l.b16 %v1486
    %v1503 = vunpack.c.l.b16 %v1487
    %v1504 = vpack.c.b16 %v1501, %v1500
    %v1505 = vpack.c.b16 %v1503, %v1502
    %1508 = vmatprep.subr.bf16.mxu0 0
    %1509 = vmatpush1.bf16.msra.mxu0 %v1504
    %1510 = vmatprep.subr.bf16.mxu0 0
    %1511 = vmatpush1.bf16.msra.mxu0 %v1505
    %1512 = vmatprep.subr.bf16.mxu0 0
    %1513 = vmatpush1.bf16.msra.mxu0 0
    %1514 = vmatprep.subr.bf16.mxu0 0
    %1515 = vmatpush1.bf16.msra.mxu0 0
    %1516 = vmatprep.subr.bf16.mxu0 0
    %1517 = vmatpush1.bf16.msra.mxu0 0
    %1518 = vmatprep.subr.bf16.mxu0 0
    %1519 = vmatpush1.bf16.msra.mxu0 0
    %1520 = vmatprep.subr.bf16.mxu0 0
    %1521 = vmatpush1.bf16.msra.mxu0 0
    %1522 = vmatprep.subr.bf16.mxu0 0
    %1523 = vmatpush1.bf16.msra.mxu0 0
    %1524 = vmatprep.subr.bf16.mxu0 0
    %1525 = vmatpush1.bf16.msra.mxu0 0
    %1526 = vmatprep.subr.bf16.mxu0 0
    %1527 = vmatpush1.bf16.msra.mxu0 0
    %1528 = vmatprep.subr.bf16.mxu0 0
    %1529 = vmatpush1.bf16.msra.mxu0 0
    %1530 = vmatprep.subr.bf16.mxu0 0
    %1531 = vmatpush1.bf16.msra.mxu0 0
    %1532 = vmatprep.subr.bf16.mxu0 0
    %1533 = vmatpush1.bf16.msra.mxu0 0
    %1534 = vmatprep.subr.bf16.mxu0 0
    %1535 = vmatpush1.bf16.msra.mxu0 0
    %1536 = vmatprep.subr.bf16.mxu0 0
    %1537 = vmatpush1.bf16.msra.mxu0 0
    %1538 = vmatprep.subr.bf16.mxu0 0
    %1539 = vmatpush1.bf16.msra.mxu0 0
    %1540 = vmatprep.mubr.bf16.mxu0 0
    %1541 = vmatmul.mubr.bf16.gmra.mrb[0].mxu0 %v559
    %v1542 = vpop.f32.mrb[0].mxu0
    %v1543 = vadd.f32 %v1494, %v1542
    %v1544 = vpop.f32.mrb[0].mxu0
    %v1545 = vpop.f32.mrb[0].mxu0
    %v1546 = vadd.f32 %v1494, %v1545
    %v1547 = vpop.f32.mrb[0].mxu0
    %1548 = vdwg.mxu0
    %s1549 = scalar_lea.vmem %s8, 32
    %v1550 = vld [vmem:[%s1549] sm:$0xf]
    %v1551 = vld [vmem:[%s1549 + $0x4] sm:$0xf]
    %v1552 = vld [vmem:[%s1549 + $0x8] sm:$0xf]
    %v1553 = vld [vmem:[%s1549 + $0xc] sm:$0xf]
    %s1554 = scalar_lea.vmem %s11, 2
    %v1555 = vld [vmem:[%s1554] sm:$0x1]
    %v1557 = vlaneseq
    %v1558 = vshrl.u32 %v1557, 7
    %v1559 = vsub.s32 0, %v1558
    %v1560 = vrot.slane %v1555, %v1559
    %v1566 = vunpack.c.l.b16 %v1550
    %v1567 = vunpack.c.l.b16 %v1551
    %v1568 = vunpack.c.l.b16 %v1552
    %v1569 = vunpack.c.l.b16 %v1553
    %v1570 = vpack.c.b16 %v1567, %v1566
    %v1571 = vpack.c.b16 %v1569, %v1568
    %1574 = vmatprep.subr.bf16.mxu0 0
    %1575 = vmatpush1.bf16.msra.mxu0 %v1570
    %1576 = vmatprep.subr.bf16.mxu0 0
    %1577 = vmatpush1.bf16.msra.mxu0 %v1571
    %1578 = vmatprep.subr.bf16.mxu0 0
    %1579 = vmatpush1.bf16.msra.mxu0 0
    %1580 = vmatprep.subr.bf16.mxu0 0
    %1581 = vmatpush1.bf16.msra.mxu0 0
    %1582 = vmatprep.subr.bf16.mxu0 0
    %1583 = vmatpush1.bf16.msra.mxu0 0
    %1584 = vmatprep.subr.bf16.mxu0 0
    %1585 = vmatpush1.bf16.msra.mxu0 0
    %1586 = vmatprep.subr.bf16.mxu0 0
    %1587 = vmatpush1.bf16.msra.mxu0 0
    %1588 = vmatprep.subr.bf16.mxu0 0
    %1589 = vmatpush1.bf16.msra.mxu0 0
    %1590 = vmatprep.subr.bf16.mxu0 0
    %1591 = vmatpush1.bf16.msra.mxu0 0
    %1592 = vmatprep.subr.bf16.mxu0 0
    %1593 = vmatpush1.bf16.msra.mxu0 0
    %1594 = vmatprep.subr.bf16.mxu0 0
    %1595 = vmatpush1.bf16.msra.mxu0 0
    %1596 = vmatprep.subr.bf16.mxu0 0
    %1597 = vmatpush1.bf16.msra.mxu0 0
    %1598 = vmatprep.subr.bf16.mxu0 0
    %1599 = vmatpush1.bf16.msra.mxu0 0
    %1600 = vmatprep.subr.bf16.mxu0 0
    %1601 = vmatpush1.bf16.msra.mxu0 0
    %1602 = vmatprep.subr.bf16.mxu0 0
    %1603 = vmatpush1.bf16.msra.mxu0 0
    %1604 = vmatprep.subr.bf16.mxu0 0
    %1605 = vmatpush1.bf16.msra.mxu0 0
    %1606 = vmatprep.mubr.bf16.mxu0 0
    %1607 = vmatmul.mubr.bf16.gmra.mrb[0].mxu0 %v559
    %v1608 = vpop.f32.mrb[0].mxu0
    %v1609 = vadd.f32 %v1560, %v1608
    %v1610 = vpop.f32.mrb[0].mxu0
    %v1611 = vpop.f32.mrb[0].mxu0
    %v1612 = vadd.f32 %v1560, %v1611
    %v1613 = vpop.f32.mrb[0].mxu0
    %1614 = vdwg.mxu0
    %v1616 = vsel %vm730, %v1477, 0
    %v1619 = vsel %vm730, %v1480, 0
    %v1622 = vsel %vm730, %v1543, 0
    %v1625 = vsel %vm730, %v1546, 0
    %1627 = vmatprep.subr.mxu0 0.0
    %1628 = vmatpush1.xpose.msra.mxu0 %v1622
    %1629 = vmatprep.subr.mxu0 0.0
    %1630 = vmatpush1.xpose.msra.mxu0 %v1625
    %1631 = vmatprep.subr.mxu0 0.0
    %1632 = vmatpush1.xpose.msra.mxu0 0.0
    %1633 = vmatprep.subr.mxu0 0.0
    %1634 = vmatpush1.xpose.msra.mxu0 0.0
    %1635 = vmatprep.subr.mxu0 0.0
    %1636 = vmatpush1.xpose.msra.mxu0 0.0
    %1637 = vmatprep.subr.mxu0 0.0
    %1638 = vmatpush1.xpose.msra.mxu0 0.0
    %1639 = vmatprep.subr.mxu0 0.0
    %1640 = vmatpush1.xpose.msra.mxu0 0.0
    %1641 = vmatprep.subr.mxu0 0.0
    %1642 = vmatpush1.xpose.msra.mxu0 0.0
    %1643 = vmatprep.subr.mxu0 0.0
    %1644 = vmatpush1.xpose.msra.mxu0 0.0
    %1645 = vmatprep.subr.mxu0 0.0
    %1646 = vmatpush1.xpose.msra.mxu0 0.0
    %1647 = vmatprep.subr.mxu0 0.0
    %1648 = vmatpush1.xpose.msra.mxu0 0.0
    %1649 = vmatprep.subr.mxu0 0.0
    %1650 = vmatpush1.xpose.msra.mxu0 0.0
    %1651 = vmatprep.subr.mxu0 0.0
    %1652 = vmatpush1.xpose.msra.mxu0 0.0
    %1653 = vmatprep.subr.mxu0 0.0
    %1654 = vmatpush1.xpose.msra.mxu0 0.0
    %1655 = vmatprep.subr.mxu0 0.0
    %1656 = vmatpush1.xpose.msra.mxu0 0.0
    %1657 = vmatprep.subr.mxu0 0.0
    %1658 = vmatpush1.xpose.msra.mxu0 0.0
    %1659 = vmatprep.subr.mxu0 0.0
    %1660 = vmatpush1.xpose.msra.mxu0 0.0
    %1661 = vmatprep.subr.mxu0 0.0
    %1662 = vmatpush1.xpose.msra.mxu0 0.0
    %1663 = vmatprep.subr.mxu0 0.0
    %1664 = vmatpush1.xpose.msra.mxu0 0.0
    %1665 = vmatprep.subr.mxu0 0.0
    %1666 = vmatpush1.xpose.msra.mxu0 0.0
    %1667 = vmatprep.subr.mxu0 0.0
    %1668 = vmatpush1.xpose.msra.mxu0 0.0
    %1669 = vmatprep.subr.mxu0 0.0
    %1670 = vmatpush1.xpose.msra.mxu0 0.0
    %1671 = vmatprep.subr.mxu0 0.0
    %1672 = vmatpush1.xpose.msra.mxu0 0.0
    %1673 = vmatprep.subr.mxu0 0.0
    %1674 = vmatpush1.xpose.msra.mxu0 0.0
    %1675 = vmatprep.subr.mxu0 0.0
    %1676 = vmatpush1.xpose.msra.mxu0 0.0
    %1677 = vmatprep.subr.mxu0 0.0
    %1678 = vmatpush1.xpose.msra.mxu0 0.0
    %1679 = vmatprep.subr.mxu0 0.0
    %1680 = vmatpush1.xpose.msra.mxu0 0.0
    %1681 = vmatprep.subr.mxu0 0.0
    %1682 = vmatpush1.xpose.msra.mxu0 0.0
    %1683 = vmatprep.subr.mxu0 0.0
    %1684 = vmatpush1.xpose.msra.mxu0 0.0
    %1685 = vmatprep.subr.mxu0 0.0
    %1686 = vmatpush1.xpose.msra.mxu0 0.0
    %1687 = vmatprep.subr.mxu0 0.0
    %1688 = vmatpush1.xpose.msra.mxu0 0.0
    %1689 = vmatprep.subr.mxu0 0.0
    %1690 = vmatpush1.xpose.msra.mxu0 0.0
    %1691 = vmatprep.mubr.f32.mxu0 0.0
    %1692 = vmatmul.mubr.f32.gmra.mrb[0].mxu0 %v1616
    %v1693 = vpop.f32.mrb[0].mxu0
    %v1694 = vadd.f32 0.0, %v1693
    %v1695 = vpop.f32.mrb[0].mxu0
    %1696 = vmatprep.mubr.f32.mxu0 0.0
    %1697 = vmatmul.mubr.f32.gmra.mrb[0].mxu0 %v1619
    %v1698 = vpop.f32.mrb[0].mxu0
    %v1699 = vadd.f32 0.0, %v1698
    %v1700 = vpop.f32.mrb[0].mxu0
    %1701 = vdwg.mxu0
    %v1702 = vmul.f32 %v1694, 0.35355338
    %v1703 = vmul.f32 %v1699, 0.35355338
    %v1704 = vadd.f32 %v1702, %v533
    %v1705 = vadd.f32 %v1703, %v534
    %v1706 = vsel %vm236, %v1704, -inf
    %1707 = vmax.xlane.f32.xlu0 %v1706
    %v1708 = vpop.xlane.xlu0 %1707
    %v1709 = vsel %vm236, %v1705, -inf
    %1710 = vmax.xlane.f32.xlu0 %v1709
    %v1711 = vpop.xlane.xlu0 %1710
    %v1712 = vsub.f32 %v1704, %v1708
    %v1713 = vsub.f32 %v1705, %v1711
    %v1714 = vmul.f32 %v1712, 1.442695
    %v1715 = vpow.pop %v1714
    %v1716 = vmul.f32 %v1713, 1.442695
    %v1717 = vpow.pop %v1716
    %v1718 = vsel %vm236, %v1715, 0.0
    %1719 = vadd.xlane.f32.xlu0 %v1718
    %v1720 = vpop.xlane.xlu0 %1719
    %v1721 = vsel %vm236, %v1717, 0.0
    %1722 = vadd.xlane.f32.xlu0 %v1721
    %v1723 = vpop.xlane.xlu0 %1722
    %v1724 = vrcp.pop %v1720
    %v1725 = vrcp.pop %v1723
    %v1726 = vmul.f32 %v1715, %v1724
    %v1727 = vmul.f32 %v1717, %v1725
    %v1729 = vsel %vm236, %v1726, 0
    %v1732 = vsel %vm236, %v1727, 0
    %1734 = vmatprep.subr.mxu0 0.0
    %1735 = vmatpush1.msra.mxu0 %v1609
    %1736 = vmatprep.subr.mxu0 0.0
    %1737 = vmatpush1.msra.mxu0 %v1612
    %1738 = vmatprep.subr.mxu0 0.0
    %1739 = vmatpush1.msra.mxu0 0.0
    %1740 = vmatprep.subr.mxu0 0.0
    %1741 = vmatpush1.msra.mxu0 0.0
    %1742 = vmatprep.subr.mxu0 0.0
    %1743 = vmatpush1.msra.mxu0 0.0
    %1744 = vmatprep.subr.mxu0 0.0
    %1745 = vmatpush1.msra.mxu0 0.0
    %1746 = vmatprep.subr.mxu0 0.0
    %1747 = vmatpush1.msra.mxu0 0.0
    %1748 = vmatprep.subr.mxu0 0.0
    %1749 = vmatpush1.msra.mxu0 0.0
    %1750 = vmatprep.subr.mxu0 0.0
    %1751 = vmatpush1.msra.mxu0 0.0
    %1752 = vmatprep.subr.mxu0 0.0
    %1753 = vmatpush1.msra.mxu0 0.0
    %1754 = vmatprep.subr.mxu0 0.0
    %1755 = vmatpush1.msra.mxu0 0.0
    %1756 = vmatprep.subr.mxu0 0.0
    %1757 = vmatpush1.msra.mxu0 0.0
    %1758 = vmatprep.subr.mxu0 0.0
    %1759 = vmatpush1.msra.mxu0 0.0
    %1760 = vmatprep.subr.mxu0 0.0
    %1761 = vmatpush1.msra.mxu0 0.0
    %1762 = vmatprep.subr.mxu0 0.0
    %1763 = vmatpush1.msra.mxu0 0.0
    %1764 = vmatprep.subr.mxu0 0.0
    %1765 = vmatpush1.msra.mxu0 0.0
    %1766 = vmatprep.subr.mxu0 0.0
    %1767 = vmatpush1.msra.mxu0 0.0
    %1768 = vmatprep.subr.mxu0 0.0
    %1769 = vmatpush1.msra.mxu0 0.0
    %1770 = vmatprep.subr.mxu0 0.0
    %1771 = vmatpush1.msra.mxu0 0.0
    %1772 = vmatprep.subr.mxu0 0.0
    %1773 = vmatpush1.msra.mxu0 0.0
    %1774 = vmatprep.subr.mxu0 0.0
    %1775 = vmatpush1.msra.mxu0 0.0
    %1776 = vmatprep.subr.mxu0 0.0
    %1777 = vmatpush1.msra.mxu0 0.0
    %1778 = vmatprep.subr.mxu0 0.0
    %1779 = vmatpush1.msra.mxu0 0.0
    %1780 = vmatprep.subr.mxu0 0.0
    %1781 = vmatpush1.msra.mxu0 0.0
    %1782 = vmatprep.subr.mxu0 0.0
    %1783 = vmatpush1.msra.mxu0 0.0
    %1784 = vmatprep.subr.mxu0 0.0
    %1785 = vmatpush1.msra.mxu0 0.0
    %1786 = vmatprep.subr.mxu0 0.0
    %1787 = vmatpush1.msra.mxu0 0.0
    %1788 = vmatprep.subr.mxu0 0.0
    %1789 = vmatpush1.msra.mxu0 0.0
    %1790 = vmatprep.subr.mxu0 0.0
    %1791 = vmatpush1.msra.mxu0 0.0
    %1792 = vmatprep.subr.mxu0 0.0
    %1793 = vmatpush1.msra.mxu0 0.0
    %1794 = vmatprep.subr.mxu0 0.0
    %1795 = vmatpush1.msra.mxu0 0.0
    %1796 = vmatprep.subr.mxu0 0.0
    %1797 = vmatpush1.msra.mxu0 0.0
    %1798 = vmatprep.mubr.f32.mxu0 0.0
    %1799 = vmatmul.mubr.f32.gmra.mrb[0].mxu0 %v1729
    %v1800 = vpop.f32.mrb[0].mxu0
    %v1801 = vadd.f32 0.0, %v1800
    %v1802 = vpop.f32.mrb[0].mxu0
    %1803 = vmatprep.mubr.f32.mxu0 0.0
    %1804 = vmatmul.mubr.f32.gmra.mrb[0].mxu0 %v1732
    %v1805 = vpop.f32.mrb[0].mxu0
    %v1806 = vadd.f32 0.0, %v1805
    %v1807 = vpop.f32.mrb[0].mxu0
    %1808 = vdwg.mxu0
    %s1809 = scalar_lea.vmem [#allocation17], 8
    %v1810 = vld [vmem:[%s1809] sm:$0xf]
    %v1811 = vpack.c.bf16 %v1806, %v1801
    %v1813 = vsel %vm730, %v1811, 0
    %v1816 = vsel %vm1325, %v1810, 0
    %1818 = vmatprep.subr.bf16.mxu0 0
    %1819 = vmatpush1.bf16.msra.mxu0 %v1816
    %1820 = vmatprep.subr.bf16.mxu0 0
    %1821 = vmatpush1.bf16.msra.mxu0 0
    %1822 = vmatprep.subr.bf16.mxu0 0
    %1823 = vmatpush1.bf16.msra.mxu0 0
    %1824 = vmatprep.subr.bf16.mxu0 0
    %1825 = vmatpush1.bf16.msra.mxu0 0
    %1826 = vmatprep.subr.bf16.mxu0 0
    %1827 = vmatpush1.bf16.msra.mxu0 0
    %1828 = vmatprep.subr.bf16.mxu0 0
    %1829 = vmatpush1.bf16.msra.mxu0 0
    %1830 = vmatprep.subr.bf16.mxu0 0
    %1831 = vmatpush1.bf16.msra.mxu0 0
    %1832 = vmatprep.subr.bf16.mxu0 0
    %1833 = vmatpush1.bf16.msra.mxu0 0
    %1834 = vmatprep.subr.bf16.mxu0 0
    %1835 = vmatpush1.bf16.msra.mxu0 0
    %1836 = vmatprep.subr.bf16.mxu0 0
    %1837 = vmatpush1.bf16.msra.mxu0 0
    %1838 = vmatprep.subr.bf16.mxu0 0
    %1839 = vmatpush1.bf16.msra.mxu0 0
    %1840 = vmatprep.subr.bf16.mxu0 0
    %1841 = vmatpush1.bf16.msra.mxu0 0
    %1842 = vmatprep.subr.bf16.mxu0 0
    %1843 = vmatpush1.bf16.msra.mxu0 0
    %1844 = vmatprep.subr.bf16.mxu0 0
    %1845 = vmatpush1.bf16.msra.mxu0 0
    %1846 = vmatprep.subr.bf16.mxu0 0
    %1847 = vmatpush1.bf16.msra.mxu0 0
    %1848 = vmatprep.subr.bf16.mxu0 0
    %1849 = vmatpush1.bf16.msra.mxu0 0
    %1850 = vmatprep.mubr.bf16.mxu0 0
    %1851 = vmatmul.mubr.bf16.gmra.mrb[0].mxu0 %v1813
    %v1852 = vpop.f32.mrb[0].mxu0
    %v1853 = vadd.f32 0.0, %v1852
    %v1854 = vpop.f32.mrb[0].mxu0
    %v1855 = vpop.f32.mrb[0].mxu0
    %v1856 = vadd.f32 0.0, %v1855
    %v1857 = vpop.f32.mrb[0].mxu0
    %1858 = vdwg.mxu0
    %v1859 = vadd.f32 %v1411, %v1853
    %v1860 = vadd.f32 %v1414, %v1856
    %s1861 = scalar_lea.vmem %s6, 48
    %v1862 = vld [vmem:[%s1861] sm:$0xf]
    %v1863 = vld [vmem:[%s1861 + $0x4] sm:$0xf]
    %v1864 = vld [vmem:[%s1861 + $0x8] sm:$0xf]
    %v1865 = vld [vmem:[%s1861 + $0xc] sm:$0xf]
    %s1866 = scalar_lea.vmem [#allocation15], 3
    %v1867 = vld [vmem:[%s1866] sm:$0x1]
    %v1869 = vlaneseq
    %v1870 = vshrl.u32 %v1869, 7
    %v1871 = vsub.s32 0, %v1870
    %v1872 = vrot.slane %v1867, %v1871
    %v1878 = vunpack.c.l.b16 %v1862
    %v1879 = vunpack.c.l.b16 %v1863
    %v1880 = vunpack.c.l.b16 %v1864
    %v1881 = vunpack.c.l.b16 %v1865
    %v1882 = vpack.c.b16 %v1879, %v1878
    %v1883 = vpack.c.b16 %v1881, %v1880
    %1886 = vmatprep.subr.bf16.mxu0 0
    %1887 = vmatpush1.bf16.msra.mxu0 %v1882
    %1888 = vmatprep.subr.bf16.mxu0 0
    %1889 = vmatpush1.bf16.msra.mxu0 %v1883
    %1890 = vmatprep.subr.bf16.mxu0 0
    %1891 = vmatpush1.bf16.msra.mxu0 0
    %1892 = vmatprep.subr.bf16.mxu0 0
    %1893 = vmatpush1.bf16.msra.mxu0 0
    %1894 = vmatprep.subr.bf16.mxu0 0
    %1895 = vmatpush1.bf16.msra.mxu0 0
    %1896 = vmatprep.subr.bf16.mxu0 0
    %1897 = vmatpush1.bf16.msra.mxu0 0
    %1898 = vmatprep.subr.bf16.mxu0 0
    %1899 = vmatpush1.bf16.msra.mxu0 0
    %1900 = vmatprep.subr.bf16.mxu0 0
    %1901 = vmatpush1.bf16.msra.mxu0 0
    %1902 = vmatprep.subr.bf16.mxu0 0
    %1903 = vmatpush1.bf16.msra.mxu0 0
    %1904 = vmatprep.subr.bf16.mxu0 0
    %1905 = vmatpush1.bf16.msra.mxu0 0
    %1906 = vmatprep.subr.bf16.mxu0 0
    %1907 = vmatpush1.bf16.msra.mxu0 0
    %1908 = vmatprep.subr.bf16.mxu0 0
    %1909 = vmatpush1.bf16.msra.mxu0 0
    %1910 = vmatprep.subr.bf16.mxu0 0
    %1911 = vmatpush1.bf16.msra.mxu0 0
    %1912 = vmatprep.subr.bf16.mxu0 0
    %1913 = vmatpush1.bf16.msra.mxu0 0
    %1914 = vmatprep.subr.bf16.mxu0 0
    %1915 = vmatpush1.bf16.msra.mxu0 0
    %1916 = vmatprep.subr.bf16.mxu0 0
    %1917 = vmatpush1.bf16.msra.mxu0 0
    %1918 = vmatprep.mubr.bf16.mxu0 0
    %1919 = vmatmul.mubr.bf16.gmra.mrb[0].mxu0 %v559
    %v1920 = vpop.f32.mrb[0].mxu0
    %v1921 = vadd.f32 %v1872, %v1920
    %v1922 = vpop.f32.mrb[0].mxu0
    %v1923 = vpop.f32.mrb[0].mxu0
    %v1924 = vadd.f32 %v1872, %v1923
    %v1925 = vpop.f32.mrb[0].mxu0
    %1926 = vdwg.mxu0
    %s1927 = scalar_lea.vmem %s7, 48
    %v1928 = vld [vmem:[%s1927] sm:$0xf]
    %v1929 = vld [vmem:[%s1927 + $0x4] sm:$0xf]
    %v1930 = vld [vmem:[%s1927 + $0x8] sm:$0xf]
    %v1931 = vld [vmem:[%s1927 + $0xc] sm:$0xf]
    %s1932 = scalar_lea.vmem %s10, 3
    %v1933 = vld [vmem:[%s1932] sm:$0x1]
    %v1935 = vlaneseq
    %v1936 = vshrl.u32 %v1935, 7
    %v1937 = vsub.s32 0, %v1936
    %v1938 = vrot.slane %v1933, %v1937
    %v1944 = vunpack.c.l.b16 %v1928
    %v1945 = vunpack.c.l.b16 %v1929
    %v1946 = vunpack.c.l.b16 %v1930
    %v1947 = vunpack.c.l.b16 %v1931
    %v1948 = vpack.c.b16 %v1945, %v1944
    %v1949 = vpack.c.b16 %v1947, %v1946
    %1952 = vmatprep.subr.bf16.mxu0 0
    %1953 = vmatpush1.bf16.msra.mxu0 %v1948
    %1954 = vmatprep.subr.bf16.mxu0 0
    %1955 = vmatpush1.bf16.msra.mxu0 %v1949
    %1956 = vmatprep.subr.bf16.mxu0 0
    %1957 = vmatpush1.bf16.msra.mxu0 0
    %1958 = vmatprep.subr.bf16.mxu0 0
    %1959 = vmatpush1.bf16.msra.mxu0 0
    %1960 = vmatprep.subr.bf16.mxu0 0
    %1961 = vmatpush1.bf16.msra.mxu0 0
    %1962 = vmatprep.subr.bf16.mxu0 0
    %1963 = vmatpush1.bf16.msra.mxu0 0
    %1964 = vmatprep.subr.bf16.mxu0 0
    %1965 = vmatpush1.bf16.msra.mxu0 0
    %1966 = vmatprep.subr.bf16.mxu0 0
    %1967 = vmatpush1.bf16.msra.mxu0 0
    %1968 = vmatprep.subr.bf16.mxu0 0
    %1969 = vmatpush1.bf16.msra.mxu0 0
    %1970 = vmatprep.subr.bf16.mxu0 0
    %1971 = vmatpush1.bf16.msra.mxu0 0
    %1972 = vmatprep.subr.bf16.mxu0 0
    %1973 = vmatpush1.bf16.msra.mxu0 0
    %1974 = vmatprep.subr.bf16.mxu0 0
    %1975 = vmatpush1.bf16.msra.mxu0 0
    %1976 = vmatprep.subr.bf16.mxu0 0
    %1977 = vmatpush1.bf16.msra.mxu0 0
    %1978 = vmatprep.subr.bf16.mxu0 0
    %1979 = vmatpush1.bf16.msra.mxu0 0
    %1980 = vmatprep.subr.bf16.mxu0 0
    %1981 = vmatpush1.bf16.msra.mxu0 0
    %1982 = vmatprep.subr.bf16.mxu0 0
    %1983 = vmatpush1.bf16.msra.mxu0 0
    %1984 = vmatprep.mubr.bf16.mxu0 0
    %1985 = vmatmul.mubr.bf16.gmra.mrb[0].mxu0 %v559
    %v1986 = vpop.f32.mrb[0].mxu0
    %v1987 = vadd.f32 %v1938, %v1986
    %v1988 = vpop.f32.mrb[0].mxu0
    %v1989 = vpop.f32.mrb[0].mxu0
    %v1990 = vadd.f32 %v1938, %v1989
    %v1991 = vpop.f32.mrb[0].mxu0
    %1992 = vdwg.mxu0
    %s1993 = scalar_lea.vmem %s8, 48
    %v1994 = vld [vmem:[%s1993] sm:$0xf]
    %v1995 = vld [vmem:[%s1993 + $0x4] sm:$0xf]
    %v1996 = vld [vmem:[%s1993 + $0x8] sm:$0xf]
    %v1997 = vld [vmem:[%s1993 + $0xc] sm:$0xf]
    %s1998 = scalar_lea.vmem %s11, 3
    %v1999 = vld [vmem:[%s1998] sm:$0x1]
    %v2001 = vlaneseq
    %v2002 = vshrl.u32 %v2001, 7
    %v2003 = vsub.s32 0, %v2002
    %v2004 = vrot.slane %v1999, %v2003
    %v2010 = vunpack.c.l.b16 %v1994
    %v2011 = vunpack.c.l.b16 %v1995
    %v2012 = vunpack.c.l.b16 %v1996
    %v2013 = vunpack.c.l.b16 %v1997
    %v2014 = vpack.c.b16 %v2011, %v2010
    %v2015 = vpack.c.b16 %v2013, %v2012
    %2018 = vmatprep.subr.bf16.mxu0 0
    %2019 = vmatpush1.bf16.msra.mxu0 %v2014
    %2020 = vmatprep.subr.bf16.mxu0 0
    %2021 = vmatpush1.bf16.msra.mxu0 %v2015
    %2022 = vmatprep.subr.bf16.mxu0 0
    %2023 = vmatpush1.bf16.msra.mxu0 0
    %2024 = vmatprep.subr.bf16.mxu0 0
    %2025 = vmatpush1.bf16.msra.mxu0 0
    %2026 = vmatprep.subr.bf16.mxu0 0
    %2027 = vmatpush1.bf16.msra.mxu0 0
    %2028 = vmatprep.subr.bf16.mxu0 0
    %2029 = vmatpush1.bf16.msra.mxu0 0
    %2030 = vmatprep.subr.bf16.mxu0 0
    %2031 = vmatpush1.bf16.msra.mxu0 0
    %2032 = vmatprep.subr.bf16.mxu0 0
    %2033 = vmatpush1.bf16.msra.mxu0 0
    %2034 = vmatprep.subr.bf16.mxu0 0
    %2035 = vmatpush1.bf16.msra.mxu0 0
    %2036 = vmatprep.subr.bf16.mxu0 0
    %2037 = vmatpush1.bf16.msra.mxu0 0
    %2038 = vmatprep.subr.bf16.mxu0 0
    %2039 = vmatpush1.bf16.msra.mxu0 0
    %2040 = vmatprep.subr.bf16.mxu0 0
    %2041 = vmatpush1.bf16.msra.mxu0 0
    %2042 = vmatprep.subr.bf16.mxu0 0
    %2043 = vmatpush1.bf16.msra.mxu0 0
    %2044 = vmatprep.subr.bf16.mxu0 0
    %2045 = vmatpush1.bf16.msra.mxu0 0
    %2046 = vmatprep.subr.bf16.mxu0 0
    %2047 = vmatpush1.bf16.msra.mxu0 0
    %2048 = vmatprep.subr.bf16.mxu0 0
    %2049 = vmatpush1.bf16.msra.mxu0 0
    %2050 = vmatprep.mubr.bf16.mxu0 0
    %2051 = vmatmul.mubr.bf16.gmra.mrb[0].mxu0 %v559
    %v2052 = vpop.f32.mrb[0].mxu0
    %v2053 = vadd.f32 %v2004, %v2052
    %v2054 = vpop.f32.mrb[0].mxu0
    %v2055 = vpop.f32.mrb[0].mxu0
    %v2056 = vadd.f32 %v2004, %v2055
    %v2057 = vpop.f32.mrb[0].mxu0
    %2058 = vdwg.mxu0
    %v2060 = vsel %vm730, %v1921, 0
    %v2063 = vsel %vm730, %v1924, 0
    %v2066 = vsel %vm730, %v1987, 0
    %v2069 = vsel %vm730, %v1990, 0
    %2071 = vmatprep.subr.mxu0 0.0
    %2072 = vmatpush1.xpose.msra.mxu0 %v2066
    %2073 = vmatprep.subr.mxu0 0.0
    %2074 = vmatpush1.xpose.msra.mxu0 %v2069
    %2075 = vmatprep.subr.mxu0 0.0
    %2076 = vmatpush1.xpose.msra.mxu0 0.0
    %2077 = vmatprep.subr.mxu0 0.0
    %2078 = vmatpush1.xpose.msra.mxu0 0.0
    %2079 = vmatprep.subr.mxu0 0.0
    %2080 = vmatpush1.xpose.msra.mxu0 0.0
    %2081 = vmatprep.subr.mxu0 0.0
    %2082 = vmatpush1.xpose.msra.mxu0 0.0
    %2083 = vmatprep.subr.mxu0 0.0
    %2084 = vmatpush1.xpose.msra.mxu0 0.0
    %2085 = vmatprep.subr.mxu0 0.0
    %2086 = vmatpush1.xpose.msra.mxu0 0.0
    %2087 = vmatprep.subr.mxu0 0.0
    %2088 = vmatpush1.xpose.msra.mxu0 0.0
    %2089 = vmatprep.subr.mxu0 0.0
    %2090 = vmatpush1.xpose.msra.mxu0 0.0
    %2091 = vmatprep.subr.mxu0 0.0
    %2092 = vmatpush1.xpose.msra.mxu0 0.0
    %2093 = vmatprep.subr.mxu0 0.0
    %2094 = vmatpush1.xpose.msra.mxu0 0.0
    %2095 = vmatprep.subr.mxu0 0.0
    %2096 = vmatpush1.xpose.msra.mxu0 0.0
    %2097 = vmatprep.subr.mxu0 0.0
    %2098 = vmatpush1.xpose.msra.mxu0 0.0
    %2099 = vmatprep.subr.mxu0 0.0
    %2100 = vmatpush1.xpose.msra.mxu0 0.0
    %2101 = vmatprep.subr.mxu0 0.0
    %2102 = vmatpush1.xpose.msra.mxu0 0.0
    %2103 = vmatprep.subr.mxu0 0.0
    %2104 = vmatpush1.xpose.msra.mxu0 0.0
    %2105 = vmatprep.subr.mxu0 0.0
    %2106 = vmatpush1.xpose.msra.mxu0 0.0
    %2107 = vmatprep.subr.mxu0 0.0
    %2108 = vmatpush1.xpose.msra.mxu0 0.0
    %2109 = vmatprep.subr.mxu0 0.0
    %2110 = vmatpush1.xpose.msra.mxu0 0.0
    %2111 = vmatprep.subr.mxu0 0.0
    %2112 = vmatpush1.xpose.msra.mxu0 0.0
    %2113 = vmatprep.subr.mxu0 0.0
    %2114 = vmatpush1.xpose.msra.mxu0 0.0
    %2115 = vmatprep.subr.mxu0 0.0
    %2116 = vmatpush1.xpose.msra.mxu0 0.0
    %2117 = vmatprep.subr.mxu0 0.0
    %2118 = vmatpush1.xpose.msra.mxu0 0.0
    %2119 = vmatprep.subr.mxu0 0.0
    %2120 = vmatpush1.xpose.msra.mxu0 0.0
    %2121 = vmatprep.subr.mxu0 0.0
    %2122 = vmatpush1.xpose.msra.mxu0 0.0
    %2123 = vmatprep.subr.mxu0 0.0
    %2124 = vmatpush1.xpose.msra.mxu0 0.0
    %2125 = vmatprep.subr.mxu0 0.0
    %2126 = vmatpush1.xpose.msra.mxu0 0.0
    %2127 = vmatprep.subr.mxu0 0.0
    %2128 = vmatpush1.xpose.msra.mxu0 0.0
    %2129 = vmatprep.subr.mxu0 0.0
    %2130 = vmatpush1.xpose.msra.mxu0 0.0
    %2131 = vmatprep.subr.mxu0 0.0
    %2132 = vmatpush1.xpose.msra.mxu0 0.0
    %2133 = vmatprep.subr.mxu0 0.0
    %2134 = vmatpush1.xpose.msra.mxu0 0.0
    %2135 = vmatprep.mubr.f32.mxu0 0.0
    %2136 = vmatmul.mubr.f32.gmra.mrb[0].mxu0 %v2060
    %v2137 = vpop.f32.mrb[0].mxu0
    %v2138 = vadd.f32 0.0, %v2137
    %v2139 = vpop.f32.mrb[0].mxu0
    %2140 = vmatprep.mubr.f32.mxu0 0.0
    %2141 = vmatmul.mubr.f32.gmra.mrb[0].mxu0 %v2063
    %v2142 = vpop.f32.mrb[0].mxu0
    %v2143 = vadd.f32 0.0, %v2142
    %v2144 = vpop.f32.mrb[0].mxu0
    %2145 = vdwg.mxu0
    %v2146 = vmul.f32 %v2138, 0.35355338
    %v2147 = vmul.f32 %v2143, 0.35355338
    %v2148 = vadd.f32 %v2146, %v533
    %v2149 = vadd.f32 %v2147, %v534
    %v2150 = vsel %vm236, %v2148, -inf
    %2151 = vmax.xlane.f32.xlu0 %v2150
    %v2152 = vpop.xlane.xlu0 %2151
    %v2153 = vsel %vm236, %v2149, -inf
    %2154 = vmax.xlane.f32.xlu0 %v2153
    %v2155 = vpop.xlane.xlu0 %2154
    %v2156 = vsub.f32 %v2148, %v2152
    %v2157 = vsub.f32 %v2149, %v2155
    %v2158 = vmul.f32 %v2156, 1.442695
    %v2159 = vpow.pop %v2158
    %v2160 = vmul.f32 %v2157, 1.442695
    %v2161 = vpow.pop %v2160
    %v2162 = vsel %vm236, %v2159, 0.0
    %2163 = vadd.xlane.f32.xlu0 %v2162
    %v2164 = vpop.xlane.xlu0 %2163
    %v2165 = vsel %vm236, %v2161, 0.0
    %2166 = vadd.xlane.f32.xlu0 %v2165
    %v2167 = vpop.xlane.xlu0 %2166
    %v2168 = vrcp.pop %v2164
    %v2169 = vrcp.pop %v2167
    %v2170 = vmul.f32 %v2159, %v2168
    %v2171 = vmul.f32 %v2161, %v2169
    %v2173 = vsel %vm236, %v2170, 0
    %v2176 = vsel %vm236, %v2171, 0
    %2178 = vmatprep.subr.mxu0 0.0
    %2179 = vmatpush1.msra.mxu0 %v2053
    %2180 = vmatprep.subr.mxu0 0.0
    %2181 = vmatpush1.msra.mxu0 %v2056
    %2182 = vmatprep.subr.mxu0 0.0
    %2183 = vmatpush1.msra.mxu0 0.0
    %2184 = vmatprep.subr.mxu0 0.0
    %2185 = vmatpush1.msra.mxu0 0.0
    %2186 = vmatprep.subr.mxu0 0.0
    %2187 = vmatpush1.msra.mxu0 0.0
    %2188 = vmatprep.subr.mxu0 0.0
    %2189 = vmatpush1.msra.mxu0 0.0
    %2190 = vmatprep.subr.mxu0 0.0
    %2191 = vmatpush1.msra.mxu0 0.0
    %2192 = vmatprep.subr.mxu0 0.0
    %2193 = vmatpush1.msra.mxu0 0.0
    %2194 = vmatprep.subr.mxu0 0.0
    %2195 = vmatpush1.msra.mxu0 0.0
    %2196 = vmatprep.subr.mxu0 0.0
    %2197 = vmatpush1.msra.mxu0 0.0
    %2198 = vmatprep.subr.mxu0 0.0
    %2199 = vmatpush1.msra.mxu0 0.0
    %2200 = vmatprep.subr.mxu0 0.0
    %2201 = vmatpush1.msra.mxu0 0.0
    %2202 = vmatprep.subr.mxu0 0.0
    %2203 = vmatpush1.msra.mxu0 0.0
    %2204 = vmatprep.subr.mxu0 0.0
    %2205 = vmatpush1.msra.mxu0 0.0
    %2206 = vmatprep.subr.mxu0 0.0
    %2207 = vmatpush1.msra.mxu0 0.0
    %2208 = vmatprep.subr.mxu0 0.0
    %2209 = vmatpush1.msra.mxu0 0.0
    %2210 = vmatprep.subr.mxu0 0.0
    %2211 = vmatpush1.msra.mxu0 0.0
    %2212 = vmatprep.subr.mxu0 0.0
    %2213 = vmatpush1.msra.mxu0 0.0
    %2214 = vmatprep.subr.mxu0 0.0
    %2215 = vmatpush1.msra.mxu0 0.0
    %2216 = vmatprep.subr.mxu0 0.0
    %2217 = vmatpush1.msra.mxu0 0.0
    %2218 = vmatprep.subr.mxu0 0.0
    %2219 = vmatpush1.msra.mxu0 0.0
    %2220 = vmatprep.subr.mxu0 0.0
    %2221 = vmatpush1.msra.mxu0 0.0
    %2222 = vmatprep.subr.mxu0 0.0
    %2223 = vmatpush1.msra.mxu0 0.0
    %2224 = vmatprep.subr.mxu0 0.0
    %2225 = vmatpush1.msra.mxu0 0.0
    %2226 = vmatprep.subr.mxu0 0.0
    %2227 = vmatpush1.msra.mxu0 0.0
    %2228 = vmatprep.subr.mxu0 0.0
    %2229 = vmatpush1.msra.mxu0 0.0
    %2230 = vmatprep.subr.mxu0 0.0
    %2231 = vmatpush1.msra.mxu0 0.0
    %2232 = vmatprep.subr.mxu0 0.0
    %2233 = vmatpush1.msra.mxu0 0.0
    %2234 = vmatprep.subr.mxu0 0.0
    %2235 = vmatpush1.msra.mxu0 0.0
    %2236 = vmatprep.subr.mxu0 0.0
    %2237 = vmatpush1.msra.mxu0 0.0
    %2238 = vmatprep.subr.mxu0 0.0
    %2239 = vmatpush1.msra.mxu0 0.0
    %2240 = vmatprep.subr.mxu0 0.0
    %2241 = vmatpush1.msra.mxu0 0.0
    %2242 = vmatprep.mubr.f32.mxu0 0.0
    %2243 = vmatmul.mubr.f32.gmra.mrb[0].mxu0 %v2173
    %v2244 = vpop.f32.mrb[0].mxu0
    %v2245 = vadd.f32 0.0, %v2244
    %v2246 = vpop.f32.mrb[0].mxu0
    %2247 = vmatprep.mubr.f32.mxu0 0.0
    %2248 = vmatmul.mubr.f32.gmra.mrb[0].mxu0 %v2176
    %v2249 = vpop.f32.mrb[0].mxu0
    %v2250 = vadd.f32 0.0, %v2249
    %v2251 = vpop.f32.mrb[0].mxu0
    %2252 = vdwg.mxu0
    %s2253 = scalar_lea.vmem [#allocation17], 12
    %v2254 = vld [vmem:[%s2253] sm:$0xf]
    %v2255 = vpack.c.bf16 %v2250, %v2245
    %v2257 = vsel %vm730, %v2255, 0
    %v2260 = vsel %vm1325, %v2254, 0
    %2262 = vmatprep.subr.bf16.mxu0 0
    %2263 = vmatpush1.bf16.msra.mxu0 %v2260
    %2264 = vmatprep.subr.bf16.mxu0 0
    %2265 = vmatpush1.bf16.msra.mxu0 0
    %2266 = vmatprep.subr.bf16.mxu0 0
    %2267 = vmatpush1.bf16.msra.mxu0 0
    %2268 = vmatprep.subr.bf16.mxu0 0
    %2269 = vmatpush1.bf16.msra.mxu0 0
    %2270 = vmatprep.subr.bf16.mxu0 0
    %2271 = vmatpush1.bf16.msra.mxu0 0
    %2272 = vmatprep.subr.bf16.mxu0 0
    %2273 = vmatpush1.bf16.msra.mxu0 0
    %2274 = vmatprep.subr.bf16.mxu0 0
    %2275 = vmatpush1.bf16.msra.mxu0 0
    %2276 = vmatprep.subr.bf16.mxu0 0
    %2277 = vmatpush1.bf16.msra.mxu0 0
    %2278 = vmatprep.subr.bf16.mxu0 0
    %2279 = vmatpush1.bf16.msra.mxu0 0
    %2280 = vmatprep.subr.bf16.mxu0 0
    %2281 = vmatpush1.bf16.msra.mxu0 0
    %2282 = vmatprep.subr.bf16.mxu0 0
    %2283 = vmatpush1.bf16.msra.mxu0 0
    %2284 = vmatprep.subr.bf16.mxu0 0
    %2285 = vmatpush1.bf16.msra.mxu0 0
    %2286 = vmatprep.subr.bf16.mxu0 0
    %2287 = vmatpush1.bf16.msra.mxu0 0
    %2288 = vmatprep.subr.bf16.mxu0 0
    %2289 = vmatpush1.bf16.msra.mxu0 0
    %2290 = vmatprep.subr.bf16.mxu0 0
    %2291 = vmatpush1.bf16.msra.mxu0 0
    %2292 = vmatprep.subr.bf16.mxu0 0
    %2293 = vmatpush1.bf16.msra.mxu0 0
    %2294 = vmatprep.mubr.bf16.mxu0 0
    %2295 = vmatmul.mubr.bf16.gmra.mrb[0].mxu0 %v2257
    %v2296 = vpop.f32.mrb[0].mxu0
    %v2297 = vadd.f32 0.0, %v2296
    %v2298 = vpop.f32.mrb[0].mxu0
    %v2299 = vpop.f32.mrb[0].mxu0
    %v2300 = vadd.f32 0.0, %v2299
    %v2301 = vpop.f32.mrb[0].mxu0
    %2302 = vdwg.mxu0
    %v2303 = vadd.f32 %v1859, %v2297
    %v2304 = vadd.f32 %v1860, %v2300
    %s2305 = scalar_lea.vmem [#allocation14], 2
    %v2306 = vld [vmem:[%s2305] sm:$0x1]
    %v2308 = vlaneseq
    %v2309 = vshrl.u32 %v2308, 7
    %v2310 = vsub.s32 0, %v2309
    %v2311 = vrot.slane %v2306, %v2310
    %v2313 = vadd.f32 %v2303, %v2311
    %v2314 = vadd.f32 %v2304, %v2311
    %s2315 = scalar_lea.vmem [#allocation9], 16
    %v2316 = vld [vmem:[%s2315] sm:$0xf]
    %v2317 = vld [vmem:[%s2315 + $0x4] sm:$0xf]
    %v2318 = vpack.c.bf16 %v2314, %v2313
    %v2321 = vunpack.c.l.b16 %v2316
    %v2322 = vunpack.c.l.b16 %v2317
    %v2323 = vpack.c.b16 %v2322, %v2321
    %v2325 = vsel %vm236, %v2323, 0
    %2327 = vmatprep.subr.bf16.mxu0 0
    %2328 = vmatpush1.bf16.msra.mxu0 %v2318
    %2329 = vmatprep.subr.bf16.mxu0 0
    %2330 = vmatpush1.bf16.msra.mxu0 0
    %2331 = vmatprep.subr.bf16.mxu0 0
    %2332 = vmatpush1.bf16.msra.mxu0 0
    %2333 = vmatprep.subr.bf16.mxu0 0
    %2334 = vmatpush1.bf16.msra.mxu0 0
    %2335 = vmatprep.subr.bf16.mxu0 0
    %2336 = vmatpush1.bf16.msra.mxu0 0
    %2337 = vmatprep.subr.bf16.mxu0 0
    %2338 = vmatpush1.bf16.msra.mxu0 0
    %2339 = vmatprep.subr.bf16.mxu0 0
    %2340 = vmatpush1.bf16.msra.mxu0 0
    %2341 = vmatprep.subr.bf16.mxu0 0
    %2342 = vmatpush1.bf16.msra.mxu0 0
    %2343 = vmatprep.subr.bf16.mxu0 0
    %2344 = vmatpush1.bf16.msra.mxu0 0
    %2345 = vmatprep.subr.bf16.mxu0 0
    %2346 = vmatpush1.bf16.msra.mxu0 0
    %2347 = vmatprep.subr.bf16.mxu0 0
    %2348 = vmatpush1.bf16.msra.mxu0 0
    %2349 = vmatprep.subr.bf16.mxu0 0
    %2350 = vmatpush1.bf16.msra.mxu0 0
    %2351 = vmatprep.subr.bf16.mxu0 0
    %2352 = vmatpush1.bf16.msra.mxu0 0
    %2353 = vmatprep.subr.bf16.mxu0 0
    %2354 = vmatpush1.bf16.msra.mxu0 0
    %2355 = vmatprep.subr.bf16.mxu0 0
    %2356 = vmatpush1.bf16.msra.mxu0 0
    %2357 = vmatprep.subr.bf16.mxu0 0
    %2358 = vmatpush1.bf16.msra.mxu0 0
    %2359 = vmatprep.mubr.bf16.mxu0 0
    %2360 = vmatmul.mubr.bf16.gmra.mrb[0].mxu0 %v2325
    %v2361 = vpop.f32.mrb[0].mxu0
    %v2362 = vadd.f32 0.0, %v2361
    %v2363 = vpop.f32.mrb[0].mxu0
    %v2364 = vpop.f32.mrb[0].mxu0
    %v2365 = vadd.f32 0.0, %v2364
    %v2366 = vpop.f32.mrb[0].mxu0
    %2367 = vdwg.mxu0
    %v2368 = vpack.c.bf16 %v2365, %v2362
    %v2369 = vld [vmem:[%s13] sm:$0xf]
    %v2370 = vld [vmem:[%s13 + $0x4] sm:$0xf]
    %v2371 = vld [vmem:[%s13 + $0x8] sm:$0xf]
    %v2372 = vld [vmem:[%s13 + $0xc] sm:$0xf]
    %v2373 = vld [vmem:[%s14] sm:$0x1]
    %v2375 = vlaneseq
    %v2376 = vshrl.u32 %v2375, 7
    %v2377 = vsub.s32 0, %v2376
    %v2378 = vrot.slane %v2373, %v2377
    %v2384 = vunpack.c.l.b16 %v2369
    %v2385 = vunpack.c.l.b16 %v2370
    %v2386 = vunpack.c.l.b16 %v2371
    %v2387 = vunpack.c.l.b16 %v2372
    %v2388 = vpack.c.b16 %v2385, %v2384
    %v2389 = vpack.c.b16 %v2387, %v2386
    %v2393 = vsel %vm355, %v2368, 0
    %2395 = vmatprep.subr.bf16.mxu0 0
    %2396 = vmatpush1.bf16.msra.mxu0 %v2388
    %2397 = vmatprep.subr.bf16.mxu0 0
    %2398 = vmatpush1.bf16.msra.mxu0 %v2389
    %2399 = vmatprep.subr.bf16.mxu0 0
    %2400 = vmatpush1.bf16.msra.mxu0 0
    %2401 = vmatprep.subr.bf16.mxu0 0
    %2402 = vmatpush1.bf16.msra.mxu0 0
    %2403 = vmatprep.subr.bf16.mxu0 0
    %2404 = vmatpush1.bf16.msra.mxu0 0
    %2405 = vmatprep.subr.bf16.mxu0 0
    %2406 = vmatpush1.bf16.msra.mxu0 0
    %2407 = vmatprep.subr.bf16.mxu0 0
    %2408 = vmatpush1.bf16.msra.mxu0 0
    %2409 = vmatprep.subr.bf16.mxu0 0
    %2410 = vmatpush1.bf16.msra.mxu0 0
    %2411 = vmatprep.subr.bf16.mxu0 0
    %2412 = vmatpush1.bf16.msra.mxu0 0
    %2413 = vmatprep.subr.bf16.mxu0 0
    %2414 = vmatpush1.bf16.msra.mxu0 0
    %2415 = vmatprep.subr.bf16.mxu0 0
    %2416 = vmatpush1.bf16.msra.mxu0 0
    %2417 = vmatprep.subr.bf16.mxu0 0
    %2418 = vmatpush1.bf16.msra.mxu0 0
    %2419 = vmatprep.subr.bf16.mxu0 0
    %2420 = vmatpush1.bf16.msra.mxu0 0
    %2421 = vmatprep.subr.bf16.mxu0 0
    %2422 = vmatpush1.bf16.msra.mxu0 0
    %2423 = vmatprep.subr.bf16.mxu0 0
    %2424 = vmatpush1.bf16.msra.mxu0 0
    %2425 = vmatprep.subr.bf16.mxu0 0
    %2426 = vmatpush1.bf16.msra.mxu0 0
    %2427 = vmatprep.mubr.bf16.mxu0 0
    %2428 = vmatmul.mubr.bf16.gmra.mrb[0].mxu0 %v2393
    %v2429 = vpop.f32.mrb[0].mxu0
    %v2430 = vadd.f32 %v2378, %v2429
    %v2431 = vpop.f32.mrb[0].mxu0
    %v2432 = vpop.f32.mrb[0].mxu0
    %v2433 = vadd.f32 %v2378, %v2432
    %v2434 = vpop.f32.mrb[0].mxu0
    %2435 = vdwg.mxu0
    %2436 = vst.msk [vmem:[#allocation2] sm:$0xff] %vm355, %v2430
    %2437 = vst.msk [vmem:[#allocation2 + $0x8] sm:$0xff] %vm355, %v2433
    %s2438 = scalar_lea.vmem %s13, 16
    %v2439 = vld [vmem:[%s2438] sm:$0xf]
    %v2440 = vld [vmem:[%s2438 + $0x4] sm:$0xf]
    %v2441 = vld [vmem:[%s2438 + $0x8] sm:$0xf]
    %v2442 = vld [vmem:[%s2438 + $0xc] sm:$0xf]
    %s2443 = scalar_lea.vmem %s14, 1
    %v2444 = vld [vmem:[%s2443] sm:$0x1]
    %v2446 = vlaneseq
    %v2447 = vshrl.u32 %v2446, 7
    %v2448 = vsub.s32 0, %v2447
    %v2449 = vrot.slane %v2444, %v2448
    %v2455 = vunpack.c.l.b16 %v2439
    %v2456 = vunpack.c.l.b16 %v2440
    %v2457 = vunpack.c.l.b16 %v2441
    %v2458 = vunpack.c.l.b16 %v2442
    %v2459 = vpack.c.b16 %v2456, %v2455
    %v2460 = vpack.c.b16 %v2458, %v2457
    %2463 = vmatprep.subr.bf16.mxu0 0
    %2464 = vmatpush1.bf16.msra.mxu0 %v2459
    %2465 = vmatprep.subr.bf16.mxu0 0
    %2466 = vmatpush1.bf16.msra.mxu0 %v2460
    %2467 = vmatprep.subr.bf16.mxu0 0
    %2468 = vmatpush1.bf16.msra.mxu0 0
    %2469 = vmatprep.subr.bf16.mxu0 0
    %2470 = vmatpush1.bf16.msra.mxu0 0
    %2471 = vmatprep.subr.bf16.mxu0 0
    %2472 = vmatpush1.bf16.msra.mxu0 0
    %2473 = vmatprep.subr.bf16.mxu0 0
    %2474 = vmatpush1.bf16.msra.mxu0 0
    %2475 = vmatprep.subr.bf16.mxu0 0
    %2476 = vmatpush1.bf16.msra.mxu0 0
    %2477 = vmatprep.subr.bf16.mxu0 0
    %2478 = vmatpush1.bf16.msra.mxu0 0
    %2479 = vmatprep.subr.bf16.mxu0 0
    %2480 = vmatpush1.bf16.msra.mxu0 0
    %2481 = vmatprep.subr.bf16.mxu0 0
    %2482 = vmatpush1.bf16.msra.mxu0 0
    %2483 = vmatprep.subr.bf16.mxu0 0
    %2484 = vmatpush1.bf16.msra.mxu0 0
    %2485 = vmatprep.subr.bf16.mxu0 0
    %2486 = vmatpush1.bf16.msra.mxu0 0
    %2487 = vmatprep.subr.bf16.mxu0 0
    %2488 = vmatpush1.bf16.msra.mxu0 0
    %2489 = vmatprep.subr.bf16.mxu0 0
    %2490 = vmatpush1.bf16.msra.mxu0 0
    %2491 = vmatprep.subr.bf16.mxu0 0
    %2492 = vmatpush1.bf16.msra.mxu0 0
    %2493 = vmatprep.subr.bf16.mxu0 0
    %2494 = vmatpush1.bf16.msra.mxu0 0
    %2495 = vmatprep.mubr.bf16.mxu0 0
    %2496 = vmatmul.mubr.bf16.gmra.mrb[0].mxu0 %v2393
    %v2497 = vpop.f32.mrb[0].mxu0
    %v2498 = vadd.f32 %v2449, %v2497
    %v2499 = vpop.f32.mrb[0].mxu0
    %v2500 = vpop.f32.mrb[0].mxu0
    %v2501 = vadd.f32 %v2449, %v2500
    %v2502 = vpop.f32.mrb[0].mxu0
    %2503 = vdwg.mxu0
    %2504 = vst.msk [vmem:[#allocation3] sm:$0xff] %vm355, %v2498
    %2505 = vst.msk [vmem:[#allocation3 + $0x8] sm:$0xff] %vm355, %v2501
    %s2506 = scalar_lea.vmem %s13, 32
    %v2507 = vld [vmem:[%s2506] sm:$0xf]
    %v2508 = vld [vmem:[%s2506 + $0x4] sm:$0xf]
    %v2509 = vld [vmem:[%s2506 + $0x8] sm:$0xf]
    %v2510 = vld [vmem:[%s2506 + $0xc] sm:$0xf]
    %s2511 = scalar_lea.vmem %s14, 2
    %v2512 = vld [vmem:[%s2511] sm:$0x1]
    %v2514 = vlaneseq
    %v2515 = vshrl.u32 %v2514, 7
    %v2516 = vsub.s32 0, %v2515
    %v2517 = vrot.slane %v2512, %v2516
    %v2523 = vunpack.c.l.b16 %v2507
    %v2524 = vunpack.c.l.b16 %v2508
    %v2525 = vunpack.c.l.b16 %v2509
    %v2526 = vunpack.c.l.b16 %v2510
    %v2527 = vpack.c.b16 %v2524, %v2523
    %v2528 = vpack.c.b16 %v2526, %v2525
    %2531 = vmatprep.subr.bf16.mxu0 0
    %2532 = vmatpush1.bf16.msra.mxu0 %v2527
    %2533 = vmatprep.subr.bf16.mxu0 0
    %2534 = vmatpush1.bf16.msra.mxu0 %v2528
    %2535 = vmatprep.subr.bf16.mxu0 0
    %2536 = vmatpush1.bf16.msra.mxu0 0
    %2537 = vmatprep.subr.bf16.mxu0 0
    %2538 = vmatpush1.bf16.msra.mxu0 0
    %2539 = vmatprep.subr.bf16.mxu0 0
    %2540 = vmatpush1.bf16.msra.mxu0 0
    %2541 = vmatprep.subr.bf16.mxu0 0
    %2542 = vmatpush1.bf16.msra.mxu0 0
    %2543 = vmatprep.subr.bf16.mxu0 0
    %2544 = vmatpush1.bf16.msra.mxu0 0
    %2545 = vmatprep.subr.bf16.mxu0 0
    %2546 = vmatpush1.bf16.msra.mxu0 0
    %2547 = vmatprep.subr.bf16.mxu0 0
    %2548 = vmatpush1.bf16.msra.mxu0 0
    %2549 = vmatprep.subr.bf16.mxu0 0
    %2550 = vmatpush1.bf16.msra.mxu0 0
    %2551 = vmatprep.subr.bf16.mxu0 0
    %2552 = vmatpush1.bf16.msra.mxu0 0
    %2553 = vmatprep.subr.bf16.mxu0 0
    %2554 = vmatpush1.bf16.msra.mxu0 0
    %2555 = vmatprep.subr.bf16.mxu0 0
    %2556 = vmatpush1.bf16.msra.mxu0 0
    %2557 = vmatprep.subr.bf16.mxu0 0
    %2558 = vmatpush1.bf16.msra.mxu0 0
    %2559 = vmatprep.subr.bf16.mxu0 0
    %2560 = vmatpush1.bf16.msra.mxu0 0
    %2561 = vmatprep.subr.bf16.mxu0 0
    %2562 = vmatpush1.bf16.msra.mxu0 0
    %2563 = vmatprep.mubr.bf16.mxu0 0
    %2564 = vmatmul.mubr.bf16.gmra.mrb[0].mxu0 %v2393
    %v2565 = vpop.f32.mrb[0].mxu0
    %v2566 = vadd.f32 %v2517, %v2565
    %v2567 = vpop.f32.mrb[0].mxu0
    %v2568 = vpop.f32.mrb[0].mxu0
    %v2569 = vadd.f32 %v2517, %v2568
    %v2570 = vpop.f32.mrb[0].mxu0
    %2571 = vdwg.mxu0
    %2572 = vst.msk [vmem:[#allocation4] sm:$0xff] %vm355, %v2566
    %2573 = vst.msk [vmem:[#allocation4 + $0x8] sm:$0xff] %vm355, %v2569
    %s2574 = scalar_lea.vmem %s13, 48
    %v2575 = vld [vmem:[%s2574] sm:$0xf]
    %v2576 = vld [vmem:[%s2574 + $0x4] sm:$0xf]
    %v2577 = vld [vmem:[%s2574 + $0x8] sm:$0xf]
    %v2578 = vld [vmem:[%s2574 + $0xc] sm:$0xf]
    %s2579 = scalar_lea.vmem %s14, 3
    %v2580 = vld [vmem:[%s2579] sm:$0x1]
    %v2582 = vlaneseq
    %v2583 = vshrl.u32 %v2582, 7
    %v2584 = vsub.s32 0, %v2583
    %v2585 = vrot.slane %v2580, %v2584
    %v2591 = vunpack.c.l.b16 %v2575
    %v2592 = vunpack.c.l.b16 %v2576
    %v2593 = vunpack.c.l.b16 %v2577
    %v2594 = vunpack.c.l.b16 %v2578
    %v2595 = vpack.c.b16 %v2592, %v2591
    %v2596 = vpack.c.b16 %v2594, %v2593
    %2599 = vmatprep.subr.bf16.mxu0 0
    %2600 = vmatpush1.bf16.msra.mxu0 %v2595
    %2601 = vmatprep.subr.bf16.mxu0 0
    %2602 = vmatpush1.bf16.msra.mxu0 %v2596
    %2603 = vmatprep.subr.bf16.mxu0 0
    %2604 = vmatpush1.bf16.msra.mxu0 0
    %2605 = vmatprep.subr.bf16.mxu0 0
    %2606 = vmatpush1.bf16.msra.mxu0 0
    %2607 = vmatprep.subr.bf16.mxu0 0
    %2608 = vmatpush1.bf16.msra.mxu0 0
    %2609 = vmatprep.subr.bf16.mxu0 0
    %2610 = vmatpush1.bf16.msra.mxu0 0
    %2611 = vmatprep.subr.bf16.mxu0 0
    %2612 = vmatpush1.bf16.msra.mxu0 0
    %2613 = vmatprep.subr.bf16.mxu0 0
    %2614 = vmatpush1.bf16.msra.mxu0 0
    %2615 = vmatprep.subr.bf16.mxu0 0
    %2616 = vmatpush1.bf16.msra.mxu0 0
    %2617 = vmatprep.subr.bf16.mxu0 0
    %2618 = vmatpush1.bf16.msra.mxu0 0
    %2619 = vmatprep.subr.bf16.mxu0 0
    %2620 = vmatpush1.bf16.msra.mxu0 0
    %2621 = vmatprep.subr.bf16.mxu0 0
    %2622 = vmatpush1.bf16.msra.mxu0 0
    %2623 = vmatprep.subr.bf16.mxu0 0
    %2624 = vmatpush1.bf16.msra.mxu0 0
    %2625 = vmatprep.subr.bf16.mxu0 0
    %2626 = vmatpush1.bf16.msra.mxu0 0
    %2627 = vmatprep.subr.bf16.mxu0 0
    %2628 = vmatpush1.bf16.msra.mxu0 0
    %2629 = vmatprep.subr.bf16.mxu0 0
    %2630 = vmatpush1.bf16.msra.mxu0 0
    %2631 = vmatprep.mubr.bf16.mxu0 0
    %2632 = vmatmul.mubr.bf16.gmra.mrb[0].mxu0 %v2393
    %v2633 = vpop.f32.mrb[0].mxu0
    %v2634 = vadd.f32 %v2585, %v2633
    %v2635 = vpop.f32.mrb[0].mxu0
    %v2636 = vpop.f32.mrb[0].mxu0
    %v2637 = vadd.f32 %v2585, %v2636
    %v2638 = vpop.f32.mrb[0].mxu0
    %2639 = vdwg.mxu0
    %2640 = vst.msk [vmem:[#allocation5] sm:$0xff] %vm355, %v2634
    %2641 = vst.msk [vmem:[#allocation5 + $0x8] sm:$0xff] %vm355, %v2637
    %v2642 = vld [vmem:[%s15] sm:$0xff]
    %v2643 = vld [vmem:[%s15 + $0x8] sm:$0xff]
    %v2644 = vld [vmem:[%s15 + $0x10] sm:$0xff]
    %v2645 = vld [vmem:[%s15 + $0x18] sm:$0xff]
    %s2646 = scalar_lea.vmem %s15, 32
    %v2647 = vld [vmem:[%s2646] sm:$0xff]
    %v2648 = vld [vmem:[%s2646 + $0x8] sm:$0xff]
    %v2649 = vld [vmem:[%s2646 + $0x10] sm:$0xff]
    %v2650 = vld [vmem:[%s2646 + $0x18] sm:$0xff]
    %s2651 = scalar_lea.vmem %s15, 64
    %v2652 = vld [vmem:[%s2651] sm:$0xff]
    %v2653 = vld [vmem:[%s2651 + $0x8] sm:$0xff]
    %v2654 = vld [vmem:[%s2651 + $0x10] sm:$0xff]
    %v2655 = vld [vmem:[%s2651 + $0x18] sm:$0xff]
    %s2656 = scalar_lea.vmem %s15, 96
    %v2657 = vld [vmem:[%s2656] sm:$0xff]
    %v2658 = vld [vmem:[%s2656 + $0x8] sm:$0xff]
    %v2659 = vld [vmem:[%s2656 + $0x10] sm:$0xff]
    %v2660 = vld [vmem:[%s2656 + $0x18] sm:$0xff]
    %v2661 = vld [vmem:[#allocation2] sm:$0x3]
    %v2663 = vsel %vm355, 0.0, 0
    %2665 = vmatprep.subr.mxu0 0.0
    %2666 = vmatpush1.msra.mxu0 %v2642
    %2667 = vmatprep.subr.mxu0 0.0
    %2668 = vmatpush1.msra.mxu0 %v2643
    %2669 = vmatprep.subr.mxu0 0.0
    %2670 = vmatpush1.msra.mxu0 %v2644
    %2671 = vmatprep.subr.mxu0 0.0
    %2672 = vmatpush1.msra.mxu0 %v2645
    %2673 = vmatprep.subr.mxu0 0.0
    %2674 = vmatpush1.msra.mxu0 0.0
    %2675 = vmatprep.subr.mxu0 0.0
    %2676 = vmatpush1.msra.mxu0 0.0
    %2677 = vmatprep.subr.mxu0 0.0
    %2678 = vmatpush1.msra.mxu0 0.0
    %2679 = vmatprep.subr.mxu0 0.0
    %2680 = vmatpush1.msra.mxu0 0.0
    %2681 = vmatprep.subr.mxu0 0.0
    %2682 = vmatpush1.msra.mxu0 0.0
    %2683 = vmatprep.subr.mxu0 0.0
    %2684 = vmatpush1.msra.mxu0 0.0
    %2685 = vmatprep.subr.mxu0 0.0
    %2686 = vmatpush1.msra.mxu0 0.0
    %2687 = vmatprep.subr.mxu0 0.0
    %2688 = vmatpush1.msra.mxu0 0.0
    %2689 = vmatprep.subr.mxu0 0.0
    %2690 = vmatpush1.msra.mxu0 0.0
    %2691 = vmatprep.subr.mxu0 0.0
    %2692 = vmatpush1.msra.mxu0 0.0
    %2693 = vmatprep.subr.mxu0 0.0
    %2694 = vmatpush1.msra.mxu0 0.0
    %2695 = vmatprep.subr.mxu0 0.0
    %2696 = vmatpush1.msra.mxu0 0.0
    %2697 = vmatprep.subr.mxu0 0.0
    %2698 = vmatpush1.msra.mxu0 0.0
    %2699 = vmatprep.subr.mxu0 0.0
    %2700 = vmatpush1.msra.mxu0 0.0
    %2701 = vmatprep.subr.mxu0 0.0
    %2702 = vmatpush1.msra.mxu0 0.0
    %2703 = vmatprep.subr.mxu0 0.0
    %2704 = vmatpush1.msra.mxu0 0.0
    %2705 = vmatprep.subr.mxu0 0.0
    %2706 = vmatpush1.msra.mxu0 0.0
    %2707 = vmatprep.subr.mxu0 0.0
    %2708 = vmatpush1.msra.mxu0 0.0
    %2709 = vmatprep.subr.mxu0 0.0
    %2710 = vmatpush1.msra.mxu0 0.0
    %2711 = vmatprep.subr.mxu0 0.0
    %2712 = vmatpush1.msra.mxu0 0.0
    %2713 = vmatprep.subr.mxu0 0.0
    %2714 = vmatpush1.msra.mxu0 0.0
    %2715 = vmatprep.subr.mxu0 0.0
    %2716 = vmatpush1.msra.mxu0 0.0
    %2717 = vmatprep.subr.mxu0 0.0
    %2718 = vmatpush1.msra.mxu0 0.0
    %2719 = vmatprep.subr.mxu0 0.0
    %2720 = vmatpush1.msra.mxu0 0.0
    %2721 = vmatprep.subr.mxu0 0.0
    %2722 = vmatpush1.msra.mxu0 0.0
    %2723 = vmatprep.subr.mxu0 0.0
    %2724 = vmatpush1.msra.mxu0 0.0
    %2725 = vmatprep.subr.mxu0 0.0
    %2726 = vmatpush1.msra.mxu0 0.0
    %2727 = vmatprep.subr.mxu0 0.0
    %2728 = vmatpush1.msra.mxu0 0.0
    %2729 = vmatprep.mubr.f32.mxu0 0.0
    %2730 = vmatmul.mubr.f32.gmra.mrb[0].mxu0 %v2663
    %v2731 = vpop.f32.mrb[0].mxu0
    %v2732 = vadd.f32 0.0, %v2731
    %v2733 = vpop.f32.mrb[0].mxu0
    %2734 = vdwg.mxu0
    %v2735 = vadd.f32 %v2661, %v2732
    %v2736 = vsub.f32 0.0, %v2735
    %v2737 = vmul.f32 %v2736, 1.442695
    %v2738 = vpow.pop %v2737
    %v2739 = vadd.f32 %v2738, 1.0
    %v2740 = vrcp.pop %v2739
    %v2741 = vmul.f32 1.0, %v2740
    %v2742 = vld [vmem:[#allocation3] sm:$0x3]
    %2743 = vmatprep.subr.mxu0 0.0
    %2744 = vmatpush1.msra.mxu0 %v2647
    %2745 = vmatprep.subr.mxu0 0.0
    %2746 = vmatpush1.msra.mxu0 %v2648
    %2747 = vmatprep.subr.mxu0 0.0
    %2748 = vmatpush1.msra.mxu0 %v2649
    %2749 = vmatprep.subr.mxu0 0.0
    %2750 = vmatpush1.msra.mxu0 %v2650
    %2751 = vmatprep.subr.mxu0 0.0
    %2752 = vmatpush1.msra.mxu0 0.0
    %2753 = vmatprep.subr.mxu0 0.0
    %2754 = vmatpush1.msra.mxu0 0.0
    %2755 = vmatprep.subr.mxu0 0.0
    %2756 = vmatpush1.msra.mxu0 0.0
    %2757 = vmatprep.subr.mxu0 0.0
    %2758 = vmatpush1.msra.mxu0 0.0
    %2759 = vmatprep.subr.mxu0 0.0
    %2760 = vmatpush1.msra.mxu0 0.0
    %2761 = vmatprep.subr.mxu0 0.0
    %2762 = vmatpush1.msra.mxu0 0.0
    %2763 = vmatprep.subr.mxu0 0.0
    %2764 = vmatpush1.msra.mxu0 0.0
    %2765 = vmatprep.subr.mxu0 0.0
    %2766 = vmatpush1.msra.mxu0 0.0
    %2767 = vmatprep.subr.mxu0 0.0
    %2768 = vmatpush1.msra.mxu0 0.0
    %2769 = vmatprep.subr.mxu0 0.0
    %2770 = vmatpush1.msra.mxu0 0.0
    %2771 = vmatprep.subr.mxu0 0.0
    %2772 = vmatpush1.msra.mxu0 0.0
    %2773 = vmatprep.subr.mxu0 0.0
    %2774 = vmatpush1.msra.mxu0 0.0
    %2775 = vmatprep.subr.mxu0 0.0
    %2776 = vmatpush1.msra.mxu0 0.0
    %2777 = vmatprep.subr.mxu0 0.0
    %2778 = vmatpush1.msra.mxu0 0.0
    %2779 = vmatprep.subr.mxu0 0.0
    %2780 = vmatpush1.msra.mxu0 0.0
    %2781 = vmatprep.subr.mxu0 0.0
    %2782 = vmatpush1.msra.mxu0 0.0
    %2783 = vmatprep.subr.mxu0 0.0
    %2784 = vmatpush1.msra.mxu0 0.0
    %2785 = vmatprep.subr.mxu0 0.0
    %2786 = vmatpush1.msra.mxu0 0.0
    %2787 = vmatprep.subr.mxu0 0.0
    %2788 = vmatpush1.msra.mxu0 0.0
    %2789 = vmatprep.subr.mxu0 0.0
    %2790 = vmatpush1.msra.mxu0 0.0
    %2791 = vmatprep.subr.mxu0 0.0
    %2792 = vmatpush1.msra.mxu0 0.0
    %2793 = vmatprep.subr.mxu0 0.0
    %2794 = vmatpush1.msra.mxu0 0.0
    %2795 = vmatprep.subr.mxu0 0.0
    %2796 = vmatpush1.msra.mxu0 0.0
    %2797 = vmatprep.subr.mxu0 0.0
    %2798 = vmatpush1.msra.mxu0 0.0
    %2799 = vmatprep.subr.mxu0 0.0
    %2800 = vmatpush1.msra.mxu0 0.0
    %2801 = vmatprep.subr.mxu0 0.0
    %2802 = vmatpush1.msra.mxu0 0.0
    %2803 = vmatprep.subr.mxu0 0.0
    %2804 = vmatpush1.msra.mxu0 0.0
    %2805 = vmatprep.subr.mxu0 0.0
    %2806 = vmatpush1.msra.mxu0 0.0
    %2807 = vmatprep.mubr.f32.mxu0 0.0
    %2808 = vmatmul.mubr.f32.gmra.mrb[0].mxu0 %v2663
    %v2809 = vpop.f32.mrb[0].mxu0
    %v2810 = vadd.f32 0.0, %v2809
    %v2811 = vpop.f32.mrb[0].mxu0
    %2812 = vdwg.mxu0
    %v2813 = vadd.f32 %v2742, %v2810
    %v2814 = vsub.f32 0.0, %v2813
    %v2815 = vmul.f32 %v2814, 1.442695
    %v2816 = vpow.pop %v2815
    %v2817 = vadd.f32 %v2816, 1.0
    %v2818 = vrcp.pop %v2817
    %v2819 = vmul.f32 1.0, %v2818
    %v2820 = vld [vmem:[#allocation4] sm:$0x3]
    %2821 = vmatprep.subr.mxu0 0.0
    %2822 = vmatpush1.msra.mxu0 %v2652
    %2823 = vmatprep.subr.mxu0 0.0
    %2824 = vmatpush1.msra.mxu0 %v2653
    %2825 = vmatprep.subr.mxu0 0.0
    %2826 = vmatpush1.msra.mxu0 %v2654
    %2827 = vmatprep.subr.mxu0 0.0
    %2828 = vmatpush1.msra.mxu0 %v2655
    %2829 = vmatprep.subr.mxu0 0.0
    %2830 = vmatpush1.msra.mxu0 0.0
    %2831 = vmatprep.subr.mxu0 0.0
    %2832 = vmatpush1.msra.mxu0 0.0
    %2833 = vmatprep.subr.mxu0 0.0
    %2834 = vmatpush1.msra.mxu0 0.0
    %2835 = vmatprep.subr.mxu0 0.0
    %2836 = vmatpush1.msra.mxu0 0.0
    %2837 = vmatprep.subr.mxu0 0.0
    %2838 = vmatpush1.msra.mxu0 0.0
    %2839 = vmatprep.subr.mxu0 0.0
    %2840 = vmatpush1.msra.mxu0 0.0
    %2841 = vmatprep.subr.mxu0 0.0
    %2842 = vmatpush1.msra.mxu0 0.0
    %2843 = vmatprep.subr.mxu0 0.0
    %2844 = vmatpush1.msra.mxu0 0.0
    %2845 = vmatprep.subr.mxu0 0.0
    %2846 = vmatpush1.msra.mxu0 0.0
    %2847 = vmatprep.subr.mxu0 0.0
    %2848 = vmatpush1.msra.mxu0 0.0
    %2849 = vmatprep.subr.mxu0 0.0
    %2850 = vmatpush1.msra.mxu0 0.0
    %2851 = vmatprep.subr.mxu0 0.0
    %2852 = vmatpush1.msra.mxu0 0.0
    %2853 = vmatprep.subr.mxu0 0.0
    %2854 = vmatpush1.msra.mxu0 0.0
    %2855 = vmatprep.subr.mxu0 0.0
    %2856 = vmatpush1.msra.mxu0 0.0
    %2857 = vmatprep.subr.mxu0 0.0
    %2858 = vmatpush1.msra.mxu0 0.0
    %2859 = vmatprep.subr.mxu0 0.0
    %2860 = vmatpush1.msra.mxu0 0.0
    %2861 = vmatprep.subr.mxu0 0.0
    %2862 = vmatpush1.msra.mxu0 0.0
    %2863 = vmatprep.subr.mxu0 0.0
    %2864 = vmatpush1.msra.mxu0 0.0
    %2865 = vmatprep.subr.mxu0 0.0
    %2866 = vmatpush1.msra.mxu0 0.0
    %2867 = vmatprep.subr.mxu0 0.0
    %2868 = vmatpush1.msra.mxu0 0.0
    %2869 = vmatprep.subr.mxu0 0.0
    %2870 = vmatpush1.msra.mxu0 0.0
    %2871 = vmatprep.subr.mxu0 0.0
    %2872 = vmatpush1.msra.mxu0 0.0
    %2873 = vmatprep.subr.mxu0 0.0
    %2874 = vmatpush1.msra.mxu0 0.0
    %2875 = vmatprep.subr.mxu0 0.0
    %2876 = vmatpush1.msra.mxu0 0.0
    %2877 = vmatprep.subr.mxu0 0.0
    %2878 = vmatpush1.msra.mxu0 0.0
    %2879 = vmatprep.subr.mxu0 0.0
    %2880 = vmatpush1.msra.mxu0 0.0
    %2881 = vmatprep.subr.mxu0 0.0
    %2882 = vmatpush1.msra.mxu0 0.0
    %2883 = vmatprep.subr.mxu0 0.0
    %2884 = vmatpush1.msra.mxu0 0.0
    %2885 = vmatprep.mubr.f32.mxu0 0.0
    %2886 = vmatmul.mubr.f32.gmra.mrb[0].mxu0 %v2663
    %v2887 = vpop.f32.mrb[0].mxu0
    %v2888 = vadd.f32 0.0, %v2887
    %v2889 = vpop.f32.mrb[0].mxu0
    %2890 = vdwg.mxu0
    %v2891 = vadd.f32 %v2820, %v2888
    %v2892 = vtanh.pop %v2891
    %v2893 = vld [vmem:[#allocation5] sm:$0x3]
    %2894 = vmatprep.subr.mxu0 0.0
    %2895 = vmatpush1.msra.mxu0 %v2657
    %2896 = vmatprep.subr.mxu0 0.0
    %2897 = vmatpush1.msra.mxu0 %v2658
    %2898 = vmatprep.subr.mxu0 0.0
    %2899 = vmatpush1.msra.mxu0 %v2659
    %2900 = vmatprep.subr.mxu0 0.0
    %2901 = vmatpush1.msra.mxu0 %v2660
    %2902 = vmatprep.subr.mxu0 0.0
    %2903 = vmatpush1.msra.mxu0 0.0
    %2904 = vmatprep.subr.mxu0 0.0
    %2905 = vmatpush1.msra.mxu0 0.0
    %2906 = vmatprep.subr.mxu0 0.0
    %2907 = vmatpush1.msra.mxu0 0.0
    %2908 = vmatprep.subr.mxu0 0.0
    %2909 = vmatpush1.msra.mxu0 0.0
    %2910 = vmatprep.subr.mxu0 0.0
    %2911 = vmatpush1.msra.mxu0 0.0
    %2912 = vmatprep.subr.mxu0 0.0
    %2913 = vmatpush1.msra.mxu0 0.0
    %2914 = vmatprep.subr.mxu0 0.0
    %2915 = vmatpush1.msra.mxu0 0.0
    %2916 = vmatprep.subr.mxu0 0.0
    %2917 = vmatpush1.msra.mxu0 0.0
    %2918 = vmatprep.subr.mxu0 0.0
    %2919 = vmatpush1.msra.mxu0 0.0
    %2920 = vmatprep.subr.mxu0 0.0
    %2921 = vmatpush1.msra.mxu0 0.0
    %2922 = vmatprep.subr.mxu0 0.0
    %2923 = vmatpush1.msra.mxu0 0.0
    %2924 = vmatprep.subr.mxu0 0.0
    %2925 = vmatpush1.msra.mxu0 0.0
    %2926 = vmatprep.subr.mxu0 0.0
    %2927 = vmatpush1.msra.mxu0 0.0
    %2928 = vmatprep.subr.mxu0 0.0
    %2929 = vmatpush1.msra.mxu0 0.0
    %2930 = vmatprep.subr.mxu0 0.0
    %2931 = vmatpush1.msra.mxu0 0.0
    %2932 = vmatprep.subr.mxu0 0.0
    %2933 = vmatpush1.msra.mxu0 0.0
    %2934 = vmatprep.subr.mxu0 0.0
    %2935 = vmatpush1.msra.mxu0 0.0
    %2936 = vmatprep.subr.mxu0 0.0
    %2937 = vmatpush1.msra.mxu0 0.0
    %2938 = vmatprep.subr.mxu0 0.0
    %2939 = vmatpush1.msra.mxu0 0.0
    %2940 = vmatprep.subr.mxu0 0.0
    %2941 = vmatpush1.msra.mxu0 0.0
    %2942 = vmatprep.subr.mxu0 0.0
    %2943 = vmatpush1.msra.mxu0 0.0
    %2944 = vmatprep.subr.mxu0 0.0
    %2945 = vmatpush1.msra.mxu0 0.0
    %2946 = vmatprep.subr.mxu0 0.0
    %2947 = vmatpush1.msra.mxu0 0.0
    %2948 = vmatprep.subr.mxu0 0.0
    %2949 = vmatpush1.msra.mxu0 0.0
    %2950 = vmatprep.subr.mxu0 0.0
    %2951 = vmatpush1.msra.mxu0 0.0
    %2952 = vmatprep.subr.mxu0 0.0
    %2953 = vmatpush1.msra.mxu0 0.0
    %2954 = vmatprep.subr.mxu0 0.0
    %2955 = vmatpush1.msra.mxu0 0.0
    %2956 = vmatprep.subr.mxu0 0.0
    %2957 = vmatpush1.msra.mxu0 0.0
    %2958 = vmatprep.mubr.f32.mxu0 0.0
    %2959 = vmatmul.mubr.f32.gmra.mrb[0].mxu0 %v2663
    %v2960 = vpop.f32.mrb[0].mxu0
    %v2961 = vadd.f32 0.0, %v2960
    %v2962 = vpop.f32.mrb[0].mxu0
    %2963 = vdwg.mxu0
    %v2964 = vadd.f32 %v2893, %v2961
    %v2965 = vsub.f32 0.0, %v2964
    %v2966 = vmul.f32 %v2965, 1.442695
    %v2967 = vpow.pop %v2966
    %v2968 = vadd.f32 %v2967, 1.0
    %v2969 = vrcp.pop %v2968
    %v2970 = vmul.f32 1.0, %v2969
    %v2971 = vmul.f32 %v2819, 0.0
    %v2972 = vmul.f32 %v2741, %v2892
    %v2973 = vadd.f32 %v2971, %v2972
    %v2974 = vtanh.pop %v2973
    %v2975 = vmul.f32 %v2970, %v2974
    %v2976 = vld [vmem:[#allocation2 + $0x2] sm:$0x3]
    %v2978 = vsel %vm355, %v2975, 0
    %2980 = vmatprep.subr.mxu0 0.0
    %2981 = vmatpush1.msra.mxu0 %v2642
    %2982 = vmatprep.subr.mxu0 0.0
    %2983 = vmatpush1.msra.mxu0 %v2643
    %2984 = vmatprep.subr.mxu0 0.0
    %2985 = vmatpush1.msra.mxu0 %v2644
    %2986 = vmatprep.subr.mxu0 0.0
    %2987 = vmatpush1.msra.mxu0 %v2645
    %2988 = vmatprep.subr.mxu0 0.0
    %2989 = vmatpush1.msra.mxu0 0.0
    %2990 = vmatprep.subr.mxu0 0.0
    %2991 = vmatpush1.msra.mxu0 0.0
    %2992 = vmatprep.subr.mxu0 0.0
    %2993 = vmatpush1.msra.mxu0 0.0
    %2994 = vmatprep.subr.mxu0 0.0
    %2995 = vmatpush1.msra.mxu0 0.0
    %2996 = vmatprep.subr.mxu0 0.0
    %2997 = vmatpush1.msra.mxu0 0.0
    %2998 = vmatprep.subr.mxu0 0.0
    %2999 = vmatpush1.msra.mxu0 0.0
    %3000 = vmatprep.subr.mxu0 0.0
    %3001 = vmatpush1.msra.mxu0 0.0
    %3002 = vmatprep.subr.mxu0 0.0
    %3003 = vmatpush1.msra.mxu0 0.0
    %3004 = vmatprep.subr.mxu0 0.0
    %3005 = vmatpush1.msra.mxu0 0.0
    %3006 = vmatprep.subr.mxu0 0.0
    %3007 = vmatpush1.msra.mxu0 0.0
    %3008 = vmatprep.subr.mxu0 0.0
    %3009 = vmatpush1.msra.mxu0 0.0
    %3010 = vmatprep.subr.mxu0 0.0
    %3011 = vmatpush1.msra.mxu0 0.0
    %3012 = vmatprep.subr.mxu0 0.0
    %3013 = vmatpush1.msra.mxu0 0.0
    %3014 = vmatprep.subr.mxu0 0.0
    %3015 = vmatpush1.msra.mxu0 0.0
    %3016 = vmatprep.subr.mxu0 0.0
    %3017 = vmatpush1.msra.mxu0 0.0
    %3018 = vmatprep.subr.mxu0 0.0
    %3019 = vmatpush1.msra.mxu0 0.0
    %3020 = vmatprep.subr.mxu0 0.0
    %3021 = vmatpush1.msra.mxu0 0.0
    %3022 = vmatprep.subr.mxu0 0.0
    %3023 = vmatpush1.msra.mxu0 0.0
    %3024 = vmatprep.subr.mxu0 0.0
    %3025 = vmatpush1.msra.mxu0 0.0
    %3026 = vmatprep.subr.mxu0 0.0
    %3027 = vmatpush1.msra.mxu0 0.0
    %3028 = vmatprep.subr.mxu0 0.0
    %3029 = vmatpush1.msra.mxu0 0.0
    %3030 = vmatprep.subr.mxu0 0.0
    %3031 = vmatpush1.msra.mxu0 0.0
    %3032 = vmatprep.subr.mxu0 0.0
    %3033 = vmatpush1.msra.mxu0 0.0
    %3034 = vmatprep.subr.mxu0 0.0
    %3035 = vmatpush1.msra.mxu0 0.0
    %3036 = vmatprep.subr.mxu0 0.0
    %3037 = vmatpush1.msra.mxu0 0.0
    %3038 = vmatprep.subr.mxu0 0.0
    %3039 = vmatpush1.msra.mxu0 0.0
    %3040 = vmatprep.subr.mxu0 0.0
    %3041 = vmatpush1.msra.mxu0 0.0
    %3042 = vmatprep.subr.mxu0 0.0
    %3043 = vmatpush1.msra.mxu0 0.0
    %3044 = vmatprep.mubr.f32.mxu0 0.0
    %3045 = vmatmul.mubr.f32.gmra.mrb[0].mxu0 %v2978
    %v3046 = vpop.f32.mrb[0].mxu0
    %v3047 = vadd.f32 0.0, %v3046
    %v3048 = vpop.f32.mrb[0].mxu0
    %3049 = vdwg.mxu0
    %v3050 = vadd.f32 %v2976, %v3047
    %v3051 = vsub.f32 0.0, %v3050
    %v3052 = vmul.f32 %v3051, 1.442695
    %v3053 = vpow.pop %v3052
    %v3054 = vadd.f32 %v3053, 1.0
    %v3055 = vrcp.pop %v3054
    %v3056 = vmul.f32 1.0, %v3055
    %v3057 = vld [vmem:[#allocation3 + $0x2] sm:$0x3]
    %3058 = vmatprep.subr.mxu0 0.0
    %3059 = vmatpush1.msra.mxu0 %v2647
    %3060 = vmatprep.subr.mxu0 0.0
    %3061 = vmatpush1.msra.mxu0 %v2648
    %3062 = vmatprep.subr.mxu0 0.0
    %3063 = vmatpush1.msra.mxu0 %v2649
    %3064 = vmatprep.subr.mxu0 0.0
    %3065 = vmatpush1.msra.mxu0 %v2650
    %3066 = vmatprep.subr.mxu0 0.0
    %3067 = vmatpush1.msra.mxu0 0.0
    %3068 = vmatprep.subr.mxu0 0.0
    %3069 = vmatpush1.msra.mxu0 0.0
    %3070 = vmatprep.subr.mxu0 0.0
    %3071 = vmatpush1.msra.mxu0 0.0
    %3072 = vmatprep.subr.mxu0 0.0
    %3073 = vmatpush1.msra.mxu0 0.0
    %3074 = vmatprep.subr.mxu0 0.0
    %3075 = vmatpush1.msra.mxu0 0.0
    %3076 = vmatprep.subr.mxu0 0.0
    %3077 = vmatpush1.msra.mxu0 0.0
    %3078 = vmatprep.subr.mxu0 0.0
    %3079 = vmatpush1.msra.mxu0 0.0
    %3080 = vmatprep.subr.mxu0 0.0
    %3081 = vmatpush1.msra.mxu0 0.0
    %3082 = vmatprep.subr.mxu0 0.0
    %3083 = vmatpush1.msra.mxu0 0.0
    %3084 = vmatprep.subr.mxu0 0.0
    %3085 = vmatpush1.msra.mxu0 0.0
    %3086 = vmatprep.subr.mxu0 0.0
    %3087 = vmatpush1.msra.mxu0 0.0
    %3088 = vmatprep.subr.mxu0 0.0
    %3089 = vmatpush1.msra.mxu0 0.0
    %3090 = vmatprep.subr.mxu0 0.0
    %3091 = vmatpush1.msra.mxu0 0.0
    %3092 = vmatprep.subr.mxu0 0.0
    %3093 = vmatpush1.msra.mxu0 0.0
    %3094 = vmatprep.subr.mxu0 0.0
    %3095 = vmatpush1.msra.mxu0 0.0
    %3096 = vmatprep.subr.mxu0 0.0
    %3097 = vmatpush1.msra.mxu0 0.0
    %3098 = vmatprep.subr.mxu0 0.0
    %3099 = vmatpush1.msra.mxu0 0.0
    %3100 = vmatprep.subr.mxu0 0.0
    %3101 = vmatpush1.msra.mxu0 0.0
    %3102 = vmatprep.subr.mxu0 0.0
    %3103 = vmatpush1.msra.mxu0 0.0
    %3104 = vmatprep.subr.mxu0 0.0
    %3105 = vmatpush1.msra.mxu0 0.0
    %3106 = vmatprep.subr.mxu0 0.0
    %3107 = vmatpush1.msra.mxu0 0.0
    %3108 = vmatprep.subr.mxu0 0.0
    %3109 = vmatpush1.msra.mxu0 0.0
    %3110 = vmatprep.subr.mxu0 0.0
    %3111 = vmatpush1.msra.mxu0 0.0
    %3112 = vmatprep.subr.mxu0 0.0
    %3113 = vmatpush1.msra.mxu0 0.0
    %3114 = vmatprep.subr.mxu0 0.0
    %3115 = vmatpush1.msra.mxu0 0.0
    %3116 = vmatprep.subr.mxu0 0.0
    %3117 = vmatpush1.msra.mxu0 0.0
    %3118 = vmatprep.subr.mxu0 0.0
    %3119 = vmatpush1.msra.mxu0 0.0
    %3120 = vmatprep.subr.mxu0 0.0
    %3121 = vmatpush1.msra.mxu0 0.0
    %3122 = vmatprep.mubr.f32.mxu0 0.0
    %3123 = vmatmul.mubr.f32.gmra.mrb[0].mxu0 %v2978
    %v3124 = vpop.f32.mrb[0].mxu0
    %v3125 = vadd.f32 0.0, %v3124
    %v3126 = vpop.f32.mrb[0].mxu0
    %3127 = vdwg.mxu0
    %v3128 = vadd.f32 %v3057, %v3125
    %v3129 = vsub.f32 0.0, %v3128
    %v3130 = vmul.f32 %v3129, 1.442695
    %v3131 = vpow.pop %v3130
    %v3132 = vadd.f32 %v3131, 1.0
    %v3133 = vrcp.pop %v3132
    %v3134 = vmul.f32 1.0, %v3133
    %v3135 = vld [vmem:[#allocation4 + $0x2] sm:$0x3]
    %3136 = vmatprep.subr.mxu0 0.0
    %3137 = vmatpush1.msra.mxu0 %v2652
    %3138 = vmatprep.subr.mxu0 0.0
    %3139 = vmatpush1.msra.mxu0 %v2653
    %3140 = vmatprep.subr.mxu0 0.0
    %3141 = vmatpush1.msra.mxu0 %v2654
    %3142 = vmatprep.subr.mxu0 0.0
    %3143 = vmatpush1.msra.mxu0 %v2655
    %3144 = vmatprep.subr.mxu0 0.0
    %3145 = vmatpush1.msra.mxu0 0.0
    %3146 = vmatprep.subr.mxu0 0.0
    %3147 = vmatpush1.msra.mxu0 0.0
    %3148 = vmatprep.subr.mxu0 0.0
    %3149 = vmatpush1.msra.mxu0 0.0
    %3150 = vmatprep.subr.mxu0 0.0
    %3151 = vmatpush1.msra.mxu0 0.0
    %3152 = vmatprep.subr.mxu0 0.0
    %3153 = vmatpush1.msra.mxu0 0.0
    %3154 = vmatprep.subr.mxu0 0.0
    %3155 = vmatpush1.msra.mxu0 0.0
    %3156 = vmatprep.subr.mxu0 0.0
    %3157 = vmatpush1.msra.mxu0 0.0
    %3158 = vmatprep.subr.mxu0 0.0
    %3159 = vmatpush1.msra.mxu0 0.0
    %3160 = vmatprep.subr.mxu0 0.0
    %3161 = vmatpush1.msra.mxu0 0.0
    %3162 = vmatprep.subr.mxu0 0.0
    %3163 = vmatpush1.msra.mxu0 0.0
    %3164 = vmatprep.subr.mxu0 0.0
    %3165 = vmatpush1.msra.mxu0 0.0
    %3166 = vmatprep.subr.mxu0 0.0
    %3167 = vmatpush1.msra.mxu0 0.0
    %3168 = vmatprep.subr.mxu0 0.0
    %3169 = vmatpush1.msra.mxu0 0.0
    %3170 = vmatprep.subr.mxu0 0.0
    %3171 = vmatpush1.msra.mxu0 0.0
    %3172 = vmatprep.subr.mxu0 0.0
    %3173 = vmatpush1.msra.mxu0 0.0
    %3174 = vmatprep.subr.mxu0 0.0
    %3175 = vmatpush1.msra.mxu0 0.0
    %3176 = vmatprep.subr.mxu0 0.0
    %3177 = vmatpush1.msra.mxu0 0.0
    %3178 = vmatprep.subr.mxu0 0.0
    %3179 = vmatpush1.msra.mxu0 0.0
    %3180 = vmatprep.subr.mxu0 0.0
    %3181 = vmatpush1.msra.mxu0 0.0
    %3182 = vmatprep.subr.mxu0 0.0
    %3183 = vmatpush1.msra.mxu0 0.0
    %3184 = vmatprep.subr.mxu0 0.0
    %3185 = vmatpush1.msra.mxu0 0.0
    %3186 = vmatprep.subr.mxu0 0.0
    %3187 = vmatpush1.msra.mxu0 0.0
    %3188 = vmatprep.subr.mxu0 0.0
    %3189 = vmatpush1.msra.mxu0 0.0
    %3190 = vmatprep.subr.mxu0 0.0
    %3191 = vmatpush1.msra.mxu0 0.0
    %3192 = vmatprep.subr.mxu0 0.0
    %3193 = vmatpush1.msra.mxu0 0.0
    %3194 = vmatprep.subr.mxu0 0.0
    %3195 = vmatpush1.msra.mxu0 0.0
    %3196 = vmatprep.subr.mxu0 0.0
    %3197 = vmatpush1.msra.mxu0 0.0
    %3198 = vmatprep.subr.mxu0 0.0
    %3199 = vmatpush1.msra.mxu0 0.0
    %3200 = vmatprep.mubr.f32.mxu0 0.0
    %3201 = vmatmul.mubr.f32.gmra.mrb[0].mxu0 %v2978
    %v3202 = vpop.f32.mrb[0].mxu0
    %v3203 = vadd.f32 0.0, %v3202
    %v3204 = vpop.f32.mrb[0].mxu0
    %3205 = vdwg.mxu0
    %v3206 = vadd.f32 %v3135, %v3203
    %v3207 = vtanh.pop %v3206
    %v3208 = vld [vmem:[#allocation5 + $0x2] sm:$0x3]
    %3209 = vmatprep.subr.mxu0 0.0
    %3210 = vmatpush1.msra.mxu0 %v2657
    %3211 = vmatprep.subr.mxu0 0.0
    %3212 = vmatpush1.msra.mxu0 %v2658
    %3213 = vmatprep.subr.mxu0 0.0
    %3214 = vmatpush1.msra.mxu0 %v2659
    %3215 = vmatprep.subr.mxu0 0.0
    %3216 = vmatpush1.msra.mxu0 %v2660
    %3217 = vmatprep.subr.mxu0 0.0
    %3218 = vmatpush1.msra.mxu0 0.0
    %3219 = vmatprep.subr.mxu0 0.0
    %3220 = vmatpush1.msra.mxu0 0.0
    %3221 = vmatprep.subr.mxu0 0.0
    %3222 = vmatpush1.msra.mxu0 0.0
    %3223 = vmatprep.subr.mxu0 0.0
    %3224 = vmatpush1.msra.mxu0 0.0
    %3225 = vmatprep.subr.mxu0 0.0
    %3226 = vmatpush1.msra.mxu0 0.0
    %3227 = vmatprep.subr.mxu0 0.0
    %3228 = vmatpush1.msra.mxu0 0.0
    %3229 = vmatprep.subr.mxu0 0.0
    %3230 = vmatpush1.msra.mxu0 0.0
    %3231 = vmatprep.subr.mxu0 0.0
    %3232 = vmatpush1.msra.mxu0 0.0
    %3233 = vmatprep.subr.mxu0 0.0
    %3234 = vmatpush1.msra.mxu0 0.0
    %3235 = vmatprep.subr.mxu0 0.0
    %3236 = vmatpush1.msra.mxu0 0.0
    %3237 = vmatprep.subr.mxu0 0.0
    %3238 = vmatpush1.msra.mxu0 0.0
    %3239 = vmatprep.subr.mxu0 0.0
    %3240 = vmatpush1.msra.mxu0 0.0
    %3241 = vmatprep.subr.mxu0 0.0
    %3242 = vmatpush1.msra.mxu0 0.0
    %3243 = vmatprep.subr.mxu0 0.0
    %3244 = vmatpush1.msra.mxu0 0.0
    %3245 = vmatprep.subr.mxu0 0.0
    %3246 = vmatpush1.msra.mxu0 0.0
    %3247 = vmatprep.subr.mxu0 0.0
    %3248 = vmatpush1.msra.mxu0 0.0
    %3249 = vmatprep.subr.mxu0 0.0
    %3250 = vmatpush1.msra.mxu0 0.0
    %3251 = vmatprep.subr.mxu0 0.0
    %3252 = vmatpush1.msra.mxu0 0.0
    %3253 = vmatprep.subr.mxu0 0.0
    %3254 = vmatpush1.msra.mxu0 0.0
    %3255 = vmatprep.subr.mxu0 0.0
    %3256 = vmatpush1.msra.mxu0 0.0
    %3257 = vmatprep.subr.mxu0 0.0
    %3258 = vmatpush1.msra.mxu0 0.0
    %3259 = vmatprep.subr.mxu0 0.0
    %3260 = vmatpush1.msra.mxu0 0.0
    %3261 = vmatprep.subr.mxu0 0.0
    %3262 = vmatpush1.msra.mxu0 0.0
    %3263 = vmatprep.subr.mxu0 0.0
    %3264 = vmatpush1.msra.mxu0 0.0
    %3265 = vmatprep.subr.mxu0 0.0
    %3266 = vmatpush1.msra.mxu0 0.0
    %3267 = vmatprep.subr.mxu0 0.0
    %3268 = vmatpush1.msra.mxu0 0.0
    %3269 = vmatprep.subr.mxu0 0.0
    %3270 = vmatpush1.msra.mxu0 0.0
    %3271 = vmatprep.subr.mxu0 0.0
    %3272 = vmatpush1.msra.mxu0 0.0
    %3273 = vmatprep.mubr.f32.mxu0 0.0
    %3274 = vmatmul.mubr.f32.gmra.mrb[0].mxu0 %v2978
    %v3275 = vpop.f32.mrb[0].mxu0
    %v3276 = vadd.f32 0.0, %v3275
    %v3277 = vpop.f32.mrb[0].mxu0
    %3278 = vdwg.mxu0
    %v3279 = vadd.f32 %v3208, %v3276
    %v3280 = vsub.f32 0.0, %v3279
    %v3281 = vmul.f32 %v3280, 1.442695
    %v3282 = vpow.pop %v3281
    %v3283 = vadd.f32 %v3282, 1.0
    %v3284 = vrcp.pop %v3283
    %v3285 = vmul.f32 1.0, %v3284
    %v3286 = vmul.f32 %v3134, %v2973
    %v3287 = vmul.f32 %v3056, %v3207
    %v3288 = vadd.f32 %v3286, %v3287
    %v3289 = vtanh.pop %v3288
    %v3290 = vmul.f32 %v3285, %v3289
    %v3291 = vld [vmem:[#allocation2 + $0x4] sm:$0x3]
    %v3293 = vsel %vm355, %v3290, 0
    %3295 = vmatprep.subr.mxu0 0.0
    %3296 = vmatpush1.msra.mxu0 %v2642
    %3297 = vmatprep.subr.mxu0 0.0
    %3298 = vmatpush1.msra.mxu0 %v2643
    %3299 = vmatprep.subr.mxu0 0.0
    %3300 = vmatpush1.msra.mxu0 %v2644
    %3301 = vmatprep.subr.mxu0 0.0
    %3302 = vmatpush1.msra.mxu0 %v2645
    %3303 = vmatprep.subr.mxu0 0.0
    %3304 = vmatpush1.msra.mxu0 0.0
    %3305 = vmatprep.subr.mxu0 0.0
    %3306 = vmatpush1.msra.mxu0 0.0
    %3307 = vmatprep.subr.mxu0 0.0
    %3308 = vmatpush1.msra.mxu0 0.0
    %3309 = vmatprep.subr.mxu0 0.0
    %3310 = vmatpush1.msra.mxu0 0.0
    %3311 = vmatprep.subr.mxu0 0.0
    %3312 = vmatpush1.msra.mxu0 0.0
    %3313 = vmatprep.subr.mxu0 0.0
    %3314 = vmatpush1.msra.mxu0 0.0
    %3315 = vmatprep.subr.mxu0 0.0
    %3316 = vmatpush1.msra.mxu0 0.0
    %3317 = vmatprep.subr.mxu0 0.0
    %3318 = vmatpush1.msra.mxu0 0.0
    %3319 = vmatprep.subr.mxu0 0.0
    %3320 = vmatpush1.msra.mxu0 0.0
    %3321 = vmatprep.subr.mxu0 0.0
    %3322 = vmatpush1.msra.mxu0 0.0
    %3323 = vmatprep.subr.mxu0 0.0
    %3324 = vmatpush1.msra.mxu0 0.0
    %3325 = vmatprep.subr.mxu0 0.0
    %3326 = vmatpush1.msra.mxu0 0.0
    %3327 = vmatprep.subr.mxu0 0.0
    %3328 = vmatpush1.msra.mxu0 0.0
    %3329 = vmatprep.subr.mxu0 0.0
    %3330 = vmatpush1.msra.mxu0 0.0
    %3331 = vmatprep.subr.mxu0 0.0
    %3332 = vmatpush1.msra.mxu0 0.0
    %3333 = vmatprep.subr.mxu0 0.0
    %3334 = vmatpush1.msra.mxu0 0.0
    %3335 = vmatprep.subr.mxu0 0.0
    %3336 = vmatpush1.msra.mxu0 0.0
    %3337 = vmatprep.subr.mxu0 0.0
    %3338 = vmatpush1.msra.mxu0 0.0
    %3339 = vmatprep.subr.mxu0 0.0
    %3340 = vmatpush1.msra.mxu0 0.0
    %3341 = vmatprep.subr.mxu0 0.0
    %3342 = vmatpush1.msra.mxu0 0.0
    %3343 = vmatprep.subr.mxu0 0.0
    %3344 = vmatpush1.msra.mxu0 0.0
    %3345 = vmatprep.subr.mxu0 0.0
    %3346 = vmatpush1.msra.mxu0 0.0
    %3347 = vmatprep.subr.mxu0 0.0
    %3348 = vmatpush1.msra.mxu0 0.0
    %3349 = vmatprep.subr.mxu0 0.0
    %3350 = vmatpush1.msra.mxu0 0.0
    %3351 = vmatprep.subr.mxu0 0.0
    %3352 = vmatpush1.msra.mxu0 0.0
    %3353 = vmatprep.subr.mxu0 0.0
    %3354 = vmatpush1.msra.mxu0 0.0
    %3355 = vmatprep.subr.mxu0 0.0
    %3356 = vmatpush1.msra.mxu0 0.0
    %3357 = vmatprep.subr.mxu0 0.0
    %3358 = vmatpush1.msra.mxu0 0.0
    %3359 = vmatprep.mubr.f32.mxu0 0.0
    %3360 = vmatmul.mubr.f32.gmra.mrb[0].mxu0 %v3293
    %v3361 = vpop.f32.mrb[0].mxu0
    %v3362 = vadd.f32 0.0, %v3361
    %v3363 = vpop.f32.mrb[0].mxu0
    %3364 = vdwg.mxu0
    %v3365 = vadd.f32 %v3291, %v3362
    %v3366 = vsub.f32 0.0, %v3365
    %v3367 = vmul.f32 %v3366, 1.442695
    %v3368 = vpow.pop %v3367
    %v3369 = vadd.f32 %v3368, 1.0
    %v3370 = vrcp.pop %v3369
    %v3371 = vmul.f32 1.0, %v3370
    %v3372 = vld [vmem:[#allocation3 + $0x4] sm:$0x3]
    %3373 = vmatprep.subr.mxu0 0.0
    %3374 = vmatpush1.msra.mxu0 %v2647
    %3375 = vmatprep.subr.mxu0 0.0
    %3376 = vmatpush1.msra.mxu0 %v2648
    %3377 = vmatprep.subr.mxu0 0.0
    %3378 = vmatpush1.msra.mxu0 %v2649
    %3379 = vmatprep.subr.mxu0 0.0
    %3380 = vmatpush1.msra.mxu0 %v2650
    %3381 = vmatprep.subr.mxu0 0.0
    %3382 = vmatpush1.msra.mxu0 0.0
    %3383 = vmatprep.subr.mxu0 0.0
    %3384 = vmatpush1.msra.mxu0 0.0
    %3385 = vmatprep.subr.mxu0 0.0
    %3386 = vmatpush1.msra.mxu0 0.0
    %3387 = vmatprep.subr.mxu0 0.0
    %3388 = vmatpush1.msra.mxu0 0.0
    %3389 = vmatprep.subr.mxu0 0.0
    %3390 = vmatpush1.msra.mxu0 0.0
    %3391 = vmatprep.subr.mxu0 0.0
    %3392 = vmatpush1.msra.mxu0 0.0
    %3393 = vmatprep.subr.mxu0 0.0
    %3394 = vmatpush1.msra.mxu0 0.0
    %3395 = vmatprep.subr.mxu0 0.0
    %3396 = vmatpush1.msra.mxu0 0.0
    %3397 = vmatprep.subr.mxu0 0.0
    %3398 = vmatpush1.msra.mxu0 0.0
    %3399 = vmatprep.subr.mxu0 0.0
    %3400 = vmatpush1.msra.mxu0 0.0
    %3401 = vmatprep.subr.mxu0 0.0
    %3402 = vmatpush1.msra.mxu0 0.0
    %3403 = vmatprep.subr.mxu0 0.0
    %3404 = vmatpush1.msra.mxu0 0.0
    %3405 = vmatprep.subr.mxu0 0.0
    %3406 = vmatpush1.msra.mxu0 0.0
    %3407 = vmatprep.subr.mxu0 0.0
    %3408 = vmatpush1.msra.mxu0 0.0
    %3409 = vmatprep.subr.mxu0 0.0
    %3410 = vmatpush1.msra.mxu0 0.0
    %3411 = vmatprep.subr.mxu0 0.0
    %3412 = vmatpush1.msra.mxu0 0.0
    %3413 = vmatprep.subr.mxu0 0.0
    %3414 = vmatpush1.msra.mxu0 0.0
    %3415 = vmatprep.subr.mxu0 0.0
    %3416 = vmatpush1.msra.mxu0 0.0
    %3417 = vmatprep.subr.mxu0 0.0
    %3418 = vmatpush1.msra.mxu0 0.0
    %3419 = vmatprep.subr.mxu0 0.0
    %3420 = vmatpush1.msra.mxu0 0.0
    %3421 = vmatprep.subr.mxu0 0.0
    %3422 = vmatpush1.msra.mxu0 0.0
    %3423 = vmatprep.subr.mxu0 0.0
    %3424 = vmatpush1.msra.mxu0 0.0
    %3425 = vmatprep.subr.mxu0 0.0
    %3426 = vmatpush1.msra.mxu0 0.0
    %3427 = vmatprep.subr.mxu0 0.0
    %3428 = vmatpush1.msra.mxu0 0.0
    %3429 = vmatprep.subr.mxu0 0.0
    %3430 = vmatpush1.msra.mxu0 0.0
    %3431 = vmatprep.subr.mxu0 0.0
    %3432 = vmatpush1.msra.mxu0 0.0
    %3433 = vmatprep.subr.mxu0 0.0
    %3434 = vmatpush1.msra.mxu0 0.0
    %3435 = vmatprep.subr.mxu0 0.0
    %3436 = vmatpush1.msra.mxu0 0.0
    %3437 = vmatprep.mubr.f32.mxu0 0.0
    %3438 = vmatmul.mubr.f32.gmra.mrb[0].mxu0 %v3293
    %v3439 = vpop.f32.mrb[0].mxu0
    %v3440 = vadd.f32 0.0, %v3439
    %v3441 = vpop.f32.mrb[0].mxu0
    %3442 = vdwg.mxu0
    %v3443 = vadd.f32 %v3372, %v3440
    %v3444 = vsub.f32 0.0, %v3443
    %v3445 = vmul.f32 %v3444, 1.442695
    %v3446 = vpow.pop %v3445
    %v3447 = vadd.f32 %v3446, 1.0
    %v3448 = vrcp.pop %v3447
    %v3449 = vmul.f32 1.0, %v3448
    %v3450 = vld [vmem:[#allocation4 + $0x4] sm:$0x3]
    %3451 = vmatprep.subr.mxu0 0.0
    %3452 = vmatpush1.msra.mxu0 %v2652
    %3453 = vmatprep.subr.mxu0 0.0
    %3454 = vmatpush1.msra.mxu0 %v2653
    %3455 = vmatprep.subr.mxu0 0.0
    %3456 = vmatpush1.msra.mxu0 %v2654
    %3457 = vmatprep.subr.mxu0 0.0
    %3458 = vmatpush1.msra.mxu0 %v2655
    %3459 = vmatprep.subr.mxu0 0.0
    %3460 = vmatpush1.msra.mxu0 0.0
    %3461 = vmatprep.subr.mxu0 0.0
    %3462 = vmatpush1.msra.mxu0 0.0
    %3463 = vmatprep.subr.mxu0 0.0
    %3464 = vmatpush1.msra.mxu0 0.0
    %3465 = vmatprep.subr.mxu0 0.0
    %3466 = vmatpush1.msra.mxu0 0.0
    %3467 = vmatprep.subr.mxu0 0.0
    %3468 = vmatpush1.msra.mxu0 0.0
    %3469 = vmatprep.subr.mxu0 0.0
    %3470 = vmatpush1.msra.mxu0 0.0
    %3471 = vmatprep.subr.mxu0 0.0
    %3472 = vmatpush1.msra.mxu0 0.0
    %3473 = vmatprep.subr.mxu0 0.0
    %3474 = vmatpush1.msra.mxu0 0.0
    %3475 = vmatprep.subr.mxu0 0.0
    %3476 = vmatpush1.msra.mxu0 0.0
    %3477 = vmatprep.subr.mxu0 0.0
    %3478 = vmatpush1.msra.mxu0 0.0
    %3479 = vmatprep.subr.mxu0 0.0
    %3480 = vmatpush1.msra.mxu0 0.0
    %3481 = vmatprep.subr.mxu0 0.0
    %3482 = vmatpush1.msra.mxu0 0.0
    %3483 = vmatprep.subr.mxu0 0.0
    %3484 = vmatpush1.msra.mxu0 0.0
    %3485 = vmatprep.subr.mxu0 0.0
    %3486 = vmatpush1.msra.mxu0 0.0
    %3487 = vmatprep.subr.mxu0 0.0
    %3488 = vmatpush1.msra.mxu0 0.0
    %3489 = vmatprep.subr.mxu0 0.0
    %3490 = vmatpush1.msra.mxu0 0.0
    %3491 = vmatprep.subr.mxu0 0.0
    %3492 = vmatpush1.msra.mxu0 0.0
    %3493 = vmatprep.subr.mxu0 0.0
    %3494 = vmatpush1.msra.mxu0 0.0
    %3495 = vmatprep.subr.mxu0 0.0
    %3496 = vmatpush1.msra.mxu0 0.0
    %3497 = vmatprep.subr.mxu0 0.0
    %3498 = vmatpush1.msra.mxu0 0.0
    %3499 = vmatprep.subr.mxu0 0.0
    %3500 = vmatpush1.msra.mxu0 0.0
    %3501 = vmatprep.subr.mxu0 0.0
    %3502 = vmatpush1.msra.mxu0 0.0
    %3503 = vmatprep.subr.mxu0 0.0
    %3504 = vmatpush1.msra.mxu0 0.0
    %3505 = vmatprep.subr.mxu0 0.0
    %3506 = vmatpush1.msra.mxu0 0.0
    %3507 = vmatprep.subr.mxu0 0.0
    %3508 = vmatpush1.msra.mxu0 0.0
    %3509 = vmatprep.subr.mxu0 0.0
    %3510 = vmatpush1.msra.mxu0 0.0
    %3511 = vmatprep.subr.mxu0 0.0
    %3512 = vmatpush1.msra.mxu0 0.0
    %3513 = vmatprep.subr.mxu0 0.0
    %3514 = vmatpush1.msra.mxu0 0.0
    %3515 = vmatprep.mubr.f32.mxu0 0.0
    %3516 = vmatmul.mubr.f32.gmra.mrb[0].mxu0 %v3293
    %v3517 = vpop.f32.mrb[0].mxu0
    %v3518 = vadd.f32 0.0, %v3517
    %v3519 = vpop.f32.mrb[0].mxu0
    %3520 = vdwg.mxu0
    %v3521 = vadd.f32 %v3450, %v3518
    %v3522 = vtanh.pop %v3521
    %v3523 = vld [vmem:[#allocation5 + $0x4] sm:$0x3]
    %3524 = vmatprep.subr.mxu0 0.0
    %3525 = vmatpush1.msra.mxu0 %v2657
    %3526 = vmatprep.subr.mxu0 0.0
    %3527 = vmatpush1.msra.mxu0 %v2658
    %3528 = vmatprep.subr.mxu0 0.0
    %3529 = vmatpush1.msra.mxu0 %v2659
    %3530 = vmatprep.subr.mxu0 0.0
    %3531 = vmatpush1.msra.mxu0 %v2660
    %3532 = vmatprep.subr.mxu0 0.0
    %3533 = vmatpush1.msra.mxu0 0.0
    %3534 = vmatprep.subr.mxu0 0.0
    %3535 = vmatpush1.msra.mxu0 0.0
    %3536 = vmatprep.subr.mxu0 0.0
    %3537 = vmatpush1.msra.mxu0 0.0
    %3538 = vmatprep.subr.mxu0 0.0
    %3539 = vmatpush1.msra.mxu0 0.0
    %3540 = vmatprep.subr.mxu0 0.0
    %3541 = vmatpush1.msra.mxu0 0.0
    %3542 = vmatprep.subr.mxu0 0.0
    %3543 = vmatpush1.msra.mxu0 0.0
    %3544 = vmatprep.subr.mxu0 0.0
    %3545 = vmatpush1.msra.mxu0 0.0
    %3546 = vmatprep.subr.mxu0 0.0
    %3547 = vmatpush1.msra.mxu0 0.0
    %3548 = vmatprep.subr.mxu0 0.0
    %3549 = vmatpush1.msra.mxu0 0.0
    %3550 = vmatprep.subr.mxu0 0.0
    %3551 = vmatpush1.msra.mxu0 0.0
    %3552 = vmatprep.subr.mxu0 0.0
    %3553 = vmatpush1.msra.mxu0 0.0
    %3554 = vmatprep.subr.mxu0 0.0
    %3555 = vmatpush1.msra.mxu0 0.0
    %3556 = vmatprep.subr.mxu0 0.0
    %3557 = vmatpush1.msra.mxu0 0.0
    %3558 = vmatprep.subr.mxu0 0.0
    %3559 = vmatpush1.msra.mxu0 0.0
    %3560 = vmatprep.subr.mxu0 0.0
    %3561 = vmatpush1.msra.mxu0 0.0
    %3562 = vmatprep.subr.mxu0 0.0
    %3563 = vmatpush1.msra.mxu0 0.0
    %3564 = vmatprep.subr.mxu0 0.0
    %3565 = vmatpush1.msra.mxu0 0.0
    %3566 = vmatprep.subr.mxu0 0.0
    %3567 = vmatpush1.msra.mxu0 0.0
    %3568 = vmatprep.subr.mxu0 0.0
    %3569 = vmatpush1.msra.mxu0 0.0
    %3570 = vmatprep.subr.mxu0 0.0
    %3571 = vmatpush1.msra.mxu0 0.0
    %3572 = vmatprep.subr.mxu0 0.0
    %3573 = vmatpush1.msra.mxu0 0.0
    %3574 = vmatprep.subr.mxu0 0.0
    %3575 = vmatpush1.msra.mxu0 0.0
    %3576 = vmatprep.subr.mxu0 0.0
    %3577 = vmatpush1.msra.mxu0 0.0
    %3578 = vmatprep.subr.mxu0 0.0
    %3579 = vmatpush1.msra.mxu0 0.0
    %3580 = vmatprep.subr.mxu0 0.0
    %3581 = vmatpush1.msra.mxu0 0.0
    %3582 = vmatprep.subr.mxu0 0.0
    %3583 = vmatpush1.msra.mxu0 0.0
    %3584 = vmatprep.subr.mxu0 0.0
    %3585 = vmatpush1.msra.mxu0 0.0
    %3586 = vmatprep.subr.mxu0 0.0
    %3587 = vmatpush1.msra.mxu0 0.0
    %3588 = vmatprep.mubr.f32.mxu0 0.0
    %3589 = vmatmul.mubr.f32.gmra.mrb[0].mxu0 %v3293
    %v3590 = vpop.f32.mrb[0].mxu0
    %v3591 = vadd.f32 0.0, %v3590
    %v3592 = vpop.f32.mrb[0].mxu0
    %3593 = vdwg.mxu0
    %v3594 = vadd.f32 %v3523, %v3591
    %v3595 = vsub.f32 0.0, %v3594
    %v3596 = vmul.f32 %v3595, 1.442695
    %v3597 = vpow.pop %v3596
    %v3598 = vadd.f32 %v3597, 1.0
    %v3599 = vrcp.pop %v3598
    %v3600 = vmul.f32 1.0, %v3599
    %v3601 = vmul.f32 %v3449, %v3288
    %v3602 = vmul.f32 %v3371, %v3522
    %v3603 = vadd.f32 %v3601, %v3602
    %v3604 = vtanh.pop %v3603
    %v3605 = vmul.f32 %v3600, %v3604
    %v3606 = vld [vmem:[#allocation2 + $0x6] sm:$0x3]
    %v3608 = vsel %vm355, %v3605, 0
    %3610 = vmatprep.subr.mxu0 0.0
    %3611 = vmatpush1.msra.mxu0 %v2642
    %3612 = vmatprep.subr.mxu0 0.0
    %3613 = vmatpush1.msra.mxu0 %v2643
    %3614 = vmatprep.subr.mxu0 0.0
    %3615 = vmatpush1.msra.mxu0 %v2644
    %3616 = vmatprep.subr.mxu0 0.0
    %3617 = vmatpush1.msra.mxu0 %v2645
    %3618 = vmatprep.subr.mxu0 0.0
    %3619 = vmatpush1.msra.mxu0 0.0
    %3620 = vmatprep.subr.mxu0 0.0
    %3621 = vmatpush1.msra.mxu0 0.0
    %3622 = vmatprep.subr.mxu0 0.0
    %3623 = vmatpush1.msra.mxu0 0.0
    %3624 = vmatprep.subr.mxu0 0.0
    %3625 = vmatpush1.msra.mxu0 0.0
    %3626 = vmatprep.subr.mxu0 0.0
    %3627 = vmatpush1.msra.mxu0 0.0
    %3628 = vmatprep.subr.mxu0 0.0
    %3629 = vmatpush1.msra.mxu0 0.0
    %3630 = vmatprep.subr.mxu0 0.0
    %3631 = vmatpush1.msra.mxu0 0.0
    %3632 = vmatprep.subr.mxu0 0.0
    %3633 = vmatpush1.msra.mxu0 0.0
    %3634 = vmatprep.subr.mxu0 0.0
    %3635 = vmatpush1.msra.mxu0 0.0
    %3636 = vmatprep.subr.mxu0 0.0
    %3637 = vmatpush1.msra.mxu0 0.0
    %3638 = vmatprep.subr.mxu0 0.0
    %3639 = vmatpush1.msra.mxu0 0.0
    %3640 = vmatprep.subr.mxu0 0.0
    %3641 = vmatpush1.msra.mxu0 0.0
    %3642 = vmatprep.subr.mxu0 0.0
    %3643 = vmatpush1.msra.mxu0 0.0
    %3644 = vmatprep.subr.mxu0 0.0
    %3645 = vmatpush1.msra.mxu0 0.0
    %3646 = vmatprep.subr.mxu0 0.0
    %3647 = vmatpush1.msra.mxu0 0.0
    %3648 = vmatprep.subr.mxu0 0.0
    %3649 = vmatpush1.msra.mxu0 0.0
    %3650 = vmatprep.subr.mxu0 0.0
    %3651 = vmatpush1.msra.mxu0 0.0
    %3652 = vmatprep.subr.mxu0 0.0
    %3653 = vmatpush1.msra.mxu0 0.0
    %3654 = vmatprep.subr.mxu0 0.0
    %3655 = vmatpush1.msra.mxu0 0.0
    %3656 = vmatprep.subr.mxu0 0.0
    %3657 = vmatpush1.msra.mxu0 0.0
    %3658 = vmatprep.subr.mxu0 0.0
    %3659 = vmatpush1.msra.mxu0 0.0
    %3660 = vmatprep.subr.mxu0 0.0
    %3661 = vmatpush1.msra.mxu0 0.0
    %3662 = vmatprep.subr.mxu0 0.0
    %3663 = vmatpush1.msra.mxu0 0.0
    %3664 = vmatprep.subr.mxu0 0.0
    %3665 = vmatpush1.msra.mxu0 0.0
    %3666 = vmatprep.subr.mxu0 0.0
    %3667 = vmatpush1.msra.mxu0 0.0
    %3668 = vmatprep.subr.mxu0 0.0
    %3669 = vmatpush1.msra.mxu0 0.0
    %3670 = vmatprep.subr.mxu0 0.0
    %3671 = vmatpush1.msra.mxu0 0.0
    %3672 = vmatprep.subr.mxu0 0.0
    %3673 = vmatpush1.msra.mxu0 0.0
    %3674 = vmatprep.mubr.f32.mxu0 0.0
    %3675 = vmatmul.mubr.f32.gmra.mrb[0].mxu0 %v3608
    %v3676 = vpop.f32.mrb[0].mxu0
    %v3677 = vadd.f32 0.0, %v3676
    %v3678 = vpop.f32.mrb[0].mxu0
    %3679 = vdwg.mxu0
    %v3680 = vadd.f32 %v3606, %v3677
    %v3681 = vsub.f32 0.0, %v3680
    %v3682 = vmul.f32 %v3681, 1.442695
    %v3683 = vpow.pop %v3682
    %v3684 = vadd.f32 %v3683, 1.0
    %v3685 = vrcp.pop %v3684
    %v3686 = vmul.f32 1.0, %v3685
    %v3687 = vld [vmem:[#allocation3 + $0x6] sm:$0x3]
    %3688 = vmatprep.subr.mxu0 0.0
    %3689 = vmatpush1.msra.mxu0 %v2647
    %3690 = vmatprep.subr.mxu0 0.0
    %3691 = vmatpush1.msra.mxu0 %v2648
    %3692 = vmatprep.subr.mxu0 0.0
    %3693 = vmatpush1.msra.mxu0 %v2649
    %3694 = vmatprep.subr.mxu0 0.0
    %3695 = vmatpush1.msra.mxu0 %v2650
    %3696 = vmatprep.subr.mxu0 0.0
    %3697 = vmatpush1.msra.mxu0 0.0
    %3698 = vmatprep.subr.mxu0 0.0
    %3699 = vmatpush1.msra.mxu0 0.0
    %3700 = vmatprep.subr.mxu0 0.0
    %3701 = vmatpush1.msra.mxu0 0.0
    %3702 = vmatprep.subr.mxu0 0.0
    %3703 = vmatpush1.msra.mxu0 0.0
    %3704 = vmatprep.subr.mxu0 0.0
    %3705 = vmatpush1.msra.mxu0 0.0
    %3706 = vmatprep.subr.mxu0 0.0
    %3707 = vmatpush1.msra.mxu0 0.0
    %3708 = vmatprep.subr.mxu0 0.0
    %3709 = vmatpush1.msra.mxu0 0.0
    %3710 = vmatprep.subr.mxu0 0.0
    %3711 = vmatpush1.msra.mxu0 0.0
    %3712 = vmatprep.subr.mxu0 0.0
    %3713 = vmatpush1.msra.mxu0 0.0
    %3714 = vmatprep.subr.mxu0 0.0
    %3715 = vmatpush1.msra.mxu0 0.0
    %3716 = vmatprep.subr.mxu0 0.0
    %3717 = vmatpush1.msra.mxu0 0.0
    %3718 = vmatprep.subr.mxu0 0.0
    %3719 = vmatpush1.msra.mxu0 0.0
    %3720 = vmatprep.subr.mxu0 0.0
    %3721 = vmatpush1.msra.mxu0 0.0
    %3722 = vmatprep.subr.mxu0 0.0
    %3723 = vmatpush1.msra.mxu0 0.0
    %3724 = vmatprep.subr.mxu0 0.0
    %3725 = vmatpush1.msra.mxu0 0.0
    %3726 = vmatprep.subr.mxu0 0.0
    %3727 = vmatpush1.msra.mxu0 0.0
    %3728 = vmatprep.subr.mxu0 0.0
    %3729 = vmatpush1.msra.mxu0 0.0
    %3730 = vmatprep.subr.mxu0 0.0
    %3731 = vmatpush1.msra.mxu0 0.0
    %3732 = vmatprep.subr.mxu0 0.0
    %3733 = vmatpush1.msra.mxu0 0.0
    %3734 = vmatprep.subr.mxu0 0.0
    %3735 = vmatpush1.msra.mxu0 0.0
    %3736 = vmatprep.subr.mxu0 0.0
    %3737 = vmatpush1.msra.mxu0 0.0
    %3738 = vmatprep.subr.mxu0 0.0
    %3739 = vmatpush1.msra.mxu0 0.0
    %3740 = vmatprep.subr.mxu0 0.0
    %3741 = vmatpush1.msra.mxu0 0.0
    %3742 = vmatprep.subr.mxu0 0.0
    %3743 = vmatpush1.msra.mxu0 0.0
    %3744 = vmatprep.subr.mxu0 0.0
    %3745 = vmatpush1.msra.mxu0 0.0
    %3746 = vmatprep.subr.mxu0 0.0
    %3747 = vmatpush1.msra.mxu0 0.0
    %3748 = vmatprep.subr.mxu0 0.0
    %3749 = vmatpush1.msra.mxu0 0.0
    %3750 = vmatprep.subr.mxu0 0.0
    %3751 = vmatpush1.msra.mxu0 0.0
    %3752 = vmatprep.mubr.f32.mxu0 0.0
    %3753 = vmatmul.mubr.f32.gmra.mrb[0].mxu0 %v3608
    %v3754 = vpop.f32.mrb[0].mxu0
    %v3755 = vadd.f32 0.0, %v3754
    %v3756 = vpop.f32.mrb[0].mxu0
    %3757 = vdwg.mxu0
    %v3758 = vadd.f32 %v3687, %v3755
    %v3759 = vsub.f32 0.0, %v3758
    %v3760 = vmul.f32 %v3759, 1.442695
    %v3761 = vpow.pop %v3760
    %v3762 = vadd.f32 %v3761, 1.0
    %v3763 = vrcp.pop %v3762
    %v3764 = vmul.f32 1.0, %v3763
    %v3765 = vld [vmem:[#allocation4 + $0x6] sm:$0x3]
    %3766 = vmatprep.subr.mxu0 0.0
    %3767 = vmatpush1.msra.mxu0 %v2652
    %3768 = vmatprep.subr.mxu0 0.0
    %3769 = vmatpush1.msra.mxu0 %v2653
    %3770 = vmatprep.subr.mxu0 0.0
    %3771 = vmatpush1.msra.mxu0 %v2654
    %3772 = vmatprep.subr.mxu0 0.0
    %3773 = vmatpush1.msra.mxu0 %v2655
    %3774 = vmatprep.subr.mxu0 0.0
    %3775 = vmatpush1.msra.mxu0 0.0
    %3776 = vmatprep.subr.mxu0 0.0
    %3777 = vmatpush1.msra.mxu0 0.0
    %3778 = vmatprep.subr.mxu0 0.0
    %3779 = vmatpush1.msra.mxu0 0.0
    %3780 = vmatprep.subr.mxu0 0.0
    %3781 = vmatpush1.msra.mxu0 0.0
    %3782 = vmatprep.subr.mxu0 0.0
    %3783 = vmatpush1.msra.mxu0 0.0
    %3784 = vmatprep.subr.mxu0 0.0
    %3785 = vmatpush1.msra.mxu0 0.0
    %3786 = vmatprep.subr.mxu0 0.0
    %3787 = vmatpush1.msra.mxu0 0.0
    %3788 = vmatprep.subr.mxu0 0.0
    %3789 = vmatpush1.msra.mxu0 0.0
    %3790 = vmatprep.subr.mxu0 0.0
    %3791 = vmatpush1.msra.mxu0 0.0
    %3792 = vmatprep.subr.mxu0 0.0
    %3793 = vmatpush1.msra.mxu0 0.0
    %3794 = vmatprep.subr.mxu0 0.0
    %3795 = vmatpush1.msra.mxu0 0.0
    %3796 = vmatprep.subr.mxu0 0.0
    %3797 = vmatpush1.msra.mxu0 0.0
    %3798 = vmatprep.subr.mxu0 0.0
    %3799 = vmatpush1.msra.mxu0 0.0
    %3800 = vmatprep.subr.mxu0 0.0
    %3801 = vmatpush1.msra.mxu0 0.0
    %3802 = vmatprep.subr.mxu0 0.0
    %3803 = vmatpush1.msra.mxu0 0.0
    %3804 = vmatprep.subr.mxu0 0.0
    %3805 = vmatpush1.msra.mxu0 0.0
    %3806 = vmatprep.subr.mxu0 0.0
    %3807 = vmatpush1.msra.mxu0 0.0
    %3808 = vmatprep.subr.mxu0 0.0
    %3809 = vmatpush1.msra.mxu0 0.0
    %3810 = vmatprep.subr.mxu0 0.0
    %3811 = vmatpush1.msra.mxu0 0.0
    %3812 = vmatprep.subr.mxu0 0.0
    %3813 = vmatpush1.msra.mxu0 0.0
    %3814 = vmatprep.subr.mxu0 0.0
    %3815 = vmatpush1.msra.mxu0 0.0
    %3816 = vmatprep.subr.mxu0 0.0
    %3817 = vmatpush1.msra.mxu0 0.0
    %3818 = vmatprep.subr.mxu0 0.0
    %3819 = vmatpush1.msra.mxu0 0.0
    %3820 = vmatprep.subr.mxu0 0.0
    %3821 = vmatpush1.msra.mxu0 0.0
    %3822 = vmatprep.subr.mxu0 0.0
    %3823 = vmatpush1.msra.mxu0 0.0
    %3824 = vmatprep.subr.mxu0 0.0
    %3825 = vmatpush1.msra.mxu0 0.0
    %3826 = vmatprep.subr.mxu0 0.0
    %3827 = vmatpush1.msra.mxu0 0.0
    %3828 = vmatprep.subr.mxu0 0.0
    %3829 = vmatpush1.msra.mxu0 0.0
    %3830 = vmatprep.mubr.f32.mxu0 0.0
    %3831 = vmatmul.mubr.f32.gmra.mrb[0].mxu0 %v3608
    %v3832 = vpop.f32.mrb[0].mxu0
    %v3833 = vadd.f32 0.0, %v3832
    %v3834 = vpop.f32.mrb[0].mxu0
    %3835 = vdwg.mxu0
    %v3836 = vadd.f32 %v3765, %v3833
    %v3837 = vtanh.pop %v3836
    %v3838 = vld [vmem:[#allocation5 + $0x6] sm:$0x3]
    %3839 = vmatprep.subr.mxu0 0.0
    %3840 = vmatpush1.msra.mxu0 %v2657
    %3841 = vmatprep.subr.mxu0 0.0
    %3842 = vmatpush1.msra.mxu0 %v2658
    %3843 = vmatprep.subr.mxu0 0.0
    %3844 = vmatpush1.msra.mxu0 %v2659
    %3845 = vmatprep.subr.mxu0 0.0
    %3846 = vmatpush1.msra.mxu0 %v2660
    %3847 = vmatprep.subr.mxu0 0.0
    %3848 = vmatpush1.msra.mxu0 0.0
    %3849 = vmatprep.subr.mxu0 0.0
    %3850 = vmatpush1.msra.mxu0 0.0
    %3851 = vmatprep.subr.mxu0 0.0
    %3852 = vmatpush1.msra.mxu0 0.0
    %3853 = vmatprep.subr.mxu0 0.0
    %3854 = vmatpush1.msra.mxu0 0.0
    %3855 = vmatprep.subr.mxu0 0.0
    %3856 = vmatpush1.msra.mxu0 0.0
    %3857 = vmatprep.subr.mxu0 0.0
    %3858 = vmatpush1.msra.mxu0 0.0
    %3859 = vmatprep.subr.mxu0 0.0
    %3860 = vmatpush1.msra.mxu0 0.0
    %3861 = vmatprep.subr.mxu0 0.0
    %3862 = vmatpush1.msra.mxu0 0.0
    %3863 = vmatprep.subr.mxu0 0.0
    %3864 = vmatpush1.msra.mxu0 0.0
    %3865 = vmatprep.subr.mxu0 0.0
    %3866 = vmatpush1.msra.mxu0 0.0
    %3867 = vmatprep.subr.mxu0 0.0
    %3868 = vmatpush1.msra.mxu0 0.0
    %3869 = vmatprep.subr.mxu0 0.0
    %3870 = vmatpush1.msra.mxu0 0.0
    %3871 = vmatprep.subr.mxu0 0.0
    %3872 = vmatpush1.msra.mxu0 0.0
    %3873 = vmatprep.subr.mxu0 0.0
    %3874 = vmatpush1.msra.mxu0 0.0
    %3875 = vmatprep.subr.mxu0 0.0
    %3876 = vmatpush1.msra.mxu0 0.0
    %3877 = vmatprep.subr.mxu0 0.0
    %3878 = vmatpush1.msra.mxu0 0.0
    %3879 = vmatprep.subr.mxu0 0.0
    %3880 = vmatpush1.msra.mxu0 0.0
    %3881 = vmatprep.subr.mxu0 0.0
    %3882 = vmatpush1.msra.mxu0 0.0
    %3883 = vmatprep.subr.mxu0 0.0
    %3884 = vmatpush1.msra.mxu0 0.0
    %3885 = vmatprep.subr.mxu0 0.0
    %3886 = vmatpush1.msra.mxu0 0.0
    %3887 = vmatprep.subr.mxu0 0.0
    %3888 = vmatpush1.msra.mxu0 0.0
    %3889 = vmatprep.subr.mxu0 0.0
    %3890 = vmatpush1.msra.mxu0 0.0
    %3891 = vmatprep.subr.mxu0 0.0
    %3892 = vmatpush1.msra.mxu0 0.0
    %3893 = vmatprep.subr.mxu0 0.0
    %3894 = vmatpush1.msra.mxu0 0.0
    %3895 = vmatprep.subr.mxu0 0.0
    %3896 = vmatpush1.msra.mxu0 0.0
    %3897 = vmatprep.subr.mxu0 0.0
    %3898 = vmatpush1.msra.mxu0 0.0
    %3899 = vmatprep.subr.mxu0 0.0
    %3900 = vmatpush1.msra.mxu0 0.0
    %3901 = vmatprep.subr.mxu0 0.0
    %3902 = vmatpush1.msra.mxu0 0.0
    %3903 = vmatprep.mubr.f32.mxu0 0.0
    %3904 = vmatmul.mubr.f32.gmra.mrb[0].mxu0 %v3608
    %v3905 = vpop.f32.mrb[0].mxu0
    %v3906 = vadd.f32 0.0, %v3905
    %v3907 = vpop.f32.mrb[0].mxu0
    %3908 = vdwg.mxu0
    %v3909 = vadd.f32 %v3838, %v3906
    %v3910 = vsub.f32 0.0, %v3909
    %v3911 = vmul.f32 %v3910, 1.442695
    %v3912 = vpow.pop %v3911
    %v3913 = vadd.f32 %v3912, 1.0
    %v3914 = vrcp.pop %v3913
    %v3915 = vmul.f32 1.0, %v3914
    %v3916 = vmul.f32 %v3764, %v3603
    %v3917 = vmul.f32 %v3686, %v3837
    %v3918 = vadd.f32 %v3916, %v3917
    %v3919 = vtanh.pop %v3918
    %v3920 = vmul.f32 %v3915, %v3919
    %v3921 = vld [vmem:[#allocation2 + $0x8] sm:$0x3]
    %v3923 = vsel %vm355, %v3920, 0
    %3925 = vmatprep.subr.mxu0 0.0
    %3926 = vmatpush1.msra.mxu0 %v2642
    %3927 = vmatprep.subr.mxu0 0.0
    %3928 = vmatpush1.msra.mxu0 %v2643
    %3929 = vmatprep.subr.mxu0 0.0
    %3930 = vmatpush1.msra.mxu0 %v2644
    %3931 = vmatprep.subr.mxu0 0.0
    %3932 = vmatpush1.msra.mxu0 %v2645
    %3933 = vmatprep.subr.mxu0 0.0
    %3934 = vmatpush1.msra.mxu0 0.0
    %3935 = vmatprep.subr.mxu0 0.0
    %3936 = vmatpush1.msra.mxu0 0.0
    %3937 = vmatprep.subr.mxu0 0.0
    %3938 = vmatpush1.msra.mxu0 0.0
    %3939 = vmatprep.subr.mxu0 0.0
    %3940 = vmatpush1.msra.mxu0 0.0
    %3941 = vmatprep.subr.mxu0 0.0
    %3942 = vmatpush1.msra.mxu0 0.0
    %3943 = vmatprep.subr.mxu0 0.0
    %3944 = vmatpush1.msra.mxu0 0.0
    %3945 = vmatprep.subr.mxu0 0.0
    %3946 = vmatpush1.msra.mxu0 0.0
    %3947 = vmatprep.subr.mxu0 0.0
    %3948 = vmatpush1.msra.mxu0 0.0
    %3949 = vmatprep.subr.mxu0 0.0
    %3950 = vmatpush1.msra.mxu0 0.0
    %3951 = vmatprep.subr.mxu0 0.0
    %3952 = vmatpush1.msra.mxu0 0.0
    %3953 = vmatprep.subr.mxu0 0.0
    %3954 = vmatpush1.msra.mxu0 0.0
    %3955 = vmatprep.subr.mxu0 0.0
    %3956 = vmatpush1.msra.mxu0 0.0
    %3957 = vmatprep.subr.mxu0 0.0
    %3958 = vmatpush1.msra.mxu0 0.0
    %3959 = vmatprep.subr.mxu0 0.0
    %3960 = vmatpush1.msra.mxu0 0.0
    %3961 = vmatprep.subr.mxu0 0.0
    %3962 = vmatpush1.msra.mxu0 0.0
    %3963 = vmatprep.subr.mxu0 0.0
    %3964 = vmatpush1.msra.mxu0 0.0
    %3965 = vmatprep.subr.mxu0 0.0
    %3966 = vmatpush1.msra.mxu0 0.0
    %3967 = vmatprep.subr.mxu0 0.0
    %3968 = vmatpush1.msra.mxu0 0.0
    %3969 = vmatprep.subr.mxu0 0.0
    %3970 = vmatpush1.msra.mxu0 0.0
    %3971 = vmatprep.subr.mxu0 0.0
    %3972 = vmatpush1.msra.mxu0 0.0
    %3973 = vmatprep.subr.mxu0 0.0
    %3974 = vmatpush1.msra.mxu0 0.0
    %3975 = vmatprep.subr.mxu0 0.0
    %3976 = vmatpush1.msra.mxu0 0.0
    %3977 = vmatprep.subr.mxu0 0.0
    %3978 = vmatpush1.msra.mxu0 0.0
    %3979 = vmatprep.subr.mxu0 0.0
    %3980 = vmatpush1.msra.mxu0 0.0
    %3981 = vmatprep.subr.mxu0 0.0
    %3982 = vmatpush1.msra.mxu0 0.0
    %3983 = vmatprep.subr.mxu0 0.0
    %3984 = vmatpush1.msra.mxu0 0.0
    %3985 = vmatprep.subr.mxu0 0.0
    %3986 = vmatpush1.msra.mxu0 0.0
    %3987 = vmatprep.subr.mxu0 0.0
    %3988 = vmatpush1.msra.mxu0 0.0
    %3989 = vmatprep.mubr.f32.mxu0 0.0
    %3990 = vmatmul.mubr.f32.gmra.mrb[0].mxu0 %v3923
    %v3991 = vpop.f32.mrb[0].mxu0
    %v3992 = vadd.f32 0.0, %v3991
    %v3993 = vpop.f32.mrb[0].mxu0
    %3994 = vdwg.mxu0
    %v3995 = vadd.f32 %v3921, %v3992
    %v3996 = vsub.f32 0.0, %v3995
    %v3997 = vmul.f32 %v3996, 1.442695
    %v3998 = vpow.pop %v3997
    %v3999 = vadd.f32 %v3998, 1.0
    %v4000 = vrcp.pop %v3999
    %v4001 = vmul.f32 1.0, %v4000
    %v4002 = vld [vmem:[#allocation3 + $0x8] sm:$0x3]
    %4003 = vmatprep.subr.mxu0 0.0
    %4004 = vmatpush1.msra.mxu0 %v2647
    %4005 = vmatprep.subr.mxu0 0.0
    %4006 = vmatpush1.msra.mxu0 %v2648
    %4007 = vmatprep.subr.mxu0 0.0
    %4008 = vmatpush1.msra.mxu0 %v2649
    %4009 = vmatprep.subr.mxu0 0.0
    %4010 = vmatpush1.msra.mxu0 %v2650
    %4011 = vmatprep.subr.mxu0 0.0
    %4012 = vmatpush1.msra.mxu0 0.0
    %4013 = vmatprep.subr.mxu0 0.0
    %4014 = vmatpush1.msra.mxu0 0.0
    %4015 = vmatprep.subr.mxu0 0.0
    %4016 = vmatpush1.msra.mxu0 0.0
    %4017 = vmatprep.subr.mxu0 0.0
    %4018 = vmatpush1.msra.mxu0 0.0
    %4019 = vmatprep.subr.mxu0 0.0
    %4020 = vmatpush1.msra.mxu0 0.0
    %4021 = vmatprep.subr.mxu0 0.0
    %4022 = vmatpush1.msra.mxu0 0.0
    %4023 = vmatprep.subr.mxu0 0.0
    %4024 = vmatpush1.msra.mxu0 0.0
    %4025 = vmatprep.subr.mxu0 0.0
    %4026 = vmatpush1.msra.mxu0 0.0
    %4027 = vmatprep.subr.mxu0 0.0
    %4028 = vmatpush1.msra.mxu0 0.0
    %4029 = vmatprep.subr.mxu0 0.0
    %4030 = vmatpush1.msra.mxu0 0.0
    %4031 = vmatprep.subr.mxu0 0.0
    %4032 = vmatpush1.msra.mxu0 0.0
    %4033 = vmatprep.subr.mxu0 0.0
    %4034 = vmatpush1.msra.mxu0 0.0
    %4035 = vmatprep.subr.mxu0 0.0
    %4036 = vmatpush1.msra.mxu0 0.0
    %4037 = vmatprep.subr.mxu0 0.0
    %4038 = vmatpush1.msra.mxu0 0.0
    %4039 = vmatprep.subr.mxu0 0.0
    %4040 = vmatpush1.msra.mxu0 0.0
    %4041 = vmatprep.subr.mxu0 0.0
    %4042 = vmatpush1.msra.mxu0 0.0
    %4043 = vmatprep.subr.mxu0 0.0
    %4044 = vmatpush1.msra.mxu0 0.0
    %4045 = vmatprep.subr.mxu0 0.0
    %4046 = vmatpush1.msra.mxu0 0.0
    %4047 = vmatprep.subr.mxu0 0.0
    %4048 = vmatpush1.msra.mxu0 0.0
    %4049 = vmatprep.subr.mxu0 0.0
    %4050 = vmatpush1.msra.mxu0 0.0
    %4051 = vmatprep.subr.mxu0 0.0
    %4052 = vmatpush1.msra.mxu0 0.0
    %4053 = vmatprep.subr.mxu0 0.0
    %4054 = vmatpush1.msra.mxu0 0.0
    %4055 = vmatprep.subr.mxu0 0.0
    %4056 = vmatpush1.msra.mxu0 0.0
    %4057 = vmatprep.subr.mxu0 0.0
    %4058 = vmatpush1.msra.mxu0 0.0
    %4059 = vmatprep.subr.mxu0 0.0
    %4060 = vmatpush1.msra.mxu0 0.0
    %4061 = vmatprep.subr.mxu0 0.0
    %4062 = vmatpush1.msra.mxu0 0.0
    %4063 = vmatprep.subr.mxu0 0.0
    %4064 = vmatpush1.msra.mxu0 0.0
    %4065 = vmatprep.subr.mxu0 0.0
    %4066 = vmatpush1.msra.mxu0 0.0
    %4067 = vmatprep.mubr.f32.mxu0 0.0
    %4068 = vmatmul.mubr.f32.gmra.mrb[0].mxu0 %v3923
    %v4069 = vpop.f32.mrb[0].mxu0
    %v4070 = vadd.f32 0.0, %v4069
    %v4071 = vpop.f32.mrb[0].mxu0
    %4072 = vdwg.mxu0
    %v4073 = vadd.f32 %v4002, %v4070
    %v4074 = vsub.f32 0.0, %v4073
    %v4075 = vmul.f32 %v4074, 1.442695
    %v4076 = vpow.pop %v4075
    %v4077 = vadd.f32 %v4076, 1.0
    %v4078 = vrcp.pop %v4077
    %v4079 = vmul.f32 1.0, %v4078
    %v4080 = vld [vmem:[#allocation4 + $0x8] sm:$0x3]
    %4081 = vmatprep.subr.mxu0 0.0
    %4082 = vmatpush1.msra.mxu0 %v2652
    %4083 = vmatprep.subr.mxu0 0.0
    %4084 = vmatpush1.msra.mxu0 %v2653
    %4085 = vmatprep.subr.mxu0 0.0
    %4086 = vmatpush1.msra.mxu0 %v2654
    %4087 = vmatprep.subr.mxu0 0.0
    %4088 = vmatpush1.msra.mxu0 %v2655
    %4089 = vmatprep.subr.mxu0 0.0
    %4090 = vmatpush1.msra.mxu0 0.0
    %4091 = vmatprep.subr.mxu0 0.0
    %4092 = vmatpush1.msra.mxu0 0.0
    %4093 = vmatprep.subr.mxu0 0.0
    %4094 = vmatpush1.msra.mxu0 0.0
    %4095 = vmatprep.subr.mxu0 0.0
    %4096 = vmatpush1.msra.mxu0 0.0
    %4097 = vmatprep.subr.mxu0 0.0
    %4098 = vmatpush1.msra.mxu0 0.0
    %4099 = vmatprep.subr.mxu0 0.0
    %4100 = vmatpush1.msra.mxu0 0.0
    %4101 = vmatprep.subr.mxu0 0.0
    %4102 = vmatpush1.msra.mxu0 0.0
    %4103 = vmatprep.subr.mxu0 0.0
    %4104 = vmatpush1.msra.mxu0 0.0
    %4105 = vmatprep.subr.mxu0 0.0
    %4106 = vmatpush1.msra.mxu0 0.0
    %4107 = vmatprep.subr.mxu0 0.0
    %4108 = vmatpush1.msra.mxu0 0.0
    %4109 = vmatprep.subr.mxu0 0.0
    %4110 = vmatpush1.msra.mxu0 0.0
    %4111 = vmatprep.subr.mxu0 0.0
    %4112 = vmatpush1.msra.mxu0 0.0
    %4113 = vmatprep.subr.mxu0 0.0
    %4114 = vmatpush1.msra.mxu0 0.0
    %4115 = vmatprep.subr.mxu0 0.0
    %4116 = vmatpush1.msra.mxu0 0.0
    %4117 = vmatprep.subr.mxu0 0.0
    %4118 = vmatpush1.msra.mxu0 0.0
    %4119 = vmatprep.subr.mxu0 0.0
    %4120 = vmatpush1.msra.mxu0 0.0
    %4121 = vmatprep.subr.mxu0 0.0
    %4122 = vmatpush1.msra.mxu0 0.0
    %4123 = vmatprep.subr.mxu0 0.0
    %4124 = vmatpush1.msra.mxu0 0.0
    %4125 = vmatprep.subr.mxu0 0.0
    %4126 = vmatpush1.msra.mxu0 0.0
    %4127 = vmatprep.subr.mxu0 0.0
    %4128 = vmatpush1.msra.mxu0 0.0
    %4129 = vmatprep.subr.mxu0 0.0
    %4130 = vmatpush1.msra.mxu0 0.0
    %4131 = vmatprep.subr.mxu0 0.0
    %4132 = vmatpush1.msra.mxu0 0.0
    %4133 = vmatprep.subr.mxu0 0.0
    %4134 = vmatpush1.msra.mxu0 0.0
    %4135 = vmatprep.subr.mxu0 0.0
    %4136 = vmatpush1.msra.mxu0 0.0
    %4137 = vmatprep.subr.mxu0 0.0
    %4138 = vmatpush1.msra.mxu0 0.0
    %4139 = vmatprep.subr.mxu0 0.0
    %4140 = vmatpush1.msra.mxu0 0.0
    %4141 = vmatprep.subr.mxu0 0.0
    %4142 = vmatpush1.msra.mxu0 0.0
    %4143 = vmatprep.subr.mxu0 0.0
    %4144 = vmatpush1.msra.mxu0 0.0
    %4145 = vmatprep.mubr.f32.mxu0 0.0
    %4146 = vmatmul.mubr.f32.gmra.mrb[0].mxu0 %v3923
    %v4147 = vpop.f32.mrb[0].mxu0
    %v4148 = vadd.f32 0.0, %v4147
    %v4149 = vpop.f32.mrb[0].mxu0
    %4150 = vdwg.mxu0
    %v4151 = vadd.f32 %v4080, %v4148
    %v4152 = vtanh.pop %v4151
    %v4153 = vld [vmem:[#allocation5 + $0x8] sm:$0x3]
    %4154 = vmatprep.subr.mxu0 0.0
    %4155 = vmatpush1.msra.mxu0 %v2657
    %4156 = vmatprep.subr.mxu0 0.0
    %4157 = vmatpush1.msra.mxu0 %v2658
    %4158 = vmatprep.subr.mxu0 0.0
    %4159 = vmatpush1.msra.mxu0 %v2659
    %4160 = vmatprep.subr.mxu0 0.0
    %4161 = vmatpush1.msra.mxu0 %v2660
    %4162 = vmatprep.subr.mxu0 0.0
    %4163 = vmatpush1.msra.mxu0 0.0
    %4164 = vmatprep.subr.mxu0 0.0
    %4165 = vmatpush1.msra.mxu0 0.0
    %4166 = vmatprep.subr.mxu0 0.0
    %4167 = vmatpush1.msra.mxu0 0.0
    %4168 = vmatprep.subr.mxu0 0.0
    %4169 = vmatpush1.msra.mxu0 0.0
    %4170 = vmatprep.subr.mxu0 0.0
    %4171 = vmatpush1.msra.mxu0 0.0
    %4172 = vmatprep.subr.mxu0 0.0
    %4173 = vmatpush1.msra.mxu0 0.0
    %4174 = vmatprep.subr.mxu0 0.0
    %4175 = vmatpush1.msra.mxu0 0.0
    %4176 = vmatprep.subr.mxu0 0.0
    %4177 = vmatpush1.msra.mxu0 0.0
    %4178 = vmatprep.subr.mxu0 0.0
    %4179 = vmatpush1.msra.mxu0 0.0
    %4180 = vmatprep.subr.mxu0 0.0
    %4181 = vmatpush1.msra.mxu0 0.0
    %4182 = vmatprep.subr.mxu0 0.0
    %4183 = vmatpush1.msra.mxu0 0.0
    %4184 = vmatprep.subr.mxu0 0.0
    %4185 = vmatpush1.msra.mxu0 0.0
    %4186 = vmatprep.subr.mxu0 0.0
    %4187 = vmatpush1.msra.mxu0 0.0
    %4188 = vmatprep.subr.mxu0 0.0
    %4189 = vmatpush1.msra.mxu0 0.0
    %4190 = vmatprep.subr.mxu0 0.0
    %4191 = vmatpush1.msra.mxu0 0.0
    %4192 = vmatprep.subr.mxu0 0.0
    %4193 = vmatpush1.msra.mxu0 0.0
    %4194 = vmatprep.subr.mxu0 0.0
    %4195 = vmatpush1.msra.mxu0 0.0
    %4196 = vmatprep.subr.mxu0 0.0
    %4197 = vmatpush1.msra.mxu0 0.0
    %4198 = vmatprep.subr.mxu0 0.0
    %4199 = vmatpush1.msra.mxu0 0.0
    %4200 = vmatprep.subr.mxu0 0.0
    %4201 = vmatpush1.msra.mxu0 0.0
    %4202 = vmatprep.subr.mxu0 0.0
    %4203 = vmatpush1.msra.mxu0 0.0
    %4204 = vmatprep.subr.mxu0 0.0
    %4205 = vmatpush1.msra.mxu0 0.0
    %4206 = vmatprep.subr.mxu0 0.0
    %4207 = vmatpush1.msra.mxu0 0.0
    %4208 = vmatprep.subr.mxu0 0.0
    %4209 = vmatpush1.msra.mxu0 0.0
    %4210 = vmatprep.subr.mxu0 0.0
    %4211 = vmatpush1.msra.mxu0 0.0
    %4212 = vmatprep.subr.mxu0 0.0
    %4213 = vmatpush1.msra.mxu0 0.0
    %4214 = vmatprep.subr.mxu0 0.0
    %4215 = vmatpush1.msra.mxu0 0.0
    %4216 = vmatprep.subr.mxu0 0.0
    %4217 = vmatpush1.msra.mxu0 0.0
    %4218 = vmatprep.mubr.f32.mxu0 0.0
    %4219 = vmatmul.mubr.f32.gmra.mrb[0].mxu0 %v3923
    %v4220 = vpop.f32.mrb[0].mxu0
    %v4221 = vadd.f32 0.0, %v4220
    %v4222 = vpop.f32.mrb[0].mxu0
    %4223 = vdwg.mxu0
    %v4224 = vadd.f32 %v4153, %v4221
    %v4225 = vsub.f32 0.0, %v4224
    %v4226 = vmul.f32 %v4225, 1.442695
    %v4227 = vpow.pop %v4226
    %v4228 = vadd.f32 %v4227, 1.0
    %v4229 = vrcp.pop %v4228
    %v4230 = vmul.f32 1.0, %v4229
    %v4231 = vmul.f32 %v4079, %v3918
    %v4232 = vmul.f32 %v4001, %v4152
    %v4233 = vadd.f32 %v4231, %v4232
    %v4234 = vtanh.pop %v4233
    %v4235 = vmul.f32 %v4230, %v4234
    %v4236 = vld [vmem:[#allocation2 + $0xa] sm:$0x3]
    %v4238 = vsel %vm355, %v4235, 0
    %4240 = vmatprep.subr.mxu0 0.0
    %4241 = vmatpush1.msra.mxu0 %v2642
    %4242 = vmatprep.subr.mxu0 0.0
    %4243 = vmatpush1.msra.mxu0 %v2643
    %4244 = vmatprep.subr.mxu0 0.0
    %4245 = vmatpush1.msra.mxu0 %v2644
    %4246 = vmatprep.subr.mxu0 0.0
    %4247 = vmatpush1.msra.mxu0 %v2645
    %4248 = vmatprep.subr.mxu0 0.0
    %4249 = vmatpush1.msra.mxu0 0.0
    %4250 = vmatprep.subr.mxu0 0.0
    %4251 = vmatpush1.msra.mxu0 0.0
    %4252 = vmatprep.subr.mxu0 0.0
    %4253 = vmatpush1.msra.mxu0 0.0
    %4254 = vmatprep.subr.mxu0 0.0
    %4255 = vmatpush1.msra.mxu0 0.0
    %4256 = vmatprep.subr.mxu0 0.0
    %4257 = vmatpush1.msra.mxu0 0.0
    %4258 = vmatprep.subr.mxu0 0.0
    %4259 = vmatpush1.msra.mxu0 0.0
    %4260 = vmatprep.subr.mxu0 0.0
    %4261 = vmatpush1.msra.mxu0 0.0
    %4262 = vmatprep.subr.mxu0 0.0
    %4263 = vmatpush1.msra.mxu0 0.0
    %4264 = vmatprep.subr.mxu0 0.0
    %4265 = vmatpush1.msra.mxu0 0.0
    %4266 = vmatprep.subr.mxu0 0.0
    %4267 = vmatpush1.msra.mxu0 0.0
    %4268 = vmatprep.subr.mxu0 0.0
    %4269 = vmatpush1.msra.mxu0 0.0
    %4270 = vmatprep.subr.mxu0 0.0
    %4271 = vmatpush1.msra.mxu0 0.0
    %4272 = vmatprep.subr.mxu0 0.0
    %4273 = vmatpush1.msra.mxu0 0.0
    %4274 = vmatprep.subr.mxu0 0.0
    %4275 = vmatpush1.msra.mxu0 0.0
    %4276 = vmatprep.subr.mxu0 0.0
    %4277 = vmatpush1.msra.mxu0 0.0
    %4278 = vmatprep.subr.mxu0 0.0
    %4279 = vmatpush1.msra.mxu0 0.0
    %4280 = vmatprep.subr.mxu0 0.0
    %4281 = vmatpush1.msra.mxu0 0.0
    %4282 = vmatprep.subr.mxu0 0.0
    %4283 = vmatpush1.msra.mxu0 0.0
    %4284 = vmatprep.subr.mxu0 0.0
    %4285 = vmatpush1.msra.mxu0 0.0
    %4286 = vmatprep.subr.mxu0 0.0
    %4287 = vmatpush1.msra.mxu0 0.0
    %4288 = vmatprep.subr.mxu0 0.0
    %4289 = vmatpush1.msra.mxu0 0.0
    %4290 = vmatprep.subr.mxu0 0.0
    %4291 = vmatpush1.msra.mxu0 0.0
    %4292 = vmatprep.subr.mxu0 0.0
    %4293 = vmatpush1.msra.mxu0 0.0
    %4294 = vmatprep.subr.mxu0 0.0
    %4295 = vmatpush1.msra.mxu0 0.0
    %4296 = vmatprep.subr.mxu0 0.0
    %4297 = vmatpush1.msra.mxu0 0.0
    %4298 = vmatprep.subr.mxu0 0.0
    %4299 = vmatpush1.msra.mxu0 0.0
    %4300 = vmatprep.subr.mxu0 0.0
    %4301 = vmatpush1.msra.mxu0 0.0
    %4302 = vmatprep.subr.mxu0 0.0
    %4303 = vmatpush1.msra.mxu0 0.0
    %4304 = vmatprep.mubr.f32.mxu0 0.0
    %4305 = vmatmul.mubr.f32.gmra.mrb[0].mxu0 %v4238
    %v4306 = vpop.f32.mrb[0].mxu0
    %v4307 = vadd.f32 0.0, %v4306
    %v4308 = vpop.f32.mrb[0].mxu0
    %4309 = vdwg.mxu0
    %v4310 = vadd.f32 %v4236, %v4307
    %v4311 = vsub.f32 0.0, %v4310
    %v4312 = vmul.f32 %v4311, 1.442695
    %v4313 = vpow.pop %v4312
    %v4314 = vadd.f32 %v4313, 1.0
    %v4315 = vrcp.pop %v4314
    %v4316 = vmul.f32 1.0, %v4315
    %v4317 = vld [vmem:[#allocation3 + $0xa] sm:$0x3]
    %4318 = vmatprep.subr.mxu0 0.0
    %4319 = vmatpush1.msra.mxu0 %v2647
    %4320 = vmatprep.subr.mxu0 0.0
    %4321 = vmatpush1.msra.mxu0 %v2648
    %4322 = vmatprep.subr.mxu0 0.0
    %4323 = vmatpush1.msra.mxu0 %v2649
    %4324 = vmatprep.subr.mxu0 0.0
    %4325 = vmatpush1.msra.mxu0 %v2650
    %4326 = vmatprep.subr.mxu0 0.0
    %4327 = vmatpush1.msra.mxu0 0.0
    %4328 = vmatprep.subr.mxu0 0.0
    %4329 = vmatpush1.msra.mxu0 0.0
    %4330 = vmatprep.subr.mxu0 0.0
    %4331 = vmatpush1.msra.mxu0 0.0
    %4332 = vmatprep.subr.mxu0 0.0
    %4333 = vmatpush1.msra.mxu0 0.0
    %4334 = vmatprep.subr.mxu0 0.0
    %4335 = vmatpush1.msra.mxu0 0.0
    %4336 = vmatprep.subr.mxu0 0.0
    %4337 = vmatpush1.msra.mxu0 0.0
    %4338 = vmatprep.subr.mxu0 0.0
    %4339 = vmatpush1.msra.mxu0 0.0
    %4340 = vmatprep.subr.mxu0 0.0
    %4341 = vmatpush1.msra.mxu0 0.0
    %4342 = vmatprep.subr.mxu0 0.0
    %4343 = vmatpush1.msra.mxu0 0.0
    %4344 = vmatprep.subr.mxu0 0.0
    %4345 = vmatpush1.msra.mxu0 0.0
    %4346 = vmatprep.subr.mxu0 0.0
    %4347 = vmatpush1.msra.mxu0 0.0
    %4348 = vmatprep.subr.mxu0 0.0
    %4349 = vmatpush1.msra.mxu0 0.0
    %4350 = vmatprep.subr.mxu0 0.0
    %4351 = vmatpush1.msra.mxu0 0.0
    %4352 = vmatprep.subr.mxu0 0.0
    %4353 = vmatpush1.msra.mxu0 0.0
    %4354 = vmatprep.subr.mxu0 0.0
    %4355 = vmatpush1.msra.mxu0 0.0
    %4356 = vmatprep.subr.mxu0 0.0
    %4357 = vmatpush1.msra.mxu0 0.0
    %4358 = vmatprep.subr.mxu0 0.0
    %4359 = vmatpush1.msra.mxu0 0.0
    %4360 = vmatprep.subr.mxu0 0.0
    %4361 = vmatpush1.msra.mxu0 0.0
    %4362 = vmatprep.subr.mxu0 0.0
    %4363 = vmatpush1.msra.mxu0 0.0
    %4364 = vmatprep.subr.mxu0 0.0
    %4365 = vmatpush1.msra.mxu0 0.0
    %4366 = vmatprep.subr.mxu0 0.0
    %4367 = vmatpush1.msra.mxu0 0.0
    %4368 = vmatprep.subr.mxu0 0.0
    %4369 = vmatpush1.msra.mxu0 0.0
    %4370 = vmatprep.subr.mxu0 0.0
    %4371 = vmatpush1.msra.mxu0 0.0
    %4372 = vmatprep.subr.mxu0 0.0
    %4373 = vmatpush1.msra.mxu0 0.0
    %4374 = vmatprep.subr.mxu0 0.0
    %4375 = vmatpush1.msra.mxu0 0.0
    %4376 = vmatprep.subr.mxu0 0.0
    %4377 = vmatpush1.msra.mxu0 0.0
    %4378 = vmatprep.subr.mxu0 0.0
    %4379 = vmatpush1.msra.mxu0 0.0
    %4380 = vmatprep.subr.mxu0 0.0
    %4381 = vmatpush1.msra.mxu0 0.0
    %4382 = vmatprep.mubr.f32.mxu0 0.0
    %4383 = vmatmul.mubr.f32.gmra.mrb[0].mxu0 %v4238
    %v4384 = vpop.f32.mrb[0].mxu0
    %v4385 = vadd.f32 0.0, %v4384
    %v4386 = vpop.f32.mrb[0].mxu0
    %4387 = vdwg.mxu0
    %v4388 = vadd.f32 %v4317, %v4385
    %v4389 = vsub.f32 0.0, %v4388
    %v4390 = vmul.f32 %v4389, 1.442695
    %v4391 = vpow.pop %v4390
    %v4392 = vadd.f32 %v4391, 1.0
    %v4393 = vrcp.pop %v4392
    %v4394 = vmul.f32 1.0, %v4393
    %v4395 = vld [vmem:[#allocation4 + $0xa] sm:$0x3]
    %4396 = vmatprep.subr.mxu0 0.0
    %4397 = vmatpush1.msra.mxu0 %v2652
    %4398 = vmatprep.subr.mxu0 0.0
    %4399 = vmatpush1.msra.mxu0 %v2653
    %4400 = vmatprep.subr.mxu0 0.0
    %4401 = vmatpush1.msra.mxu0 %v2654
    %4402 = vmatprep.subr.mxu0 0.0
    %4403 = vmatpush1.msra.mxu0 %v2655
    %4404 = vmatprep.subr.mxu0 0.0
    %4405 = vmatpush1.msra.mxu0 0.0
    %4406 = vmatprep.subr.mxu0 0.0
    %4407 = vmatpush1.msra.mxu0 0.0
    %4408 = vmatprep.subr.mxu0 0.0
    %4409 = vmatpush1.msra.mxu0 0.0
    %4410 = vmatprep.subr.mxu0 0.0
    %4411 = vmatpush1.msra.mxu0 0.0
    %4412 = vmatprep.subr.mxu0 0.0
    %4413 = vmatpush1.msra.mxu0 0.0
    %4414 = vmatprep.subr.mxu0 0.0
    %4415 = vmatpush1.msra.mxu0 0.0
    %4416 = vmatprep.subr.mxu0 0.0
    %4417 = vmatpush1.msra.mxu0 0.0
    %4418 = vmatprep.subr.mxu0 0.0
    %4419 = vmatpush1.msra.mxu0 0.0
    %4420 = vmatprep.subr.mxu0 0.0
    %4421 = vmatpush1.msra.mxu0 0.0
    %4422 = vmatprep.subr.mxu0 0.0
    %4423 = vmatpush1.msra.mxu0 0.0
    %4424 = vmatprep.subr.mxu0 0.0
    %4425 = vmatpush1.msra.mxu0 0.0
    %4426 = vmatprep.subr.mxu0 0.0
    %4427 = vmatpush1.msra.mxu0 0.0
    %4428 = vmatprep.subr.mxu0 0.0
    %4429 = vmatpush1.msra.mxu0 0.0
    %4430 = vmatprep.subr.mxu0 0.0
    %4431 = vmatpush1.msra.mxu0 0.0
    %4432 = vmatprep.subr.mxu0 0.0
    %4433 = vmatpush1.msra.mxu0 0.0
    %4434 = vmatprep.subr.mxu0 0.0
    %4435 = vmatpush1.msra.mxu0 0.0
    %4436 = vmatprep.subr.mxu0 0.0
    %4437 = vmatpush1.msra.mxu0 0.0
    %4438 = vmatprep.subr.mxu0 0.0
    %4439 = vmatpush1.msra.mxu0 0.0
    %4440 = vmatprep.subr.mxu0 0.0
    %4441 = vmatpush1.msra.mxu0 0.0
    %4442 = vmatprep.subr.mxu0 0.0
    %4443 = vmatpush1.msra.mxu0 0.0
    %4444 = vmatprep.subr.mxu0 0.0
    %4445 = vmatpush1.msra.mxu0 0.0
    %4446 = vmatprep.subr.mxu0 0.0
    %4447 = vmatpush1.msra.mxu0 0.0
    %4448 = vmatprep.subr.mxu0 0.0
    %4449 = vmatpush1.msra.mxu0 0.0
    %4450 = vmatprep.subr.mxu0 0.0
    %4451 = vmatpush1.msra.mxu0 0.0
    %4452 = vmatprep.subr.mxu0 0.0
    %4453 = vmatpush1.msra.mxu0 0.0
    %4454 = vmatprep.subr.mxu0 0.0
    %4455 = vmatpush1.msra.mxu0 0.0
    %4456 = vmatprep.subr.mxu0 0.0
    %4457 = vmatpush1.msra.mxu0 0.0
    %4458 = vmatprep.subr.mxu0 0.0
    %4459 = vmatpush1.msra.mxu0 0.0
    %4460 = vmatprep.mubr.f32.mxu0 0.0
    %4461 = vmatmul.mubr.f32.gmra.mrb[0].mxu0 %v4238
    %v4462 = vpop.f32.mrb[0].mxu0
    %v4463 = vadd.f32 0.0, %v4462
    %v4464 = vpop.f32.mrb[0].mxu0
    %4465 = vdwg.mxu0
    %v4466 = vadd.f32 %v4395, %v4463
    %v4467 = vtanh.pop %v4466
    %v4468 = vld [vmem:[#allocation5 + $0xa] sm:$0x3]
    %4469 = vmatprep.subr.mxu0 0.0
    %4470 = vmatpush1.msra.mxu0 %v2657
    %4471 = vmatprep.subr.mxu0 0.0
    %4472 = vmatpush1.msra.mxu0 %v2658
    %4473 = vmatprep.subr.mxu0 0.0
    %4474 = vmatpush1.msra.mxu0 %v2659
    %4475 = vmatprep.subr.mxu0 0.0
    %4476 = vmatpush1.msra.mxu0 %v2660
    %4477 = vmatprep.subr.mxu0 0.0
    %4478 = vmatpush1.msra.mxu0 0.0
    %4479 = vmatprep.subr.mxu0 0.0
    %4480 = vmatpush1.msra.mxu0 0.0
    %4481 = vmatprep.subr.mxu0 0.0
    %4482 = vmatpush1.msra.mxu0 0.0
    %4483 = vmatprep.subr.mxu0 0.0
    %4484 = vmatpush1.msra.mxu0 0.0
    %4485 = vmatprep.subr.mxu0 0.0
    %4486 = vmatpush1.msra.mxu0 0.0
    %4487 = vmatprep.subr.mxu0 0.0
    %4488 = vmatpush1.msra.mxu0 0.0
    %4489 = vmatprep.subr.mxu0 0.0
    %4490 = vmatpush1.msra.mxu0 0.0
    %4491 = vmatprep.subr.mxu0 0.0
    %4492 = vmatpush1.msra.mxu0 0.0
    %4493 = vmatprep.subr.mxu0 0.0
    %4494 = vmatpush1.msra.mxu0 0.0
    %4495 = vmatprep.subr.mxu0 0.0
    %4496 = vmatpush1.msra.mxu0 0.0
    %4497 = vmatprep.subr.mxu0 0.0
    %4498 = vmatpush1.msra.mxu0 0.0
    %4499 = vmatprep.subr.mxu0 0.0
    %4500 = vmatpush1.msra.mxu0 0.0
    %4501 = vmatprep.subr.mxu0 0.0
    %4502 = vmatpush1.msra.mxu0 0.0
    %4503 = vmatprep.subr.mxu0 0.0
    %4504 = vmatpush1.msra.mxu0 0.0
    %4505 = vmatprep.subr.mxu0 0.0
    %4506 = vmatpush1.msra.mxu0 0.0
    %4507 = vmatprep.subr.mxu0 0.0
    %4508 = vmatpush1.msra.mxu0 0.0
    %4509 = vmatprep.subr.mxu0 0.0
    %4510 = vmatpush1.msra.mxu0 0.0
    %4511 = vmatprep.subr.mxu0 0.0
    %4512 = vmatpush1.msra.mxu0 0.0
    %4513 = vmatprep.subr.mxu0 0.0
    %4514 = vmatpush1.msra.mxu0 0.0
    %4515 = vmatprep.subr.mxu0 0.0
    %4516 = vmatpush1.msra.mxu0 0.0
    %4517 = vmatprep.subr.mxu0 0.0
    %4518 = vmatpush1.msra.mxu0 0.0
    %4519 = vmatprep.subr.mxu0 0.0
    %4520 = vmatpush1.msra.mxu0 0.0
    %4521 = vmatprep.subr.mxu0 0.0
    %4522 = vmatpush1.msra.mxu0 0.0
    %4523 = vmatprep.subr.mxu0 0.0
    %4524 = vmatpush1.msra.mxu0 0.0
    %4525 = vmatprep.subr.mxu0 0.0
    %4526 = vmatpush1.msra.mxu0 0.0
    %4527 = vmatprep.subr.mxu0 0.0
    %4528 = vmatpush1.msra.mxu0 0.0
    %4529 = vmatprep.subr.mxu0 0.0
    %4530 = vmatpush1.msra.mxu0 0.0
    %4531 = vmatprep.subr.mxu0 0.0
    %4532 = vmatpush1.msra.mxu0 0.0
    %4533 = vmatprep.mubr.f32.mxu0 0.0
    %4534 = vmatmul.mubr.f32.gmra.mrb[0].mxu0 %v4238
    %v4535 = vpop.f32.mrb[0].mxu0
    %v4536 = vadd.f32 0.0, %v4535
    %v4537 = vpop.f32.mrb[0].mxu0
    %4538 = vdwg.mxu0
    %v4539 = vadd.f32 %v4468, %v4536
    %v4540 = vsub.f32 0.0, %v4539
    %v4541 = vmul.f32 %v4540, 1.442695
    %v4542 = vpow.pop %v4541
    %v4543 = vadd.f32 %v4542, 1.0
    %v4544 = vrcp.pop %v4543
    %v4545 = vmul.f32 1.0, %v4544
    %v4546 = vmul.f32 %v4394, %v4233
    %v4547 = vmul.f32 %v4316, %v4467
    %v4548 = vadd.f32 %v4546, %v4547
    %v4549 = vtanh.pop %v4548
    %v4550 = vmul.f32 %v4545, %v4549
    %v4551 = vld [vmem:[#allocation2 + $0xc] sm:$0x3]
    %v4553 = vsel %vm355, %v4550, 0
    %4555 = vmatprep.subr.mxu0 0.0
    %4556 = vmatpush1.msra.mxu0 %v2642
    %4557 = vmatprep.subr.mxu0 0.0
    %4558 = vmatpush1.msra.mxu0 %v2643
    %4559 = vmatprep.subr.mxu0 0.0
    %4560 = vmatpush1.msra.mxu0 %v2644
    %4561 = vmatprep.subr.mxu0 0.0
    %4562 = vmatpush1.msra.mxu0 %v2645
    %4563 = vmatprep.subr.mxu0 0.0
    %4564 = vmatpush1.msra.mxu0 0.0
    %4565 = vmatprep.subr.mxu0 0.0
    %4566 = vmatpush1.msra.mxu0 0.0
    %4567 = vmatprep.subr.mxu0 0.0
    %4568 = vmatpush1.msra.mxu0 0.0
    %4569 = vmatprep.subr.mxu0 0.0
    %4570 = vmatpush1.msra.mxu0 0.0
    %4571 = vmatprep.subr.mxu0 0.0
    %4572 = vmatpush1.msra.mxu0 0.0
    %4573 = vmatprep.subr.mxu0 0.0
    %4574 = vmatpush1.msra.mxu0 0.0
    %4575 = vmatprep.subr.mxu0 0.0
    %4576 = vmatpush1.msra.mxu0 0.0
    %4577 = vmatprep.subr.mxu0 0.0
    %4578 = vmatpush1.msra.mxu0 0.0
    %4579 = vmatprep.subr.mxu0 0.0
    %4580 = vmatpush1.msra.mxu0 0.0
    %4581 = vmatprep.subr.mxu0 0.0
    %4582 = vmatpush1.msra.mxu0 0.0
    %4583 = vmatprep.subr.mxu0 0.0
    %4584 = vmatpush1.msra.mxu0 0.0
    %4585 = vmatprep.subr.mxu0 0.0
    %4586 = vmatpush1.msra.mxu0 0.0
    %4587 = vmatprep.subr.mxu0 0.0
    %4588 = vmatpush1.msra.mxu0 0.0
    %4589 = vmatprep.subr.mxu0 0.0
    %4590 = vmatpush1.msra.mxu0 0.0
    %4591 = vmatprep.subr.mxu0 0.0
    %4592 = vmatpush1.msra.mxu0 0.0
    %4593 = vmatprep.subr.mxu0 0.0
    %4594 = vmatpush1.msra.mxu0 0.0
    %4595 = vmatprep.subr.mxu0 0.0
    %4596 = vmatpush1.msra.mxu0 0.0
    %4597 = vmatprep.subr.mxu0 0.0
    %4598 = vmatpush1.msra.mxu0 0.0
    %4599 = vmatprep.subr.mxu0 0.0
    %4600 = vmatpush1.msra.mxu0 0.0
    %4601 = vmatprep.subr.mxu0 0.0
    %4602 = vmatpush1.msra.mxu0 0.0
    %4603 = vmatprep.subr.mxu0 0.0
    %4604 = vmatpush1.msra.mxu0 0.0
    %4605 = vmatprep.subr.mxu0 0.0
    %4606 = vmatpush1.msra.mxu0 0.0
    %4607 = vmatprep.subr.mxu0 0.0
    %4608 = vmatpush1.msra.mxu0 0.0
    %4609 = vmatprep.subr.mxu0 0.0
    %4610 = vmatpush1.msra.mxu0 0.0
    %4611 = vmatprep.subr.mxu0 0.0
    %4612 = vmatpush1.msra.mxu0 0.0
    %4613 = vmatprep.subr.mxu0 0.0
    %4614 = vmatpush1.msra.mxu0 0.0
    %4615 = vmatprep.subr.mxu0 0.0
    %4616 = vmatpush1.msra.mxu0 0.0
    %4617 = vmatprep.subr.mxu0 0.0
    %4618 = vmatpush1.msra.mxu0 0.0
    %4619 = vmatprep.mubr.f32.mxu0 0.0
    %4620 = vmatmul.mubr.f32.gmra.mrb[0].mxu0 %v4553
    %v4621 = vpop.f32.mrb[0].mxu0
    %v4622 = vadd.f32 0.0, %v4621
    %v4623 = vpop.f32.mrb[0].mxu0
    %4624 = vdwg.mxu0
    %v4625 = vadd.f32 %v4551, %v4622
    %v4626 = vsub.f32 0.0, %v4625
    %v4627 = vmul.f32 %v4626, 1.442695
    %v4628 = vpow.pop %v4627
    %v4629 = vadd.f32 %v4628, 1.0
    %v4630 = vrcp.pop %v4629
    %v4631 = vmul.f32 1.0, %v4630
    %v4632 = vld [vmem:[#allocation3 + $0xc] sm:$0x3]
    %4633 = vmatprep.subr.mxu0 0.0
    %4634 = vmatpush1.msra.mxu0 %v2647
    %4635 = vmatprep.subr.mxu0 0.0
    %4636 = vmatpush1.msra.mxu0 %v2648
    %4637 = vmatprep.subr.mxu0 0.0
    %4638 = vmatpush1.msra.mxu0 %v2649
    %4639 = vmatprep.subr.mxu0 0.0
    %4640 = vmatpush1.msra.mxu0 %v2650
    %4641 = vmatprep.subr.mxu0 0.0
    %4642 = vmatpush1.msra.mxu0 0.0
    %4643 = vmatprep.subr.mxu0 0.0
    %4644 = vmatpush1.msra.mxu0 0.0
    %4645 = vmatprep.subr.mxu0 0.0
    %4646 = vmatpush1.msra.mxu0 0.0
    %4647 = vmatprep.subr.mxu0 0.0
    %4648 = vmatpush1.msra.mxu0 0.0
    %4649 = vmatprep.subr.mxu0 0.0
    %4650 = vmatpush1.msra.mxu0 0.0
    %4651 = vmatprep.subr.mxu0 0.0
    %4652 = vmatpush1.msra.mxu0 0.0
    %4653 = vmatprep.subr.mxu0 0.0
    %4654 = vmatpush1.msra.mxu0 0.0
    %4655 = vmatprep.subr.mxu0 0.0
    %4656 = vmatpush1.msra.mxu0 0.0
    %4657 = vmatprep.subr.mxu0 0.0
    %4658 = vmatpush1.msra.mxu0 0.0
    %4659 = vmatprep.subr.mxu0 0.0
    %4660 = vmatpush1.msra.mxu0 0.0
    %4661 = vmatprep.subr.mxu0 0.0
    %4662 = vmatpush1.msra.mxu0 0.0
    %4663 = vmatprep.subr.mxu0 0.0
    %4664 = vmatpush1.msra.mxu0 0.0
    %4665 = vmatprep.subr.mxu0 0.0
    %4666 = vmatpush1.msra.mxu0 0.0
    %4667 = vmatprep.subr.mxu0 0.0
    %4668 = vmatpush1.msra.mxu0 0.0
    %4669 = vmatprep.subr.mxu0 0.0
    %4670 = vmatpush1.msra.mxu0 0.0
    %4671 = vmatprep.subr.mxu0 0.0
    %4672 = vmatpush1.msra.mxu0 0.0
    %4673 = vmatprep.subr.mxu0 0.0
    %4674 = vmatpush1.msra.mxu0 0.0
    %4675 = vmatprep.subr.mxu0 0.0
    %4676 = vmatpush1.msra.mxu0 0.0
    %4677 = vmatprep.subr.mxu0 0.0
    %4678 = vmatpush1.msra.mxu0 0.0
    %4679 = vmatprep.subr.mxu0 0.0
    %4680 = vmatpush1.msra.mxu0 0.0
    %4681 = vmatprep.subr.mxu0 0.0
    %4682 = vmatpush1.msra.mxu0 0.0
    %4683 = vmatprep.subr.mxu0 0.0
    %4684 = vmatpush1.msra.mxu0 0.0
    %4685 = vmatprep.subr.mxu0 0.0
    %4686 = vmatpush1.msra.mxu0 0.0
    %4687 = vmatprep.subr.mxu0 0.0
    %4688 = vmatpush1.msra.mxu0 0.0
    %4689 = vmatprep.subr.mxu0 0.0
    %4690 = vmatpush1.msra.mxu0 0.0
    %4691 = vmatprep.subr.mxu0 0.0
    %4692 = vmatpush1.msra.mxu0 0.0
    %4693 = vmatprep.subr.mxu0 0.0
    %4694 = vmatpush1.msra.mxu0 0.0
    %4695 = vmatprep.subr.mxu0 0.0
    %4696 = vmatpush1.msra.mxu0 0.0
    %4697 = vmatprep.mubr.f32.mxu0 0.0
    %4698 = vmatmul.mubr.f32.gmra.mrb[0].mxu0 %v4553
    %v4699 = vpop.f32.mrb[0].mxu0
    %v4700 = vadd.f32 0.0, %v4699
    %v4701 = vpop.f32.mrb[0].mxu0
    %4702 = vdwg.mxu0
    %v4703 = vadd.f32 %v4632, %v4700
    %v4704 = vsub.f32 0.0, %v4703
    %v4705 = vmul.f32 %v4704, 1.442695
    %v4706 = vpow.pop %v4705
    %v4707 = vadd.f32 %v4706, 1.0
    %v4708 = vrcp.pop %v4707
    %v4709 = vmul.f32 1.0, %v4708
    %v4710 = vld [vmem:[#allocation4 + $0xc] sm:$0x3]
    %4711 = vmatprep.subr.mxu0 0.0
    %4712 = vmatpush1.msra.mxu0 %v2652
    %4713 = vmatprep.subr.mxu0 0.0
    %4714 = vmatpush1.msra.mxu0 %v2653
    %4715 = vmatprep.subr.mxu0 0.0
    %4716 = vmatpush1.msra.mxu0 %v2654
    %4717 = vmatprep.subr.mxu0 0.0
    %4718 = vmatpush1.msra.mxu0 %v2655
    %4719 = vmatprep.subr.mxu0 0.0
    %4720 = vmatpush1.msra.mxu0 0.0
    %4721 = vmatprep.subr.mxu0 0.0
    %4722 = vmatpush1.msra.mxu0 0.0
    %4723 = vmatprep.subr.mxu0 0.0
    %4724 = vmatpush1.msra.mxu0 0.0
    %4725 = vmatprep.subr.mxu0 0.0
    %4726 = vmatpush1.msra.mxu0 0.0
    %4727 = vmatprep.subr.mxu0 0.0
    %4728 = vmatpush1.msra.mxu0 0.0
    %4729 = vmatprep.subr.mxu0 0.0
    %4730 = vmatpush1.msra.mxu0 0.0
    %4731 = vmatprep.subr.mxu0 0.0
    %4732 = vmatpush1.msra.mxu0 0.0
    %4733 = vmatprep.subr.mxu0 0.0
    %4734 = vmatpush1.msra.mxu0 0.0
    %4735 = vmatprep.subr.mxu0 0.0
    %4736 = vmatpush1.msra.mxu0 0.0
    %4737 = vmatprep.subr.mxu0 0.0
    %4738 = vmatpush1.msra.mxu0 0.0
    %4739 = vmatprep.subr.mxu0 0.0
    %4740 = vmatpush1.msra.mxu0 0.0
    %4741 = vmatprep.subr.mxu0 0.0
    %4742 = vmatpush1.msra.mxu0 0.0
    %4743 = vmatprep.subr.mxu0 0.0
    %4744 = vmatpush1.msra.mxu0 0.0
    %4745 = vmatprep.subr.mxu0 0.0
    %4746 = vmatpush1.msra.mxu0 0.0
    %4747 = vmatprep.subr.mxu0 0.0
    %4748 = vmatpush1.msra.mxu0 0.0
    %4749 = vmatprep.subr.mxu0 0.0
    %4750 = vmatpush1.msra.mxu0 0.0
    %4751 = vmatprep.subr.mxu0 0.0
    %4752 = vmatpush1.msra.mxu0 0.0
    %4753 = vmatprep.subr.mxu0 0.0
    %4754 = vmatpush1.msra.mxu0 0.0
    %4755 = vmatprep.subr.mxu0 0.0
    %4756 = vmatpush1.msra.mxu0 0.0
    %4757 = vmatprep.subr.mxu0 0.0
    %4758 = vmatpush1.msra.mxu0 0.0
    %4759 = vmatprep.subr.mxu0 0.0
    %4760 = vmatpush1.msra.mxu0 0.0
    %4761 = vmatprep.subr.mxu0 0.0
    %4762 = vmatpush1.msra.mxu0 0.0
    %4763 = vmatprep.subr.mxu0 0.0
    %4764 = vmatpush1.msra.mxu0 0.0
    %4765 = vmatprep.subr.mxu0 0.0
    %4766 = vmatpush1.msra.mxu0 0.0
    %4767 = vmatprep.subr.mxu0 0.0
    %4768 = vmatpush1.msra.mxu0 0.0
    %4769 = vmatprep.subr.mxu0 0.0
    %4770 = vmatpush1.msra.mxu0 0.0
    %4771 = vmatprep.subr.mxu0 0.0
    %4772 = vmatpush1.msra.mxu0 0.0
    %4773 = vmatprep.subr.mxu0 0.0
    %4774 = vmatpush1.msra.mxu0 0.0
    %4775 = vmatprep.mubr.f32.mxu0 0.0
    %4776 = vmatmul.mubr.f32.gmra.mrb[0].mxu0 %v4553
    %v4777 = vpop.f32.mrb[0].mxu0
    %v4778 = vadd.f32 0.0, %v4777
    %v4779 = vpop.f32.mrb[0].mxu0
    %4780 = vdwg.mxu0
    %v4781 = vadd.f32 %v4710, %v4778
    %v4782 = vtanh.pop %v4781
    %v4783 = vld [vmem:[#allocation5 + $0xc] sm:$0x3]
    %4784 = vmatprep.subr.mxu0 0.0
    %4785 = vmatpush1.msra.mxu0 %v2657
    %4786 = vmatprep.subr.mxu0 0.0
    %4787 = vmatpush1.msra.mxu0 %v2658
    %4788 = vmatprep.subr.mxu0 0.0
    %4789 = vmatpush1.msra.mxu0 %v2659
    %4790 = vmatprep.subr.mxu0 0.0
    %4791 = vmatpush1.msra.mxu0 %v2660
    %4792 = vmatprep.subr.mxu0 0.0
    %4793 = vmatpush1.msra.mxu0 0.0
    %4794 = vmatprep.subr.mxu0 0.0
    %4795 = vmatpush1.msra.mxu0 0.0
    %4796 = vmatprep.subr.mxu0 0.0
    %4797 = vmatpush1.msra.mxu0 0.0
    %4798 = vmatprep.subr.mxu0 0.0
    %4799 = vmatpush1.msra.mxu0 0.0
    %4800 = vmatprep.subr.mxu0 0.0
    %4801 = vmatpush1.msra.mxu0 0.0
    %4802 = vmatprep.subr.mxu0 0.0
    %4803 = vmatpush1.msra.mxu0 0.0
    %4804 = vmatprep.subr.mxu0 0.0
    %4805 = vmatpush1.msra.mxu0 0.0
    %4806 = vmatprep.subr.mxu0 0.0
    %4807 = vmatpush1.msra.mxu0 0.0
    %4808 = vmatprep.subr.mxu0 0.0
    %4809 = vmatpush1.msra.mxu0 0.0
    %4810 = vmatprep.subr.mxu0 0.0
    %4811 = vmatpush1.msra.mxu0 0.0
    %4812 = vmatprep.subr.mxu0 0.0
    %4813 = vmatpush1.msra.mxu0 0.0
    %4814 = vmatprep.subr.mxu0 0.0
    %4815 = vmatpush1.msra.mxu0 0.0
    %4816 = vmatprep.subr.mxu0 0.0
    %4817 = vmatpush1.msra.mxu0 0.0
    %4818 = vmatprep.subr.mxu0 0.0
    %4819 = vmatpush1.msra.mxu0 0.0
    %4820 = vmatprep.subr.mxu0 0.0
    %4821 = vmatpush1.msra.mxu0 0.0
    %4822 = vmatprep.subr.mxu0 0.0
    %4823 = vmatpush1.msra.mxu0 0.0
    %4824 = vmatprep.subr.mxu0 0.0
    %4825 = vmatpush1.msra.mxu0 0.0
    %4826 = vmatprep.subr.mxu0 0.0
    %4827 = vmatpush1.msra.mxu0 0.0
    %4828 = vmatprep.subr.mxu0 0.0
    %4829 = vmatpush1.msra.mxu0 0.0
    %4830 = vmatprep.subr.mxu0 0.0
    %4831 = vmatpush1.msra.mxu0 0.0
    %4832 = vmatprep.subr.mxu0 0.0
    %4833 = vmatpush1.msra.mxu0 0.0
    %4834 = vmatprep.subr.mxu0 0.0
    %4835 = vmatpush1.msra.mxu0 0.0
    %4836 = vmatprep.subr.mxu0 0.0
    %4837 = vmatpush1.msra.mxu0 0.0
    %4838 = vmatprep.subr.mxu0 0.0
    %4839 = vmatpush1.msra.mxu0 0.0
    %4840 = vmatprep.subr.mxu0 0.0
    %4841 = vmatpush1.msra.mxu0 0.0
    %4842 = vmatprep.subr.mxu0 0.0
    %4843 = vmatpush1.msra.mxu0 0.0
    %4844 = vmatprep.subr.mxu0 0.0
    %4845 = vmatpush1.msra.mxu0 0.0
    %4846 = vmatprep.subr.mxu0 0.0
    %4847 = vmatpush1.msra.mxu0 0.0
    %4848 = vmatprep.mubr.f32.mxu0 0.0
    %4849 = vmatmul.mubr.f32.gmra.mrb[0].mxu0 %v4553
    %v4850 = vpop.f32.mrb[0].mxu0
    %v4851 = vadd.f32 0.0, %v4850
    %v4852 = vpop.f32.mrb[0].mxu0
    %4853 = vdwg.mxu0
    %v4854 = vadd.f32 %v4783, %v4851
    %v4855 = vsub.f32 0.0, %v4854
    %v4856 = vmul.f32 %v4855, 1.442695
    %v4857 = vpow.pop %v4856
    %v4858 = vadd.f32 %v4857, 1.0
    %v4859 = vrcp.pop %v4858
    %v4860 = vmul.f32 1.0, %v4859
    %v4861 = vmul.f32 %v4709, %v4548
    %v4862 = vmul.f32 %v4631, %v4782
    %v4863 = vadd.f32 %v4861, %v4862
    %v4864 = vtanh.pop %v4863
    %v4865 = vmul.f32 %v4860, %v4864
    %v4866 = vld [vmem:[#allocation2 + $0xe] sm:$0x3]
    %v4868 = vsel %vm355, %v4865, 0
    %4870 = vmatprep.subr.mxu0 0.0
    %4871 = vmatpush1.msra.mxu0 %v2642
    %4872 = vmatprep.subr.mxu0 0.0
    %4873 = vmatpush1.msra.mxu0 %v2643
    %4874 = vmatprep.subr.mxu0 0.0
    %4875 = vmatpush1.msra.mxu0 %v2644
    %4876 = vmatprep.subr.mxu0 0.0
    %4877 = vmatpush1.msra.mxu0 %v2645
    %4878 = vmatprep.subr.mxu0 0.0
    %4879 = vmatpush1.msra.mxu0 0.0
    %4880 = vmatprep.subr.mxu0 0.0
    %4881 = vmatpush1.msra.mxu0 0.0
    %4882 = vmatprep.subr.mxu0 0.0
    %4883 = vmatpush1.msra.mxu0 0.0
    %4884 = vmatprep.subr.mxu0 0.0
    %4885 = vmatpush1.msra.mxu0 0.0
    %4886 = vmatprep.subr.mxu0 0.0
    %4887 = vmatpush1.msra.mxu0 0.0
    %4888 = vmatprep.subr.mxu0 0.0
    %4889 = vmatpush1.msra.mxu0 0.0
    %4890 = vmatprep.subr.mxu0 0.0
    %4891 = vmatpush1.msra.mxu0 0.0
    %4892 = vmatprep.subr.mxu0 0.0
    %4893 = vmatpush1.msra.mxu0 0.0
    %4894 = vmatprep.subr.mxu0 0.0
    %4895 = vmatpush1.msra.mxu0 0.0
    %4896 = vmatprep.subr.mxu0 0.0
    %4897 = vmatpush1.msra.mxu0 0.0
    %4898 = vmatprep.subr.mxu0 0.0
    %4899 = vmatpush1.msra.mxu0 0.0
    %4900 = vmatprep.subr.mxu0 0.0
    %4901 = vmatpush1.msra.mxu0 0.0
    %4902 = vmatprep.subr.mxu0 0.0
    %4903 = vmatpush1.msra.mxu0 0.0
    %4904 = vmatprep.subr.mxu0 0.0
    %4905 = vmatpush1.msra.mxu0 0.0
    %4906 = vmatprep.subr.mxu0 0.0
    %4907 = vmatpush1.msra.mxu0 0.0
    %4908 = vmatprep.subr.mxu0 0.0
    %4909 = vmatpush1.msra.mxu0 0.0
    %4910 = vmatprep.subr.mxu0 0.0
    %4911 = vmatpush1.msra.mxu0 0.0
    %4912 = vmatprep.subr.mxu0 0.0
    %4913 = vmatpush1.msra.mxu0 0.0
    %4914 = vmatprep.subr.mxu0 0.0
    %4915 = vmatpush1.msra.mxu0 0.0
    %4916 = vmatprep.subr.mxu0 0.0
    %4917 = vmatpush1.msra.mxu0 0.0
    %4918 = vmatprep.subr.mxu0 0.0
    %4919 = vmatpush1.msra.mxu0 0.0
    %4920 = vmatprep.subr.mxu0 0.0
    %4921 = vmatpush1.msra.mxu0 0.0
    %4922 = vmatprep.subr.mxu0 0.0
    %4923 = vmatpush1.msra.mxu0 0.0
    %4924 = vmatprep.subr.mxu0 0.0
    %4925 = vmatpush1.msra.mxu0 0.0
    %4926 = vmatprep.subr.mxu0 0.0
    %4927 = vmatpush1.msra.mxu0 0.0
    %4928 = vmatprep.subr.mxu0 0.0
    %4929 = vmatpush1.msra.mxu0 0.0
    %4930 = vmatprep.subr.mxu0 0.0
    %4931 = vmatpush1.msra.mxu0 0.0
    %4932 = vmatprep.subr.mxu0 0.0
    %4933 = vmatpush1.msra.mxu0 0.0
    %4934 = vmatprep.mubr.f32.mxu0 0.0
    %4935 = vmatmul.mubr.f32.gmra.mrb[0].mxu0 %v4868
    %v4936 = vpop.f32.mrb[0].mxu0
    %v4937 = vadd.f32 0.0, %v4936
    %v4938 = vpop.f32.mrb[0].mxu0
    %4939 = vdwg.mxu0
    %v4940 = vadd.f32 %v4866, %v4937
    %v4941 = vsub.f32 0.0, %v4940
    %v4942 = vmul.f32 %v4941, 1.442695
    %v4943 = vpow.pop %v4942
    %v4944 = vadd.f32 %v4943, 1.0
    %v4945 = vrcp.pop %v4944
    %v4946 = vmul.f32 1.0, %v4945
    %v4947 = vld [vmem:[#allocation3 + $0xe] sm:$0x3]
    %4948 = vmatprep.subr.mxu0 0.0
    %4949 = vmatpush1.msra.mxu0 %v2647
    %4950 = vmatprep.subr.mxu0 0.0
    %4951 = vmatpush1.msra.mxu0 %v2648
    %4952 = vmatprep.subr.mxu0 0.0
    %4953 = vmatpush1.msra.mxu0 %v2649
    %4954 = vmatprep.subr.mxu0 0.0
    %4955 = vmatpush1.msra.mxu0 %v2650
    %4956 = vmatprep.subr.mxu0 0.0
    %4957 = vmatpush1.msra.mxu0 0.0
    %4958 = vmatprep.subr.mxu0 0.0
    %4959 = vmatpush1.msra.mxu0 0.0
    %4960 = vmatprep.subr.mxu0 0.0
    %4961 = vmatpush1.msra.mxu0 0.0
    %4962 = vmatprep.subr.mxu0 0.0
    %4963 = vmatpush1.msra.mxu0 0.0
    %4964 = vmatprep.subr.mxu0 0.0
    %4965 = vmatpush1.msra.mxu0 0.0
    %4966 = vmatprep.subr.mxu0 0.0
    %4967 = vmatpush1.msra.mxu0 0.0
    %4968 = vmatprep.subr.mxu0 0.0
    %4969 = vmatpush1.msra.mxu0 0.0
    %4970 = vmatprep.subr.mxu0 0.0
    %4971 = vmatpush1.msra.mxu0 0.0
    %4972 = vmatprep.subr.mxu0 0.0
    %4973 = vmatpush1.msra.mxu0 0.0
    %4974 = vmatprep.subr.mxu0 0.0
    %4975 = vmatpush1.msra.mxu0 0.0
    %4976 = vmatprep.subr.mxu0 0.0
    %4977 = vmatpush1.msra.mxu0 0.0
    %4978 = vmatprep.subr.mxu0 0.0
    %4979 = vmatpush1.msra.mxu0 0.0
    %4980 = vmatprep.subr.mxu0 0.0
    %4981 = vmatpush1.msra.mxu0 0.0
    %4982 = vmatprep.subr.mxu0 0.0
    %4983 = vmatpush1.msra.mxu0 0.0
    %4984 = vmatprep.subr.mxu0 0.0
    %4985 = vmatpush1.msra.mxu0 0.0
    %4986 = vmatprep.subr.mxu0 0.0
    %4987 = vmatpush1.msra.mxu0 0.0
    %4988 = vmatprep.subr.mxu0 0.0
    %4989 = vmatpush1.msra.mxu0 0.0
    %4990 = vmatprep.subr.mxu0 0.0
    %4991 = vmatpush1.msra.mxu0 0.0
    %4992 = vmatprep.subr.mxu0 0.0
    %4993 = vmatpush1.msra.mxu0 0.0
    %4994 = vmatprep.subr.mxu0 0.0
    %4995 = vmatpush1.msra.mxu0 0.0
    %4996 = vmatprep.subr.mxu0 0.0
    %4997 = vmatpush1.msra.mxu0 0.0
    %4998 = vmatprep.subr.mxu0 0.0
    %4999 = vmatpush1.msra.mxu0 0.0
    %5000 = vmatprep.subr.mxu0 0.0
    %5001 = vmatpush1.msra.mxu0 0.0
    %5002 = vmatprep.subr.mxu0 0.0
    %5003 = vmatpush1.msra.mxu0 0.0
    %5004 = vmatprep.subr.mxu0 0.0
    %5005 = vmatpush1.msra.mxu0 0.0
    %5006 = vmatprep.subr.mxu0 0.0
    %5007 = vmatpush1.msra.mxu0 0.0
    %5008 = vmatprep.subr.mxu0 0.0
    %5009 = vmatpush1.msra.mxu0 0.0
    %5010 = vmatprep.subr.mxu0 0.0
    %5011 = vmatpush1.msra.mxu0 0.0
    %5012 = vmatprep.mubr.f32.mxu0 0.0
    %5013 = vmatmul.mubr.f32.gmra.mrb[0].mxu0 %v4868
    %v5014 = vpop.f32.mrb[0].mxu0
    %v5015 = vadd.f32 0.0, %v5014
    %v5016 = vpop.f32.mrb[0].mxu0
    %5017 = vdwg.mxu0
    %v5018 = vadd.f32 %v4947, %v5015
    %v5019 = vsub.f32 0.0, %v5018
    %v5020 = vmul.f32 %v5019, 1.442695
    %v5021 = vpow.pop %v5020
    %v5022 = vadd.f32 %v5021, 1.0
    %v5023 = vrcp.pop %v5022
    %v5024 = vmul.f32 1.0, %v5023
    %v5025 = vld [vmem:[#allocation4 + $0xe] sm:$0x3]
    %5026 = vmatprep.subr.mxu0 0.0
    %5027 = vmatpush1.msra.mxu0 %v2652
    %5028 = vmatprep.subr.mxu0 0.0
    %5029 = vmatpush1.msra.mxu0 %v2653
    %5030 = vmatprep.subr.mxu0 0.0
    %5031 = vmatpush1.msra.mxu0 %v2654
    %5032 = vmatprep.subr.mxu0 0.0
    %5033 = vmatpush1.msra.mxu0 %v2655
    %5034 = vmatprep.subr.mxu0 0.0
    %5035 = vmatpush1.msra.mxu0 0.0
    %5036 = vmatprep.subr.mxu0 0.0
    %5037 = vmatpush1.msra.mxu0 0.0
    %5038 = vmatprep.subr.mxu0 0.0
    %5039 = vmatpush1.msra.mxu0 0.0
    %5040 = vmatprep.subr.mxu0 0.0
    %5041 = vmatpush1.msra.mxu0 0.0
    %5042 = vmatprep.subr.mxu0 0.0
    %5043 = vmatpush1.msra.mxu0 0.0
    %5044 = vmatprep.subr.mxu0 0.0
    %5045 = vmatpush1.msra.mxu0 0.0
    %5046 = vmatprep.subr.mxu0 0.0
    %5047 = vmatpush1.msra.mxu0 0.0
    %5048 = vmatprep.subr.mxu0 0.0
    %5049 = vmatpush1.msra.mxu0 0.0
    %5050 = vmatprep.subr.mxu0 0.0
    %5051 = vmatpush1.msra.mxu0 0.0
    %5052 = vmatprep.subr.mxu0 0.0
    %5053 = vmatpush1.msra.mxu0 0.0
    %5054 = vmatprep.subr.mxu0 0.0
    %5055 = vmatpush1.msra.mxu0 0.0
    %5056 = vmatprep.subr.mxu0 0.0
    %5057 = vmatpush1.msra.mxu0 0.0
    %5058 = vmatprep.subr.mxu0 0.0
    %5059 = vmatpush1.msra.mxu0 0.0
    %5060 = vmatprep.subr.mxu0 0.0
    %5061 = vmatpush1.msra.mxu0 0.0
    %5062 = vmatprep.subr.mxu0 0.0
    %5063 = vmatpush1.msra.mxu0 0.0
    %5064 = vmatprep.subr.mxu0 0.0
    %5065 = vmatpush1.msra.mxu0 0.0
    %5066 = vmatprep.subr.mxu0 0.0
    %5067 = vmatpush1.msra.mxu0 0.0
    %5068 = vmatprep.subr.mxu0 0.0
    %5069 = vmatpush1.msra.mxu0 0.0
    %5070 = vmatprep.subr.mxu0 0.0
    %5071 = vmatpush1.msra.mxu0 0.0
    %5072 = vmatprep.subr.mxu0 0.0
    %5073 = vmatpush1.msra.mxu0 0.0
    %5074 = vmatprep.subr.mxu0 0.0
    %5075 = vmatpush1.msra.mxu0 0.0
    %5076 = vmatprep.subr.mxu0 0.0
    %5077 = vmatpush1.msra.mxu0 0.0
    %5078 = vmatprep.subr.mxu0 0.0
    %5079 = vmatpush1.msra.mxu0 0.0
    %5080 = vmatprep.subr.mxu0 0.0
    %5081 = vmatpush1.msra.mxu0 0.0
    %5082 = vmatprep.subr.mxu0 0.0
    %5083 = vmatpush1.msra.mxu0 0.0
    %5084 = vmatprep.subr.mxu0 0.0
    %5085 = vmatpush1.msra.mxu0 0.0
    %5086 = vmatprep.subr.mxu0 0.0
    %5087 = vmatpush1.msra.mxu0 0.0
    %5088 = vmatprep.subr.mxu0 0.0
    %5089 = vmatpush1.msra.mxu0 0.0
    %5090 = vmatprep.mubr.f32.mxu0 0.0
    %5091 = vmatmul.mubr.f32.gmra.mrb[0].mxu0 %v4868
    %v5092 = vpop.f32.mrb[0].mxu0
    %v5093 = vadd.f32 0.0, %v5092
    %v5094 = vpop.f32.mrb[0].mxu0
    %5095 = vdwg.mxu0
    %v5096 = vadd.f32 %v5025, %v5093
    %v5097 = vtanh.pop %v5096
    %v5098 = vld [vmem:[#allocation5 + $0xe] sm:$0x3]
    %5099 = vmatprep.subr.mxu0 0.0
    %5100 = vmatpush1.msra.mxu0 %v2657
    %5101 = vmatprep.subr.mxu0 0.0
    %5102 = vmatpush1.msra.mxu0 %v2658
    %5103 = vmatprep.subr.mxu0 0.0
    %5104 = vmatpush1.msra.mxu0 %v2659
    %5105 = vmatprep.subr.mxu0 0.0
    %5106 = vmatpush1.msra.mxu0 %v2660
    %5107 = vmatprep.subr.mxu0 0.0
    %5108 = vmatpush1.msra.mxu0 0.0
    %5109 = vmatprep.subr.mxu0 0.0
    %5110 = vmatpush1.msra.mxu0 0.0
    %5111 = vmatprep.subr.mxu0 0.0
    %5112 = vmatpush1.msra.mxu0 0.0
    %5113 = vmatprep.subr.mxu0 0.0
    %5114 = vmatpush1.msra.mxu0 0.0
    %5115 = vmatprep.subr.mxu0 0.0
    %5116 = vmatpush1.msra.mxu0 0.0
    %5117 = vmatprep.subr.mxu0 0.0
    %5118 = vmatpush1.msra.mxu0 0.0
    %5119 = vmatprep.subr.mxu0 0.0
    %5120 = vmatpush1.msra.mxu0 0.0
    %5121 = vmatprep.subr.mxu0 0.0
    %5122 = vmatpush1.msra.mxu0 0.0
    %5123 = vmatprep.subr.mxu0 0.0
    %5124 = vmatpush1.msra.mxu0 0.0
    %5125 = vmatprep.subr.mxu0 0.0
    %5126 = vmatpush1.msra.mxu0 0.0
    %5127 = vmatprep.subr.mxu0 0.0
    %5128 = vmatpush1.msra.mxu0 0.0
    %5129 = vmatprep.subr.mxu0 0.0
    %5130 = vmatpush1.msra.mxu0 0.0
    %5131 = vmatprep.subr.mxu0 0.0
    %5132 = vmatpush1.msra.mxu0 0.0
    %5133 = vmatprep.subr.mxu0 0.0
    %5134 = vmatpush1.msra.mxu0 0.0
    %5135 = vmatprep.subr.mxu0 0.0
    %5136 = vmatpush1.msra.mxu0 0.0
    %5137 = vmatprep.subr.mxu0 0.0
    %5138 = vmatpush1.msra.mxu0 0.0
    %5139 = vmatprep.subr.mxu0 0.0
    %5140 = vmatpush1.msra.mxu0 0.0
    %5141 = vmatprep.subr.mxu0 0.0
    %5142 = vmatpush1.msra.mxu0 0.0
    %5143 = vmatprep.subr.mxu0 0.0
    %5144 = vmatpush1.msra.mxu0 0.0
    %5145 = vmatprep.subr.mxu0 0.0
    %5146 = vmatpush1.msra.mxu0 0.0
    %5147 = vmatprep.subr.mxu0 0.0
    %5148 = vmatpush1.msra.mxu0 0.0
    %5149 = vmatprep.subr.mxu0 0.0
    %5150 = vmatpush1.msra.mxu0 0.0
    %5151 = vmatprep.subr.mxu0 0.0
    %5152 = vmatpush1.msra.mxu0 0.0
    %5153 = vmatprep.subr.mxu0 0.0
    %5154 = vmatpush1.msra.mxu0 0.0
    %5155 = vmatprep.subr.mxu0 0.0
    %5156 = vmatpush1.msra.mxu0 0.0
    %5157 = vmatprep.subr.mxu0 0.0
    %5158 = vmatpush1.msra.mxu0 0.0
    %5159 = vmatprep.subr.mxu0 0.0
    %5160 = vmatpush1.msra.mxu0 0.0
    %5161 = vmatprep.subr.mxu0 0.0
    %5162 = vmatpush1.msra.mxu0 0.0
    %5163 = vmatprep.mubr.f32.mxu0 0.0
    %5164 = vmatmul.mubr.f32.gmra.mrb[0].mxu0 %v4868
    %v5165 = vpop.f32.mrb[0].mxu0
    %v5166 = vadd.f32 0.0, %v5165
    %v5167 = vpop.f32.mrb[0].mxu0
    %5168 = vdwg.mxu0
    %v5169 = vadd.f32 %v5098, %v5166
    %v5170 = vsub.f32 0.0, %v5169
    %v5171 = vmul.f32 %v5170, 1.442695
    %v5172 = vpow.pop %v5171
    %v5173 = vadd.f32 %v5172, 1.0
    %v5174 = vrcp.pop %v5173
    %v5175 = vmul.f32 1.0, %v5174
    %v5176 = vmul.f32 %v5024, %v4863
    %v5177 = vmul.f32 %v4946, %v5097
    %v5178 = vadd.f32 %v5176, %v5177
    %v5179 = vtanh.pop %v5178
    %v5180 = vmul.f32 %v5175, %v5179
    %v5181 = vld [vmem:[%s16] sm:$0xff]
    %v5182 = vld [vmem:[%s16 + $0x8] sm:$0xff]
    %v5183 = vld [vmem:[%s16 + $0x10] sm:$0xff]
    %v5184 = vld [vmem:[%s16 + $0x18] sm:$0xff]
    %v5185 = vld [vmem:[%s17] sm:$0x1]
    %v5187 = vlaneseq
    %v5188 = vshrl.u32 %v5187, 7
    %v5189 = vsub.s32 0, %v5188
    %v5190 = vrot.slane %v5185, %v5189
    %v5193 = vsel %vm355, %v5180, 0
    %5195 = vmatprep.subr.mxu0 0.0
    %5196 = vmatpush1.msra.mxu0 %v5181
    %5197 = vmatprep.subr.mxu0 0.0
    %5198 = vmatpush1.msra.mxu0 %v5182
    %5199 = vmatprep.subr.mxu0 0.0
    %5200 = vmatpush1.msra.mxu0 %v5183
    %5201 = vmatprep.subr.mxu0 0.0
    %5202 = vmatpush1.msra.mxu0 %v5184
    %5203 = vmatprep.subr.mxu0 0.0
    %5204 = vmatpush1.msra.mxu0 0.0
    %5205 = vmatprep.subr.mxu0 0.0
    %5206 = vmatpush1.msra.mxu0 0.0
    %5207 = vmatprep.subr.mxu0 0.0
    %5208 = vmatpush1.msra.mxu0 0.0
    %5209 = vmatprep.subr.mxu0 0.0
    %5210 = vmatpush1.msra.mxu0 0.0
    %5211 = vmatprep.subr.mxu0 0.0
    %5212 = vmatpush1.msra.mxu0 0.0
    %5213 = vmatprep.subr.mxu0 0.0
    %5214 = vmatpush1.msra.mxu0 0.0
    %5215 = vmatprep.subr.mxu0 0.0
    %5216 = vmatpush1.msra.mxu0 0.0
    %5217 = vmatprep.subr.mxu0 0.0
    %5218 = vmatpush1.msra.mxu0 0.0
    %5219 = vmatprep.subr.mxu0 0.0
    %5220 = vmatpush1.msra.mxu0 0.0
    %5221 = vmatprep.subr.mxu0 0.0
    %5222 = vmatpush1.msra.mxu0 0.0
    %5223 = vmatprep.subr.mxu0 0.0
    %5224 = vmatpush1.msra.mxu0 0.0
    %5225 = vmatprep.subr.mxu0 0.0
    %5226 = vmatpush1.msra.mxu0 0.0
    %5227 = vmatprep.subr.mxu0 0.0
    %5228 = vmatpush1.msra.mxu0 0.0
    %5229 = vmatprep.subr.mxu0 0.0
    %5230 = vmatpush1.msra.mxu0 0.0
    %5231 = vmatprep.subr.mxu0 0.0
    %5232 = vmatpush1.msra.mxu0 0.0
    %5233 = vmatprep.subr.mxu0 0.0
    %5234 = vmatpush1.msra.mxu0 0.0
    %5235 = vmatprep.subr.mxu0 0.0
    %5236 = vmatpush1.msra.mxu0 0.0
    %5237 = vmatprep.subr.mxu0 0.0
    %5238 = vmatpush1.msra.mxu0 0.0
    %5239 = vmatprep.subr.mxu0 0.0
    %5240 = vmatpush1.msra.mxu0 0.0
    %5241 = vmatprep.subr.mxu0 0.0
    %5242 = vmatpush1.msra.mxu0 0.0
    %5243 = vmatprep.subr.mxu0 0.0
    %5244 = vmatpush1.msra.mxu0 0.0
    %5245 = vmatprep.subr.mxu0 0.0
    %5246 = vmatpush1.msra.mxu0 0.0
    %5247 = vmatprep.subr.mxu0 0.0
    %5248 = vmatpush1.msra.mxu0 0.0
    %5249 = vmatprep.subr.mxu0 0.0
    %5250 = vmatpush1.msra.mxu0 0.0
    %5251 = vmatprep.subr.mxu0 0.0
    %5252 = vmatpush1.msra.mxu0 0.0
    %5253 = vmatprep.subr.mxu0 0.0
    %5254 = vmatpush1.msra.mxu0 0.0
    %5255 = vmatprep.subr.mxu0 0.0
    %5256 = vmatpush1.msra.mxu0 0.0
    %5257 = vmatprep.subr.mxu0 0.0
    %5258 = vmatpush1.msra.mxu0 0.0
    %5259 = vmatprep.mubr.f32.mxu0 0.0
    %5260 = vmatmul.mubr.f32.gmra.mrb[0].mxu0 %v5193
    %v5261 = vpop.f32.mrb[0].mxu0
    %v5262 = vadd.f32 %v5190, %v5261
    %v5263 = vpop.f32.mrb[0].mxu0
    %5264 = vdwg.mxu0
    %5265 = vst [vmem:[#allocation18] sm:$0x3] %v5262
    // Predicated region
    $region102: #{tpu_custom_call.1} parent=1 // pred_check
      _
    $region103: #{tpu_custom_call.1} parent=1 // pred_check_branch
      %5267 = sbr.rel (0) target = $region105
    $region104: #{tpu_custom_call.1} parent=1 // pred_region
      %s5269 = ssub.s32 32, 32
      %5270 = vsyncadd [#allocation8], %s5269
      %s5272 = sshll.u32 [#allocation18], 4
      %s5273 = int_to_ptr.vmem [resolvable:$true] %s5272
      %5275 = dma.vmem_to_hbm [thread:$0]  %s5273, 32, %s18, [#allocation8]
    $region105: #{tpu_custom_call.1} parent=1 // pred_fallthru
      _
    // Predicated region
    $region106: #{tpu_custom_call.1} parent=1 // pred_check
      _
    $region107: #{tpu_custom_call.1} parent=1 // pred_check_branch
      %5277 = sbr.rel (0) target = $region109
    $region108: #{tpu_custom_call.1} parent=1 // pred_region
      %5278 = dma.done [#allocation8], 32
    $region109: #{tpu_custom_call.1} parent=1 // pred_fallthru
      _
    %5279 = vsyncpa [#allocation7], 1
    %5280 = vsyncpa [#allocation10], 1
    %5281 = vsyncpa [#allocation13], 1
    %5282 = vsyncpa [#allocation16], 1
    %5283 = vsyncpa [#allocation8], 1

</llo_original>
